<compile_context>
chip_gen: v6e
topology: v6e:2x2x1
jax: 0.10.0
libtpu: 0.0.40
codegen_flags: <defaults>
</compile_context>

<pallas_src>
import functools
import math

import jax
import jax.numpy as jnp
import numpy as np
from jax.experimental import pallas as pl
from jax.experimental.pallas import tpu as pltpu

# ----------------------------- config constants ------------------------------
B           = 2
IN_CHANS    = 3
CROP        = 64
PATCH       = 16
EMBED_DIM   = 32
NUM_HEADS   = 2
HEAD_DIM    = EMBED_DIM // NUM_HEADS
MLP_RATIO   = 4.0
HIDDEN      = int(EMBED_DIM * MLP_RATIO)
DEPTH       = 2
NUM_CLASSES = 10
HP = WP     = CROP // PATCH                    # 4
NUM_PATCHES = HP * WP                          # 16
PATCH_DIM   = IN_CHANS * PATCH * PATCH         # 768
STRIDE_Q    = [(2, 2), None]                   # spatial q-pool stride per block
STRIDE_KV   = [(1, 1), (1, 1)]                 # spatial kv-pool stride per block
LN_EPS      = 1e-6
POOL_LN_EPS = 1e-5
SQRT2_INV   = float(1.0 / math.sqrt(2.0))
NEG_BIG     = -1e30


# ------------------------- host-side constant builders -----------------------
def _seg_matrix(width, group):
    # block-diagonal 1/group matrix: x @ seg == per-head group mean broadcast back
    m = np.zeros((width, width), np.float32)
    for g in range(width // group):
        m[g * group:(g + 1) * group, g * group:(g + 1) * group] = 1.0 / group
    return m


def _conv_pool_sel(H, W, sh, sw):
    """Stacked 0/1 neighbour-selection matrix for a 3x3 (pad 1) depthwise conv."""
    Ho = (H + 2 - 3) // sh + 1
    Wo = (W + 2 - 3) // sw + 1
    L, Lq = H * W, Ho * Wo
    S = np.zeros((9 * Lq, L), np.float32)
    for dh in range(3):
        for dw in range(3):
            t = dh * 3 + dw
            for ho in range(Ho):
                for wo in range(Wo):
                    hi, wi = ho * sh - 1 + dh, wo * sw - 1 + dw
                    if 0 <= hi < H and 0 <= wi < W:
                        S[t * Lq + ho * Wo + wo, hi * W + wi] = 1.0
    return S, Ho, Wo


def _max_pool_sel(H, W, sh, sw):
    """Selection + (-inf) mask for the MaxPool3d skip path (kernel = s+1 if s>1)."""
    kh = 3 if sh > 1 else 1
    kw = 3 if sw > 1 else 1
    ph, pw = kh // 2, kw // 2
    Ho = (H + 2 * ph - kh) // sh + 1
    Wo = (W + 2 * pw - kw) // sw + 1
    L, Lq = H * W, Ho * Wo
    S = np.zeros((kh * kw * Lq, L), np.float32)
    neg = np.full((kh * kw * Lq, 1), NEG_BIG, np.float32)
    for dh in range(kh):
        for dw in range(kw):
            t = dh * kw + dw
            for ho in range(Ho):
                for wo in range(Wo):
                    hi, wi = ho * sh - ph + dh, wo * sw - pw + dw
                    if 0 <= hi < H and 0 <= wi < W:
                        S[t * Lq + ho * Wo + wo, hi * W + wi] = 1.0
                        neg[t * Lq + ho * Wo + wo, 0] = 0.0
    return S, neg, Ho, Wo


# --------------------------- in-kernel math helpers ---------------------------
def _layernorm(x, g, b, eps):
    mu = jnp.mean(x, axis=-1, keepdims=True)
    xc = x - mu
    var = jnp.mean(xc * xc, axis=-1, keepdims=True)
    return xc * jax.lax.rsqrt(var + eps) * g + b


def _grouped_ln(x, seg, g, b, eps):
    # per-head LayerNorm(head_dim) via one block-diagonal segment matmul (MXU),
    # one full-width result -- no per-head partial lane slices/stores.
    gm = jnp.dot(x, seg, preferred_element_type=jnp.float32)
    xc = x - gm
    gv = jnp.dot(xc * xc, seg, preferred_element_type=jnp.float32)
    return xc * jax.lax.rsqrt(gv + eps) * g + b


def _gelu(y):
    # exact (erf-based) GELU, matching torch.nn.GELU()
    return 0.5 * y * (1.0 + jax.lax.erf(y * SQRT2_INV))


def _bdot(a, w):
    # bf16 operands, f32 accumulate (single MXU pass on v6e/v7x)
    return jnp.dot(a.astype(jnp.bfloat16), w.astype(jnp.bfloat16),
                   preferred_element_type=jnp.float32)


def _fdot(a, w):
    return jnp.dot(a, w, preferred_element_type=jnp.float32)


def _pool_conv(body, sel, w9):
    # depthwise 3x3 conv = ONE neighbour-gather matmul + 9 per-tap channel scales
    lq = sel.shape[0] // 9
    gath = _fdot(sel, body)                                  # (9*Lq, Cw)
    out = gath[0:lq, :] * w9[0:1, :]
    for t in range(1, 9):
        out = out + gath[t * lq:(t + 1) * lq, :] * w9[t:t + 1, :]
    return out


def _pool_max(body, sel, neg, lq):
    # MaxPool skip path: gather matmul, push out-of-bounds taps to -1e30, tap max
    taps = sel.shape[0] // lq
    gath = _fdot(sel, body) + neg
    out = gath[0:lq, :]
    for t in range(1, taps):
        out = jnp.maximum(out, gath[t * lq:(t + 1) * lq, :])
    return out


def _attend(q, k_cls, k_body, v_cls, v_body, scale):
    # all heads per call via full-C masked contractions (no rank-16 dots);
    # keys/values stay split into cls row + body slab (no in-kernel concat).
    nq, C = q.shape
    ch = jax.lax.broadcasted_iota(jnp.int32, (1, C), 1)
    out = jnp.zeros((nq, C), jnp.float32)
    for h in range(NUM_HEADS):
        m = ((ch >= h * HEAD_DIM) & (ch < (h + 1) * HEAD_DIM)).astype(jnp.float32)
        s_b = jax.lax.dot_general(q, k_body * m, (((1,), (1,)), ((), ())),
                                  preferred_element_type=jnp.float32) * scale
        s_c = jax.lax.dot_general(q, k_cls * m, (((1,), (1,)), ((), ())),
                                  preferred_element_type=jnp.float32) * scale
        mx = jnp.maximum(jnp.max(s_b, axis=-1, keepdims=True), s_c)   # stable softmax
        e_b = jnp.exp(s_b - mx)
        e_c = jnp.exp(s_c - mx)
        r = pl.reciprocal(jnp.sum(e_b, axis=-1, keepdims=True) + e_c, approx=True)
        out = out + (_fdot(e_b, v_body * m) + e_c * (v_cls * m)) * r
    return out


# ------------------------------ fused block body ------------------------------
def _block(d, i, body, cls):
    C = EMBED_DIM
    pool_q = (f"b{i}_pq_sel" in d)

    # --- LN(norm1) + fused [Wq|Wk|Wv] projection (body rows and cls row) ---
    g1, b1 = d[f"b{i}_n1g"][...], d[f"b{i}_n1b"][...]
    qkvw, qkvb = d[f"b{i}_qkvw"][...], d[f"b{i}_qkvb"][...]
    qkv_body = _bdot(_layernorm(body, g1, b1, LN_EPS), qkvw) + qkvb
    qkv_cls = _bdot(_layernorm(cls, g1, b1, LN_EPS), qkvw) + qkvb
    q_b, kv_b = qkv_body[:, :C], qkv_body[:, C:]      # k|v adjacent -> 2C-wide slab
    q_c, kv_c = qkv_cls[:, :C], qkv_cls[:, C:]

    seg32, seg64 = d["seg32"][...], d["seg64"][...]

    # --- Q pooling (depthwise conv + per-head LN), only when this block pools q ---
    if pool_q:
        pg, pb = d[f"b{i}_pq_g"][...], d[f"b{i}_pq_b"][...]
        q_b = _pool_conv(q_b, d[f"b{i}_pq_sel"][...], d[f"b{i}_pq_w"][...])
        q_b = _grouped_ln(q_b, seg32, pg, pb, POOL_LN_EPS)
        q_c = _grouped_ln(q_c, seg32, pg, pb, POOL_LN_EPS)

    # --- fused K+V pooling on the 2C-wide channel slab ---
    kg, kb2 = d[f"b{i}_pkv_g"][...], d[f"b{i}_pkv_b"][...]
    kv_b = _pool_conv(kv_b, d[f"b{i}_pkv_sel"][...], d[f"b{i}_pkv_w"][...])
    kv_b = _grouped_ln(kv_b, seg64, kg, kb2, POOL_LN_EPS)
    kv_c = _grouped_ln(kv_c, seg64, kg, kb2, POOL_LN_EPS)
    k_b, v_b = kv_b[:, :C], kv_b[:, C:]
    k_c, v_c = kv_c[:, :C], kv_c[:, C:]

    # --- residual path: MaxPool3d skip iff this block pools q ---
    if pool_q:
        lq = d[f"b{i}_pq_sel"].shape[0] // 9
        res_b = _pool_max(body, d[f"b{i}_skip_sel"][...], d[f"b{i}_skip_neg"][...], lq)
        res_c = cls
    else:
        res_b, res_c = body, cls

    # --- multi-head attention + output projection + residual ---
    scale = HEAD_DIM ** (-0.5)
    pw, pbias = d[f"b{i}_projw"][...], d[f"b{i}_projb"][...]
    a_b = _bdot(_attend(q_b, k_c, k_b, v_c, v_b, scale), pw) + pbias + res_b
    a_c = _bdot(_attend(q_c, k_c, k_b, v_c, v_b, scale), pw) + pbias + res_c

    # --- LN(norm2) + fc1 + GELU + fc2 + residual (128-wide hidden stays in VMEM) ---
    g2, b2 = d[f"b{i}_n2g"][...], d[f"b{i}_n2b"][...]
    w1, bb1 = d[f"b{i}_fc1w"][...], d[f"b{i}_fc1b"][...]
    w2, bb2 = d[f"b{i}_fc2w"][...], d[f"b{i}_fc2b"][...]

    def ffn(x):
        h = _gelu(_bdot(_layernorm(x, g2, b2, LN_EPS), w1) + bb1)
        return x + _bdot(h, w2) + bb2

    return ffn(a_b), ffn(a_c)


# --------------------------- the single fused kernel --------------------------
def _mvit_kernel(*refs, names):
    out_ref = refs[-1]
    d = dict(zip(names, refs[:-1]))

    # PatchEmbed: Conv2d(k=16, s=16) == patch-unfold (host) + one MXU matmul; the
    # flatten(2).transpose(1, 2) is implicit in the channel-last token layout.
    x16 = d["xp"][0]                                            # (16, 768)
    emb = _bdot(x16, d["patch_w"][...]) + d["patch_b"][...]     # (16, 32)
    pos = d["pos"][...]                                         # (17, 32)
    body = emb + pos[1:, :]
    cls = d["cls"][...] + pos[0:1, :]

    for i in range(DEPTH):
        body, cls = _block(d, i, body, cls)

    # final LayerNorm + classifier head on the cls token (LayerNorm is per-token)
    cls_n = _layernorm(cls, d["norm_g"][...], d["norm_b"][...], LN_EPS)
    out_ref[0] = _fdot(cls_n, d["head_w"][...]) + d["head_b"][...]


# --------------------------------- the wrapper ---------------------------------
def mvit_forward(p, x):
    Bb = x.shape[0]
    dim = EMBED_DIM

    # patch-unfold of the raw NCHW image (host-side glue feeding the single launch)
    xp = x.reshape(Bb, IN_CHANS, HP, PATCH, WP, PATCH)
    xp = xp.transpose(0, 2, 4, 1, 3, 5).reshape(Bb, NUM_PATCHES, PATCH_DIM)

    names, inputs, in_specs = [], [], []

    def add(name, arr, spec=None):
        arr = jnp.asarray(arr, jnp.float32)
        if spec is None:
            nd = arr.ndim
            spec = pl.BlockSpec(arr.shape, lambda b, _nd=nd: (0,) * _nd)
        names.append(name)
        inputs.append(arr)
        in_specs.append(spec)

    add("xp", xp, pl.BlockSpec((1, NUM_PATCHES, PATCH_DIM), lambda b: (b, 0, 0)))
    add("patch_w", p["patch_w"])
    add("patch_b", p["patch_b"].reshape(1, dim))
    add("cls", p["cls_token"].reshape(1, dim))
    add("pos", p["pos_embed"].reshape(NUM_PATCHES + 1, dim))
    add("seg32", _seg_matrix(dim, HEAD_DIM))
    add("seg64", _seg_matrix(2 * dim, HEAD_DIM))
    add("norm_g", p["norm_g"].reshape(1, dim))
    add("norm_b", p["norm_b"].reshape(1, dim))
    add("head_w", p["head_w"])
    add("head_b", p["head_b"].reshape(1, NUM_CLASSES))

    H = W = HP
    for i, blk in enumerate(p["blocks"]):
        add(f"b{i}_n1g", blk["norm1_g"].reshape(1, dim))
        add(f"b{i}_n1b", blk["norm1_b"].reshape(1, dim))
        add(f"b{i}_qkvw", blk["qkv_w"])
        add(f"b{i}_qkvb", blk["qkv_b"].reshape(1, 3 * dim))
        if "pool_q_w" in blk:
            sh, sw = STRIDE_Q[i]
            sel_q, Hq, Wq = _conv_pool_sel(H, W, sh, sw)
            add(f"b{i}_pq_sel", sel_q)
            add(f"b{i}_pq_w", blk["pool_q_w"][9:18, :])    # middle-time taps (T=1)
            add(f"b{i}_pq_g", blk["pool_q_g"].reshape(1, dim))
            add(f"b{i}_pq_b", blk["pool_q_b"].reshape(1, dim))
            sel_m, neg_m, _, _ = _max_pool_sel(H, W, sh, sw)
            add(f"b{i}_skip_sel", sel_m)
            add(f"b{i}_skip_neg", neg_m)
        else:
            Hq, Wq = H, W
        sel_kv, _, _ = _conv_pool_sel(H, W, *STRIDE_KV[i])
        add(f"b{i}_pkv_sel", sel_kv)
        add(f"b{i}_pkv_w", blk["pool_kv_w"][9:18, :])
        add(f"b{i}_pkv_g", blk["pool_kv_g"].reshape(1, 2 * dim))
        add(f"b{i}_pkv_b", blk["pool_kv_b"].reshape(1, 2 * dim))
        add(f"b{i}_projw", blk["proj_w"])
        add(f"b{i}_projb", blk["proj_b"].reshape(1, dim))
        add(f"b{i}_n2g", blk["norm2_g"].reshape(1, dim))
        add(f"b{i}_n2b", blk["norm2_b"].reshape(1, dim))
        add(f"b{i}_fc1w", blk["fc1_w"])
        add(f"b{i}_fc1b", blk["fc1_b"].reshape(1, HIDDEN))
        add(f"b{i}_fc2w", blk["fc2_w"])
        add(f"b{i}_fc2b", blk["fc2_b"].reshape(1, dim))
        H, W = Hq, Wq

    out = pl.pallas_call(
        functools.partial(_mvit_kernel, names=tuple(names)),
        out_shape=jax.ShapeDtypeStruct((Bb, 1, NUM_CLASSES), jnp.float32),
        grid=(Bb,),
        in_specs=in_specs,
        out_specs=pl.BlockSpec((1, 1, NUM_CLASSES), lambda b: (b, 0, 0)),
        compiler_params=pltpu.CompilerParams(
            dimension_semantics=("parallel",)),     # engages the 2nd TC on v7x
    )(*inputs)
    return out.reshape(Bb, NUM_CLASSES)


# ------------------------------ parameter init --------------------------------
def init_params(key):
    dim, hd, nH = EMBED_DIM, HEAD_DIM, NUM_HEADS
    K = 27
    it = iter(list(jax.random.split(key, 64)))

    def nrm(shape):
        return jax.random.normal(next(it), shape, dtype=jnp.float32) * 0.02

    p = {
        "patch_w": nrm((PATCH_DIM, dim)),
        "patch_b": jnp.zeros((dim,), jnp.float32),
        "cls_token": nrm((1, 1, dim)),
        "pos_embed": nrm((1, NUM_PATCHES + 1, dim)),
        "norm_g": jnp.ones((dim,), jnp.float32),
        "norm_b": jnp.zeros((dim,), jnp.float32),
        "head_w": nrm((dim, NUM_CLASSES)),
        "head_b": jnp.zeros((NUM_CLASSES,), jnp.float32),
    }

    def tile_pool(w_base, g_base, b_base):
        # per-head depthwise conv / LN(head_dim) params tiled head-major on channels
        return (jnp.tile(w_base, (1, nH)), jnp.tile(g_base, nH), jnp.tile(b_base, nH))

    blocks = []
    for i in range(DEPTH):
        q_w, k_w, v_w = nrm((dim, dim)), nrm((dim, dim)), nrm((dim, dim))
        wk = nrm((K, hd)); gk = jnp.ones((hd,), jnp.float32); bk = jnp.zeros((hd,), jnp.float32)
        wv = nrm((K, hd)); gv = jnp.ones((hd,), jnp.float32); bv = jnp.zeros((hd,), jnp.float32)
        wkf, gkf, bkf = tile_pool(wk, gk, bk)
        wvf, gvf, bvf = tile_pool(wv, gv, bv)

        blk = {
            "norm1_g": jnp.ones((dim,), jnp.float32),
            "norm1_b": jnp.zeros((dim,), jnp.float32),
            "qkv_w": jnp.concatenate([q_w, k_w, v_w], axis=1),
            "qkv_b": jnp.zeros((3 * dim,), jnp.float32),
            "proj_w": nrm((dim, dim)),
            "proj_b": jnp.zeros((dim,), jnp.float32),
            "norm2_g": jnp.ones((dim,), jnp.float32),
            "norm2_b": jnp.zeros((dim,), jnp.float32),
            "fc1_w": nrm((dim, HIDDEN)), "fc1_b": jnp.zeros((HIDDEN,), jnp.float32),
            "fc2_w": nrm((HIDDEN, dim)), "fc2_b": jnp.zeros((dim,), jnp.float32),
            "pool_kv_w": jnp.concatenate([wkf, wvf], axis=1),
            "pool_kv_g": jnp.concatenate([gkf, gvf]),
            "pool_kv_b": jnp.concatenate([bkf, bvf]),
        }
        if STRIDE_Q[i] is not None:
            wq = nrm((K, hd)); gq = jnp.ones((hd,), jnp.float32); bq = jnp.zeros((hd,), jnp.float32)
            blk["pool_q_w"], blk["pool_q_g"], blk["pool_q_b"] = tile_pool(wq, gq, bq)
        blocks.append(blk)
    p["blocks"] = blocks
    return p


# ----------------------------------- main --------------------------------------
if __name__ == "__main__":
    key = jax.random.PRNGKey(0)
    pkey, xkey = jax.random.split(key)
    params = init_params(pkey)
    x = jax.random.normal(xkey, (B, IN_CHANS, CROP, CROP), dtype=jnp.float32)

    fwd = jax.jit(mvit_forward)
    out = fwd(params, x)
    jax.block_until_ready(out)
    assert out.shape == (B, NUM_CLASSES), out.shape
    assert bool(jnp.all(jnp.isfinite(out)))
    print("KERNEL_OK")
</pallas_src>

<mosaic_0001>
module attributes {stable_mosaic.version = 11 : i64} {
  func.func @_mvit_kernel(%arg0: i32, %arg1: memref<1x16x768xf32, #tpu.memory_space<vmem>>, %arg2: memref<768x32xf32, #tpu.memory_space<vmem>>, %arg3: memref<1x32xf32, #tpu.memory_space<vmem>>, %arg4: memref<1x32xf32, #tpu.memory_space<vmem>>, %arg5: memref<17x32xf32, #tpu.memory_space<vmem>>, %arg6: memref<32x32xf32, #tpu.memory_space<vmem>>, %arg7: memref<64x64xf32, #tpu.memory_space<vmem>>, %arg8: memref<1x32xf32, #tpu.memory_space<vmem>>, %arg9: memref<1x32xf32, #tpu.memory_space<vmem>>, %arg10: memref<32x10xf32, #tpu.memory_space<vmem>>, %arg11: memref<1x10xf32, #tpu.memory_space<vmem>>, %arg12: memref<1x32xf32, #tpu.memory_space<vmem>>, %arg13: memref<1x32xf32, #tpu.memory_space<vmem>>, %arg14: memref<32x96xf32, #tpu.memory_space<vmem>>, %arg15: memref<1x96xf32, #tpu.memory_space<vmem>>, %arg16: memref<36x16xf32, #tpu.memory_space<vmem>>, %arg17: memref<9x32xf32, #tpu.memory_space<vmem>>, %arg18: memref<1x32xf32, #tpu.memory_space<vmem>>, %arg19: memref<1x32xf32, #tpu.memory_space<vmem>>, %arg20: memref<36x16xf32, #tpu.memory_space<vmem>>, %arg21: memref<36x1xf32, #tpu.memory_space<vmem>>, %arg22: memref<144x16xf32, #tpu.memory_space<vmem>>, %arg23: memref<9x64xf32, #tpu.memory_space<vmem>>, %arg24: memref<1x64xf32, #tpu.memory_space<vmem>>, %arg25: memref<1x64xf32, #tpu.memory_space<vmem>>, %arg26: memref<32x32xf32, #tpu.memory_space<vmem>>, %arg27: memref<1x32xf32, #tpu.memory_space<vmem>>, %arg28: memref<1x32xf32, #tpu.memory_space<vmem>>, %arg29: memref<1x32xf32, #tpu.memory_space<vmem>>, %arg30: memref<32x128xf32, #tpu.memory_space<vmem>>, %arg31: memref<1x128xf32, #tpu.memory_space<vmem>>, %arg32: memref<128x32xf32, #tpu.memory_space<vmem>>, %arg33: memref<1x32xf32, #tpu.memory_space<vmem>>, %arg34: memref<1x32xf32, #tpu.memory_space<vmem>>, %arg35: memref<1x32xf32, #tpu.memory_space<vmem>>, %arg36: memref<32x96xf32, #tpu.memory_space<vmem>>, %arg37: memref<1x96xf32, #tpu.memory_space<vmem>>, %arg38: memref<36x4xf32, #tpu.memory_space<vmem>>, %arg39: memref<9x64xf32, #tpu.memory_space<vmem>>, %arg40: memref<1x64xf32, #tpu.memory_space<vmem>>, %arg41: memref<1x64xf32, #tpu.memory_space<vmem>>, %arg42: memref<32x32xf32, #tpu.memory_space<vmem>>, %arg43: memref<1x32xf32, #tpu.memory_space<vmem>>, %arg44: memref<1x32xf32, #tpu.memory_space<vmem>>, %arg45: memref<1x32xf32, #tpu.memory_space<vmem>>, %arg46: memref<32x128xf32, #tpu.memory_space<vmem>>, %arg47: memref<1x128xf32, #tpu.memory_space<vmem>>, %arg48: memref<128x32xf32, #tpu.memory_space<vmem>>, %arg49: memref<1x32xf32, #tpu.memory_space<vmem>>, %arg50: memref<1x1x10xf32, #tpu.memory_space<vmem>>) attributes {dimension_semantics = [#tpu.dimension_semantics<parallel>], iteration_bounds = array<i64: 2>, scalar_prefetch = 0 : i64, scratch_operands = 0 : i64, tpu.core_type = #tpu.core_type<tc>, window_params = [{transform_indices = @transform_0, window_bounds = array<i64: 1, 16, 768>}, {pipeline_mode = #tpu.pipeline_mode<synchronous>, transform_indices = @transform_1, window_bounds = array<i64: 768, 32>}, {pipeline_mode = #tpu.pipeline_mode<synchronous>, transform_indices = @transform_2, window_bounds = array<i64: 1, 32>}, {pipeline_mode = #tpu.pipeline_mode<synchronous>, transform_indices = @transform_3, window_bounds = array<i64: 1, 32>}, {pipeline_mode = #tpu.pipeline_mode<synchronous>, transform_indices = @transform_4, window_bounds = array<i64: 17, 32>}, {pipeline_mode = #tpu.pipeline_mode<synchronous>, transform_indices = @transform_5, window_bounds = array<i64: 32, 32>}, {pipeline_mode = #tpu.pipeline_mode<synchronous>, transform_indices = @transform_6, window_bounds = array<i64: 64, 64>}, {pipeline_mode = #tpu.pipeline_mode<synchronous>, transform_indices = @transform_7, window_bounds = array<i64: 1, 32>}, {pipeline_mode = #tpu.pipeline_mode<synchronous>, transform_indices = @transform_8, window_bounds = array<i64: 1, 32>}, {pipeline_mode = #tpu.pipeline_mode<synchronous>, transform_indices = @transform_9, window_bounds = array<i64: 32, 10>}, {pipeline_mode = #tpu.pipeline_mode<synchronous>, transform_indices = @transform_10, window_bounds = array<i64: 1, 10>}, {pipeline_mode = #tpu.pipeline_mode<synchronous>, transform_indices = @transform_11, window_bounds = array<i64: 1, 32>}, {pipeline_mode = #tpu.pipeline_mode<synchronous>, transform_indices = @transform_12, window_bounds = array<i64: 1, 32>}, {pipeline_mode = #tpu.pipeline_mode<synchronous>, transform_indices = @transform_13, window_bounds = array<i64: 32, 96>}, {pipeline_mode = #tpu.pipeline_mode<synchronous>, transform_indices = @transform_14, window_bounds = array<i64: 1, 96>}, {pipeline_mode = #tpu.pipeline_mode<synchronous>, transform_indices = @transform_15, window_bounds = array<i64: 36, 16>}, {pipeline_mode = #tpu.pipeline_mode<synchronous>, transform_indices = @transform_16, window_bounds = array<i64: 9, 32>}, {pipeline_mode = #tpu.pipeline_mode<synchronous>, transform_indices = @transform_17, window_bounds = array<i64: 1, 32>}, {pipeline_mode = #tpu.pipeline_mode<synchronous>, transform_indices = @transform_18, window_bounds = array<i64: 1, 32>}, {pipeline_mode = #tpu.pipeline_mode<synchronous>, transform_indices = @transform_19, window_bounds = array<i64: 36, 16>}, {pipeline_mode = #tpu.pipeline_mode<synchronous>, transform_indices = @transform_20, window_bounds = array<i64: 36, 1>}, {pipeline_mode = #tpu.pipeline_mode<synchronous>, transform_indices = @transform_21, window_bounds = array<i64: 144, 16>}, {pipeline_mode = #tpu.pipeline_mode<synchronous>, transform_indices = @transform_22, window_bounds = array<i64: 9, 64>}, {pipeline_mode = #tpu.pipeline_mode<synchronous>, transform_indices = @transform_23, window_bounds = array<i64: 1, 64>}, {pipeline_mode = #tpu.pipeline_mode<synchronous>, transform_indices = @transform_24, window_bounds = array<i64: 1, 64>}, {pipeline_mode = #tpu.pipeline_mode<synchronous>, transform_indices = @transform_25, window_bounds = array<i64: 32, 32>}, {pipeline_mode = #tpu.pipeline_mode<synchronous>, transform_indices = @transform_26, window_bounds = array<i64: 1, 32>}, {pipeline_mode = #tpu.pipeline_mode<synchronous>, transform_indices = @transform_27, window_bounds = array<i64: 1, 32>}, {pipeline_mode = #tpu.pipeline_mode<synchronous>, transform_indices = @transform_28, window_bounds = array<i64: 1, 32>}, {pipeline_mode = #tpu.pipeline_mode<synchronous>, transform_indices = @transform_29, window_bounds = array<i64: 32, 128>}, {pipeline_mode = #tpu.pipeline_mode<synchronous>, transform_indices = @transform_30, window_bounds = array<i64: 1, 128>}, {pipeline_mode = #tpu.pipeline_mode<synchronous>, transform_indices = @transform_31, window_bounds = array<i64: 128, 32>}, {pipeline_mode = #tpu.pipeline_mode<synchronous>, transform_indices = @transform_32, window_bounds = array<i64: 1, 32>}, {pipeline_mode = #tpu.pipeline_mode<synchronous>, transform_indices = @transform_33, window_bounds = array<i64: 1, 32>}, {pipeline_mode = #tpu.pipeline_mode<synchronous>, transform_indices = @transform_34, window_bounds = array<i64: 1, 32>}, {pipeline_mode = #tpu.pipeline_mode<synchronous>, transform_indices = @transform_35, window_bounds = array<i64: 32, 96>}, {pipeline_mode = #tpu.pipeline_mode<synchronous>, transform_indices = @transform_36, window_bounds = array<i64: 1, 96>}, {pipeline_mode = #tpu.pipeline_mode<synchronous>, transform_indices = @transform_37, window_bounds = array<i64: 36, 4>}, {pipeline_mode = #tpu.pipeline_mode<synchronous>, transform_indices = @transform_38, window_bounds = array<i64: 9, 64>}, {pipeline_mode = #tpu.pipeline_mode<synchronous>, transform_indices = @transform_39, window_bounds = array<i64: 1, 64>}, {pipeline_mode = #tpu.pipeline_mode<synchronous>, transform_indices = @transform_40, window_bounds = array<i64: 1, 64>}, {pipeline_mode = #tpu.pipeline_mode<synchronous>, transform_indices = @transform_41, window_bounds = array<i64: 32, 32>}, {pipeline_mode = #tpu.pipeline_mode<synchronous>, transform_indices = @transform_42, window_bounds = array<i64: 1, 32>}, {pipeline_mode = #tpu.pipeline_mode<synchronous>, transform_indices = @transform_43, window_bounds = array<i64: 1, 32>}, {pipeline_mode = #tpu.pipeline_mode<synchronous>, transform_indices = @transform_44, window_bounds = array<i64: 1, 32>}, {pipeline_mode = #tpu.pipeline_mode<synchronous>, transform_indices = @transform_45, window_bounds = array<i64: 32, 128>}, {pipeline_mode = #tpu.pipeline_mode<synchronous>, transform_indices = @transform_46, window_bounds = array<i64: 1, 128>}, {pipeline_mode = #tpu.pipeline_mode<synchronous>, transform_indices = @transform_47, window_bounds = array<i64: 128, 32>}, {pipeline_mode = #tpu.pipeline_mode<synchronous>, transform_indices = @transform_48, window_bounds = array<i64: 1, 32>}, {transform_indices = @transform_49, window_bounds = array<i64: 1, 1, 10>}]} {
    %c0 = arith.constant 0 : index
    %c0_0 = arith.constant 0 : index
    %c0_1 = arith.constant 0 : index
    %0 = vector.load %arg1[%c0, %c0_0, %c0_1] : memref<1x16x768xf32, #tpu.memory_space<vmem>>, vector<1x16x768xf32>
    %1 = vector.shape_cast %0 : vector<1x16x768xf32> to vector<16x768xf32>
    %c0_2 = arith.constant 0 : index
    %c0_3 = arith.constant 0 : index
    %2 = vector.load %arg2[%c0_2, %c0_3] : memref<768x32xf32, #tpu.memory_space<vmem>>, vector<768x32xf32>
    %3 = arith.truncf %1 : vector<16x768xf32> to vector<16x768xbf16>
    %4 = arith.truncf %2 : vector<768x32xf32> to vector<768x32xbf16>
    %cst = arith.constant dense<0.000000e+00> : vector<16x32xf32>
    %5 = tpu.matmul %3, %4, %cst {dimension_numbers = #tpu.dot_dimension_numbers<[1], [0], [0], [1], [0, 0, 1, 1], [], []>} : vector<16x768xbf16>, vector<768x32xbf16>, vector<16x32xf32> -> vector<16x32xf32>
    %c0_4 = arith.constant 0 : index
    %c0_5 = arith.constant 0 : index
    %6 = vector.load %arg3[%c0_4, %c0_5] : memref<1x32xf32, #tpu.memory_space<vmem>>, vector<1x32xf32>
    %7 = vector.broadcast %6 : vector<1x32xf32> to vector<16x32xf32>
    %8 = arith.addf %5, %7 : vector<16x32xf32>
    %c0_6 = arith.constant 0 : index
    %c0_7 = arith.constant 0 : index
    %9 = vector.load %arg5[%c0_6, %c0_7] : memref<17x32xf32, #tpu.memory_space<vmem>>, vector<17x32xf32>
    %10 = vector.extract_strided_slice %9 {offsets = [1, 0], sizes = [16, 32], strides = [1, 1]} : vector<17x32xf32> to vector<16x32xf32>
    %11 = arith.addf %8, %10 : vector<16x32xf32>
    %c0_8 = arith.constant 0 : index
    %c0_9 = arith.constant 0 : index
    %12 = vector.load %arg4[%c0_8, %c0_9] : memref<1x32xf32, #tpu.memory_space<vmem>>, vector<1x32xf32>
    %13 = vector.extract_strided_slice %9 {offsets = [0, 0], sizes = [1, 32], strides = [1, 1]} : vector<17x32xf32> to vector<1x32xf32>
    %14 = arith.addf %12, %13 : vector<1x32xf32>
    %c0_10 = arith.constant 0 : index
    %c0_11 = arith.constant 0 : index
    %15 = vector.load %arg12[%c0_10, %c0_11] : memref<1x32xf32, #tpu.memory_space<vmem>>, vector<1x32xf32>
    %c0_12 = arith.constant 0 : index
    %c0_13 = arith.constant 0 : index
    %16 = vector.load %arg13[%c0_12, %c0_13] : memref<1x32xf32, #tpu.memory_space<vmem>>, vector<1x32xf32>
    %c0_14 = arith.constant 0 : index
    %c0_15 = arith.constant 0 : index
    %17 = vector.load %arg14[%c0_14, %c0_15] : memref<32x96xf32, #tpu.memory_space<vmem>>, vector<32x96xf32>
    %c0_16 = arith.constant 0 : index
    %c0_17 = arith.constant 0 : index
    %18 = vector.load %arg15[%c0_16, %c0_17] : memref<1x96xf32, #tpu.memory_space<vmem>>, vector<1x96xf32>
    %cst_18 = arith.constant dense<0.000000e+00> : vector<16xf32>
    %19 = vector.multi_reduction <add>, %11, %cst_18 [1] : vector<16x32xf32> to vector<16xf32>
    %20 = vector.shape_cast %19 : vector<16xf32> to vector<16x1xf32>
    %cst_19 = arith.constant 3.200000e+01 : f32
    %21 = vector.broadcast %cst_19 : f32 to vector<16x1xf32>
    %22 = arith.divf %20, %21 : vector<16x1xf32>
    %23 = vector.broadcast %22 : vector<16x1xf32> to vector<16x32xf32>
    %24 = arith.subf %11, %23 : vector<16x32xf32>
    %25 = arith.mulf %24, %24 : vector<16x32xf32>
    %cst_20 = arith.constant dense<0.000000e+00> : vector<16xf32>
    %26 = vector.multi_reduction <add>, %25, %cst_20 [1] : vector<16x32xf32> to vector<16xf32>
    %27 = vector.shape_cast %26 : vector<16xf32> to vector<16x1xf32>
    %cst_21 = arith.constant 3.200000e+01 : f32
    %28 = vector.broadcast %cst_21 : f32 to vector<16x1xf32>
    %29 = arith.divf %27, %28 : vector<16x1xf32>
    %cst_22 = arith.constant 9.99999997E-7 : f32
    %30 = vector.broadcast %cst_22 : f32 to vector<16x1xf32>
    %31 = arith.addf %29, %30 : vector<16x1xf32>
    %32 = math.rsqrt %31 : vector<16x1xf32>
    %33 = vector.broadcast %32 : vector<16x1xf32> to vector<16x32xf32>
    %34 = arith.mulf %24, %33 : vector<16x32xf32>
    %35 = vector.broadcast %15 : vector<1x32xf32> to vector<16x32xf32>
    %36 = arith.mulf %34, %35 : vector<16x32xf32>
    %37 = vector.broadcast %16 : vector<1x32xf32> to vector<16x32xf32>
    %38 = arith.addf %36, %37 : vector<16x32xf32>
    %39 = arith.truncf %38 : vector<16x32xf32> to vector<16x32xbf16>
    %40 = arith.truncf %17 : vector<32x96xf32> to vector<32x96xbf16>
    %cst_23 = arith.constant dense<0.000000e+00> : vector<16x96xf32>
    %41 = tpu.matmul %39, %40, %cst_23 {dimension_numbers = #tpu.dot_dimension_numbers<[1], [0], [0], [1], [0, 0, 1, 1], [], []>} : vector<16x32xbf16>, vector<32x96xbf16>, vector<16x96xf32> -> vector<16x96xf32>
    %42 = vector.broadcast %18 : vector<1x96xf32> to vector<16x96xf32>
    %43 = arith.addf %41, %42 : vector<16x96xf32>
    %cst_24 = arith.constant dense<0.000000e+00> : vector<1xf32>
    %44 = vector.multi_reduction <add>, %14, %cst_24 [1] : vector<1x32xf32> to vector<1xf32>
    %45 = vector.shape_cast %44 : vector<1xf32> to vector<1x1xf32>
    %cst_25 = arith.constant 3.200000e+01 : f32
    %46 = vector.broadcast %cst_25 : f32 to vector<1x1xf32>
    %47 = arith.divf %45, %46 : vector<1x1xf32>
    %48 = vector.broadcast %47 : vector<1x1xf32> to vector<1x32xf32>
    %49 = arith.subf %14, %48 : vector<1x32xf32>
    %50 = arith.mulf %49, %49 : vector<1x32xf32>
    %cst_26 = arith.constant dense<0.000000e+00> : vector<1xf32>
    %51 = vector.multi_reduction <add>, %50, %cst_26 [1] : vector<1x32xf32> to vector<1xf32>
    %52 = vector.shape_cast %51 : vector<1xf32> to vector<1x1xf32>
    %cst_27 = arith.constant 3.200000e+01 : f32
    %53 = vector.broadcast %cst_27 : f32 to vector<1x1xf32>
    %54 = arith.divf %52, %53 : vector<1x1xf32>
    %cst_28 = arith.constant 9.99999997E-7 : f32
    %55 = vector.broadcast %cst_28 : f32 to vector<1x1xf32>
    %56 = arith.addf %54, %55 : vector<1x1xf32>
    %57 = math.rsqrt %56 : vector<1x1xf32>
    %58 = vector.broadcast %57 : vector<1x1xf32> to vector<1x32xf32>
    %59 = arith.mulf %49, %58 : vector<1x32xf32>
    %60 = arith.mulf %59, %15 : vector<1x32xf32>
    %61 = arith.addf %60, %16 : vector<1x32xf32>
    %62 = arith.truncf %61 : vector<1x32xf32> to vector<1x32xbf16>
    %63 = arith.truncf %17 : vector<32x96xf32> to vector<32x96xbf16>
    %cst_29 = arith.constant dense<0.000000e+00> : vector<1x96xf32>
    %64 = tpu.matmul %62, %63, %cst_29 {dimension_numbers = #tpu.dot_dimension_numbers<[1], [0], [0], [1], [0, 0, 1, 1], [], []>} : vector<1x32xbf16>, vector<32x96xbf16>, vector<1x96xf32> -> vector<1x96xf32>
    %65 = arith.addf %64, %18 : vector<1x96xf32>
    %66 = vector.extract_strided_slice %43 {offsets = [0, 0], sizes = [16, 32], strides = [1, 1]} : vector<16x96xf32> to vector<16x32xf32>
    %67 = vector.extract_strided_slice %43 {offsets = [0, 32], sizes = [16, 64], strides = [1, 1]} : vector<16x96xf32> to vector<16x64xf32>
    %68 = vector.extract_strided_slice %65 {offsets = [0, 0], sizes = [1, 32], strides = [1, 1]} : vector<1x96xf32> to vector<1x32xf32>
    %69 = vector.extract_strided_slice %65 {offsets = [0, 32], sizes = [1, 64], strides = [1, 1]} : vector<1x96xf32> to vector<1x64xf32>
    %c0_30 = arith.constant 0 : index
    %c0_31 = arith.constant 0 : index
    %70 = vector.load %arg6[%c0_30, %c0_31] : memref<32x32xf32, #tpu.memory_space<vmem>>, vector<32x32xf32>
    %c0_32 = arith.constant 0 : index
    %c0_33 = arith.constant 0 : index
    %71 = vector.load %arg7[%c0_32, %c0_33] : memref<64x64xf32, #tpu.memory_space<vmem>>, vector<64x64xf32>
    %c0_34 = arith.constant 0 : index
    %c0_35 = arith.constant 0 : index
    %72 = vector.load %arg18[%c0_34, %c0_35] : memref<1x32xf32, #tpu.memory_space<vmem>>, vector<1x32xf32>
    %c0_36 = arith.constant 0 : index
    %c0_37 = arith.constant 0 : index
    %73 = vector.load %arg19[%c0_36, %c0_37] : memref<1x32xf32, #tpu.memory_space<vmem>>, vector<1x32xf32>
    %c0_38 = arith.constant 0 : index
    %c0_39 = arith.constant 0 : index
    %74 = vector.load %arg16[%c0_38, %c0_39] : memref<36x16xf32, #tpu.memory_space<vmem>>, vector<36x16xf32>
    %c0_40 = arith.constant 0 : index
    %c0_41 = arith.constant 0 : index
    %75 = vector.load %arg17[%c0_40, %c0_41] : memref<9x32xf32, #tpu.memory_space<vmem>>, vector<9x32xf32>
    %cst_42 = arith.constant dense<0.000000e+00> : vector<36x32xf32>
    %76 = tpu.matmul %74, %66, %cst_42 {dimension_numbers = #tpu.dot_dimension_numbers<[1], [0], [0], [1], [0, 0, 1, 1], [], []>} : vector<36x16xf32>, vector<16x32xf32>, vector<36x32xf32> -> vector<36x32xf32>
    %77 = vector.extract_strided_slice %76 {offsets = [0, 0], sizes = [4, 32], strides = [1, 1]} : vector<36x32xf32> to vector<4x32xf32>
    %78 = vector.extract_strided_slice %75 {offsets = [0, 0], sizes = [1, 32], strides = [1, 1]} : vector<9x32xf32> to vector<1x32xf32>
    %79 = vector.broadcast %78 : vector<1x32xf32> to vector<4x32xf32>
    %80 = arith.mulf %77, %79 : vector<4x32xf32>
    %81 = vector.extract_strided_slice %76 {offsets = [4, 0], sizes = [4, 32], strides = [1, 1]} : vector<36x32xf32> to vector<4x32xf32>
    %82 = vector.extract_strided_slice %75 {offsets = [1, 0], sizes = [1, 32], strides = [1, 1]} : vector<9x32xf32> to vector<1x32xf32>
    %83 = vector.broadcast %82 : vector<1x32xf32> to vector<4x32xf32>
    %84 = arith.mulf %81, %83 : vector<4x32xf32>
    %85 = arith.addf %80, %84 : vector<4x32xf32>
    %86 = vector.extract_strided_slice %76 {offsets = [8, 0], sizes = [4, 32], strides = [1, 1]} : vector<36x32xf32> to vector<4x32xf32>
    %87 = vector.extract_strided_slice %75 {offsets = [2, 0], sizes = [1, 32], strides = [1, 1]} : vector<9x32xf32> to vector<1x32xf32>
    %88 = vector.broadcast %87 : vector<1x32xf32> to vector<4x32xf32>
    %89 = arith.mulf %86, %88 : vector<4x32xf32>
    %90 = arith.addf %85, %89 : vector<4x32xf32>
    %91 = vector.extract_strided_slice %76 {offsets = [12, 0], sizes = [4, 32], strides = [1, 1]} : vector<36x32xf32> to vector<4x32xf32>
    %92 = vector.extract_strided_slice %75 {offsets = [3, 0], sizes = [1, 32], strides = [1, 1]} : vector<9x32xf32> to vector<1x32xf32>
    %93 = vector.broadcast %92 : vector<1x32xf32> to vector<4x32xf32>
    %94 = arith.mulf %91, %93 : vector<4x32xf32>
    %95 = arith.addf %90, %94 : vector<4x32xf32>
    %96 = vector.extract_strided_slice %76 {offsets = [16, 0], sizes = [4, 32], strides = [1, 1]} : vector<36x32xf32> to vector<4x32xf32>
    %97 = vector.extract_strided_slice %75 {offsets = [4, 0], sizes = [1, 32], strides = [1, 1]} : vector<9x32xf32> to vector<1x32xf32>
    %98 = vector.broadcast %97 : vector<1x32xf32> to vector<4x32xf32>
    %99 = arith.mulf %96, %98 : vector<4x32xf32>
    %100 = arith.addf %95, %99 : vector<4x32xf32>
    %101 = vector.extract_strided_slice %76 {offsets = [20, 0], sizes = [4, 32], strides = [1, 1]} : vector<36x32xf32> to vector<4x32xf32>
    %102 = vector.extract_strided_slice %75 {offsets = [5, 0], sizes = [1, 32], strides = [1, 1]} : vector<9x32xf32> to vector<1x32xf32>
    %103 = vector.broadcast %102 : vector<1x32xf32> to vector<4x32xf32>
    %104 = arith.mulf %101, %103 : vector<4x32xf32>
    %105 = arith.addf %100, %104 : vector<4x32xf32>
    %106 = vector.extract_strided_slice %76 {offsets = [24, 0], sizes = [4, 32], strides = [1, 1]} : vector<36x32xf32> to vector<4x32xf32>
    %107 = vector.extract_strided_slice %75 {offsets = [6, 0], sizes = [1, 32], strides = [1, 1]} : vector<9x32xf32> to vector<1x32xf32>
    %108 = vector.broadcast %107 : vector<1x32xf32> to vector<4x32xf32>
    %109 = arith.mulf %106, %108 : vector<4x32xf32>
    %110 = arith.addf %105, %109 : vector<4x32xf32>
    %111 = vector.extract_strided_slice %76 {offsets = [28, 0], sizes = [4, 32], strides = [1, 1]} : vector<36x32xf32> to vector<4x32xf32>
    %112 = vector.extract_strided_slice %75 {offsets = [7, 0], sizes = [1, 32], strides = [1, 1]} : vector<9x32xf32> to vector<1x32xf32>
    %113 = vector.broadcast %112 : vector<1x32xf32> to vector<4x32xf32>
    %114 = arith.mulf %111, %113 : vector<4x32xf32>
    %115 = arith.addf %110, %114 : vector<4x32xf32>
    %116 = vector.extract_strided_slice %76 {offsets = [32, 0], sizes = [4, 32], strides = [1, 1]} : vector<36x32xf32> to vector<4x32xf32>
    %117 = vector.extract_strided_slice %75 {offsets = [8, 0], sizes = [1, 32], strides = [1, 1]} : vector<9x32xf32> to vector<1x32xf32>
    %118 = vector.broadcast %117 : vector<1x32xf32> to vector<4x32xf32>
    %119 = arith.mulf %116, %118 : vector<4x32xf32>
    %120 = arith.addf %115, %119 : vector<4x32xf32>
    %cst_43 = arith.constant dense<0.000000e+00> : vector<4x32xf32>
    %121 = tpu.matmul %120, %70, %cst_43 {dimension_numbers = #tpu.dot_dimension_numbers<[1], [0], [0], [1], [0, 0, 1, 1], [], []>} : vector<4x32xf32>, vector<32x32xf32>, vector<4x32xf32> -> vector<4x32xf32>
    %122 = arith.subf %120, %121 : vector<4x32xf32>
    %123 = arith.mulf %122, %122 : vector<4x32xf32>
    %cst_44 = arith.constant dense<0.000000e+00> : vector<4x32xf32>
    %124 = tpu.matmul %123, %70, %cst_44 {dimension_numbers = #tpu.dot_dimension_numbers<[1], [0], [0], [1], [0, 0, 1, 1], [], []>} : vector<4x32xf32>, vector<32x32xf32>, vector<4x32xf32> -> vector<4x32xf32>
    %cst_45 = arith.constant 9.99999974E-6 : f32
    %125 = vector.broadcast %cst_45 : f32 to vector<4x32xf32>
    %126 = arith.addf %124, %125 : vector<4x32xf32>
    %127 = math.rsqrt %126 : vector<4x32xf32>
    %128 = arith.mulf %122, %127 : vector<4x32xf32>
    %129 = vector.broadcast %72 : vector<1x32xf32> to vector<4x32xf32>
    %130 = arith.mulf %128, %129 : vector<4x32xf32>
    %131 = vector.broadcast %73 : vector<1x32xf32> to vector<4x32xf32>
    %132 = arith.addf %130, %131 : vector<4x32xf32>
    %cst_46 = arith.constant dense<0.000000e+00> : vector<1x32xf32>
    %133 = tpu.matmul %68, %70, %cst_46 {dimension_numbers = #tpu.dot_dimension_numbers<[1], [0], [0], [1], [0, 0, 1, 1], [], []>} : vector<1x32xf32>, vector<32x32xf32>, vector<1x32xf32> -> vector<1x32xf32>
    %134 = arith.subf %68, %133 : vector<1x32xf32>
    %135 = arith.mulf %134, %134 : vector<1x32xf32>
    %cst_47 = arith.constant dense<0.000000e+00> : vector<1x32xf32>
    %136 = tpu.matmul %135, %70, %cst_47 {dimension_numbers = #tpu.dot_dimension_numbers<[1], [0], [0], [1], [0, 0, 1, 1], [], []>} : vector<1x32xf32>, vector<32x32xf32>, vector<1x32xf32> -> vector<1x32xf32>
    %cst_48 = arith.constant 9.99999974E-6 : f32
    %137 = vector.broadcast %cst_48 : f32 to vector<1x32xf32>
    %138 = arith.addf %136, %137 : vector<1x32xf32>
    %139 = math.rsqrt %138 : vector<1x32xf32>
    %140 = arith.mulf %134, %139 : vector<1x32xf32>
    %141 = arith.mulf %140, %72 : vector<1x32xf32>
    %142 = arith.addf %141, %73 : vector<1x32xf32>
    %c0_49 = arith.constant 0 : index
    %c0_50 = arith.constant 0 : index
    %143 = vector.load %arg24[%c0_49, %c0_50] : memref<1x64xf32, #tpu.memory_space<vmem>>, vector<1x64xf32>
    %c0_51 = arith.constant 0 : index
    %c0_52 = arith.constant 0 : index
    %144 = vector.load %arg25[%c0_51, %c0_52] : memref<1x64xf32, #tpu.memory_space<vmem>>, vector<1x64xf32>
    %c0_53 = arith.constant 0 : index
    %c0_54 = arith.constant 0 : index
    %145 = vector.load %arg22[%c0_53, %c0_54] : memref<144x16xf32, #tpu.memory_space<vmem>>, vector<144x16xf32>
    %c0_55 = arith.constant 0 : index
    %c0_56 = arith.constant 0 : index
    %146 = vector.load %arg23[%c0_55, %c0_56] : memref<9x64xf32, #tpu.memory_space<vmem>>, vector<9x64xf32>
    %cst_57 = arith.constant dense<0.000000e+00> : vector<144x64xf32>
    %147 = tpu.matmul %145, %67, %cst_57 {dimension_numbers = #tpu.dot_dimension_numbers<[1], [0], [0], [1], [0, 0, 1, 1], [], []>} : vector<144x16xf32>, vector<16x64xf32>, vector<144x64xf32> -> vector<144x64xf32>
    %148 = vector.extract_strided_slice %147 {offsets = [0, 0], sizes = [16, 64], strides = [1, 1]} : vector<144x64xf32> to vector<16x64xf32>
    %149 = vector.extract_strided_slice %146 {offsets = [0, 0], sizes = [1, 64], strides = [1, 1]} : vector<9x64xf32> to vector<1x64xf32>
    %150 = vector.broadcast %149 : vector<1x64xf32> to vector<16x64xf32>
    %151 = arith.mulf %148, %150 : vector<16x64xf32>
    %152 = vector.extract_strided_slice %147 {offsets = [16, 0], sizes = [16, 64], strides = [1, 1]} : vector<144x64xf32> to vector<16x64xf32>
    %153 = vector.extract_strided_slice %146 {offsets = [1, 0], sizes = [1, 64], strides = [1, 1]} : vector<9x64xf32> to vector<1x64xf32>
    %154 = vector.broadcast %153 : vector<1x64xf32> to vector<16x64xf32>
    %155 = arith.mulf %152, %154 : vector<16x64xf32>
    %156 = arith.addf %151, %155 : vector<16x64xf32>
    %157 = vector.extract_strided_slice %147 {offsets = [32, 0], sizes = [16, 64], strides = [1, 1]} : vector<144x64xf32> to vector<16x64xf32>
    %158 = vector.extract_strided_slice %146 {offsets = [2, 0], sizes = [1, 64], strides = [1, 1]} : vector<9x64xf32> to vector<1x64xf32>
    %159 = vector.broadcast %158 : vector<1x64xf32> to vector<16x64xf32>
    %160 = arith.mulf %157, %159 : vector<16x64xf32>
    %161 = arith.addf %156, %160 : vector<16x64xf32>
    %162 = vector.extract_strided_slice %147 {offsets = [48, 0], sizes = [16, 64], strides = [1, 1]} : vector<144x64xf32> to vector<16x64xf32>
    %163 = vector.extract_strided_slice %146 {offsets = [3, 0], sizes = [1, 64], strides = [1, 1]} : vector<9x64xf32> to vector<1x64xf32>
    %164 = vector.broadcast %163 : vector<1x64xf32> to vector<16x64xf32>
    %165 = arith.mulf %162, %164 : vector<16x64xf32>
    %166 = arith.addf %161, %165 : vector<16x64xf32>
    %167 = vector.extract_strided_slice %147 {offsets = [64, 0], sizes = [16, 64], strides = [1, 1]} : vector<144x64xf32> to vector<16x64xf32>
    %168 = vector.extract_strided_slice %146 {offsets = [4, 0], sizes = [1, 64], strides = [1, 1]} : vector<9x64xf32> to vector<1x64xf32>
    %169 = vector.broadcast %168 : vector<1x64xf32> to vector<16x64xf32>
    %170 = arith.mulf %167, %169 : vector<16x64xf32>
    %171 = arith.addf %166, %170 : vector<16x64xf32>
    %172 = vector.extract_strided_slice %147 {offsets = [80, 0], sizes = [16, 64], strides = [1, 1]} : vector<144x64xf32> to vector<16x64xf32>
    %173 = vector.extract_strided_slice %146 {offsets = [5, 0], sizes = [1, 64], strides = [1, 1]} : vector<9x64xf32> to vector<1x64xf32>
    %174 = vector.broadcast %173 : vector<1x64xf32> to vector<16x64xf32>
    %175 = arith.mulf %172, %174 : vector<16x64xf32>
    %176 = arith.addf %171, %175 : vector<16x64xf32>
    %177 = vector.extract_strided_slice %147 {offsets = [96, 0], sizes = [16, 64], strides = [1, 1]} : vector<144x64xf32> to vector<16x64xf32>
    %178 = vector.extract_strided_slice %146 {offsets = [6, 0], sizes = [1, 64], strides = [1, 1]} : vector<9x64xf32> to vector<1x64xf32>
    %179 = vector.broadcast %178 : vector<1x64xf32> to vector<16x64xf32>
    %180 = arith.mulf %177, %179 : vector<16x64xf32>
    %181 = arith.addf %176, %180 : vector<16x64xf32>
    %182 = vector.extract_strided_slice %147 {offsets = [112, 0], sizes = [16, 64], strides = [1, 1]} : vector<144x64xf32> to vector<16x64xf32>
    %183 = vector.extract_strided_slice %146 {offsets = [7, 0], sizes = [1, 64], strides = [1, 1]} : vector<9x64xf32> to vector<1x64xf32>
    %184 = vector.broadcast %183 : vector<1x64xf32> to vector<16x64xf32>
    %185 = arith.mulf %182, %184 : vector<16x64xf32>
    %186 = arith.addf %181, %185 : vector<16x64xf32>
    %187 = vector.extract_strided_slice %147 {offsets = [128, 0], sizes = [16, 64], strides = [1, 1]} : vector<144x64xf32> to vector<16x64xf32>
    %188 = vector.extract_strided_slice %146 {offsets = [8, 0], sizes = [1, 64], strides = [1, 1]} : vector<9x64xf32> to vector<1x64xf32>
    %189 = vector.broadcast %188 : vector<1x64xf32> to vector<16x64xf32>
    %190 = arith.mulf %187, %189 : vector<16x64xf32>
    %191 = arith.addf %186, %190 : vector<16x64xf32>
    %cst_58 = arith.constant dense<0.000000e+00> : vector<16x64xf32>
    %192 = tpu.matmul %191, %71, %cst_58 {dimension_numbers = #tpu.dot_dimension_numbers<[1], [0], [0], [1], [0, 0, 1, 1], [], []>} : vector<16x64xf32>, vector<64x64xf32>, vector<16x64xf32> -> vector<16x64xf32>
    %193 = arith.subf %191, %192 : vector<16x64xf32>
    %194 = arith.mulf %193, %193 : vector<16x64xf32>
    %cst_59 = arith.constant dense<0.000000e+00> : vector<16x64xf32>
    %195 = tpu.matmul %194, %71, %cst_59 {dimension_numbers = #tpu.dot_dimension_numbers<[1], [0], [0], [1], [0, 0, 1, 1], [], []>} : vector<16x64xf32>, vector<64x64xf32>, vector<16x64xf32> -> vector<16x64xf32>
    %cst_60 = arith.constant 9.99999974E-6 : f32
    %196 = vector.broadcast %cst_60 : f32 to vector<16x64xf32>
    %197 = arith.addf %195, %196 : vector<16x64xf32>
    %198 = math.rsqrt %197 : vector<16x64xf32>
    %199 = arith.mulf %193, %198 : vector<16x64xf32>
    %200 = vector.broadcast %143 : vector<1x64xf32> to vector<16x64xf32>
    %201 = arith.mulf %199, %200 : vector<16x64xf32>
    %202 = vector.broadcast %144 : vector<1x64xf32> to vector<16x64xf32>
    %203 = arith.addf %201, %202 : vector<16x64xf32>
    %cst_61 = arith.constant dense<0.000000e+00> : vector<1x64xf32>
    %204 = tpu.matmul %69, %71, %cst_61 {dimension_numbers = #tpu.dot_dimension_numbers<[1], [0], [0], [1], [0, 0, 1, 1], [], []>} : vector<1x64xf32>, vector<64x64xf32>, vector<1x64xf32> -> vector<1x64xf32>
    %205 = arith.subf %69, %204 : vector<1x64xf32>
    %206 = arith.mulf %205, %205 : vector<1x64xf32>
    %cst_62 = arith.constant dense<0.000000e+00> : vector<1x64xf32>
    %207 = tpu.matmul %206, %71, %cst_62 {dimension_numbers = #tpu.dot_dimension_numbers<[1], [0], [0], [1], [0, 0, 1, 1], [], []>} : vector<1x64xf32>, vector<64x64xf32>, vector<1x64xf32> -> vector<1x64xf32>
    %cst_63 = arith.constant 9.99999974E-6 : f32
    %208 = vector.broadcast %cst_63 : f32 to vector<1x64xf32>
    %209 = arith.addf %207, %208 : vector<1x64xf32>
    %210 = math.rsqrt %209 : vector<1x64xf32>
    %211 = arith.mulf %205, %210 : vector<1x64xf32>
    %212 = arith.mulf %211, %143 : vector<1x64xf32>
    %213 = arith.addf %212, %144 : vector<1x64xf32>
    %214 = vector.extract_strided_slice %203 {offsets = [0, 0], sizes = [16, 32], strides = [1, 1]} : vector<16x64xf32> to vector<16x32xf32>
    %215 = vector.extract_strided_slice %203 {offsets = [0, 32], sizes = [16, 32], strides = [1, 1]} : vector<16x64xf32> to vector<16x32xf32>
    %216 = vector.extract_strided_slice %213 {offsets = [0, 0], sizes = [1, 32], strides = [1, 1]} : vector<1x64xf32> to vector<1x32xf32>
    %217 = vector.extract_strided_slice %213 {offsets = [0, 32], sizes = [1, 32], strides = [1, 1]} : vector<1x64xf32> to vector<1x32xf32>
    %c0_64 = arith.constant 0 : index
    %c0_65 = arith.constant 0 : index
    %218 = vector.load %arg20[%c0_64, %c0_65] : memref<36x16xf32, #tpu.memory_space<vmem>>, vector<36x16xf32>
    %c0_66 = arith.constant 0 : index
    %c0_67 = arith.constant 0 : index
    %219 = vector.load %arg21[%c0_66, %c0_67] : memref<36x1xf32, #tpu.memory_space<vmem>>, vector<36x1xf32>
    %cst_68 = arith.constant dense<0.000000e+00> : vector<36x32xf32>
    %220 = tpu.matmul %218, %11, %cst_68 {dimension_numbers = #tpu.dot_dimension_numbers<[1], [0], [0], [1], [0, 0, 1, 1], [], []>} : vector<36x16xf32>, vector<16x32xf32>, vector<36x32xf32> -> vector<36x32xf32>
    %221 = vector.broadcast %219 : vector<36x1xf32> to vector<36x32xf32>
    %222 = arith.addf %220, %221 : vector<36x32xf32>
    %223 = vector.extract_strided_slice %222 {offsets = [0, 0], sizes = [4, 32], strides = [1, 1]} : vector<36x32xf32> to vector<4x32xf32>
    %224 = vector.extract_strided_slice %222 {offsets = [4, 0], sizes = [4, 32], strides = [1, 1]} : vector<36x32xf32> to vector<4x32xf32>
    %225 = arith.maximumf %223, %224 : vector<4x32xf32>
    %226 = vector.extract_strided_slice %222 {offsets = [8, 0], sizes = [4, 32], strides = [1, 1]} : vector<36x32xf32> to vector<4x32xf32>
    %227 = arith.maximumf %225, %226 : vector<4x32xf32>
    %228 = vector.extract_strided_slice %222 {offsets = [12, 0], sizes = [4, 32], strides = [1, 1]} : vector<36x32xf32> to vector<4x32xf32>
    %229 = arith.maximumf %227, %228 : vector<4x32xf32>
    %230 = vector.extract_strided_slice %222 {offsets = [16, 0], sizes = [4, 32], strides = [1, 1]} : vector<36x32xf32> to vector<4x32xf32>
    %231 = arith.maximumf %229, %230 : vector<4x32xf32>
    %232 = vector.extract_strided_slice %222 {offsets = [20, 0], sizes = [4, 32], strides = [1, 1]} : vector<36x32xf32> to vector<4x32xf32>
    %233 = arith.maximumf %231, %232 : vector<4x32xf32>
    %234 = vector.extract_strided_slice %222 {offsets = [24, 0], sizes = [4, 32], strides = [1, 1]} : vector<36x32xf32> to vector<4x32xf32>
    %235 = arith.maximumf %233, %234 : vector<4x32xf32>
    %236 = vector.extract_strided_slice %222 {offsets = [28, 0], sizes = [4, 32], strides = [1, 1]} : vector<36x32xf32> to vector<4x32xf32>
    %237 = arith.maximumf %235, %236 : vector<4x32xf32>
    %238 = vector.extract_strided_slice %222 {offsets = [32, 0], sizes = [4, 32], strides = [1, 1]} : vector<36x32xf32> to vector<4x32xf32>
    %239 = arith.maximumf %237, %238 : vector<4x32xf32>
    %c0_69 = arith.constant 0 : index
    %c0_70 = arith.constant 0 : index
    %240 = vector.load %arg26[%c0_69, %c0_70] : memref<32x32xf32, #tpu.memory_space<vmem>>, vector<32x32xf32>
    %c0_71 = arith.constant 0 : index
    %c0_72 = arith.constant 0 : index
    %241 = vector.load %arg27[%c0_71, %c0_72] : memref<1x32xf32, #tpu.memory_space<vmem>>, vector<1x32xf32>
    %242 = tpu.iota {dimensions = array<i32: 1>} : vector<1x32xi32>
    %cst_73 = arith.constant 0.000000e+00 : f32
    %243 = vector.broadcast %cst_73 : f32 to vector<4x32xf32>
    %c0_i32 = arith.constant 0 : i32
    %244 = vector.broadcast %c0_i32 : i32 to vector<1x32xi32>
    %245 = arith.cmpi sge, %242, %244 : vector<1x32xi32>
    %c16_i32 = arith.constant 16 : i32
    %246 = vector.broadcast %c16_i32 : i32 to vector<1x32xi32>
    %247 = arith.cmpi slt, %242, %246 : vector<1x32xi32>
    %248 = arith.andi %245, %247 : vector<1x32xi1>
    %249 = arith.extui %248 : vector<1x32xi1> to vector<1x32xi32>
    %250 = arith.sitofp %249 : vector<1x32xi32> to vector<1x32xf32>
    %251 = vector.broadcast %250 : vector<1x32xf32> to vector<16x32xf32>
    %252 = arith.mulf %214, %251 : vector<16x32xf32>
    %cst_74 = arith.constant dense<0.000000e+00> : vector<4x16xf32>
    %253 = tpu.matmul %132, %252, %cst_74 {dimension_numbers = #tpu.dot_dimension_numbers<[1], [1], [0], [0], [0, 0, 1, 0], [], []>} : vector<4x32xf32>, vector<16x32xf32>, vector<4x16xf32> -> vector<4x16xf32>
    %cst_75 = arith.constant 2.500000e-01 : f32
    %254 = vector.broadcast %cst_75 : f32 to vector<4x16xf32>
    %255 = arith.mulf %253, %254 : vector<4x16xf32>
    %256 = arith.mulf %216, %250 : vector<1x32xf32>
    %cst_76 = arith.constant dense<0.000000e+00> : vector<4x1xf32>
    %257 = tpu.matmul %132, %256, %cst_76 {dimension_numbers = #tpu.dot_dimension_numbers<[1], [1], [0], [0], [0, 0, 1, 0], [], []>} : vector<4x32xf32>, vector<1x32xf32>, vector<4x1xf32> -> vector<4x1xf32>
    %cst_77 = arith.constant 2.500000e-01 : f32
    %258 = vector.broadcast %cst_77 : f32 to vector<4x1xf32>
    %259 = arith.mulf %257, %258 : vector<4x1xf32>
    %cst_78 = arith.constant dense<0xFF800000> : vector<4xf32>
    %260 = vector.multi_reduction <maximumf>, %255, %cst_78 [1] : vector<4x16xf32> to vector<4xf32>
    %261 = vector.shape_cast %260 : vector<4xf32> to vector<4x1xf32>
    %262 = arith.maximumf %261, %259 : vector<4x1xf32>
    %263 = vector.broadcast %262 : vector<4x1xf32> to vector<4x16xf32>
    %264 = arith.subf %255, %263 : vector<4x16xf32>
    %265 = math.exp %264 : vector<4x16xf32>
    %266 = arith.subf %259, %262 : vector<4x1xf32>
    %267 = math.exp %266 : vector<4x1xf32>
    %cst_79 = arith.constant dense<0.000000e+00> : vector<4xf32>
    %268 = vector.multi_reduction <add>, %265, %cst_79 [1] : vector<4x16xf32> to vector<4xf32>
    %269 = vector.shape_cast %268 : vector<4xf32> to vector<4x1xf32>
    %270 = arith.addf %269, %267 : vector<4x1xf32>
    %271 = tpu.reciprocal %270 {approx = true} : vector<4x1xf32> -> vector<4x1xf32>
    %272 = vector.broadcast %250 : vector<1x32xf32> to vector<16x32xf32>
    %273 = arith.mulf %215, %272 : vector<16x32xf32>
    %cst_80 = arith.constant dense<0.000000e+00> : vector<4x32xf32>
    %274 = tpu.matmul %265, %273, %cst_80 {dimension_numbers = #tpu.dot_dimension_numbers<[1], [0], [0], [1], [0, 0, 1, 1], [], []>} : vector<4x16xf32>, vector<16x32xf32>, vector<4x32xf32> -> vector<4x32xf32>
    %275 = arith.mulf %217, %250 : vector<1x32xf32>
    %276 = vector.broadcast %267 : vector<4x1xf32> to vector<4x32xf32>
    %277 = vector.broadcast %275 : vector<1x32xf32> to vector<4x32xf32>
    %278 = arith.mulf %276, %277 : vector<4x32xf32>
    %279 = arith.addf %274, %278 : vector<4x32xf32>
    %280 = vector.broadcast %271 : vector<4x1xf32> to vector<4x32xf32>
    %281 = arith.mulf %279, %280 : vector<4x32xf32>
    %282 = arith.addf %243, %281 : vector<4x32xf32>
    %c16_i32_81 = arith.constant 16 : i32
    %283 = vector.broadcast %c16_i32_81 : i32 to vector<1x32xi32>
    %284 = arith.cmpi sge, %242, %283 : vector<1x32xi32>
    %c32_i32 = arith.constant 32 : i32
    %285 = vector.broadcast %c32_i32 : i32 to vector<1x32xi32>
    %286 = arith.cmpi slt, %242, %285 : vector<1x32xi32>
    %287 = arith.andi %284, %286 : vector<1x32xi1>
    %288 = arith.extui %287 : vector<1x32xi1> to vector<1x32xi32>
    %289 = arith.sitofp %288 : vector<1x32xi32> to vector<1x32xf32>
    %290 = vector.broadcast %289 : vector<1x32xf32> to vector<16x32xf32>
    %291 = arith.mulf %214, %290 : vector<16x32xf32>
    %cst_82 = arith.constant dense<0.000000e+00> : vector<4x16xf32>
    %292 = tpu.matmul %132, %291, %cst_82 {dimension_numbers = #tpu.dot_dimension_numbers<[1], [1], [0], [0], [0, 0, 1, 0], [], []>} : vector<4x32xf32>, vector<16x32xf32>, vector<4x16xf32> -> vector<4x16xf32>
    %cst_83 = arith.constant 2.500000e-01 : f32
    %293 = vector.broadcast %cst_83 : f32 to vector<4x16xf32>
    %294 = arith.mulf %292, %293 : vector<4x16xf32>
    %295 = arith.mulf %216, %289 : vector<1x32xf32>
    %cst_84 = arith.constant dense<0.000000e+00> : vector<4x1xf32>
    %296 = tpu.matmul %132, %295, %cst_84 {dimension_numbers = #tpu.dot_dimension_numbers<[1], [1], [0], [0], [0, 0, 1, 0], [], []>} : vector<4x32xf32>, vector<1x32xf32>, vector<4x1xf32> -> vector<4x1xf32>
    %cst_85 = arith.constant 2.500000e-01 : f32
    %297 = vector.broadcast %cst_85 : f32 to vector<4x1xf32>
    %298 = arith.mulf %296, %297 : vector<4x1xf32>
    %cst_86 = arith.constant dense<0xFF800000> : vector<4xf32>
    %299 = vector.multi_reduction <maximumf>, %294, %cst_86 [1] : vector<4x16xf32> to vector<4xf32>
    %300 = vector.shape_cast %299 : vector<4xf32> to vector<4x1xf32>
    %301 = arith.maximumf %300, %298 : vector<4x1xf32>
    %302 = vector.broadcast %301 : vector<4x1xf32> to vector<4x16xf32>
    %303 = arith.subf %294, %302 : vector<4x16xf32>
    %304 = math.exp %303 : vector<4x16xf32>
    %305 = arith.subf %298, %301 : vector<4x1xf32>
    %306 = math.exp %305 : vector<4x1xf32>
    %cst_87 = arith.constant dense<0.000000e+00> : vector<4xf32>
    %307 = vector.multi_reduction <add>, %304, %cst_87 [1] : vector<4x16xf32> to vector<4xf32>
    %308 = vector.shape_cast %307 : vector<4xf32> to vector<4x1xf32>
    %309 = arith.addf %308, %306 : vector<4x1xf32>
    %310 = tpu.reciprocal %309 {approx = true} : vector<4x1xf32> -> vector<4x1xf32>
    %311 = vector.broadcast %289 : vector<1x32xf32> to vector<16x32xf32>
    %312 = arith.mulf %215, %311 : vector<16x32xf32>
    %cst_88 = arith.constant dense<0.000000e+00> : vector<4x32xf32>
    %313 = tpu.matmul %304, %312, %cst_88 {dimension_numbers = #tpu.dot_dimension_numbers<[1], [0], [0], [1], [0, 0, 1, 1], [], []>} : vector<4x16xf32>, vector<16x32xf32>, vector<4x32xf32> -> vector<4x32xf32>
    %314 = arith.mulf %217, %289 : vector<1x32xf32>
    %315 = vector.broadcast %306 : vector<4x1xf32> to vector<4x32xf32>
    %316 = vector.broadcast %314 : vector<1x32xf32> to vector<4x32xf32>
    %317 = arith.mulf %315, %316 : vector<4x32xf32>
    %318 = arith.addf %313, %317 : vector<4x32xf32>
    %319 = vector.broadcast %310 : vector<4x1xf32> to vector<4x32xf32>
    %320 = arith.mulf %318, %319 : vector<4x32xf32>
    %321 = arith.addf %282, %320 : vector<4x32xf32>
    %322 = arith.truncf %321 : vector<4x32xf32> to vector<4x32xbf16>
    %323 = arith.truncf %240 : vector<32x32xf32> to vector<32x32xbf16>
    %cst_89 = arith.constant dense<0.000000e+00> : vector<4x32xf32>
    %324 = tpu.matmul %322, %323, %cst_89 {dimension_numbers = #tpu.dot_dimension_numbers<[1], [0], [0], [1], [0, 0, 1, 1], [], []>} : vector<4x32xbf16>, vector<32x32xbf16>, vector<4x32xf32> -> vector<4x32xf32>
    %325 = vector.broadcast %241 : vector<1x32xf32> to vector<4x32xf32>
    %326 = arith.addf %324, %325 : vector<4x32xf32>
    %327 = arith.addf %326, %239 : vector<4x32xf32>
    %328 = tpu.iota {dimensions = array<i32: 1>} : vector<1x32xi32>
    %cst_90 = arith.constant 0.000000e+00 : f32
    %329 = vector.broadcast %cst_90 : f32 to vector<1x32xf32>
    %c0_i32_91 = arith.constant 0 : i32
    %330 = vector.broadcast %c0_i32_91 : i32 to vector<1x32xi32>
    %331 = arith.cmpi sge, %328, %330 : vector<1x32xi32>
    %c16_i32_92 = arith.constant 16 : i32
    %332 = vector.broadcast %c16_i32_92 : i32 to vector<1x32xi32>
    %333 = arith.cmpi slt, %328, %332 : vector<1x32xi32>
    %334 = arith.andi %331, %333 : vector<1x32xi1>
    %335 = arith.extui %334 : vector<1x32xi1> to vector<1x32xi32>
    %336 = arith.sitofp %335 : vector<1x32xi32> to vector<1x32xf32>
    %337 = vector.broadcast %336 : vector<1x32xf32> to vector<16x32xf32>
    %338 = arith.mulf %214, %337 : vector<16x32xf32>
    %cst_93 = arith.constant dense<0.000000e+00> : vector<1x16xf32>
    %339 = tpu.matmul %142, %338, %cst_93 {dimension_numbers = #tpu.dot_dimension_numbers<[1], [1], [0], [0], [0, 0, 1, 0], [], []>} : vector<1x32xf32>, vector<16x32xf32>, vector<1x16xf32> -> vector<1x16xf32>
    %cst_94 = arith.constant 2.500000e-01 : f32
    %340 = vector.broadcast %cst_94 : f32 to vector<1x16xf32>
    %341 = arith.mulf %339, %340 : vector<1x16xf32>
    %342 = arith.mulf %216, %336 : vector<1x32xf32>
    %cst_95 = arith.constant dense<0.000000e+00> : vector<1x1xf32>
    %343 = tpu.matmul %142, %342, %cst_95 {dimension_numbers = #tpu.dot_dimension_numbers<[1], [1], [0], [0], [0, 0, 1, 0], [], []>} : vector<1x32xf32>, vector<1x32xf32>, vector<1x1xf32> -> vector<1x1xf32>
    %cst_96 = arith.constant 2.500000e-01 : f32
    %344 = vector.broadcast %cst_96 : f32 to vector<1x1xf32>
    %345 = arith.mulf %343, %344 : vector<1x1xf32>
    %cst_97 = arith.constant dense<0xFF800000> : vector<1xf32>
    %346 = vector.multi_reduction <maximumf>, %341, %cst_97 [1] : vector<1x16xf32> to vector<1xf32>
    %347 = vector.shape_cast %346 : vector<1xf32> to vector<1x1xf32>
    %348 = arith.maximumf %347, %345 : vector<1x1xf32>
    %349 = vector.broadcast %348 : vector<1x1xf32> to vector<1x16xf32>
    %350 = arith.subf %341, %349 : vector<1x16xf32>
    %351 = math.exp %350 : vector<1x16xf32>
    %352 = arith.subf %345, %348 : vector<1x1xf32>
    %353 = math.exp %352 : vector<1x1xf32>
    %cst_98 = arith.constant dense<0.000000e+00> : vector<1xf32>
    %354 = vector.multi_reduction <add>, %351, %cst_98 [1] : vector<1x16xf32> to vector<1xf32>
    %355 = vector.shape_cast %354 : vector<1xf32> to vector<1x1xf32>
    %356 = arith.addf %355, %353 : vector<1x1xf32>
    %357 = tpu.reciprocal %356 {approx = true} : vector<1x1xf32> -> vector<1x1xf32>
    %358 = vector.broadcast %336 : vector<1x32xf32> to vector<16x32xf32>
    %359 = arith.mulf %215, %358 : vector<16x32xf32>
    %cst_99 = arith.constant dense<0.000000e+00> : vector<1x32xf32>
    %360 = tpu.matmul %351, %359, %cst_99 {dimension_numbers = #tpu.dot_dimension_numbers<[1], [0], [0], [1], [0, 0, 1, 1], [], []>} : vector<1x16xf32>, vector<16x32xf32>, vector<1x32xf32> -> vector<1x32xf32>
    %361 = arith.mulf %217, %336 : vector<1x32xf32>
    %362 = vector.broadcast %353 : vector<1x1xf32> to vector<1x32xf32>
    %363 = arith.mulf %362, %361 : vector<1x32xf32>
    %364 = arith.addf %360, %363 : vector<1x32xf32>
    %365 = vector.broadcast %357 : vector<1x1xf32> to vector<1x32xf32>
    %366 = arith.mulf %364, %365 : vector<1x32xf32>
    %367 = arith.addf %329, %366 : vector<1x32xf32>
    %c16_i32_100 = arith.constant 16 : i32
    %368 = vector.broadcast %c16_i32_100 : i32 to vector<1x32xi32>
    %369 = arith.cmpi sge, %328, %368 : vector<1x32xi32>
    %c32_i32_101 = arith.constant 32 : i32
    %370 = vector.broadcast %c32_i32_101 : i32 to vector<1x32xi32>
    %371 = arith.cmpi slt, %328, %370 : vector<1x32xi32>
    %372 = arith.andi %369, %371 : vector<1x32xi1>
    %373 = arith.extui %372 : vector<1x32xi1> to vector<1x32xi32>
    %374 = arith.sitofp %373 : vector<1x32xi32> to vector<1x32xf32>
    %375 = vector.broadcast %374 : vector<1x32xf32> to vector<16x32xf32>
    %376 = arith.mulf %214, %375 : vector<16x32xf32>
    %cst_102 = arith.constant dense<0.000000e+00> : vector<1x16xf32>
    %377 = tpu.matmul %142, %376, %cst_102 {dimension_numbers = #tpu.dot_dimension_numbers<[1], [1], [0], [0], [0, 0, 1, 0], [], []>} : vector<1x32xf32>, vector<16x32xf32>, vector<1x16xf32> -> vector<1x16xf32>
    %cst_103 = arith.constant 2.500000e-01 : f32
    %378 = vector.broadcast %cst_103 : f32 to vector<1x16xf32>
    %379 = arith.mulf %377, %378 : vector<1x16xf32>
    %380 = arith.mulf %216, %374 : vector<1x32xf32>
    %cst_104 = arith.constant dense<0.000000e+00> : vector<1x1xf32>
    %381 = tpu.matmul %142, %380, %cst_104 {dimension_numbers = #tpu.dot_dimension_numbers<[1], [1], [0], [0], [0, 0, 1, 0], [], []>} : vector<1x32xf32>, vector<1x32xf32>, vector<1x1xf32> -> vector<1x1xf32>
    %cst_105 = arith.constant 2.500000e-01 : f32
    %382 = vector.broadcast %cst_105 : f32 to vector<1x1xf32>
    %383 = arith.mulf %381, %382 : vector<1x1xf32>
    %cst_106 = arith.constant dense<0xFF800000> : vector<1xf32>
    %384 = vector.multi_reduction <maximumf>, %379, %cst_106 [1] : vector<1x16xf32> to vector<1xf32>
    %385 = vector.shape_cast %384 : vector<1xf32> to vector<1x1xf32>
    %386 = arith.maximumf %385, %383 : vector<1x1xf32>
    %387 = vector.broadcast %386 : vector<1x1xf32> to vector<1x16xf32>
    %388 = arith.subf %379, %387 : vector<1x16xf32>
    %389 = math.exp %388 : vector<1x16xf32>
    %390 = arith.subf %383, %386 : vector<1x1xf32>
    %391 = math.exp %390 : vector<1x1xf32>
    %cst_107 = arith.constant dense<0.000000e+00> : vector<1xf32>
    %392 = vector.multi_reduction <add>, %389, %cst_107 [1] : vector<1x16xf32> to vector<1xf32>
    %393 = vector.shape_cast %392 : vector<1xf32> to vector<1x1xf32>
    %394 = arith.addf %393, %391 : vector<1x1xf32>
    %395 = tpu.reciprocal %394 {approx = true} : vector<1x1xf32> -> vector<1x1xf32>
    %396 = vector.broadcast %374 : vector<1x32xf32> to vector<16x32xf32>
    %397 = arith.mulf %215, %396 : vector<16x32xf32>
    %cst_108 = arith.constant dense<0.000000e+00> : vector<1x32xf32>
    %398 = tpu.matmul %389, %397, %cst_108 {dimension_numbers = #tpu.dot_dimension_numbers<[1], [0], [0], [1], [0, 0, 1, 1], [], []>} : vector<1x16xf32>, vector<16x32xf32>, vector<1x32xf32> -> vector<1x32xf32>
    %399 = arith.mulf %217, %374 : vector<1x32xf32>
    %400 = vector.broadcast %391 : vector<1x1xf32> to vector<1x32xf32>
    %401 = arith.mulf %400, %399 : vector<1x32xf32>
    %402 = arith.addf %398, %401 : vector<1x32xf32>
    %403 = vector.broadcast %395 : vector<1x1xf32> to vector<1x32xf32>
    %404 = arith.mulf %402, %403 : vector<1x32xf32>
    %405 = arith.addf %367, %404 : vector<1x32xf32>
    %406 = arith.truncf %405 : vector<1x32xf32> to vector<1x32xbf16>
    %407 = arith.truncf %240 : vector<32x32xf32> to vector<32x32xbf16>
    %cst_109 = arith.constant dense<0.000000e+00> : vector<1x32xf32>
    %408 = tpu.matmul %406, %407, %cst_109 {dimension_numbers = #tpu.dot_dimension_numbers<[1], [0], [0], [1], [0, 0, 1, 1], [], []>} : vector<1x32xbf16>, vector<32x32xbf16>, vector<1x32xf32> -> vector<1x32xf32>
    %409 = arith.addf %408, %241 : vector<1x32xf32>
    %410 = arith.addf %409, %14 : vector<1x32xf32>
    %c0_110 = arith.constant 0 : index
    %c0_111 = arith.constant 0 : index
    %411 = vector.load %arg28[%c0_110, %c0_111] : memref<1x32xf32, #tpu.memory_space<vmem>>, vector<1x32xf32>
    %c0_112 = arith.constant 0 : index
    %c0_113 = arith.constant 0 : index
    %412 = vector.load %arg29[%c0_112, %c0_113] : memref<1x32xf32, #tpu.memory_space<vmem>>, vector<1x32xf32>
    %c0_114 = arith.constant 0 : index
    %c0_115 = arith.constant 0 : index
    %413 = vector.load %arg30[%c0_114, %c0_115] : memref<32x128xf32, #tpu.memory_space<vmem>>, vector<32x128xf32>
    %c0_116 = arith.constant 0 : index
    %c0_117 = arith.constant 0 : index
    %414 = vector.load %arg31[%c0_116, %c0_117] : memref<1x128xf32, #tpu.memory_space<vmem>>, vector<1x128xf32>
    %c0_118 = arith.constant 0 : index
    %c0_119 = arith.constant 0 : index
    %415 = vector.load %arg32[%c0_118, %c0_119] : memref<128x32xf32, #tpu.memory_space<vmem>>, vector<128x32xf32>
    %c0_120 = arith.constant 0 : index
    %c0_121 = arith.constant 0 : index
    %416 = vector.load %arg33[%c0_120, %c0_121] : memref<1x32xf32, #tpu.memory_space<vmem>>, vector<1x32xf32>
    %cst_122 = arith.constant dense<0.000000e+00> : vector<4xf32>
    %417 = vector.multi_reduction <add>, %327, %cst_122 [1] : vector<4x32xf32> to vector<4xf32>
    %418 = vector.shape_cast %417 : vector<4xf32> to vector<4x1xf32>
    %cst_123 = arith.constant 3.200000e+01 : f32
    %419 = vector.broadcast %cst_123 : f32 to vector<4x1xf32>
    %420 = arith.divf %418, %419 : vector<4x1xf32>
    %421 = vector.broadcast %420 : vector<4x1xf32> to vector<4x32xf32>
    %422 = arith.subf %327, %421 : vector<4x32xf32>
    %423 = arith.mulf %422, %422 : vector<4x32xf32>
    %cst_124 = arith.constant dense<0.000000e+00> : vector<4xf32>
    %424 = vector.multi_reduction <add>, %423, %cst_124 [1] : vector<4x32xf32> to vector<4xf32>
    %425 = vector.shape_cast %424 : vector<4xf32> to vector<4x1xf32>
    %cst_125 = arith.constant 3.200000e+01 : f32
    %426 = vector.broadcast %cst_125 : f32 to vector<4x1xf32>
    %427 = arith.divf %425, %426 : vector<4x1xf32>
    %cst_126 = arith.constant 9.99999997E-7 : f32
    %428 = vector.broadcast %cst_126 : f32 to vector<4x1xf32>
    %429 = arith.addf %427, %428 : vector<4x1xf32>
    %430 = math.rsqrt %429 : vector<4x1xf32>
    %431 = vector.broadcast %430 : vector<4x1xf32> to vector<4x32xf32>
    %432 = arith.mulf %422, %431 : vector<4x32xf32>
    %433 = vector.broadcast %411 : vector<1x32xf32> to vector<4x32xf32>
    %434 = arith.mulf %432, %433 : vector<4x32xf32>
    %435 = vector.broadcast %412 : vector<1x32xf32> to vector<4x32xf32>
    %436 = arith.addf %434, %435 : vector<4x32xf32>
    %437 = arith.truncf %436 : vector<4x32xf32> to vector<4x32xbf16>
    %438 = arith.truncf %413 : vector<32x128xf32> to vector<32x128xbf16>
    %cst_127 = arith.constant dense<0.000000e+00> : vector<4x128xf32>
    %439 = tpu.matmul %437, %438, %cst_127 {dimension_numbers = #tpu.dot_dimension_numbers<[1], [0], [0], [1], [0, 0, 1, 1], [], []>} : vector<4x32xbf16>, vector<32x128xbf16>, vector<4x128xf32> -> vector<4x128xf32>
    %440 = vector.broadcast %414 : vector<1x128xf32> to vector<4x128xf32>
    %441 = arith.addf %439, %440 : vector<4x128xf32>
    %cst_128 = arith.constant 5.000000e-01 : f32
    %442 = vector.broadcast %cst_128 : f32 to vector<4x128xf32>
    %443 = arith.mulf %442, %441 : vector<4x128xf32>
    %cst_129 = arith.constant 0.707106769 : f32
    %444 = vector.broadcast %cst_129 : f32 to vector<4x128xf32>
    %445 = arith.mulf %441, %444 : vector<4x128xf32>
    %446 = math.erf %445 : vector<4x128xf32>
    %cst_130 = arith.constant 1.000000e+00 : f32
    %447 = vector.broadcast %cst_130 : f32 to vector<4x128xf32>
    %448 = arith.addf %447, %446 : vector<4x128xf32>
    %449 = arith.mulf %443, %448 : vector<4x128xf32>
    %450 = arith.truncf %449 : vector<4x128xf32> to vector<4x128xbf16>
    %451 = arith.truncf %415 : vector<128x32xf32> to vector<128x32xbf16>
    %cst_131 = arith.constant dense<0.000000e+00> : vector<4x32xf32>
    %452 = tpu.matmul %450, %451, %cst_131 {dimension_numbers = #tpu.dot_dimension_numbers<[1], [0], [0], [1], [0, 0, 1, 1], [], []>} : vector<4x128xbf16>, vector<128x32xbf16>, vector<4x32xf32> -> vector<4x32xf32>
    %453 = arith.addf %327, %452 : vector<4x32xf32>
    %454 = vector.broadcast %416 : vector<1x32xf32> to vector<4x32xf32>
    %455 = arith.addf %453, %454 : vector<4x32xf32>
    %cst_132 = arith.constant dense<0.000000e+00> : vector<1xf32>
    %456 = vector.multi_reduction <add>, %410, %cst_132 [1] : vector<1x32xf32> to vector<1xf32>
    %457 = vector.shape_cast %456 : vector<1xf32> to vector<1x1xf32>
    %cst_133 = arith.constant 3.200000e+01 : f32
    %458 = vector.broadcast %cst_133 : f32 to vector<1x1xf32>
    %459 = arith.divf %457, %458 : vector<1x1xf32>
    %460 = vector.broadcast %459 : vector<1x1xf32> to vector<1x32xf32>
    %461 = arith.subf %410, %460 : vector<1x32xf32>
    %462 = arith.mulf %461, %461 : vector<1x32xf32>
    %cst_134 = arith.constant dense<0.000000e+00> : vector<1xf32>
    %463 = vector.multi_reduction <add>, %462, %cst_134 [1] : vector<1x32xf32> to vector<1xf32>
    %464 = vector.shape_cast %463 : vector<1xf32> to vector<1x1xf32>
    %cst_135 = arith.constant 3.200000e+01 : f32
    %465 = vector.broadcast %cst_135 : f32 to vector<1x1xf32>
    %466 = arith.divf %464, %465 : vector<1x1xf32>
    %cst_136 = arith.constant 9.99999997E-7 : f32
    %467 = vector.broadcast %cst_136 : f32 to vector<1x1xf32>
    %468 = arith.addf %466, %467 : vector<1x1xf32>
    %469 = math.rsqrt %468 : vector<1x1xf32>
    %470 = vector.broadcast %469 : vector<1x1xf32> to vector<1x32xf32>
    %471 = arith.mulf %461, %470 : vector<1x32xf32>
    %472 = arith.mulf %471, %411 : vector<1x32xf32>
    %473 = arith.addf %472, %412 : vector<1x32xf32>
    %474 = arith.truncf %473 : vector<1x32xf32> to vector<1x32xbf16>
    %475 = arith.truncf %413 : vector<32x128xf32> to vector<32x128xbf16>
    %cst_137 = arith.constant dense<0.000000e+00> : vector<1x128xf32>
    %476 = tpu.matmul %474, %475, %cst_137 {dimension_numbers = #tpu.dot_dimension_numbers<[1], [0], [0], [1], [0, 0, 1, 1], [], []>} : vector<1x32xbf16>, vector<32x128xbf16>, vector<1x128xf32> -> vector<1x128xf32>
    %477 = arith.addf %476, %414 : vector<1x128xf32>
    %cst_138 = arith.constant 5.000000e-01 : f32
    %478 = vector.broadcast %cst_138 : f32 to vector<1x128xf32>
    %479 = arith.mulf %478, %477 : vector<1x128xf32>
    %cst_139 = arith.constant 0.707106769 : f32
    %480 = vector.broadcast %cst_139 : f32 to vector<1x128xf32>
    %481 = arith.mulf %477, %480 : vector<1x128xf32>
    %482 = math.erf %481 : vector<1x128xf32>
    %cst_140 = arith.constant 1.000000e+00 : f32
    %483 = vector.broadcast %cst_140 : f32 to vector<1x128xf32>
    %484 = arith.addf %483, %482 : vector<1x128xf32>
    %485 = arith.mulf %479, %484 : vector<1x128xf32>
    %486 = arith.truncf %485 : vector<1x128xf32> to vector<1x128xbf16>
    %487 = arith.truncf %415 : vector<128x32xf32> to vector<128x32xbf16>
    %cst_141 = arith.constant dense<0.000000e+00> : vector<1x32xf32>
    %488 = tpu.matmul %486, %487, %cst_141 {dimension_numbers = #tpu.dot_dimension_numbers<[1], [0], [0], [1], [0, 0, 1, 1], [], []>} : vector<1x128xbf16>, vector<128x32xbf16>, vector<1x32xf32> -> vector<1x32xf32>
    %489 = arith.addf %410, %488 : vector<1x32xf32>
    %490 = arith.addf %489, %416 : vector<1x32xf32>
    %c0_142 = arith.constant 0 : index
    %c0_143 = arith.constant 0 : index
    %491 = vector.load %arg34[%c0_142, %c0_143] : memref<1x32xf32, #tpu.memory_space<vmem>>, vector<1x32xf32>
    %c0_144 = arith.constant 0 : index
    %c0_145 = arith.constant 0 : index
    %492 = vector.load %arg35[%c0_144, %c0_145] : memref<1x32xf32, #tpu.memory_space<vmem>>, vector<1x32xf32>
    %c0_146 = arith.constant 0 : index
    %c0_147 = arith.constant 0 : index
    %493 = vector.load %arg36[%c0_146, %c0_147] : memref<32x96xf32, #tpu.memory_space<vmem>>, vector<32x96xf32>
    %c0_148 = arith.constant 0 : index
    %c0_149 = arith.constant 0 : index
    %494 = vector.load %arg37[%c0_148, %c0_149] : memref<1x96xf32, #tpu.memory_space<vmem>>, vector<1x96xf32>
    %cst_150 = arith.constant dense<0.000000e+00> : vector<4xf32>
    %495 = vector.multi_reduction <add>, %455, %cst_150 [1] : vector<4x32xf32> to vector<4xf32>
    %496 = vector.shape_cast %495 : vector<4xf32> to vector<4x1xf32>
    %cst_151 = arith.constant 3.200000e+01 : f32
    %497 = vector.broadcast %cst_151 : f32 to vector<4x1xf32>
    %498 = arith.divf %496, %497 : vector<4x1xf32>
    %499 = vector.broadcast %498 : vector<4x1xf32> to vector<4x32xf32>
    %500 = arith.subf %455, %499 : vector<4x32xf32>
    %501 = arith.mulf %500, %500 : vector<4x32xf32>
    %cst_152 = arith.constant dense<0.000000e+00> : vector<4xf32>
    %502 = vector.multi_reduction <add>, %501, %cst_152 [1] : vector<4x32xf32> to vector<4xf32>
    %503 = vector.shape_cast %502 : vector<4xf32> to vector<4x1xf32>
    %cst_153 = arith.constant 3.200000e+01 : f32
    %504 = vector.broadcast %cst_153 : f32 to vector<4x1xf32>
    %505 = arith.divf %503, %504 : vector<4x1xf32>
    %cst_154 = arith.constant 9.99999997E-7 : f32
    %506 = vector.broadcast %cst_154 : f32 to vector<4x1xf32>
    %507 = arith.addf %505, %506 : vector<4x1xf32>
    %508 = math.rsqrt %507 : vector<4x1xf32>
    %509 = vector.broadcast %508 : vector<4x1xf32> to vector<4x32xf32>
    %510 = arith.mulf %500, %509 : vector<4x32xf32>
    %511 = vector.broadcast %491 : vector<1x32xf32> to vector<4x32xf32>
    %512 = arith.mulf %510, %511 : vector<4x32xf32>
    %513 = vector.broadcast %492 : vector<1x32xf32> to vector<4x32xf32>
    %514 = arith.addf %512, %513 : vector<4x32xf32>
    %515 = arith.truncf %514 : vector<4x32xf32> to vector<4x32xbf16>
    %516 = arith.truncf %493 : vector<32x96xf32> to vector<32x96xbf16>
    %cst_155 = arith.constant dense<0.000000e+00> : vector<4x96xf32>
    %517 = tpu.matmul %515, %516, %cst_155 {dimension_numbers = #tpu.dot_dimension_numbers<[1], [0], [0], [1], [0, 0, 1, 1], [], []>} : vector<4x32xbf16>, vector<32x96xbf16>, vector<4x96xf32> -> vector<4x96xf32>
    %518 = vector.broadcast %494 : vector<1x96xf32> to vector<4x96xf32>
    %519 = arith.addf %517, %518 : vector<4x96xf32>
    %cst_156 = arith.constant dense<0.000000e+00> : vector<1xf32>
    %520 = vector.multi_reduction <add>, %490, %cst_156 [1] : vector<1x32xf32> to vector<1xf32>
    %521 = vector.shape_cast %520 : vector<1xf32> to vector<1x1xf32>
    %cst_157 = arith.constant 3.200000e+01 : f32
    %522 = vector.broadcast %cst_157 : f32 to vector<1x1xf32>
    %523 = arith.divf %521, %522 : vector<1x1xf32>
    %524 = vector.broadcast %523 : vector<1x1xf32> to vector<1x32xf32>
    %525 = arith.subf %490, %524 : vector<1x32xf32>
    %526 = arith.mulf %525, %525 : vector<1x32xf32>
    %cst_158 = arith.constant dense<0.000000e+00> : vector<1xf32>
    %527 = vector.multi_reduction <add>, %526, %cst_158 [1] : vector<1x32xf32> to vector<1xf32>
    %528 = vector.shape_cast %527 : vector<1xf32> to vector<1x1xf32>
    %cst_159 = arith.constant 3.200000e+01 : f32
    %529 = vector.broadcast %cst_159 : f32 to vector<1x1xf32>
    %530 = arith.divf %528, %529 : vector<1x1xf32>
    %cst_160 = arith.constant 9.99999997E-7 : f32
    %531 = vector.broadcast %cst_160 : f32 to vector<1x1xf32>
    %532 = arith.addf %530, %531 : vector<1x1xf32>
    %533 = math.rsqrt %532 : vector<1x1xf32>
    %534 = vector.broadcast %533 : vector<1x1xf32> to vector<1x32xf32>
    %535 = arith.mulf %525, %534 : vector<1x32xf32>
    %536 = arith.mulf %535, %491 : vector<1x32xf32>
    %537 = arith.addf %536, %492 : vector<1x32xf32>
    %538 = arith.truncf %537 : vector<1x32xf32> to vector<1x32xbf16>
    %539 = arith.truncf %493 : vector<32x96xf32> to vector<32x96xbf16>
    %cst_161 = arith.constant dense<0.000000e+00> : vector<1x96xf32>
    %540 = tpu.matmul %538, %539, %cst_161 {dimension_numbers = #tpu.dot_dimension_numbers<[1], [0], [0], [1], [0, 0, 1, 1], [], []>} : vector<1x32xbf16>, vector<32x96xbf16>, vector<1x96xf32> -> vector<1x96xf32>
    %541 = arith.addf %540, %494 : vector<1x96xf32>
    %542 = vector.extract_strided_slice %519 {offsets = [0, 32], sizes = [4, 64], strides = [1, 1]} : vector<4x96xf32> to vector<4x64xf32>
    %543 = vector.extract_strided_slice %541 {offsets = [0, 0], sizes = [1, 32], strides = [1, 1]} : vector<1x96xf32> to vector<1x32xf32>
    %544 = vector.extract_strided_slice %541 {offsets = [0, 32], sizes = [1, 64], strides = [1, 1]} : vector<1x96xf32> to vector<1x64xf32>
    %c0_162 = arith.constant 0 : index
    %c0_163 = arith.constant 0 : index
    %545 = vector.load %arg7[%c0_162, %c0_163] : memref<64x64xf32, #tpu.memory_space<vmem>>, vector<64x64xf32>
    %c0_164 = arith.constant 0 : index
    %c0_165 = arith.constant 0 : index
    %546 = vector.load %arg40[%c0_164, %c0_165] : memref<1x64xf32, #tpu.memory_space<vmem>>, vector<1x64xf32>
    %c0_166 = arith.constant 0 : index
    %c0_167 = arith.constant 0 : index
    %547 = vector.load %arg41[%c0_166, %c0_167] : memref<1x64xf32, #tpu.memory_space<vmem>>, vector<1x64xf32>
    %c0_168 = arith.constant 0 : index
    %c0_169 = arith.constant 0 : index
    %548 = vector.load %arg38[%c0_168, %c0_169] : memref<36x4xf32, #tpu.memory_space<vmem>>, vector<36x4xf32>
    %c0_170 = arith.constant 0 : index
    %c0_171 = arith.constant 0 : index
    %549 = vector.load %arg39[%c0_170, %c0_171] : memref<9x64xf32, #tpu.memory_space<vmem>>, vector<9x64xf32>
    %cst_172 = arith.constant dense<0.000000e+00> : vector<36x64xf32>
    %550 = tpu.matmul %548, %542, %cst_172 {dimension_numbers = #tpu.dot_dimension_numbers<[1], [0], [0], [1], [0, 0, 1, 1], [], []>} : vector<36x4xf32>, vector<4x64xf32>, vector<36x64xf32> -> vector<36x64xf32>
    %551 = vector.extract_strided_slice %550 {offsets = [0, 0], sizes = [4, 64], strides = [1, 1]} : vector<36x64xf32> to vector<4x64xf32>
    %552 = vector.extract_strided_slice %549 {offsets = [0, 0], sizes = [1, 64], strides = [1, 1]} : vector<9x64xf32> to vector<1x64xf32>
    %553 = vector.broadcast %552 : vector<1x64xf32> to vector<4x64xf32>
    %554 = arith.mulf %551, %553 : vector<4x64xf32>
    %555 = vector.extract_strided_slice %550 {offsets = [4, 0], sizes = [4, 64], strides = [1, 1]} : vector<36x64xf32> to vector<4x64xf32>
    %556 = vector.extract_strided_slice %549 {offsets = [1, 0], sizes = [1, 64], strides = [1, 1]} : vector<9x64xf32> to vector<1x64xf32>
    %557 = vector.broadcast %556 : vector<1x64xf32> to vector<4x64xf32>
    %558 = arith.mulf %555, %557 : vector<4x64xf32>
    %559 = arith.addf %554, %558 : vector<4x64xf32>
    %560 = vector.extract_strided_slice %550 {offsets = [8, 0], sizes = [4, 64], strides = [1, 1]} : vector<36x64xf32> to vector<4x64xf32>
    %561 = vector.extract_strided_slice %549 {offsets = [2, 0], sizes = [1, 64], strides = [1, 1]} : vector<9x64xf32> to vector<1x64xf32>
    %562 = vector.broadcast %561 : vector<1x64xf32> to vector<4x64xf32>
    %563 = arith.mulf %560, %562 : vector<4x64xf32>
    %564 = arith.addf %559, %563 : vector<4x64xf32>
    %565 = vector.extract_strided_slice %550 {offsets = [12, 0], sizes = [4, 64], strides = [1, 1]} : vector<36x64xf32> to vector<4x64xf32>
    %566 = vector.extract_strided_slice %549 {offsets = [3, 0], sizes = [1, 64], strides = [1, 1]} : vector<9x64xf32> to vector<1x64xf32>
    %567 = vector.broadcast %566 : vector<1x64xf32> to vector<4x64xf32>
    %568 = arith.mulf %565, %567 : vector<4x64xf32>
    %569 = arith.addf %564, %568 : vector<4x64xf32>
    %570 = vector.extract_strided_slice %550 {offsets = [16, 0], sizes = [4, 64], strides = [1, 1]} : vector<36x64xf32> to vector<4x64xf32>
    %571 = vector.extract_strided_slice %549 {offsets = [4, 0], sizes = [1, 64], strides = [1, 1]} : vector<9x64xf32> to vector<1x64xf32>
    %572 = vector.broadcast %571 : vector<1x64xf32> to vector<4x64xf32>
    %573 = arith.mulf %570, %572 : vector<4x64xf32>
    %574 = arith.addf %569, %573 : vector<4x64xf32>
    %575 = vector.extract_strided_slice %550 {offsets = [20, 0], sizes = [4, 64], strides = [1, 1]} : vector<36x64xf32> to vector<4x64xf32>
    %576 = vector.extract_strided_slice %549 {offsets = [5, 0], sizes = [1, 64], strides = [1, 1]} : vector<9x64xf32> to vector<1x64xf32>
    %577 = vector.broadcast %576 : vector<1x64xf32> to vector<4x64xf32>
    %578 = arith.mulf %575, %577 : vector<4x64xf32>
    %579 = arith.addf %574, %578 : vector<4x64xf32>
    %580 = vector.extract_strided_slice %550 {offsets = [24, 0], sizes = [4, 64], strides = [1, 1]} : vector<36x64xf32> to vector<4x64xf32>
    %581 = vector.extract_strided_slice %549 {offsets = [6, 0], sizes = [1, 64], strides = [1, 1]} : vector<9x64xf32> to vector<1x64xf32>
    %582 = vector.broadcast %581 : vector<1x64xf32> to vector<4x64xf32>
    %583 = arith.mulf %580, %582 : vector<4x64xf32>
    %584 = arith.addf %579, %583 : vector<4x64xf32>
    %585 = vector.extract_strided_slice %550 {offsets = [28, 0], sizes = [4, 64], strides = [1, 1]} : vector<36x64xf32> to vector<4x64xf32>
    %586 = vector.extract_strided_slice %549 {offsets = [7, 0], sizes = [1, 64], strides = [1, 1]} : vector<9x64xf32> to vector<1x64xf32>
    %587 = vector.broadcast %586 : vector<1x64xf32> to vector<4x64xf32>
    %588 = arith.mulf %585, %587 : vector<4x64xf32>
    %589 = arith.addf %584, %588 : vector<4x64xf32>
    %590 = vector.extract_strided_slice %550 {offsets = [32, 0], sizes = [4, 64], strides = [1, 1]} : vector<36x64xf32> to vector<4x64xf32>
    %591 = vector.extract_strided_slice %549 {offsets = [8, 0], sizes = [1, 64], strides = [1, 1]} : vector<9x64xf32> to vector<1x64xf32>
    %592 = vector.broadcast %591 : vector<1x64xf32> to vector<4x64xf32>
    %593 = arith.mulf %590, %592 : vector<4x64xf32>
    %594 = arith.addf %589, %593 : vector<4x64xf32>
    %cst_173 = arith.constant dense<0.000000e+00> : vector<4x64xf32>
    %595 = tpu.matmul %594, %545, %cst_173 {dimension_numbers = #tpu.dot_dimension_numbers<[1], [0], [0], [1], [0, 0, 1, 1], [], []>} : vector<4x64xf32>, vector<64x64xf32>, vector<4x64xf32> -> vector<4x64xf32>
    %596 = arith.subf %594, %595 : vector<4x64xf32>
    %597 = arith.mulf %596, %596 : vector<4x64xf32>
    %cst_174 = arith.constant dense<0.000000e+00> : vector<4x64xf32>
    %598 = tpu.matmul %597, %545, %cst_174 {dimension_numbers = #tpu.dot_dimension_numbers<[1], [0], [0], [1], [0, 0, 1, 1], [], []>} : vector<4x64xf32>, vector<64x64xf32>, vector<4x64xf32> -> vector<4x64xf32>
    %cst_175 = arith.constant 9.99999974E-6 : f32
    %599 = vector.broadcast %cst_175 : f32 to vector<4x64xf32>
    %600 = arith.addf %598, %599 : vector<4x64xf32>
    %601 = math.rsqrt %600 : vector<4x64xf32>
    %602 = arith.mulf %596, %601 : vector<4x64xf32>
    %603 = vector.broadcast %546 : vector<1x64xf32> to vector<4x64xf32>
    %604 = arith.mulf %602, %603 : vector<4x64xf32>
    %605 = vector.broadcast %547 : vector<1x64xf32> to vector<4x64xf32>
    %606 = arith.addf %604, %605 : vector<4x64xf32>
    %cst_176 = arith.constant dense<0.000000e+00> : vector<1x64xf32>
    %607 = tpu.matmul %544, %545, %cst_176 {dimension_numbers = #tpu.dot_dimension_numbers<[1], [0], [0], [1], [0, 0, 1, 1], [], []>} : vector<1x64xf32>, vector<64x64xf32>, vector<1x64xf32> -> vector<1x64xf32>
    %608 = arith.subf %544, %607 : vector<1x64xf32>
    %609 = arith.mulf %608, %608 : vector<1x64xf32>
    %cst_177 = arith.constant dense<0.000000e+00> : vector<1x64xf32>
    %610 = tpu.matmul %609, %545, %cst_177 {dimension_numbers = #tpu.dot_dimension_numbers<[1], [0], [0], [1], [0, 0, 1, 1], [], []>} : vector<1x64xf32>, vector<64x64xf32>, vector<1x64xf32> -> vector<1x64xf32>
    %cst_178 = arith.constant 9.99999974E-6 : f32
    %611 = vector.broadcast %cst_178 : f32 to vector<1x64xf32>
    %612 = arith.addf %610, %611 : vector<1x64xf32>
    %613 = math.rsqrt %612 : vector<1x64xf32>
    %614 = arith.mulf %608, %613 : vector<1x64xf32>
    %615 = arith.mulf %614, %546 : vector<1x64xf32>
    %616 = arith.addf %615, %547 : vector<1x64xf32>
    %617 = vector.extract_strided_slice %606 {offsets = [0, 0], sizes = [4, 32], strides = [1, 1]} : vector<4x64xf32> to vector<4x32xf32>
    %618 = vector.extract_strided_slice %606 {offsets = [0, 32], sizes = [4, 32], strides = [1, 1]} : vector<4x64xf32> to vector<4x32xf32>
    %619 = vector.extract_strided_slice %616 {offsets = [0, 0], sizes = [1, 32], strides = [1, 1]} : vector<1x64xf32> to vector<1x32xf32>
    %620 = vector.extract_strided_slice %616 {offsets = [0, 32], sizes = [1, 32], strides = [1, 1]} : vector<1x64xf32> to vector<1x32xf32>
    %c0_179 = arith.constant 0 : index
    %c0_180 = arith.constant 0 : index
    %621 = vector.load %arg42[%c0_179, %c0_180] : memref<32x32xf32, #tpu.memory_space<vmem>>, vector<32x32xf32>
    %c0_181 = arith.constant 0 : index
    %c0_182 = arith.constant 0 : index
    %622 = vector.load %arg43[%c0_181, %c0_182] : memref<1x32xf32, #tpu.memory_space<vmem>>, vector<1x32xf32>
    %623 = tpu.iota {dimensions = array<i32: 1>} : vector<1x32xi32>
    %cst_183 = arith.constant 0.000000e+00 : f32
    %624 = vector.broadcast %cst_183 : f32 to vector<1x32xf32>
    %c0_i32_184 = arith.constant 0 : i32
    %625 = vector.broadcast %c0_i32_184 : i32 to vector<1x32xi32>
    %626 = arith.cmpi sge, %623, %625 : vector<1x32xi32>
    %c16_i32_185 = arith.constant 16 : i32
    %627 = vector.broadcast %c16_i32_185 : i32 to vector<1x32xi32>
    %628 = arith.cmpi slt, %623, %627 : vector<1x32xi32>
    %629 = arith.andi %626, %628 : vector<1x32xi1>
    %630 = arith.extui %629 : vector<1x32xi1> to vector<1x32xi32>
    %631 = arith.sitofp %630 : vector<1x32xi32> to vector<1x32xf32>
    %632 = vector.broadcast %631 : vector<1x32xf32> to vector<4x32xf32>
    %633 = arith.mulf %617, %632 : vector<4x32xf32>
    %cst_186 = arith.constant dense<0.000000e+00> : vector<1x4xf32>
    %634 = tpu.matmul %543, %633, %cst_186 {dimension_numbers = #tpu.dot_dimension_numbers<[1], [1], [0], [0], [0, 0, 1, 0], [], []>} : vector<1x32xf32>, vector<4x32xf32>, vector<1x4xf32> -> vector<1x4xf32>
    %cst_187 = arith.constant 2.500000e-01 : f32
    %635 = vector.broadcast %cst_187 : f32 to vector<1x4xf32>
    %636 = arith.mulf %634, %635 : vector<1x4xf32>
    %637 = arith.mulf %619, %631 : vector<1x32xf32>
    %cst_188 = arith.constant dense<0.000000e+00> : vector<1x1xf32>
    %638 = tpu.matmul %543, %637, %cst_188 {dimension_numbers = #tpu.dot_dimension_numbers<[1], [1], [0], [0], [0, 0, 1, 0], [], []>} : vector<1x32xf32>, vector<1x32xf32>, vector<1x1xf32> -> vector<1x1xf32>
    %cst_189 = arith.constant 2.500000e-01 : f32
    %639 = vector.broadcast %cst_189 : f32 to vector<1x1xf32>
    %640 = arith.mulf %638, %639 : vector<1x1xf32>
    %cst_190 = arith.constant dense<0xFF800000> : vector<1xf32>
    %641 = vector.multi_reduction <maximumf>, %636, %cst_190 [1] : vector<1x4xf32> to vector<1xf32>
    %642 = vector.shape_cast %641 : vector<1xf32> to vector<1x1xf32>
    %643 = arith.maximumf %642, %640 : vector<1x1xf32>
    %644 = vector.broadcast %643 : vector<1x1xf32> to vector<1x4xf32>
    %645 = arith.subf %636, %644 : vector<1x4xf32>
    %646 = math.exp %645 : vector<1x4xf32>
    %647 = arith.subf %640, %643 : vector<1x1xf32>
    %648 = math.exp %647 : vector<1x1xf32>
    %cst_191 = arith.constant dense<0.000000e+00> : vector<1xf32>
    %649 = vector.multi_reduction <add>, %646, %cst_191 [1] : vector<1x4xf32> to vector<1xf32>
    %650 = vector.shape_cast %649 : vector<1xf32> to vector<1x1xf32>
    %651 = arith.addf %650, %648 : vector<1x1xf32>
    %652 = tpu.reciprocal %651 {approx = true} : vector<1x1xf32> -> vector<1x1xf32>
    %653 = vector.broadcast %631 : vector<1x32xf32> to vector<4x32xf32>
    %654 = arith.mulf %618, %653 : vector<4x32xf32>
    %cst_192 = arith.constant dense<0.000000e+00> : vector<1x32xf32>
    %655 = tpu.matmul %646, %654, %cst_192 {dimension_numbers = #tpu.dot_dimension_numbers<[1], [0], [0], [1], [0, 0, 1, 1], [], []>} : vector<1x4xf32>, vector<4x32xf32>, vector<1x32xf32> -> vector<1x32xf32>
    %656 = arith.mulf %620, %631 : vector<1x32xf32>
    %657 = vector.broadcast %648 : vector<1x1xf32> to vector<1x32xf32>
    %658 = arith.mulf %657, %656 : vector<1x32xf32>
    %659 = arith.addf %655, %658 : vector<1x32xf32>
    %660 = vector.broadcast %652 : vector<1x1xf32> to vector<1x32xf32>
    %661 = arith.mulf %659, %660 : vector<1x32xf32>
    %662 = arith.addf %624, %661 : vector<1x32xf32>
    %c16_i32_193 = arith.constant 16 : i32
    %663 = vector.broadcast %c16_i32_193 : i32 to vector<1x32xi32>
    %664 = arith.cmpi sge, %623, %663 : vector<1x32xi32>
    %c32_i32_194 = arith.constant 32 : i32
    %665 = vector.broadcast %c32_i32_194 : i32 to vector<1x32xi32>
    %666 = arith.cmpi slt, %623, %665 : vector<1x32xi32>
    %667 = arith.andi %664, %666 : vector<1x32xi1>
    %668 = arith.extui %667 : vector<1x32xi1> to vector<1x32xi32>
    %669 = arith.sitofp %668 : vector<1x32xi32> to vector<1x32xf32>
    %670 = vector.broadcast %669 : vector<1x32xf32> to vector<4x32xf32>
    %671 = arith.mulf %617, %670 : vector<4x32xf32>
    %cst_195 = arith.constant dense<0.000000e+00> : vector<1x4xf32>
    %672 = tpu.matmul %543, %671, %cst_195 {dimension_numbers = #tpu.dot_dimension_numbers<[1], [1], [0], [0], [0, 0, 1, 0], [], []>} : vector<1x32xf32>, vector<4x32xf32>, vector<1x4xf32> -> vector<1x4xf32>
    %cst_196 = arith.constant 2.500000e-01 : f32
    %673 = vector.broadcast %cst_196 : f32 to vector<1x4xf32>
    %674 = arith.mulf %672, %673 : vector<1x4xf32>
    %675 = arith.mulf %619, %669 : vector<1x32xf32>
    %cst_197 = arith.constant dense<0.000000e+00> : vector<1x1xf32>
    %676 = tpu.matmul %543, %675, %cst_197 {dimension_numbers = #tpu.dot_dimension_numbers<[1], [1], [0], [0], [0, 0, 1, 0], [], []>} : vector<1x32xf32>, vector<1x32xf32>, vector<1x1xf32> -> vector<1x1xf32>
    %cst_198 = arith.constant 2.500000e-01 : f32
    %677 = vector.broadcast %cst_198 : f32 to vector<1x1xf32>
    %678 = arith.mulf %676, %677 : vector<1x1xf32>
    %cst_199 = arith.constant dense<0xFF800000> : vector<1xf32>
    %679 = vector.multi_reduction <maximumf>, %674, %cst_199 [1] : vector<1x4xf32> to vector<1xf32>
    %680 = vector.shape_cast %679 : vector<1xf32> to vector<1x1xf32>
    %681 = arith.maximumf %680, %678 : vector<1x1xf32>
    %682 = vector.broadcast %681 : vector<1x1xf32> to vector<1x4xf32>
    %683 = arith.subf %674, %682 : vector<1x4xf32>
    %684 = math.exp %683 : vector<1x4xf32>
    %685 = arith.subf %678, %681 : vector<1x1xf32>
    %686 = math.exp %685 : vector<1x1xf32>
    %cst_200 = arith.constant dense<0.000000e+00> : vector<1xf32>
    %687 = vector.multi_reduction <add>, %684, %cst_200 [1] : vector<1x4xf32> to vector<1xf32>
    %688 = vector.shape_cast %687 : vector<1xf32> to vector<1x1xf32>
    %689 = arith.addf %688, %686 : vector<1x1xf32>
    %690 = tpu.reciprocal %689 {approx = true} : vector<1x1xf32> -> vector<1x1xf32>
    %691 = vector.broadcast %669 : vector<1x32xf32> to vector<4x32xf32>
    %692 = arith.mulf %618, %691 : vector<4x32xf32>
    %cst_201 = arith.constant dense<0.000000e+00> : vector<1x32xf32>
    %693 = tpu.matmul %684, %692, %cst_201 {dimension_numbers = #tpu.dot_dimension_numbers<[1], [0], [0], [1], [0, 0, 1, 1], [], []>} : vector<1x4xf32>, vector<4x32xf32>, vector<1x32xf32> -> vector<1x32xf32>
    %694 = arith.mulf %620, %669 : vector<1x32xf32>
    %695 = vector.broadcast %686 : vector<1x1xf32> to vector<1x32xf32>
    %696 = arith.mulf %695, %694 : vector<1x32xf32>
    %697 = arith.addf %693, %696 : vector<1x32xf32>
    %698 = vector.broadcast %690 : vector<1x1xf32> to vector<1x32xf32>
    %699 = arith.mulf %697, %698 : vector<1x32xf32>
    %700 = arith.addf %662, %699 : vector<1x32xf32>
    %701 = arith.truncf %700 : vector<1x32xf32> to vector<1x32xbf16>
    %702 = arith.truncf %621 : vector<32x32xf32> to vector<32x32xbf16>
    %cst_202 = arith.constant dense<0.000000e+00> : vector<1x32xf32>
    %703 = tpu.matmul %701, %702, %cst_202 {dimension_numbers = #tpu.dot_dimension_numbers<[1], [0], [0], [1], [0, 0, 1, 1], [], []>} : vector<1x32xbf16>, vector<32x32xbf16>, vector<1x32xf32> -> vector<1x32xf32>
    %704 = arith.addf %703, %622 : vector<1x32xf32>
    %705 = arith.addf %704, %490 : vector<1x32xf32>
    %c0_203 = arith.constant 0 : index
    %c0_204 = arith.constant 0 : index
    %706 = vector.load %arg44[%c0_203, %c0_204] : memref<1x32xf32, #tpu.memory_space<vmem>>, vector<1x32xf32>
    %c0_205 = arith.constant 0 : index
    %c0_206 = arith.constant 0 : index
    %707 = vector.load %arg45[%c0_205, %c0_206] : memref<1x32xf32, #tpu.memory_space<vmem>>, vector<1x32xf32>
    %c0_207 = arith.constant 0 : index
    %c0_208 = arith.constant 0 : index
    %708 = vector.load %arg46[%c0_207, %c0_208] : memref<32x128xf32, #tpu.memory_space<vmem>>, vector<32x128xf32>
    %c0_209 = arith.constant 0 : index
    %c0_210 = arith.constant 0 : index
    %709 = vector.load %arg47[%c0_209, %c0_210] : memref<1x128xf32, #tpu.memory_space<vmem>>, vector<1x128xf32>
    %c0_211 = arith.constant 0 : index
    %c0_212 = arith.constant 0 : index
    %710 = vector.load %arg48[%c0_211, %c0_212] : memref<128x32xf32, #tpu.memory_space<vmem>>, vector<128x32xf32>
    %c0_213 = arith.constant 0 : index
    %c0_214 = arith.constant 0 : index
    %711 = vector.load %arg49[%c0_213, %c0_214] : memref<1x32xf32, #tpu.memory_space<vmem>>, vector<1x32xf32>
    %cst_215 = arith.constant dense<0.000000e+00> : vector<1xf32>
    %712 = vector.multi_reduction <add>, %705, %cst_215 [1] : vector<1x32xf32> to vector<1xf32>
    %713 = vector.shape_cast %712 : vector<1xf32> to vector<1x1xf32>
    %cst_216 = arith.constant 3.200000e+01 : f32
    %714 = vector.broadcast %cst_216 : f32 to vector<1x1xf32>
    %715 = arith.divf %713, %714 : vector<1x1xf32>
    %716 = vector.broadcast %715 : vector<1x1xf32> to vector<1x32xf32>
    %717 = arith.subf %705, %716 : vector<1x32xf32>
    %718 = arith.mulf %717, %717 : vector<1x32xf32>
    %cst_217 = arith.constant dense<0.000000e+00> : vector<1xf32>
    %719 = vector.multi_reduction <add>, %718, %cst_217 [1] : vector<1x32xf32> to vector<1xf32>
    %720 = vector.shape_cast %719 : vector<1xf32> to vector<1x1xf32>
    %cst_218 = arith.constant 3.200000e+01 : f32
    %721 = vector.broadcast %cst_218 : f32 to vector<1x1xf32>
    %722 = arith.divf %720, %721 : vector<1x1xf32>
    %cst_219 = arith.constant 9.99999997E-7 : f32
    %723 = vector.broadcast %cst_219 : f32 to vector<1x1xf32>
    %724 = arith.addf %722, %723 : vector<1x1xf32>
    %725 = math.rsqrt %724 : vector<1x1xf32>
    %726 = vector.broadcast %725 : vector<1x1xf32> to vector<1x32xf32>
    %727 = arith.mulf %717, %726 : vector<1x32xf32>
    %728 = arith.mulf %727, %706 : vector<1x32xf32>
    %729 = arith.addf %728, %707 : vector<1x32xf32>
    %730 = arith.truncf %729 : vector<1x32xf32> to vector<1x32xbf16>
    %731 = arith.truncf %708 : vector<32x128xf32> to vector<32x128xbf16>
    %cst_220 = arith.constant dense<0.000000e+00> : vector<1x128xf32>
    %732 = tpu.matmul %730, %731, %cst_220 {dimension_numbers = #tpu.dot_dimension_numbers<[1], [0], [0], [1], [0, 0, 1, 1], [], []>} : vector<1x32xbf16>, vector<32x128xbf16>, vector<1x128xf32> -> vector<1x128xf32>
    %733 = arith.addf %732, %709 : vector<1x128xf32>
    %cst_221 = arith.constant 5.000000e-01 : f32
    %734 = vector.broadcast %cst_221 : f32 to vector<1x128xf32>
    %735 = arith.mulf %734, %733 : vector<1x128xf32>
    %cst_222 = arith.constant 0.707106769 : f32
    %736 = vector.broadcast %cst_222 : f32 to vector<1x128xf32>
    %737 = arith.mulf %733, %736 : vector<1x128xf32>
    %738 = math.erf %737 : vector<1x128xf32>
    %cst_223 = arith.constant 1.000000e+00 : f32
    %739 = vector.broadcast %cst_223 : f32 to vector<1x128xf32>
    %740 = arith.addf %739, %738 : vector<1x128xf32>
    %741 = arith.mulf %735, %740 : vector<1x128xf32>
    %742 = arith.truncf %741 : vector<1x128xf32> to vector<1x128xbf16>
    %743 = arith.truncf %710 : vector<128x32xf32> to vector<128x32xbf16>
    %cst_224 = arith.constant dense<0.000000e+00> : vector<1x32xf32>
    %744 = tpu.matmul %742, %743, %cst_224 {dimension_numbers = #tpu.dot_dimension_numbers<[1], [0], [0], [1], [0, 0, 1, 1], [], []>} : vector<1x128xbf16>, vector<128x32xbf16>, vector<1x32xf32> -> vector<1x32xf32>
    %745 = arith.addf %705, %744 : vector<1x32xf32>
    %746 = arith.addf %745, %711 : vector<1x32xf32>
    %c0_225 = arith.constant 0 : index
    %c0_226 = arith.constant 0 : index
    %747 = vector.load %arg8[%c0_225, %c0_226] : memref<1x32xf32, #tpu.memory_space<vmem>>, vector<1x32xf32>
    %c0_227 = arith.constant 0 : index
    %c0_228 = arith.constant 0 : index
    %748 = vector.load %arg9[%c0_227, %c0_228] : memref<1x32xf32, #tpu.memory_space<vmem>>, vector<1x32xf32>
    %cst_229 = arith.constant dense<0.000000e+00> : vector<1xf32>
    %749 = vector.multi_reduction <add>, %746, %cst_229 [1] : vector<1x32xf32> to vector<1xf32>
    %750 = vector.shape_cast %749 : vector<1xf32> to vector<1x1xf32>
    %cst_230 = arith.constant 3.200000e+01 : f32
    %751 = vector.broadcast %cst_230 : f32 to vector<1x1xf32>
    %752 = arith.divf %750, %751 : vector<1x1xf32>
    %753 = vector.broadcast %752 : vector<1x1xf32> to vector<1x32xf32>
    %754 = arith.subf %746, %753 : vector<1x32xf32>
    %755 = arith.mulf %754, %754 : vector<1x32xf32>
    %cst_231 = arith.constant dense<0.000000e+00> : vector<1xf32>
    %756 = vector.multi_reduction <add>, %755, %cst_231 [1] : vector<1x32xf32> to vector<1xf32>
    %757 = vector.shape_cast %756 : vector<1xf32> to vector<1x1xf32>
    %cst_232 = arith.constant 3.200000e+01 : f32
    %758 = vector.broadcast %cst_232 : f32 to vector<1x1xf32>
    %759 = arith.divf %757, %758 : vector<1x1xf32>
    %cst_233 = arith.constant 9.99999997E-7 : f32
    %760 = vector.broadcast %cst_233 : f32 to vector<1x1xf32>
    %761 = arith.addf %759, %760 : vector<1x1xf32>
    %762 = math.rsqrt %761 : vector<1x1xf32>
    %763 = vector.broadcast %762 : vector<1x1xf32> to vector<1x32xf32>
    %764 = arith.mulf %754, %763 : vector<1x32xf32>
    %765 = arith.mulf %764, %747 : vector<1x32xf32>
    %766 = arith.addf %765, %748 : vector<1x32xf32>
    %c0_234 = arith.constant 0 : index
    %c0_235 = arith.constant 0 : index
    %767 = vector.load %arg10[%c0_234, %c0_235] : memref<32x10xf32, #tpu.memory_space<vmem>>, vector<32x10xf32>
    %cst_236 = arith.constant dense<0.000000e+00> : vector<1x10xf32>
    %768 = tpu.matmul %766, %767, %cst_236 {dimension_numbers = #tpu.dot_dimension_numbers<[1], [0], [0], [1], [0, 0, 1, 1], [], []>} : vector<1x32xf32>, vector<32x10xf32>, vector<1x10xf32> -> vector<1x10xf32>
    %c0_237 = arith.constant 0 : index
    %c0_238 = arith.constant 0 : index
    %769 = vector.load %arg11[%c0_237, %c0_238] : memref<1x10xf32, #tpu.memory_space<vmem>>, vector<1x10xf32>
    %770 = arith.addf %768, %769 : vector<1x10xf32>
    %c0_239 = arith.constant 0 : index
    %c0_240 = arith.constant 0 : index
    %c0_241 = arith.constant 0 : index
    %771 = vector.load %arg50[%c0_239, %c0_240, %c0_241] : memref<1x1x10xf32, #tpu.memory_space<vmem>>, vector<1x1x10xf32>
    %772 = vector.shape_cast %771 : vector<1x1x10xf32> to vector<1x10xf32>
    %773 = vector.shape_cast %770 : vector<1x10xf32> to vector<1x1x10xf32>
    tpu.vector_store %arg50[%c0_239, %c0_240, %c0_241], %773 {strides = array<i32>} : memref<1x1x10xf32, #tpu.memory_space<vmem>>, vector<1x1x10xf32>,
    return
  }
  func.func @transform_0(%arg0: i32) -> (i32, i32, i32) {
    %c0_i32 = arith.constant 0 : i32
    %c0_i32_0 = arith.constant 0 : i32
    %c0_i32_1 = arith.constant 0 : i32
    return %arg0, %c0_i32, %c0_i32_0 : i32, i32, i32
  }
  func.func @transform_1(%arg0: i32) -> (i32, i32) {
    %c0_i32 = arith.constant 0 : i32
    %c0_i32_0 = arith.constant 0 : i32
    %c0_i32_1 = arith.constant 0 : i32
    return %c0_i32, %c0_i32_0 : i32, i32
  }
  func.func @transform_2(%arg0: i32) -> (i32, i32) {
    %c0_i32 = arith.constant 0 : i32
    %c0_i32_0 = arith.constant 0 : i32
    %c0_i32_1 = arith.constant 0 : i32
    return %c0_i32, %c0_i32_0 : i32, i32
  }
  func.func @transform_3(%arg0: i32) -> (i32, i32) {
    %c0_i32 = arith.constant 0 : i32
    %c0_i32_0 = arith.constant 0 : i32
    %c0_i32_1 = arith.constant 0 : i32
    return %c0_i32, %c0_i32_0 : i32, i32
  }
  func.func @transform_4(%arg0: i32) -> (i32, i32) {
    %c0_i32 = arith.constant 0 : i32
    %c0_i32_0 = arith.constant 0 : i32
    %c0_i32_1 = arith.constant 0 : i32
    return %c0_i32, %c0_i32_0 : i32, i32
  }
  func.func @transform_5(%arg0: i32) -> (i32, i32) {
    %c0_i32 = arith.constant 0 : i32
    %c0_i32_0 = arith.constant 0 : i32
    %c0_i32_1 = arith.constant 0 : i32
    return %c0_i32, %c0_i32_0 : i32, i32
  }
  func.func @transform_6(%arg0: i32) -> (i32, i32) {
    %c0_i32 = arith.constant 0 : i32
    %c0_i32_0 = arith.constant 0 : i32
    %c0_i32_1 = arith.constant 0 : i32
    return %c0_i32, %c0_i32_0 : i32, i32
  }
  func.func @transform_7(%arg0: i32) -> (i32, i32) {
    %c0_i32 = arith.constant 0 : i32
    %c0_i32_0 = arith.constant 0 : i32
    %c0_i32_1 = arith.constant 0 : i32
    return %c0_i32, %c0_i32_0 : i32, i32
  }
  func.func @transform_8(%arg0: i32) -> (i32, i32) {
    %c0_i32 = arith.constant 0 : i32
    %c0_i32_0 = arith.constant 0 : i32
    %c0_i32_1 = arith.constant 0 : i32
    return %c0_i32, %c0_i32_0 : i32, i32
  }
  func.func @transform_9(%arg0: i32) -> (i32, i32) {
    %c0_i32 = arith.constant 0 : i32
    %c0_i32_0 = arith.constant 0 : i32
    %c0_i32_1 = arith.constant 0 : i32
    return %c0_i32, %c0_i32_0 : i32, i32
  }
  func.func @transform_10(%arg0: i32) -> (i32, i32) {
    %c0_i32 = arith.constant 0 : i32
    %c0_i32_0 = arith.constant 0 : i32
    %c0_i32_1 = arith.constant 0 : i32
    return %c0_i32, %c0_i32_0 : i32, i32
  }
  func.func @transform_11(%arg0: i32) -> (i32, i32) {
    %c0_i32 = arith.constant 0 : i32
    %c0_i32_0 = arith.constant 0 : i32
    %c0_i32_1 = arith.constant 0 : i32
    return %c0_i32, %c0_i32_0 : i32, i32
  }
  func.func @transform_12(%arg0: i32) -> (i32, i32) {
    %c0_i32 = arith.constant 0 : i32
    %c0_i32_0 = arith.constant 0 : i32
    %c0_i32_1 = arith.constant 0 : i32
    return %c0_i32, %c0_i32_0 : i32, i32
  }
  func.func @transform_13(%arg0: i32) -> (i32, i32) {
    %c0_i32 = arith.constant 0 : i32
    %c0_i32_0 = arith.constant 0 : i32
    %c0_i32_1 = arith.constant 0 : i32
    return %c0_i32, %c0_i32_0 : i32, i32
  }
  func.func @transform_14(%arg0: i32) -> (i32, i32) {
    %c0_i32 = arith.constant 0 : i32
    %c0_i32_0 = arith.constant 0 : i32
    %c0_i32_1 = arith.constant 0 : i32
    return %c0_i32, %c0_i32_0 : i32, i32
  }
  func.func @transform_15(%arg0: i32) -> (i32, i32) {
    %c0_i32 = arith.constant 0 : i32
    %c0_i32_0 = arith.constant 0 : i32
    %c0_i32_1 = arith.constant 0 : i32
    return %c0_i32, %c0_i32_0 : i32, i32
  }
  func.func @transform_16(%arg0: i32) -> (i32, i32) {
    %c0_i32 = arith.constant 0 : i32
    %c0_i32_0 = arith.constant 0 : i32
    %c0_i32_1 = arith.constant 0 : i32
    return %c0_i32, %c0_i32_0 : i32, i32
  }
  func.func @transform_17(%arg0: i32) -> (i32, i32) {
    %c0_i32 = arith.constant 0 : i32
    %c0_i32_0 = arith.constant 0 : i32
    %c0_i32_1 = arith.constant 0 : i32
    return %c0_i32, %c0_i32_0 : i32, i32
  }
  func.func @transform_18(%arg0: i32) -> (i32, i32) {
    %c0_i32 = arith.constant 0 : i32
    %c0_i32_0 = arith.constant 0 : i32
    %c0_i32_1 = arith.constant 0 : i32
    return %c0_i32, %c0_i32_0 : i32, i32
  }
  func.func @transform_19(%arg0: i32) -> (i32, i32) {
    %c0_i32 = arith.constant 0 : i32
    %c0_i32_0 = arith.constant 0 : i32
    %c0_i32_1 = arith.constant 0 : i32
    return %c0_i32, %c0_i32_0 : i32, i32
  }
  func.func @transform_20(%arg0: i32) -> (i32, i32) {
    %c0_i32 = arith.constant 0 : i32
    %c0_i32_0 = arith.constant 0 : i32
    %c0_i32_1 = arith.constant 0 : i32
    return %c0_i32, %c0_i32_0 : i32, i32
  }
  func.func @transform_21(%arg0: i32) -> (i32, i32) {
    %c0_i32 = arith.constant 0 : i32
    %c0_i32_0 = arith.constant 0 : i32
    %c0_i32_1 = arith.constant 0 : i32
    return %c0_i32, %c0_i32_0 : i32, i32
  }
  func.func @transform_22(%arg0: i32) -> (i32, i32) {
    %c0_i32 = arith.constant 0 : i32
    %c0_i32_0 = arith.constant 0 : i32
    %c0_i32_1 = arith.constant 0 : i32
    return %c0_i32, %c0_i32_0 : i32, i32
  }
  func.func @transform_23(%arg0: i32) -> (i32, i32) {
    %c0_i32 = arith.constant 0 : i32
    %c0_i32_0 = arith.constant 0 : i32
    %c0_i32_1 = arith.constant 0 : i32
    return %c0_i32, %c0_i32_0 : i32, i32
  }
  func.func @transform_24(%arg0: i32) -> (i32, i32) {
    %c0_i32 = arith.constant 0 : i32
    %c0_i32_0 = arith.constant 0 : i32
    %c0_i32_1 = arith.constant 0 : i32
    return %c0_i32, %c0_i32_0 : i32, i32
  }
  func.func @transform_25(%arg0: i32) -> (i32, i32) {
    %c0_i32 = arith.constant 0 : i32
    %c0_i32_0 = arith.constant 0 : i32
    %c0_i32_1 = arith.constant 0 : i32
    return %c0_i32, %c0_i32_0 : i32, i32
  }
  func.func @transform_26(%arg0: i32) -> (i32, i32) {
    %c0_i32 = arith.constant 0 : i32
    %c0_i32_0 = arith.constant 0 : i32
    %c0_i32_1 = arith.constant 0 : i32
    return %c0_i32, %c0_i32_0 : i32, i32
  }
  func.func @transform_27(%arg0: i32) -> (i32, i32) {
    %c0_i32 = arith.constant 0 : i32
    %c0_i32_0 = arith.constant 0 : i32
    %c0_i32_1 = arith.constant 0 : i32
    return %c0_i32, %c0_i32_0 : i32, i32
  }
  func.func @transform_28(%arg0: i32) -> (i32, i32) {
    %c0_i32 = arith.constant 0 : i32
    %c0_i32_0 = arith.constant 0 : i32
    %c0_i32_1 = arith.constant 0 : i32
    return %c0_i32, %c0_i32_0 : i32, i32
  }
  func.func @transform_29(%arg0: i32) -> (i32, i32) {
    %c0_i32 = arith.constant 0 : i32
    %c0_i32_0 = arith.constant 0 : i32
    %c0_i32_1 = arith.constant 0 : i32
    return %c0_i32, %c0_i32_0 : i32, i32
  }
  func.func @transform_30(%arg0: i32) -> (i32, i32) {
    %c0_i32 = arith.constant 0 : i32
    %c0_i32_0 = arith.constant 0 : i32
    %c0_i32_1 = arith.constant 0 : i32
    return %c0_i32, %c0_i32_0 : i32, i32
  }
  func.func @transform_31(%arg0: i32) -> (i32, i32) {
    %c0_i32 = arith.constant 0 : i32
    %c0_i32_0 = arith.constant 0 : i32
    %c0_i32_1 = arith.constant 0 : i32
    return %c0_i32, %c0_i32_0 : i32, i32
  }
  func.func @transform_32(%arg0: i32) -> (i32, i32) {
    %c0_i32 = arith.constant 0 : i32
    %c0_i32_0 = arith.constant 0 : i32
    %c0_i32_1 = arith.constant 0 : i32
    return %c0_i32, %c0_i32_0 : i32, i32
  }
  func.func @transform_33(%arg0: i32) -> (i32, i32) {
    %c0_i32 = arith.constant 0 : i32
    %c0_i32_0 = arith.constant 0 : i32
    %c0_i32_1 = arith.constant 0 : i32
    return %c0_i32, %c0_i32_0 : i32, i32
  }
  func.func @transform_34(%arg0: i32) -> (i32, i32) {
    %c0_i32 = arith.constant 0 : i32
    %c0_i32_0 = arith.constant 0 : i32
    %c0_i32_1 = arith.constant 0 : i32
    return %c0_i32, %c0_i32_0 : i32, i32
  }
  func.func @transform_35(%arg0: i32) -> (i32, i32) {
    %c0_i32 = arith.constant 0 : i32
    %c0_i32_0 = arith.constant 0 : i32
    %c0_i32_1 = arith.constant 0 : i32
    return %c0_i32, %c0_i32_0 : i32, i32
  }
  func.func @transform_36(%arg0: i32) -> (i32, i32) {
    %c0_i32 = arith.constant 0 : i32
    %c0_i32_0 = arith.constant 0 : i32
    %c0_i32_1 = arith.constant 0 : i32
    return %c0_i32, %c0_i32_0 : i32, i32
  }
  func.func @transform_37(%arg0: i32) -> (i32, i32) {
    %c0_i32 = arith.constant 0 : i32
    %c0_i32_0 = arith.constant 0 : i32
    %c0_i32_1 = arith.constant 0 : i32
    return %c0_i32, %c0_i32_0 : i32, i32
  }
  func.func @transform_38(%arg0: i32) -> (i32, i32) {
    %c0_i32 = arith.constant 0 : i32
    %c0_i32_0 = arith.constant 0 : i32
    %c0_i32_1 = arith.constant 0 : i32
    return %c0_i32, %c0_i32_0 : i32, i32
  }
  func.func @transform_39(%arg0: i32) -> (i32, i32) {
    %c0_i32 = arith.constant 0 : i32
    %c0_i32_0 = arith.constant 0 : i32
    %c0_i32_1 = arith.constant 0 : i32
    return %c0_i32, %c0_i32_0 : i32, i32
  }
  func.func @transform_40(%arg0: i32) -> (i32, i32) {
    %c0_i32 = arith.constant 0 : i32
    %c0_i32_0 = arith.constant 0 : i32
    %c0_i32_1 = arith.constant 0 : i32
    return %c0_i32, %c0_i32_0 : i32, i32
  }
  func.func @transform_41(%arg0: i32) -> (i32, i32) {
    %c0_i32 = arith.constant 0 : i32
    %c0_i32_0 = arith.constant 0 : i32
    %c0_i32_1 = arith.constant 0 : i32
    return %c0_i32, %c0_i32_0 : i32, i32
  }
  func.func @transform_42(%arg0: i32) -> (i32, i32) {
    %c0_i32 = arith.constant 0 : i32
    %c0_i32_0 = arith.constant 0 : i32
    %c0_i32_1 = arith.constant 0 : i32
    return %c0_i32, %c0_i32_0 : i32, i32
  }
  func.func @transform_43(%arg0: i32) -> (i32, i32) {
    %c0_i32 = arith.constant 0 : i32
    %c0_i32_0 = arith.constant 0 : i32
    %c0_i32_1 = arith.constant 0 : i32
    return %c0_i32, %c0_i32_0 : i32, i32
  }
  func.func @transform_44(%arg0: i32) -> (i32, i32) {
    %c0_i32 = arith.constant 0 : i32
    %c0_i32_0 = arith.constant 0 : i32
    %c0_i32_1 = arith.constant 0 : i32
    return %c0_i32, %c0_i32_0 : i32, i32
  }
  func.func @transform_45(%arg0: i32) -> (i32, i32) {
    %c0_i32 = arith.constant 0 : i32
    %c0_i32_0 = arith.constant 0 : i32
    %c0_i32_1 = arith.constant 0 : i32
    return %c0_i32, %c0_i32_0 : i32, i32
  }
  func.func @transform_46(%arg0: i32) -> (i32, i32) {
    %c0_i32 = arith.constant 0 : i32
    %c0_i32_0 = arith.constant 0 : i32
    %c0_i32_1 = arith.constant 0 : i32
    return %c0_i32, %c0_i32_0 : i32, i32
  }
  func.func @transform_47(%arg0: i32) -> (i32, i32) {
    %c0_i32 = arith.constant 0 : i32
    %c0_i32_0 = arith.constant 0 : i32
    %c0_i32_1 = arith.constant 0 : i32
    return %c0_i32, %c0_i32_0 : i32, i32
  }
  func.func @transform_48(%arg0: i32) -> (i32, i32) {
    %c0_i32 = arith.constant 0 : i32
    %c0_i32_0 = arith.constant 0 : i32
    %c0_i32_1 = arith.constant 0 : i32
    return %c0_i32, %c0_i32_0 : i32, i32
  }
  func.func @transform_49(%arg0: i32) -> (i32, i32, i32) {
    %c0_i32 = arith.constant 0 : i32
    %c0_i32_0 = arith.constant 0 : i32
    %c0_i32_1 = arith.constant 0 : i32
    return %arg0, %c0_i32, %c0_i32_0 : i32, i32, i32
  }
}

</mosaic_0001>

<llo_original>
// kernel: mvit_forward.1
$region0: #{mvit_forward.1}
  #allocation0 [shape = 'u32[]', space=smem, size = 0x4, offset = 0x4, fixed_abs, tag = 'smem constant byte address 0x4 - core index']
  #allocation1 [shape = 'u32[144,128]{1,0:T(1,128)}', space=vmem, size = 0x12000, scoped, tag = 'internal scratch']
  %s0 = inlined_call_operand.smem [shape: u32[50], index: -1, kind: input, shape index: {}]
  %s1 = sld [smem:[%s0]]
  %s2 = scalar_lea.smem %s0, 1
  %s3 = sld [smem:[%s2]]
  %s4 = scalar_lea.smem %s0, 2
  %s5 = sld [smem:[%s4]]
  %s6 = scalar_lea.smem %s0, 3
  %s7 = sld [smem:[%s6]]
  %s8 = scalar_lea.smem %s0, 4
  %s9 = sld [smem:[%s8]]
  %s10 = scalar_lea.smem %s0, 5
  %s11 = sld [smem:[%s10]]
  %s12 = scalar_lea.smem %s0, 6
  %s13 = sld [smem:[%s12]]
  %s14 = scalar_lea.smem %s0, 7
  %s15 = sld [smem:[%s14]]
  %s16 = scalar_lea.smem %s0, 8
  %s17 = sld [smem:[%s16]]
  %s18 = scalar_lea.smem %s0, 9
  %s19 = sld [smem:[%s18]]
  %s20 = scalar_lea.smem %s0, 10
  %s21 = sld [smem:[%s20]]
  %s22 = scalar_lea.smem %s0, 11
  %s23 = sld [smem:[%s22]]
  %s24 = scalar_lea.smem %s0, 12
  %s25 = sld [smem:[%s24]]
  %s26 = scalar_lea.smem %s0, 13
  %s27 = sld [smem:[%s26]]
  %s28 = scalar_lea.smem %s0, 14
  %s29 = sld [smem:[%s28]]
  %s30 = scalar_lea.smem %s0, 15
  %s31 = sld [smem:[%s30]]
  %s32 = scalar_lea.smem %s0, 16
  %s33 = sld [smem:[%s32]]
  %s34 = scalar_lea.smem %s0, 17
  %s35 = sld [smem:[%s34]]
  %s36 = scalar_lea.smem %s0, 18
  %s37 = sld [smem:[%s36]]
  %s38 = scalar_lea.smem %s0, 19
  %s39 = sld [smem:[%s38]]
  %s40 = scalar_lea.smem %s0, 20
  %s41 = sld [smem:[%s40]]
  %s42 = scalar_lea.smem %s0, 21
  %s43 = sld [smem:[%s42]]
  %s44 = scalar_lea.smem %s0, 22
  %s45 = sld [smem:[%s44]]
  %s46 = scalar_lea.smem %s0, 23
  %s47 = sld [smem:[%s46]]
  %s48 = scalar_lea.smem %s0, 24
  %s49 = sld [smem:[%s48]]
  %s50 = scalar_lea.smem %s0, 25
  %s51 = sld [smem:[%s50]]
  %s52 = scalar_lea.smem %s0, 26
  %s53 = sld [smem:[%s52]]
  %s54 = scalar_lea.smem %s0, 27
  %s55 = sld [smem:[%s54]]
  %s56 = scalar_lea.smem %s0, 28
  %s57 = sld [smem:[%s56]]
  %s58 = scalar_lea.smem %s0, 29
  %s59 = sld [smem:[%s58]]
  %s60 = scalar_lea.smem %s0, 30
  %s61 = sld [smem:[%s60]]
  %s62 = scalar_lea.smem %s0, 31
  %s63 = sld [smem:[%s62]]
  %s64 = scalar_lea.smem %s0, 32
  %s65 = sld [smem:[%s64]]
  %s66 = scalar_lea.smem %s0, 33
  %s67 = sld [smem:[%s66]]
  %s68 = scalar_lea.smem %s0, 34
  %s69 = sld [smem:[%s68]]
  %s70 = scalar_lea.smem %s0, 35
  %s71 = sld [smem:[%s70]]
  %s72 = scalar_lea.smem %s0, 36
  %s73 = sld [smem:[%s72]]
  %s74 = scalar_lea.smem %s0, 37
  %s75 = sld [smem:[%s74]]
  %s76 = scalar_lea.smem %s0, 38
  %s77 = sld [smem:[%s76]]
  %s78 = scalar_lea.smem %s0, 39
  %s79 = sld [smem:[%s78]]
  %s80 = scalar_lea.smem %s0, 40
  %s81 = sld [smem:[%s80]]
  %s82 = scalar_lea.smem %s0, 41
  %s83 = sld [smem:[%s82]]
  %s84 = scalar_lea.smem %s0, 42
  %s85 = sld [smem:[%s84]]
  %s86 = scalar_lea.smem %s0, 43
  %s87 = sld [smem:[%s86]]
  %s88 = scalar_lea.smem %s0, 44
  %s89 = sld [smem:[%s88]]
  %s90 = scalar_lea.smem %s0, 45
  %s91 = sld [smem:[%s90]]
  %s92 = scalar_lea.smem %s0, 46
  %s93 = sld [smem:[%s92]]
  %s94 = scalar_lea.smem %s0, 47
  %s95 = sld [smem:[%s94]]
  %s96 = scalar_lea.smem %s0, 48
  %s97 = sld [smem:[%s96]]
  %s98 = scalar_lea.smem %s0, 49
  %s99 = sld [smem:[%s98]]
  %s100 = sld [smem:[#allocation0]]
  $region257: #{mvit_forward.1} parent=0
    _
  %s102 = ssub.s32 1, %s100
  %s103 = scalar_select 0, %s102, %s100
  $region1: #{mvit_forward.1} parent=0
    #allocation2 [shape = 'u8[512]{0}', space=vmem, size = 0x400, scoped, tag = 'input window, operand 39, single buffered']
    #allocation3 [shape = 's32[2]{0}', space=sflag, size = 0x8, scoped, tag = 'scoped memory for mvit_forward.1']
    #allocation4 [shape = 's32[2]{0}', space=sflag, size = 0x8, scoped, tag = 'scoped memory for mvit_forward.1']
    #allocation5 [shape = 'u8[512]{0}', space=vmem, size = 0x400, scoped, tag = 'input window, operand 40, single buffered']
    #allocation6 [shape = 's32[1]{0}', space=sflag, size = 0x4, scoped, tag = 'scoped memory for mvit_forward.1']
    #allocation7 [shape = 'u8[512]{0}', space=vmem, size = 0x400, scoped, tag = 'input window, operand 42, single buffered']
    #allocation8 [shape = 'u8[512]{0}', space=vmem, size = 0x400, scoped, tag = 'input window, operand 43, single buffered']
    #allocation9 [shape = 's32[1]{0}', space=sflag, size = 0x4, scoped, tag = 'scoped memory for mvit_forward.1']
    #allocation10 [shape = 'u8[512]{0}', space=vmem, size = 0x400, scoped, tag = 'input window, operand 44, single buffered']
    #allocation11 [shape = 'u8[512]{0}', space=vmem, size = 0x400, scoped, tag = 'input window, operand 46, single buffered']
    #allocation12 [shape = 's32[1]{0}', space=sflag, size = 0x4, scoped, tag = 'scoped memory for mvit_forward.1']
    #allocation13 [shape = 'u8[512]{0}', space=vmem, size = 0x400, scoped, tag = 'input window, operand 48, single buffered']
    #allocation14 [shape = 'u8[1024]{0}', space=vmem, size = 0x400, scoped, tag = 'output window, operand 0']
    %104 = vsyncpa [#allocation3], 0
    %105 = vsyncpa [#allocation6], 0
    %106 = vsyncpa [#allocation9], 0
    %107 = vsyncpa [#allocation12], 0
    %108 = vsyncpa [#allocation4], 0
    %s109 = scalar_lea.sflag [#allocation4], 1
    %110 = vsyncpa %s109, 0
    loop: start=0, step=1, limit=4
    $region2: #{mvit_forward.1} parent=1 // loop_pre_header
      _
    $region3: #{mvit_forward.1} parent=1 // loop_header
      %s112 = sphi 0, %s116
      %p113 = scmp.ge.s32.totalorder %s112, 4
      %s122 = sphi 0, %s124
      %s125 = sphi 0, %s122
      %s126 = sphi 0, %s125
      %s142 = sphi 0, %s126
      %s146 = sphi 0, %s146
      %s148 = sphi 0, %s146
      %s149 = sphi 0, %s148
      %s163 = sphi 0, %s149
      %s167 = sphi 0, %s167
      %s169 = sphi 0, %s167
      %s170 = sphi 0, %s169
      %s184 = sphi 0, %s170
      %s188 = sphi 0, %s188
      %s190 = sphi 0, %s188
      %s191 = sphi 0, %s190
      %s205 = sphi 0, %s191
      %s209 = sphi 0, %s209
      %s211 = sphi 0, %s209
      %s212 = sphi 0, %s211
      %s226 = sphi 0, %s212
      %s230 = sphi 0, %s230
      %s232 = sphi 0, %s230
      %s233 = sphi 0, %s232
      %s247 = sphi 0, %s233
      %s251 = sphi 0, %s251
      %s253 = sphi 0, %s251
      %s254 = sphi 0, %s253
      %s268 = sphi 0, %s254
      %s272 = sphi 0, %s272
      %s274 = sphi 0, %s272
      %s275 = sphi 0, %s274
      %s289 = sphi 0, %s275
      %s293 = sphi 0, %s293
      %s295 = sphi 0, %s293
      %s296 = sphi 0, %s295
      %s310 = sphi 0, %s296
      %s314 = sphi 0, %s314
      %s316 = sphi 0, %s314
      %s317 = sphi 0, %s316
      %s331 = sphi 0, %s317
      %s335 = sphi 0, %s335
      %s337 = sphi 0, %s335
      %s338 = sphi 0, %s337
      %s352 = sphi 0, %s338
      %s356 = sphi 0, %s356
      %s358 = sphi 0, %s356
      %s359 = sphi 0, %s358
      %s373 = sphi 0, %s359
      %s377 = sphi 0, %s377
      %s379 = sphi 0, %s377
      %s380 = sphi 0, %s379
      %s394 = sphi 0, %s380
      %s398 = sphi 0, %s398
      %s400 = sphi 0, %s398
      %s401 = sphi 0, %s400
      %s415 = sphi 0, %s401
      %s419 = sphi 0, %s419
      %s421 = sphi 0, %s419
      %s422 = sphi 0, %s421
      %s436 = sphi 0, %s422
      %s440 = sphi 0, %s440
      %s442 = sphi 0, %s440
      %s443 = sphi 0, %s442
      %s457 = sphi 0, %s443
      %s461 = sphi 0, %s461
      %s463 = sphi 0, %s461
      %s464 = sphi 0, %s463
      %s478 = sphi 0, %s464
      %s482 = sphi 0, %s482
      %s484 = sphi 0, %s482
      %s485 = sphi 0, %s484
      %s499 = sphi 0, %s485
      %s503 = sphi 0, %s503
      %s505 = sphi 0, %s503
      %s506 = sphi 0, %s505
      %s520 = sphi 0, %s506
      %s524 = sphi 0, %s524
      %s526 = sphi 0, %s524
      %s527 = sphi 0, %s526
      %s541 = sphi 0, %s527
      %s545 = sphi 0, %s545
      %s547 = sphi 0, %s545
      %s548 = sphi 0, %s547
      %s562 = sphi 0, %s548
      %s566 = sphi 0, %s566
      %s568 = sphi 0, %s566
      %s569 = sphi 0, %s568
      %s583 = sphi 0, %s569
      %s587 = sphi 0, %s587
      %s589 = sphi 0, %s587
      %s590 = sphi 0, %s589
      %s604 = sphi 0, %s590
      %s608 = sphi 0, %s608
      %s610 = sphi 0, %s608
      %s611 = sphi 0, %s610
      %s625 = sphi 0, %s611
      %s629 = sphi 0, %s629
      %s631 = sphi 0, %s629
      %s632 = sphi 0, %s631
      %s646 = sphi 0, %s632
      %s650 = sphi 0, %s650
      %s652 = sphi 0, %s650
      %s653 = sphi 0, %s652
      %s667 = sphi 0, %s653
      %s671 = sphi 0, %s671
      %s673 = sphi 0, %s671
      %s674 = sphi 0, %s673
      %s688 = sphi 0, %s674
      %s692 = sphi 0, %s692
      %s694 = sphi 0, %s692
      %s695 = sphi 0, %s694
      %s709 = sphi 0, %s695
      %s713 = sphi 0, %s713
      %s715 = sphi 0, %s713
      %s716 = sphi 0, %s715
      %s730 = sphi 0, %s716
      %s734 = sphi 0, %s734
      %s736 = sphi 0, %s734
      %s737 = sphi 0, %s736
      %s751 = sphi 0, %s737
      %s755 = sphi 0, %s755
      %s757 = sphi 0, %s755
      %s758 = sphi 0, %s757
      %s772 = sphi 0, %s758
      %s776 = sphi 0, %s776
      %s778 = sphi 0, %s776
      %s779 = sphi 0, %s778
      %s793 = sphi 0, %s779
      %s797 = sphi 0, %s797
      %s799 = sphi 0, %s797
      %s800 = sphi 0, %s799
      %s814 = sphi 0, %s800
      %s818 = sphi 0, %s818
      %s820 = sphi 0, %s818
      %s821 = sphi 0, %s820
      %s835 = sphi 0, %s821
      %s839 = sphi 0, %s839
      %s841 = sphi 0, %s839
      %s842 = sphi 0, %s841
      %s856 = sphi 0, %s842
      %s860 = sphi 0, %s860
      %s862 = sphi 0, %s860
      %s863 = sphi 0, %s862
      %s877 = sphi 0, %s863
      %s881 = sphi 0, %s881
      %s883 = sphi 0, %s881
      %s884 = sphi 0, %s883
      %s898 = sphi 0, %s884
      %s902 = sphi 0, %s902
      %s904 = sphi 0, %s902
      %s905 = sphi 0, %s904
      %s919 = sphi 0, %s905
      %s923 = sphi 0, %s923
      %s925 = sphi 0, %s923
      %s926 = sphi 0, %s925
      %s940 = sphi 0, %s926
      %s944 = sphi 0, %s944
      %s946 = sphi 0, %s944
      %s947 = sphi 0, %s946
      %s961 = sphi 0, %s947
      %s965 = sphi 0, %s965
      %s967 = sphi 0, %s965
      %s968 = sphi 0, %s967
      %s982 = sphi 0, %s968
      %s986 = sphi 0, %s986
      %s988 = sphi 0, %s986
      %s989 = sphi 0, %s988
      %s1003 = sphi 0, %s989
      %s1007 = sphi 0, %s1007
      %s1009 = sphi 0, %s1007
      %s1010 = sphi 0, %s1009
      %s1024 = sphi 0, %s1010
      %s1028 = sphi 0, %s1028
      %s1030 = sphi 0, %s1028
      %s1031 = sphi 0, %s1030
      %s1045 = sphi 0, %s1031
      %s1049 = sphi 0, %s1049
      %s1051 = sphi 0, %s1049
      %s1052 = sphi 0, %s1051
      %s1066 = sphi 0, %s1052
      %s1070 = sphi 0, %s1070
      %s1072 = sphi 0, %s1070
      %s1073 = sphi 0, %s1072
      %s1087 = sphi 0, %s1073
      %s1091 = sphi 0, %s1091
      %s1093 = sphi 0, %s1091
      %s1094 = sphi 0, %s1093
      %s1108 = sphi 0, %s1094
      %s1112 = sphi 0, %s1112
      %s1114 = sphi 0, %s1112
      %s1115 = sphi 0, %s1114
      %s1129 = sphi 0, %s1115
      %s1133 = sphi 0, %s1133
      %s1135 = sphi 0, %s1133
      %s1136 = sphi 0, %s1135
      %s1150 = sphi 0, %s1136
      %s1156 = sphi 0, %s1158
      %s1159 = sphi 0, %s1156
      %s1160 = sphi 0, %s1159
      %s1176 = sphi 0, %s1160
    $region4: #{mvit_forward.1} parent=1 // loop_header_branch
      %115 = sbr.rel (%p113) target = $region8
    $region5: #{mvit_forward.1} parent=1 // loop_body
      %s117 = ssub.s32 %s112, 1
      %s118 = ssub.s32 %s112, 2
      %s119 = sadd.s32 %s112, 1
      %s120 = ssub.s32 %s112, %s119
      %p121 = scmp.eq.s32.totalorder %s120, 0
      %s123 = sadd.s32 %s122, 1
      %s124 = scalar_select %p121, %s122, %s123
      %p127 = pneg %p121
      %p128 = scmp.eq.s32.totalorder %s112, 1
      %p129 = por %p127, %p128
      %p130 = scmp.ne.s32.totalorder %s122, %s125
      %p131 = scmp.eq.s32.totalorder %s112, 0
      %p132 = por %p130, %p131
      %p133 = scmp.ne.s32.totalorder %s122, %s125
      %p134 = scmp.eq.s32.totalorder %s117, 1
      %p135 = por %p133, %p134
      %p136 = scmp.ne.s32.totalorder %s125, %s126
      %p137 = scmp.eq.s32.totalorder %s117, 0
      %p138 = por %p136, %p137
      %p139 = scmp.ne.s32.totalorder %s125, %s126
      %p140 = scmp.eq.s32.totalorder %s118, 1
      %p141 = por %p139, %p140
      %p143 = scmp.ne.s32.totalorder %s126, %s142
      %p144 = scmp.eq.s32.totalorder %s118, 0
      %p145 = por %p143, %p144
      %s147 = sadd.s32 %s146, 1
      %p150 = scmp.eq.s32.totalorder %s112, 1
      %p151 = scmp.ne.s32.totalorder %s146, %s148
      %p152 = scmp.eq.s32.totalorder %s112, 0
      %p153 = por %p151, %p152
      %p154 = scmp.ne.s32.totalorder %s146, %s148
      %p155 = scmp.eq.s32.totalorder %s117, 1
      %p156 = por %p154, %p155
      %p157 = scmp.ne.s32.totalorder %s148, %s149
      %p158 = scmp.eq.s32.totalorder %s117, 0
      %p159 = por %p157, %p158
      %p160 = scmp.ne.s32.totalorder %s148, %s149
      %p161 = scmp.eq.s32.totalorder %s118, 1
      %p162 = por %p160, %p161
      %p164 = scmp.ne.s32.totalorder %s149, %s163
      %p165 = scmp.eq.s32.totalorder %s118, 0
      %p166 = por %p164, %p165
      %s168 = sadd.s32 %s167, 1
      %p171 = scmp.eq.s32.totalorder %s112, 1
      %p172 = scmp.ne.s32.totalorder %s167, %s169
      %p173 = scmp.eq.s32.totalorder %s112, 0
      %p174 = por %p172, %p173
      %p175 = scmp.ne.s32.totalorder %s167, %s169
      %p176 = scmp.eq.s32.totalorder %s117, 1
      %p177 = por %p175, %p176
      %p178 = scmp.ne.s32.totalorder %s169, %s170
      %p179 = scmp.eq.s32.totalorder %s117, 0
      %p180 = por %p178, %p179
      %p181 = scmp.ne.s32.totalorder %s169, %s170
      %p182 = scmp.eq.s32.totalorder %s118, 1
      %p183 = por %p181, %p182
      %p185 = scmp.ne.s32.totalorder %s170, %s184
      %p186 = scmp.eq.s32.totalorder %s118, 0
      %p187 = por %p185, %p186
      %s189 = sadd.s32 %s188, 1
      %p192 = scmp.eq.s32.totalorder %s112, 1
      %p193 = scmp.ne.s32.totalorder %s188, %s190
      %p194 = scmp.eq.s32.totalorder %s112, 0
      %p195 = por %p193, %p194
      %p196 = scmp.ne.s32.totalorder %s188, %s190
      %p197 = scmp.eq.s32.totalorder %s117, 1
      %p198 = por %p196, %p197
      %p199 = scmp.ne.s32.totalorder %s190, %s191
      %p200 = scmp.eq.s32.totalorder %s117, 0
      %p201 = por %p199, %p200
      %p202 = scmp.ne.s32.totalorder %s190, %s191
      %p203 = scmp.eq.s32.totalorder %s118, 1
      %p204 = por %p202, %p203
      %p206 = scmp.ne.s32.totalorder %s191, %s205
      %p207 = scmp.eq.s32.totalorder %s118, 0
      %p208 = por %p206, %p207
      %s210 = sadd.s32 %s209, 1
      %p213 = scmp.eq.s32.totalorder %s112, 1
      %p214 = scmp.ne.s32.totalorder %s209, %s211
      %p215 = scmp.eq.s32.totalorder %s112, 0
      %p216 = por %p214, %p215
      %p217 = scmp.ne.s32.totalorder %s209, %s211
      %p218 = scmp.eq.s32.totalorder %s117, 1
      %p219 = por %p217, %p218
      %p220 = scmp.ne.s32.totalorder %s211, %s212
      %p221 = scmp.eq.s32.totalorder %s117, 0
      %p222 = por %p220, %p221
      %p223 = scmp.ne.s32.totalorder %s211, %s212
      %p224 = scmp.eq.s32.totalorder %s118, 1
      %p225 = por %p223, %p224
      %p227 = scmp.ne.s32.totalorder %s212, %s226
      %p228 = scmp.eq.s32.totalorder %s118, 0
      %p229 = por %p227, %p228
      %s231 = sadd.s32 %s230, 1
      %p234 = scmp.eq.s32.totalorder %s112, 1
      %p235 = scmp.ne.s32.totalorder %s230, %s232
      %p236 = scmp.eq.s32.totalorder %s112, 0
      %p237 = por %p235, %p236
      %p238 = scmp.ne.s32.totalorder %s230, %s232
      %p239 = scmp.eq.s32.totalorder %s117, 1
      %p240 = por %p238, %p239
      %p241 = scmp.ne.s32.totalorder %s232, %s233
      %p242 = scmp.eq.s32.totalorder %s117, 0
      %p243 = por %p241, %p242
      %p244 = scmp.ne.s32.totalorder %s232, %s233
      %p245 = scmp.eq.s32.totalorder %s118, 1
      %p246 = por %p244, %p245
      %p248 = scmp.ne.s32.totalorder %s233, %s247
      %p249 = scmp.eq.s32.totalorder %s118, 0
      %p250 = por %p248, %p249
      %s252 = sadd.s32 %s251, 1
      %p255 = scmp.eq.s32.totalorder %s112, 1
      %p256 = scmp.ne.s32.totalorder %s251, %s253
      %p257 = scmp.eq.s32.totalorder %s112, 0
      %p258 = por %p256, %p257
      %p259 = scmp.ne.s32.totalorder %s251, %s253
      %p260 = scmp.eq.s32.totalorder %s117, 1
      %p261 = por %p259, %p260
      %p262 = scmp.ne.s32.totalorder %s253, %s254
      %p263 = scmp.eq.s32.totalorder %s117, 0
      %p264 = por %p262, %p263
      %p265 = scmp.ne.s32.totalorder %s253, %s254
      %p266 = scmp.eq.s32.totalorder %s118, 1
      %p267 = por %p265, %p266
      %p269 = scmp.ne.s32.totalorder %s254, %s268
      %p270 = scmp.eq.s32.totalorder %s118, 0
      %p271 = por %p269, %p270
      %s273 = sadd.s32 %s272, 1
      %p276 = scmp.eq.s32.totalorder %s112, 1
      %p277 = scmp.ne.s32.totalorder %s272, %s274
      %p278 = scmp.eq.s32.totalorder %s112, 0
      %p279 = por %p277, %p278
      %p280 = scmp.ne.s32.totalorder %s272, %s274
      %p281 = scmp.eq.s32.totalorder %s117, 1
      %p282 = por %p280, %p281
      %p283 = scmp.ne.s32.totalorder %s274, %s275
      %p284 = scmp.eq.s32.totalorder %s117, 0
      %p285 = por %p283, %p284
      %p286 = scmp.ne.s32.totalorder %s274, %s275
      %p287 = scmp.eq.s32.totalorder %s118, 1
      %p288 = por %p286, %p287
      %p290 = scmp.ne.s32.totalorder %s275, %s289
      %p291 = scmp.eq.s32.totalorder %s118, 0
      %p292 = por %p290, %p291
      %s294 = sadd.s32 %s293, 1
      %p297 = scmp.eq.s32.totalorder %s112, 1
      %p298 = scmp.ne.s32.totalorder %s293, %s295
      %p299 = scmp.eq.s32.totalorder %s112, 0
      %p300 = por %p298, %p299
      %p301 = scmp.ne.s32.totalorder %s293, %s295
      %p302 = scmp.eq.s32.totalorder %s117, 1
      %p303 = por %p301, %p302
      %p304 = scmp.ne.s32.totalorder %s295, %s296
      %p305 = scmp.eq.s32.totalorder %s117, 0
      %p306 = por %p304, %p305
      %p307 = scmp.ne.s32.totalorder %s295, %s296
      %p308 = scmp.eq.s32.totalorder %s118, 1
      %p309 = por %p307, %p308
      %p311 = scmp.ne.s32.totalorder %s296, %s310
      %p312 = scmp.eq.s32.totalorder %s118, 0
      %p313 = por %p311, %p312
      %s315 = sadd.s32 %s314, 1
      %p318 = scmp.eq.s32.totalorder %s112, 1
      %p319 = scmp.ne.s32.totalorder %s314, %s316
      %p320 = scmp.eq.s32.totalorder %s112, 0
      %p321 = por %p319, %p320
      %p322 = scmp.ne.s32.totalorder %s314, %s316
      %p323 = scmp.eq.s32.totalorder %s117, 1
      %p324 = por %p322, %p323
      %p325 = scmp.ne.s32.totalorder %s316, %s317
      %p326 = scmp.eq.s32.totalorder %s117, 0
      %p327 = por %p325, %p326
      %p328 = scmp.ne.s32.totalorder %s316, %s317
      %p329 = scmp.eq.s32.totalorder %s118, 1
      %p330 = por %p328, %p329
      %p332 = scmp.ne.s32.totalorder %s317, %s331
      %p333 = scmp.eq.s32.totalorder %s118, 0
      %p334 = por %p332, %p333
      %s336 = sadd.s32 %s335, 1
      %p339 = scmp.eq.s32.totalorder %s112, 1
      %p340 = scmp.ne.s32.totalorder %s335, %s337
      %p341 = scmp.eq.s32.totalorder %s112, 0
      %p342 = por %p340, %p341
      %p343 = scmp.ne.s32.totalorder %s335, %s337
      %p344 = scmp.eq.s32.totalorder %s117, 1
      %p345 = por %p343, %p344
      %p346 = scmp.ne.s32.totalorder %s337, %s338
      %p347 = scmp.eq.s32.totalorder %s117, 0
      %p348 = por %p346, %p347
      %p349 = scmp.ne.s32.totalorder %s337, %s338
      %p350 = scmp.eq.s32.totalorder %s118, 1
      %p351 = por %p349, %p350
      %p353 = scmp.ne.s32.totalorder %s338, %s352
      %p354 = scmp.eq.s32.totalorder %s118, 0
      %p355 = por %p353, %p354
      %s357 = sadd.s32 %s356, 1
      %p360 = scmp.eq.s32.totalorder %s112, 1
      %p361 = scmp.ne.s32.totalorder %s356, %s358
      %p362 = scmp.eq.s32.totalorder %s112, 0
      %p363 = por %p361, %p362
      %p364 = scmp.ne.s32.totalorder %s356, %s358
      %p365 = scmp.eq.s32.totalorder %s117, 1
      %p366 = por %p364, %p365
      %p367 = scmp.ne.s32.totalorder %s358, %s359
      %p368 = scmp.eq.s32.totalorder %s117, 0
      %p369 = por %p367, %p368
      %p370 = scmp.ne.s32.totalorder %s358, %s359
      %p371 = scmp.eq.s32.totalorder %s118, 1
      %p372 = por %p370, %p371
      %p374 = scmp.ne.s32.totalorder %s359, %s373
      %p375 = scmp.eq.s32.totalorder %s118, 0
      %p376 = por %p374, %p375
      %s378 = sadd.s32 %s377, 1
      %p381 = scmp.eq.s32.totalorder %s112, 1
      %p382 = scmp.ne.s32.totalorder %s377, %s379
      %p383 = scmp.eq.s32.totalorder %s112, 0
      %p384 = por %p382, %p383
      %p385 = scmp.ne.s32.totalorder %s377, %s379
      %p386 = scmp.eq.s32.totalorder %s117, 1
      %p387 = por %p385, %p386
      %p388 = scmp.ne.s32.totalorder %s379, %s380
      %p389 = scmp.eq.s32.totalorder %s117, 0
      %p390 = por %p388, %p389
      %p391 = scmp.ne.s32.totalorder %s379, %s380
      %p392 = scmp.eq.s32.totalorder %s118, 1
      %p393 = por %p391, %p392
      %p395 = scmp.ne.s32.totalorder %s380, %s394
      %p396 = scmp.eq.s32.totalorder %s118, 0
      %p397 = por %p395, %p396
      %s399 = sadd.s32 %s398, 1
      %p402 = scmp.eq.s32.totalorder %s112, 1
      %p403 = scmp.ne.s32.totalorder %s398, %s400
      %p404 = scmp.eq.s32.totalorder %s112, 0
      %p405 = por %p403, %p404
      %p406 = scmp.ne.s32.totalorder %s398, %s400
      %p407 = scmp.eq.s32.totalorder %s117, 1
      %p408 = por %p406, %p407
      %p409 = scmp.ne.s32.totalorder %s400, %s401
      %p410 = scmp.eq.s32.totalorder %s117, 0
      %p411 = por %p409, %p410
      %p412 = scmp.ne.s32.totalorder %s400, %s401
      %p413 = scmp.eq.s32.totalorder %s118, 1
      %p414 = por %p412, %p413
      %p416 = scmp.ne.s32.totalorder %s401, %s415
      %p417 = scmp.eq.s32.totalorder %s118, 0
      %p418 = por %p416, %p417
      %s420 = sadd.s32 %s419, 1
      %p423 = scmp.eq.s32.totalorder %s112, 1
      %p424 = scmp.ne.s32.totalorder %s419, %s421
      %p425 = scmp.eq.s32.totalorder %s112, 0
      %p426 = por %p424, %p425
      %p427 = scmp.ne.s32.totalorder %s419, %s421
      %p428 = scmp.eq.s32.totalorder %s117, 1
      %p429 = por %p427, %p428
      %p430 = scmp.ne.s32.totalorder %s421, %s422
      %p431 = scmp.eq.s32.totalorder %s117, 0
      %p432 = por %p430, %p431
      %p433 = scmp.ne.s32.totalorder %s421, %s422
      %p434 = scmp.eq.s32.totalorder %s118, 1
      %p435 = por %p433, %p434
      %p437 = scmp.ne.s32.totalorder %s422, %s436
      %p438 = scmp.eq.s32.totalorder %s118, 0
      %p439 = por %p437, %p438
      %s441 = sadd.s32 %s440, 1
      %p444 = scmp.eq.s32.totalorder %s112, 1
      %p445 = scmp.ne.s32.totalorder %s440, %s442
      %p446 = scmp.eq.s32.totalorder %s112, 0
      %p447 = por %p445, %p446
      %p448 = scmp.ne.s32.totalorder %s440, %s442
      %p449 = scmp.eq.s32.totalorder %s117, 1
      %p450 = por %p448, %p449
      %p451 = scmp.ne.s32.totalorder %s442, %s443
      %p452 = scmp.eq.s32.totalorder %s117, 0
      %p453 = por %p451, %p452
      %p454 = scmp.ne.s32.totalorder %s442, %s443
      %p455 = scmp.eq.s32.totalorder %s118, 1
      %p456 = por %p454, %p455
      %p458 = scmp.ne.s32.totalorder %s443, %s457
      %p459 = scmp.eq.s32.totalorder %s118, 0
      %p460 = por %p458, %p459
      %s462 = sadd.s32 %s461, 1
      %p465 = scmp.eq.s32.totalorder %s112, 1
      %p466 = scmp.ne.s32.totalorder %s461, %s463
      %p467 = scmp.eq.s32.totalorder %s112, 0
      %p468 = por %p466, %p467
      %p469 = scmp.ne.s32.totalorder %s461, %s463
      %p470 = scmp.eq.s32.totalorder %s117, 1
      %p471 = por %p469, %p470
      %p472 = scmp.ne.s32.totalorder %s463, %s464
      %p473 = scmp.eq.s32.totalorder %s117, 0
      %p474 = por %p472, %p473
      %p475 = scmp.ne.s32.totalorder %s463, %s464
      %p476 = scmp.eq.s32.totalorder %s118, 1
      %p477 = por %p475, %p476
      %p479 = scmp.ne.s32.totalorder %s464, %s478
      %p480 = scmp.eq.s32.totalorder %s118, 0
      %p481 = por %p479, %p480
      %s483 = sadd.s32 %s482, 1
      %p486 = scmp.eq.s32.totalorder %s112, 1
      %p487 = scmp.ne.s32.totalorder %s482, %s484
      %p488 = scmp.eq.s32.totalorder %s112, 0
      %p489 = por %p487, %p488
      %p490 = scmp.ne.s32.totalorder %s482, %s484
      %p491 = scmp.eq.s32.totalorder %s117, 1
      %p492 = por %p490, %p491
      %p493 = scmp.ne.s32.totalorder %s484, %s485
      %p494 = scmp.eq.s32.totalorder %s117, 0
      %p495 = por %p493, %p494
      %p496 = scmp.ne.s32.totalorder %s484, %s485
      %p497 = scmp.eq.s32.totalorder %s118, 1
      %p498 = por %p496, %p497
      %p500 = scmp.ne.s32.totalorder %s485, %s499
      %p501 = scmp.eq.s32.totalorder %s118, 0
      %p502 = por %p500, %p501
      %s504 = sadd.s32 %s503, 1
      %p507 = scmp.eq.s32.totalorder %s112, 1
      %p508 = scmp.ne.s32.totalorder %s503, %s505
      %p509 = scmp.eq.s32.totalorder %s112, 0
      %p510 = por %p508, %p509
      %p511 = scmp.ne.s32.totalorder %s503, %s505
      %p512 = scmp.eq.s32.totalorder %s117, 1
      %p513 = por %p511, %p512
      %p514 = scmp.ne.s32.totalorder %s505, %s506
      %p515 = scmp.eq.s32.totalorder %s117, 0
      %p516 = por %p514, %p515
      %p517 = scmp.ne.s32.totalorder %s505, %s506
      %p518 = scmp.eq.s32.totalorder %s118, 1
      %p519 = por %p517, %p518
      %p521 = scmp.ne.s32.totalorder %s506, %s520
      %p522 = scmp.eq.s32.totalorder %s118, 0
      %p523 = por %p521, %p522
      %s525 = sadd.s32 %s524, 1
      %p528 = scmp.eq.s32.totalorder %s112, 1
      %p529 = scmp.ne.s32.totalorder %s524, %s526
      %p530 = scmp.eq.s32.totalorder %s112, 0
      %p531 = por %p529, %p530
      %p532 = scmp.ne.s32.totalorder %s524, %s526
      %p533 = scmp.eq.s32.totalorder %s117, 1
      %p534 = por %p532, %p533
      %p535 = scmp.ne.s32.totalorder %s526, %s527
      %p536 = scmp.eq.s32.totalorder %s117, 0
      %p537 = por %p535, %p536
      %p538 = scmp.ne.s32.totalorder %s526, %s527
      %p539 = scmp.eq.s32.totalorder %s118, 1
      %p540 = por %p538, %p539
      %p542 = scmp.ne.s32.totalorder %s527, %s541
      %p543 = scmp.eq.s32.totalorder %s118, 0
      %p544 = por %p542, %p543
      %s546 = sadd.s32 %s545, 1
      %p549 = scmp.eq.s32.totalorder %s112, 1
      %p550 = scmp.ne.s32.totalorder %s545, %s547
      %p551 = scmp.eq.s32.totalorder %s112, 0
      %p552 = por %p550, %p551
      %p553 = scmp.ne.s32.totalorder %s545, %s547
      %p554 = scmp.eq.s32.totalorder %s117, 1
      %p555 = por %p553, %p554
      %p556 = scmp.ne.s32.totalorder %s547, %s548
      %p557 = scmp.eq.s32.totalorder %s117, 0
      %p558 = por %p556, %p557
      %p559 = scmp.ne.s32.totalorder %s547, %s548
      %p560 = scmp.eq.s32.totalorder %s118, 1
      %p561 = por %p559, %p560
      %p563 = scmp.ne.s32.totalorder %s548, %s562
      %p564 = scmp.eq.s32.totalorder %s118, 0
      %p565 = por %p563, %p564
      %s567 = sadd.s32 %s566, 1
      %p570 = scmp.eq.s32.totalorder %s112, 1
      %p571 = scmp.ne.s32.totalorder %s566, %s568
      %p572 = scmp.eq.s32.totalorder %s112, 0
      %p573 = por %p571, %p572
      %p574 = scmp.ne.s32.totalorder %s566, %s568
      %p575 = scmp.eq.s32.totalorder %s117, 1
      %p576 = por %p574, %p575
      %p577 = scmp.ne.s32.totalorder %s568, %s569
      %p578 = scmp.eq.s32.totalorder %s117, 0
      %p579 = por %p577, %p578
      %p580 = scmp.ne.s32.totalorder %s568, %s569
      %p581 = scmp.eq.s32.totalorder %s118, 1
      %p582 = por %p580, %p581
      %p584 = scmp.ne.s32.totalorder %s569, %s583
      %p585 = scmp.eq.s32.totalorder %s118, 0
      %p586 = por %p584, %p585
      %s588 = sadd.s32 %s587, 1
      %p591 = scmp.eq.s32.totalorder %s112, 1
      %p592 = scmp.ne.s32.totalorder %s587, %s589
      %p593 = scmp.eq.s32.totalorder %s112, 0
      %p594 = por %p592, %p593
      %p595 = scmp.ne.s32.totalorder %s587, %s589
      %p596 = scmp.eq.s32.totalorder %s117, 1
      %p597 = por %p595, %p596
      %p598 = scmp.ne.s32.totalorder %s589, %s590
      %p599 = scmp.eq.s32.totalorder %s117, 0
      %p600 = por %p598, %p599
      %p601 = scmp.ne.s32.totalorder %s589, %s590
      %p602 = scmp.eq.s32.totalorder %s118, 1
      %p603 = por %p601, %p602
      %p605 = scmp.ne.s32.totalorder %s590, %s604
      %p606 = scmp.eq.s32.totalorder %s118, 0
      %p607 = por %p605, %p606
      %s609 = sadd.s32 %s608, 1
      %p612 = scmp.eq.s32.totalorder %s112, 1
      %p613 = scmp.ne.s32.totalorder %s608, %s610
      %p614 = scmp.eq.s32.totalorder %s112, 0
      %p615 = por %p613, %p614
      %p616 = scmp.ne.s32.totalorder %s608, %s610
      %p617 = scmp.eq.s32.totalorder %s117, 1
      %p618 = por %p616, %p617
      %p619 = scmp.ne.s32.totalorder %s610, %s611
      %p620 = scmp.eq.s32.totalorder %s117, 0
      %p621 = por %p619, %p620
      %p622 = scmp.ne.s32.totalorder %s610, %s611
      %p623 = scmp.eq.s32.totalorder %s118, 1
      %p624 = por %p622, %p623
      %p626 = scmp.ne.s32.totalorder %s611, %s625
      %p627 = scmp.eq.s32.totalorder %s118, 0
      %p628 = por %p626, %p627
      %s630 = sadd.s32 %s629, 1
      %p633 = scmp.eq.s32.totalorder %s112, 1
      %p634 = scmp.ne.s32.totalorder %s629, %s631
      %p635 = scmp.eq.s32.totalorder %s112, 0
      %p636 = por %p634, %p635
      %p637 = scmp.ne.s32.totalorder %s629, %s631
      %p638 = scmp.eq.s32.totalorder %s117, 1
      %p639 = por %p637, %p638
      %p640 = scmp.ne.s32.totalorder %s631, %s632
      %p641 = scmp.eq.s32.totalorder %s117, 0
      %p642 = por %p640, %p641
      %p643 = scmp.ne.s32.totalorder %s631, %s632
      %p644 = scmp.eq.s32.totalorder %s118, 1
      %p645 = por %p643, %p644
      %p647 = scmp.ne.s32.totalorder %s632, %s646
      %p648 = scmp.eq.s32.totalorder %s118, 0
      %p649 = por %p647, %p648
      %s651 = sadd.s32 %s650, 1
      %p654 = scmp.eq.s32.totalorder %s112, 1
      %p655 = scmp.ne.s32.totalorder %s650, %s652
      %p656 = scmp.eq.s32.totalorder %s112, 0
      %p657 = por %p655, %p656
      %p658 = scmp.ne.s32.totalorder %s650, %s652
      %p659 = scmp.eq.s32.totalorder %s117, 1
      %p660 = por %p658, %p659
      %p661 = scmp.ne.s32.totalorder %s652, %s653
      %p662 = scmp.eq.s32.totalorder %s117, 0
      %p663 = por %p661, %p662
      %p664 = scmp.ne.s32.totalorder %s652, %s653
      %p665 = scmp.eq.s32.totalorder %s118, 1
      %p666 = por %p664, %p665
      %p668 = scmp.ne.s32.totalorder %s653, %s667
      %p669 = scmp.eq.s32.totalorder %s118, 0
      %p670 = por %p668, %p669
      %s672 = sadd.s32 %s671, 1
      %p675 = scmp.eq.s32.totalorder %s112, 1
      %p676 = scmp.ne.s32.totalorder %s671, %s673
      %p677 = scmp.eq.s32.totalorder %s112, 0
      %p678 = por %p676, %p677
      %p679 = scmp.ne.s32.totalorder %s671, %s673
      %p680 = scmp.eq.s32.totalorder %s117, 1
      %p681 = por %p679, %p680
      %p682 = scmp.ne.s32.totalorder %s673, %s674
      %p683 = scmp.eq.s32.totalorder %s117, 0
      %p684 = por %p682, %p683
      %p685 = scmp.ne.s32.totalorder %s673, %s674
      %p686 = scmp.eq.s32.totalorder %s118, 1
      %p687 = por %p685, %p686
      %p689 = scmp.ne.s32.totalorder %s674, %s688
      %p690 = scmp.eq.s32.totalorder %s118, 0
      %p691 = por %p689, %p690
      %s693 = sadd.s32 %s692, 1
      %p696 = scmp.eq.s32.totalorder %s112, 1
      %p697 = scmp.ne.s32.totalorder %s692, %s694
      %p698 = scmp.eq.s32.totalorder %s112, 0
      %p699 = por %p697, %p698
      %p700 = scmp.ne.s32.totalorder %s692, %s694
      %p701 = scmp.eq.s32.totalorder %s117, 1
      %p702 = por %p700, %p701
      %p703 = scmp.ne.s32.totalorder %s694, %s695
      %p704 = scmp.eq.s32.totalorder %s117, 0
      %p705 = por %p703, %p704
      %p706 = scmp.ne.s32.totalorder %s694, %s695
      %p707 = scmp.eq.s32.totalorder %s118, 1
      %p708 = por %p706, %p707
      %p710 = scmp.ne.s32.totalorder %s695, %s709
      %p711 = scmp.eq.s32.totalorder %s118, 0
      %p712 = por %p710, %p711
      %s714 = sadd.s32 %s713, 1
      %p717 = scmp.eq.s32.totalorder %s112, 1
      %p718 = scmp.ne.s32.totalorder %s713, %s715
      %p719 = scmp.eq.s32.totalorder %s112, 0
      %p720 = por %p718, %p719
      %p721 = scmp.ne.s32.totalorder %s713, %s715
      %p722 = scmp.eq.s32.totalorder %s117, 1
      %p723 = por %p721, %p722
      %p724 = scmp.ne.s32.totalorder %s715, %s716
      %p725 = scmp.eq.s32.totalorder %s117, 0
      %p726 = por %p724, %p725
      %p727 = scmp.ne.s32.totalorder %s715, %s716
      %p728 = scmp.eq.s32.totalorder %s118, 1
      %p729 = por %p727, %p728
      %p731 = scmp.ne.s32.totalorder %s716, %s730
      %p732 = scmp.eq.s32.totalorder %s118, 0
      %p733 = por %p731, %p732
      %s735 = sadd.s32 %s734, 1
      %p738 = scmp.eq.s32.totalorder %s112, 1
      %p739 = scmp.ne.s32.totalorder %s734, %s736
      %p740 = scmp.eq.s32.totalorder %s112, 0
      %p741 = por %p739, %p740
      %p742 = scmp.ne.s32.totalorder %s734, %s736
      %p743 = scmp.eq.s32.totalorder %s117, 1
      %p744 = por %p742, %p743
      %p745 = scmp.ne.s32.totalorder %s736, %s737
      %p746 = scmp.eq.s32.totalorder %s117, 0
      %p747 = por %p745, %p746
      %p748 = scmp.ne.s32.totalorder %s736, %s737
      %p749 = scmp.eq.s32.totalorder %s118, 1
      %p750 = por %p748, %p749
      %p752 = scmp.ne.s32.totalorder %s737, %s751
      %p753 = scmp.eq.s32.totalorder %s118, 0
      %p754 = por %p752, %p753
      %s756 = sadd.s32 %s755, 1
      %p759 = scmp.eq.s32.totalorder %s112, 1
      %p760 = scmp.ne.s32.totalorder %s755, %s757
      %p761 = scmp.eq.s32.totalorder %s112, 0
      %p762 = por %p760, %p761
      %p763 = scmp.ne.s32.totalorder %s755, %s757
      %p764 = scmp.eq.s32.totalorder %s117, 1
      %p765 = por %p763, %p764
      %p766 = scmp.ne.s32.totalorder %s757, %s758
      %p767 = scmp.eq.s32.totalorder %s117, 0
      %p768 = por %p766, %p767
      %p769 = scmp.ne.s32.totalorder %s757, %s758
      %p770 = scmp.eq.s32.totalorder %s118, 1
      %p771 = por %p769, %p770
      %p773 = scmp.ne.s32.totalorder %s758, %s772
      %p774 = scmp.eq.s32.totalorder %s118, 0
      %p775 = por %p773, %p774
      %s777 = sadd.s32 %s776, 1
      %p780 = scmp.eq.s32.totalorder %s112, 1
      %p781 = scmp.ne.s32.totalorder %s776, %s778
      %p782 = scmp.eq.s32.totalorder %s112, 0
      %p783 = por %p781, %p782
      %p784 = scmp.ne.s32.totalorder %s776, %s778
      %p785 = scmp.eq.s32.totalorder %s117, 1
      %p786 = por %p784, %p785
      %p787 = scmp.ne.s32.totalorder %s778, %s779
      %p788 = scmp.eq.s32.totalorder %s117, 0
      %p789 = por %p787, %p788
      %p790 = scmp.ne.s32.totalorder %s778, %s779
      %p791 = scmp.eq.s32.totalorder %s118, 1
      %p792 = por %p790, %p791
      %p794 = scmp.ne.s32.totalorder %s779, %s793
      %p795 = scmp.eq.s32.totalorder %s118, 0
      %p796 = por %p794, %p795
      %s798 = sadd.s32 %s797, 1
      %p801 = scmp.eq.s32.totalorder %s112, 1
      %p802 = scmp.ne.s32.totalorder %s797, %s799
      %p803 = scmp.eq.s32.totalorder %s112, 0
      %p804 = por %p802, %p803
      %p805 = scmp.ne.s32.totalorder %s797, %s799
      %p806 = scmp.eq.s32.totalorder %s117, 1
      %p807 = por %p805, %p806
      %p808 = scmp.ne.s32.totalorder %s799, %s800
      %p809 = scmp.eq.s32.totalorder %s117, 0
      %p810 = por %p808, %p809
      %p811 = scmp.ne.s32.totalorder %s799, %s800
      %p812 = scmp.eq.s32.totalorder %s118, 1
      %p813 = por %p811, %p812
      %p815 = scmp.ne.s32.totalorder %s800, %s814
      %p816 = scmp.eq.s32.totalorder %s118, 0
      %p817 = por %p815, %p816
      %s819 = sadd.s32 %s818, 1
      %p822 = scmp.eq.s32.totalorder %s112, 1
      %p823 = scmp.ne.s32.totalorder %s818, %s820
      %p824 = scmp.eq.s32.totalorder %s112, 0
      %p825 = por %p823, %p824
      %p826 = scmp.ne.s32.totalorder %s818, %s820
      %p827 = scmp.eq.s32.totalorder %s117, 1
      %p828 = por %p826, %p827
      %p829 = scmp.ne.s32.totalorder %s820, %s821
      %p830 = scmp.eq.s32.totalorder %s117, 0
      %p831 = por %p829, %p830
      %p832 = scmp.ne.s32.totalorder %s820, %s821
      %p833 = scmp.eq.s32.totalorder %s118, 1
      %p834 = por %p832, %p833
      %p836 = scmp.ne.s32.totalorder %s821, %s835
      %p837 = scmp.eq.s32.totalorder %s118, 0
      %p838 = por %p836, %p837
      %s840 = sadd.s32 %s839, 1
      %p843 = scmp.eq.s32.totalorder %s112, 1
      %p844 = scmp.ne.s32.totalorder %s839, %s841
      %p845 = scmp.eq.s32.totalorder %s112, 0
      %p846 = por %p844, %p845
      %p847 = scmp.ne.s32.totalorder %s839, %s841
      %p848 = scmp.eq.s32.totalorder %s117, 1
      %p849 = por %p847, %p848
      %p850 = scmp.ne.s32.totalorder %s841, %s842
      %p851 = scmp.eq.s32.totalorder %s117, 0
      %p852 = por %p850, %p851
      %p853 = scmp.ne.s32.totalorder %s841, %s842
      %p854 = scmp.eq.s32.totalorder %s118, 1
      %p855 = por %p853, %p854
      %p857 = scmp.ne.s32.totalorder %s842, %s856
      %p858 = scmp.eq.s32.totalorder %s118, 0
      %p859 = por %p857, %p858
      %s861 = sadd.s32 %s860, 1
      %p864 = scmp.eq.s32.totalorder %s112, 1
      %p865 = scmp.ne.s32.totalorder %s860, %s862
      %p866 = scmp.eq.s32.totalorder %s112, 0
      %p867 = por %p865, %p866
      %p868 = scmp.ne.s32.totalorder %s860, %s862
      %p869 = scmp.eq.s32.totalorder %s117, 1
      %p870 = por %p868, %p869
      %p871 = scmp.ne.s32.totalorder %s862, %s863
      %p872 = scmp.eq.s32.totalorder %s117, 0
      %p873 = por %p871, %p872
      %p874 = scmp.ne.s32.totalorder %s862, %s863
      %p875 = scmp.eq.s32.totalorder %s118, 1
      %p876 = por %p874, %p875
      %p878 = scmp.ne.s32.totalorder %s863, %s877
      %p879 = scmp.eq.s32.totalorder %s118, 0
      %p880 = por %p878, %p879
      %s882 = sadd.s32 %s881, 1
      %p885 = scmp.eq.s32.totalorder %s112, 1
      %p886 = scmp.ne.s32.totalorder %s881, %s883
      %p887 = scmp.eq.s32.totalorder %s112, 0
      %p888 = por %p886, %p887
      %p889 = scmp.ne.s32.totalorder %s881, %s883
      %p890 = scmp.eq.s32.totalorder %s117, 1
      %p891 = por %p889, %p890
      %p892 = scmp.ne.s32.totalorder %s883, %s884
      %p893 = scmp.eq.s32.totalorder %s117, 0
      %p894 = por %p892, %p893
      %p895 = scmp.ne.s32.totalorder %s883, %s884
      %p896 = scmp.eq.s32.totalorder %s118, 1
      %p897 = por %p895, %p896
      %p899 = scmp.ne.s32.totalorder %s884, %s898
      %p900 = scmp.eq.s32.totalorder %s118, 0
      %p901 = por %p899, %p900
      %s903 = sadd.s32 %s902, 1
      %p906 = scmp.eq.s32.totalorder %s112, 1
      %p907 = scmp.ne.s32.totalorder %s902, %s904
      %p908 = scmp.eq.s32.totalorder %s112, 0
      %p909 = por %p907, %p908
      %p910 = scmp.ne.s32.totalorder %s902, %s904
      %p911 = scmp.eq.s32.totalorder %s117, 1
      %p912 = por %p910, %p911
      %p913 = scmp.ne.s32.totalorder %s904, %s905
      %p914 = scmp.eq.s32.totalorder %s117, 0
      %p915 = por %p913, %p914
      %p916 = scmp.ne.s32.totalorder %s904, %s905
      %p917 = scmp.eq.s32.totalorder %s118, 1
      %p918 = por %p916, %p917
      %p920 = scmp.ne.s32.totalorder %s905, %s919
      %p921 = scmp.eq.s32.totalorder %s118, 0
      %p922 = por %p920, %p921
      %s924 = sadd.s32 %s923, 1
      %p927 = scmp.eq.s32.totalorder %s112, 1
      %p928 = scmp.ne.s32.totalorder %s923, %s925
      %p929 = scmp.eq.s32.totalorder %s112, 0
      %p930 = por %p928, %p929
      %p931 = scmp.ne.s32.totalorder %s923, %s925
      %p932 = scmp.eq.s32.totalorder %s117, 1
      %p933 = por %p931, %p932
      %p934 = scmp.ne.s32.totalorder %s925, %s926
      %p935 = scmp.eq.s32.totalorder %s117, 0
      %p936 = por %p934, %p935
      %p937 = scmp.ne.s32.totalorder %s925, %s926
      %p938 = scmp.eq.s32.totalorder %s118, 1
      %p939 = por %p937, %p938
      %p941 = scmp.ne.s32.totalorder %s926, %s940
      %p942 = scmp.eq.s32.totalorder %s118, 0
      %p943 = por %p941, %p942
      %s945 = sadd.s32 %s944, 1
      %p948 = scmp.eq.s32.totalorder %s112, 1
      %p949 = scmp.ne.s32.totalorder %s944, %s946
      %p950 = scmp.eq.s32.totalorder %s112, 0
      %p951 = por %p949, %p950
      %p952 = scmp.ne.s32.totalorder %s944, %s946
      %p953 = scmp.eq.s32.totalorder %s117, 1
      %p954 = por %p952, %p953
      %p955 = scmp.ne.s32.totalorder %s946, %s947
      %p956 = scmp.eq.s32.totalorder %s117, 0
      %p957 = por %p955, %p956
      %p958 = scmp.ne.s32.totalorder %s946, %s947
      %p959 = scmp.eq.s32.totalorder %s118, 1
      %p960 = por %p958, %p959
      %p962 = scmp.ne.s32.totalorder %s947, %s961
      %p963 = scmp.eq.s32.totalorder %s118, 0
      %p964 = por %p962, %p963
      %s966 = sadd.s32 %s965, 1
      %p969 = scmp.eq.s32.totalorder %s112, 1
      %p970 = scmp.ne.s32.totalorder %s965, %s967
      %p971 = scmp.eq.s32.totalorder %s112, 0
      %p972 = por %p970, %p971
      %p973 = scmp.ne.s32.totalorder %s965, %s967
      %p974 = scmp.eq.s32.totalorder %s117, 1
      %p975 = por %p973, %p974
      %p976 = scmp.ne.s32.totalorder %s967, %s968
      %p977 = scmp.eq.s32.totalorder %s117, 0
      %p978 = por %p976, %p977
      %p979 = scmp.ne.s32.totalorder %s967, %s968
      %p980 = scmp.eq.s32.totalorder %s118, 1
      %p981 = por %p979, %p980
      %p983 = scmp.ne.s32.totalorder %s968, %s982
      %p984 = scmp.eq.s32.totalorder %s118, 0
      %p985 = por %p983, %p984
      %s987 = sadd.s32 %s986, 1
      %p990 = scmp.eq.s32.totalorder %s112, 1
      %p991 = scmp.ne.s32.totalorder %s986, %s988
      %p992 = scmp.eq.s32.totalorder %s112, 0
      %p993 = por %p991, %p992
      %p994 = scmp.ne.s32.totalorder %s986, %s988
      %p995 = scmp.eq.s32.totalorder %s117, 1
      %p996 = por %p994, %p995
      %p997 = scmp.ne.s32.totalorder %s988, %s989
      %p998 = scmp.eq.s32.totalorder %s117, 0
      %p999 = por %p997, %p998
      %p1000 = scmp.ne.s32.totalorder %s988, %s989
      %p1001 = scmp.eq.s32.totalorder %s118, 1
      %p1002 = por %p1000, %p1001
      %p1004 = scmp.ne.s32.totalorder %s989, %s1003
      %p1005 = scmp.eq.s32.totalorder %s118, 0
      %p1006 = por %p1004, %p1005
      %s1008 = sadd.s32 %s1007, 1
      %p1011 = scmp.eq.s32.totalorder %s112, 1
      %p1012 = scmp.ne.s32.totalorder %s1007, %s1009
      %p1013 = scmp.eq.s32.totalorder %s112, 0
      %p1014 = por %p1012, %p1013
      %p1015 = scmp.ne.s32.totalorder %s1007, %s1009
      %p1016 = scmp.eq.s32.totalorder %s117, 1
      %p1017 = por %p1015, %p1016
      %p1018 = scmp.ne.s32.totalorder %s1009, %s1010
      %p1019 = scmp.eq.s32.totalorder %s117, 0
      %p1020 = por %p1018, %p1019
      %p1021 = scmp.ne.s32.totalorder %s1009, %s1010
      %p1022 = scmp.eq.s32.totalorder %s118, 1
      %p1023 = por %p1021, %p1022
      %p1025 = scmp.ne.s32.totalorder %s1010, %s1024
      %p1026 = scmp.eq.s32.totalorder %s118, 0
      %p1027 = por %p1025, %p1026
      %s1029 = sadd.s32 %s1028, 1
      %p1032 = scmp.eq.s32.totalorder %s112, 1
      %p1033 = scmp.ne.s32.totalorder %s1028, %s1030
      %p1034 = scmp.eq.s32.totalorder %s112, 0
      %p1035 = por %p1033, %p1034
      %p1036 = scmp.ne.s32.totalorder %s1028, %s1030
      %p1037 = scmp.eq.s32.totalorder %s117, 1
      %p1038 = por %p1036, %p1037
      %p1039 = scmp.ne.s32.totalorder %s1030, %s1031
      %p1040 = scmp.eq.s32.totalorder %s117, 0
      %p1041 = por %p1039, %p1040
      %p1042 = scmp.ne.s32.totalorder %s1030, %s1031
      %p1043 = scmp.eq.s32.totalorder %s118, 1
      %p1044 = por %p1042, %p1043
      %p1046 = scmp.ne.s32.totalorder %s1031, %s1045
      %p1047 = scmp.eq.s32.totalorder %s118, 0
      %p1048 = por %p1046, %p1047
      %s1050 = sadd.s32 %s1049, 1
      %p1053 = scmp.eq.s32.totalorder %s112, 1
      %p1054 = scmp.ne.s32.totalorder %s1049, %s1051
      %p1055 = scmp.eq.s32.totalorder %s112, 0
      %p1056 = por %p1054, %p1055
      %p1057 = scmp.ne.s32.totalorder %s1049, %s1051
      %p1058 = scmp.eq.s32.totalorder %s117, 1
      %p1059 = por %p1057, %p1058
      %p1060 = scmp.ne.s32.totalorder %s1051, %s1052
      %p1061 = scmp.eq.s32.totalorder %s117, 0
      %p1062 = por %p1060, %p1061
      %p1063 = scmp.ne.s32.totalorder %s1051, %s1052
      %p1064 = scmp.eq.s32.totalorder %s118, 1
      %p1065 = por %p1063, %p1064
      %p1067 = scmp.ne.s32.totalorder %s1052, %s1066
      %p1068 = scmp.eq.s32.totalorder %s118, 0
      %p1069 = por %p1067, %p1068
      %s1071 = sadd.s32 %s1070, 1
      %p1074 = scmp.eq.s32.totalorder %s112, 1
      %p1075 = scmp.ne.s32.totalorder %s1070, %s1072
      %p1076 = scmp.eq.s32.totalorder %s112, 0
      %p1077 = por %p1075, %p1076
      %p1078 = scmp.ne.s32.totalorder %s1070, %s1072
      %p1079 = scmp.eq.s32.totalorder %s117, 1
      %p1080 = por %p1078, %p1079
      %p1081 = scmp.ne.s32.totalorder %s1072, %s1073
      %p1082 = scmp.eq.s32.totalorder %s117, 0
      %p1083 = por %p1081, %p1082
      %p1084 = scmp.ne.s32.totalorder %s1072, %s1073
      %p1085 = scmp.eq.s32.totalorder %s118, 1
      %p1086 = por %p1084, %p1085
      %p1088 = scmp.ne.s32.totalorder %s1073, %s1087
      %p1089 = scmp.eq.s32.totalorder %s118, 0
      %p1090 = por %p1088, %p1089
      %s1092 = sadd.s32 %s1091, 1
      %p1095 = scmp.eq.s32.totalorder %s112, 1
      %p1096 = scmp.ne.s32.totalorder %s1091, %s1093
      %p1097 = scmp.eq.s32.totalorder %s112, 0
      %p1098 = por %p1096, %p1097
      %p1099 = scmp.ne.s32.totalorder %s1091, %s1093
      %p1100 = scmp.eq.s32.totalorder %s117, 1
      %p1101 = por %p1099, %p1100
      %p1102 = scmp.ne.s32.totalorder %s1093, %s1094
      %p1103 = scmp.eq.s32.totalorder %s117, 0
      %p1104 = por %p1102, %p1103
      %p1105 = scmp.ne.s32.totalorder %s1093, %s1094
      %p1106 = scmp.eq.s32.totalorder %s118, 1
      %p1107 = por %p1105, %p1106
      %p1109 = scmp.ne.s32.totalorder %s1094, %s1108
      %p1110 = scmp.eq.s32.totalorder %s118, 0
      %p1111 = por %p1109, %p1110
      %s1113 = sadd.s32 %s1112, 1
      %p1116 = scmp.eq.s32.totalorder %s112, 1
      %p1117 = scmp.ne.s32.totalorder %s1112, %s1114
      %p1118 = scmp.eq.s32.totalorder %s112, 0
      %p1119 = por %p1117, %p1118
      %p1120 = scmp.ne.s32.totalorder %s1112, %s1114
      %p1121 = scmp.eq.s32.totalorder %s117, 1
      %p1122 = por %p1120, %p1121
      %p1123 = scmp.ne.s32.totalorder %s1114, %s1115
      %p1124 = scmp.eq.s32.totalorder %s117, 0
      %p1125 = por %p1123, %p1124
      %p1126 = scmp.ne.s32.totalorder %s1114, %s1115
      %p1127 = scmp.eq.s32.totalorder %s118, 1
      %p1128 = por %p1126, %p1127
      %p1130 = scmp.ne.s32.totalorder %s1115, %s1129
      %p1131 = scmp.eq.s32.totalorder %s118, 0
      %p1132 = por %p1130, %p1131
      %s1134 = sadd.s32 %s1133, 1
      %p1137 = scmp.eq.s32.totalorder %s112, 1
      %p1138 = scmp.ne.s32.totalorder %s1133, %s1135
      %p1139 = scmp.eq.s32.totalorder %s112, 0
      %p1140 = por %p1138, %p1139
      %p1141 = scmp.ne.s32.totalorder %s1133, %s1135
      %p1142 = scmp.eq.s32.totalorder %s117, 1
      %p1143 = por %p1141, %p1142
      %p1144 = scmp.ne.s32.totalorder %s1135, %s1136
      %p1145 = scmp.eq.s32.totalorder %s117, 0
      %p1146 = por %p1144, %p1145
      %p1147 = scmp.ne.s32.totalorder %s1135, %s1136
      %p1148 = scmp.eq.s32.totalorder %s118, 1
      %p1149 = por %p1147, %p1148
      %p1151 = scmp.ne.s32.totalorder %s1136, %s1150
      %p1152 = scmp.eq.s32.totalorder %s118, 0
      %p1153 = por %p1151, %p1152
      %s1154 = ssub.s32 %s112, %s119
      %p1155 = scmp.eq.s32.totalorder %s1154, 0
      %s1157 = sadd.s32 %s1156, 1
      %s1158 = scalar_select %p1155, %s1156, %s1157
      %p1161 = pneg %p1155
      %p1162 = scmp.eq.s32.totalorder %s112, 1
      %p1163 = por %p1161, %p1162
      %p1164 = scmp.ne.s32.totalorder %s1156, %s1159
      %p1165 = scmp.eq.s32.totalorder %s112, 0
      %p1166 = por %p1164, %p1165
      %p1167 = scmp.ne.s32.totalorder %s1156, %s1159
      %p1168 = scmp.eq.s32.totalorder %s117, 1
      %p1169 = por %p1167, %p1168
      %p1170 = scmp.ne.s32.totalorder %s1159, %s1160
      %p1171 = scmp.eq.s32.totalorder %s117, 0
      %p1172 = por %p1170, %p1171
      %p1173 = scmp.ne.s32.totalorder %s1159, %s1160
      %p1174 = scmp.eq.s32.totalorder %s118, 1
      %p1175 = por %p1173, %p1174
      %p1177 = scmp.ne.s32.totalorder %s1160, %s1176
      %p1178 = scmp.eq.s32.totalorder %s118, 0
      %p1179 = por %p1177, %p1178
      %p1180 = scmp.le.s32.totalorder 1, %s112
      %p1181 = scmp.lt.s32.totalorder %s112, 3
      %p1182 = pnand %p1180, %p1181
      %p1183 = pneg %p1182
      // Predicated region
      $region9: #{mvit_forward.1} parent=5 // pred_check
        _
      $region10: #{mvit_forward.1} parent=5 // pred_check_branch
        %1185 = sbr.rel (%p1182) target = $region12
      $region11: #{mvit_forward.1} parent=5 // pred_region
        %s1186 = ssub.s32 %s112, 1
        // Predicated region
        $region13: #{mvit_forward.1} parent=11 // pred_check
          %p1187 = pneg %p159
        $region14: #{mvit_forward.1} parent=11 // pred_check_branch
          %1189 = sbr.rel (%p1187) target = $region16
        $region15: #{mvit_forward.1} parent=11 // pred_region
          _
        $region16: #{mvit_forward.1} parent=11 // pred_fallthru
          _
        // Predicated region
        $region17: #{mvit_forward.1} parent=11 // pred_check
          %p1190 = pneg %p180
        $region18: #{mvit_forward.1} parent=11 // pred_check_branch
          %1192 = sbr.rel (%p1190) target = $region20
        $region19: #{mvit_forward.1} parent=11 // pred_region
          _
        $region20: #{mvit_forward.1} parent=11 // pred_fallthru
          _
        // Predicated region
        $region21: #{mvit_forward.1} parent=11 // pred_check
          %p1193 = pneg %p201
        $region22: #{mvit_forward.1} parent=11 // pred_check_branch
          %1195 = sbr.rel (%p1193) target = $region24
        $region23: #{mvit_forward.1} parent=11 // pred_region
          _
        $region24: #{mvit_forward.1} parent=11 // pred_fallthru
          _
        // Predicated region
        $region25: #{mvit_forward.1} parent=11 // pred_check
          %p1196 = pneg %p222
        $region26: #{mvit_forward.1} parent=11 // pred_check_branch
          %1198 = sbr.rel (%p1196) target = $region28
        $region27: #{mvit_forward.1} parent=11 // pred_region
          _
        $region28: #{mvit_forward.1} parent=11 // pred_fallthru
          _
        // Predicated region
        $region29: #{mvit_forward.1} parent=11 // pred_check
          %p1199 = pneg %p243
        $region30: #{mvit_forward.1} parent=11 // pred_check_branch
          %1201 = sbr.rel (%p1199) target = $region32
        $region31: #{mvit_forward.1} parent=11 // pred_region
          _
        $region32: #{mvit_forward.1} parent=11 // pred_fallthru
          _
        // Predicated region
        $region33: #{mvit_forward.1} parent=11 // pred_check
          %p1202 = pneg %p264
        $region34: #{mvit_forward.1} parent=11 // pred_check_branch
          %1204 = sbr.rel (%p1202) target = $region36
        $region35: #{mvit_forward.1} parent=11 // pred_region
          _
        $region36: #{mvit_forward.1} parent=11 // pred_fallthru
          _
        // Predicated region
        $region37: #{mvit_forward.1} parent=11 // pred_check
          %p1205 = pneg %p285
        $region38: #{mvit_forward.1} parent=11 // pred_check_branch
          %1207 = sbr.rel (%p1205) target = $region40
        $region39: #{mvit_forward.1} parent=11 // pred_region
          _
        $region40: #{mvit_forward.1} parent=11 // pred_fallthru
          _
        // Predicated region
        $region41: #{mvit_forward.1} parent=11 // pred_check
          %p1208 = pneg %p306
        $region42: #{mvit_forward.1} parent=11 // pred_check_branch
          %1210 = sbr.rel (%p1208) target = $region44
        $region43: #{mvit_forward.1} parent=11 // pred_region
          _
        $region44: #{mvit_forward.1} parent=11 // pred_fallthru
          _
        // Predicated region
        $region45: #{mvit_forward.1} parent=11 // pred_check
          %p1211 = pneg %p327
        $region46: #{mvit_forward.1} parent=11 // pred_check_branch
          %1213 = sbr.rel (%p1211) target = $region48
        $region47: #{mvit_forward.1} parent=11 // pred_region
          _
        $region48: #{mvit_forward.1} parent=11 // pred_fallthru
          _
        // Predicated region
        $region49: #{mvit_forward.1} parent=11 // pred_check
          %p1214 = pneg %p348
        $region50: #{mvit_forward.1} parent=11 // pred_check_branch
          %1216 = sbr.rel (%p1214) target = $region52
        $region51: #{mvit_forward.1} parent=11 // pred_region
          _
        $region52: #{mvit_forward.1} parent=11 // pred_fallthru
          _
        // Predicated region
        $region53: #{mvit_forward.1} parent=11 // pred_check
          %p1217 = pneg %p369
        $region54: #{mvit_forward.1} parent=11 // pred_check_branch
          %1219 = sbr.rel (%p1217) target = $region56
        $region55: #{mvit_forward.1} parent=11 // pred_region
          _
        $region56: #{mvit_forward.1} parent=11 // pred_fallthru
          _
        // Predicated region
        $region57: #{mvit_forward.1} parent=11 // pred_check
          %p1220 = pneg %p390
        $region58: #{mvit_forward.1} parent=11 // pred_check_branch
          %1222 = sbr.rel (%p1220) target = $region60
        $region59: #{mvit_forward.1} parent=11 // pred_region
          _
        $region60: #{mvit_forward.1} parent=11 // pred_fallthru
          _
        // Predicated region
        $region61: #{mvit_forward.1} parent=11 // pred_check
          %p1223 = pneg %p411
        $region62: #{mvit_forward.1} parent=11 // pred_check_branch
          %1225 = sbr.rel (%p1223) target = $region64
        $region63: #{mvit_forward.1} parent=11 // pred_region
          _
        $region64: #{mvit_forward.1} parent=11 // pred_fallthru
          _
        // Predicated region
        $region65: #{mvit_forward.1} parent=11 // pred_check
          %p1226 = pneg %p432
        $region66: #{mvit_forward.1} parent=11 // pred_check_branch
          %1228 = sbr.rel (%p1226) target = $region68
        $region67: #{mvit_forward.1} parent=11 // pred_region
          _
        $region68: #{mvit_forward.1} parent=11 // pred_fallthru
          _
        // Predicated region
        $region69: #{mvit_forward.1} parent=11 // pred_check
          %p1229 = pneg %p453
        $region70: #{mvit_forward.1} parent=11 // pred_check_branch
          %1231 = sbr.rel (%p1229) target = $region72
        $region71: #{mvit_forward.1} parent=11 // pred_region
          _
        $region72: #{mvit_forward.1} parent=11 // pred_fallthru
          _
        // Predicated region
        $region73: #{mvit_forward.1} parent=11 // pred_check
          %p1232 = pneg %p474
        $region74: #{mvit_forward.1} parent=11 // pred_check_branch
          %1234 = sbr.rel (%p1232) target = $region76
        $region75: #{mvit_forward.1} parent=11 // pred_region
          _
        $region76: #{mvit_forward.1} parent=11 // pred_fallthru
          _
        // Predicated region
        $region77: #{mvit_forward.1} parent=11 // pred_check
          %p1235 = pneg %p495
        $region78: #{mvit_forward.1} parent=11 // pred_check_branch
          %1237 = sbr.rel (%p1235) target = $region80
        $region79: #{mvit_forward.1} parent=11 // pred_region
          _
        $region80: #{mvit_forward.1} parent=11 // pred_fallthru
          _
        // Predicated region
        $region81: #{mvit_forward.1} parent=11 // pred_check
          %p1238 = pneg %p516
        $region82: #{mvit_forward.1} parent=11 // pred_check_branch
          %1240 = sbr.rel (%p1238) target = $region84
        $region83: #{mvit_forward.1} parent=11 // pred_region
          _
        $region84: #{mvit_forward.1} parent=11 // pred_fallthru
          _
        // Predicated region
        $region85: #{mvit_forward.1} parent=11 // pred_check
          %p1241 = pneg %p537
        $region86: #{mvit_forward.1} parent=11 // pred_check_branch
          %1243 = sbr.rel (%p1241) target = $region88
        $region87: #{mvit_forward.1} parent=11 // pred_region
          _
        $region88: #{mvit_forward.1} parent=11 // pred_fallthru
          _
        // Predicated region
        $region89: #{mvit_forward.1} parent=11 // pred_check
          %p1244 = pneg %p558
        $region90: #{mvit_forward.1} parent=11 // pred_check_branch
          %1246 = sbr.rel (%p1244) target = $region92
        $region91: #{mvit_forward.1} parent=11 // pred_region
          _
        $region92: #{mvit_forward.1} parent=11 // pred_fallthru
          _
        // Predicated region
        $region93: #{mvit_forward.1} parent=11 // pred_check
          %p1247 = pneg %p579
        $region94: #{mvit_forward.1} parent=11 // pred_check_branch
          %1249 = sbr.rel (%p1247) target = $region96
        $region95: #{mvit_forward.1} parent=11 // pred_region
          _
        $region96: #{mvit_forward.1} parent=11 // pred_fallthru
          _
        // Predicated region
        $region97: #{mvit_forward.1} parent=11 // pred_check
          %p1250 = pneg %p600
        $region98: #{mvit_forward.1} parent=11 // pred_check_branch
          %1252 = sbr.rel (%p1250) target = $region100
        $region99: #{mvit_forward.1} parent=11 // pred_region
          _
        $region100: #{mvit_forward.1} parent=11 // pred_fallthru
          _
        // Predicated region
        $region101: #{mvit_forward.1} parent=11 // pred_check
          %p1253 = pneg %p621
        $region102: #{mvit_forward.1} parent=11 // pred_check_branch
          %1255 = sbr.rel (%p1253) target = $region104
        $region103: #{mvit_forward.1} parent=11 // pred_region
          _
        $region104: #{mvit_forward.1} parent=11 // pred_fallthru
          _
        // Predicated region
        $region105: #{mvit_forward.1} parent=11 // pred_check
          %p1256 = pneg %p642
        $region106: #{mvit_forward.1} parent=11 // pred_check_branch
          %1258 = sbr.rel (%p1256) target = $region108
        $region107: #{mvit_forward.1} parent=11 // pred_region
          _
        $region108: #{mvit_forward.1} parent=11 // pred_fallthru
          _
        // Predicated region
        $region109: #{mvit_forward.1} parent=11 // pred_check
          %p1259 = pneg %p663
        $region110: #{mvit_forward.1} parent=11 // pred_check_branch
          %1261 = sbr.rel (%p1259) target = $region112
        $region111: #{mvit_forward.1} parent=11 // pred_region
          _
        $region112: #{mvit_forward.1} parent=11 // pred_fallthru
          _
        // Predicated region
        $region113: #{mvit_forward.1} parent=11 // pred_check
          %p1262 = pneg %p684
        $region114: #{mvit_forward.1} parent=11 // pred_check_branch
          %1264 = sbr.rel (%p1262) target = $region116
        $region115: #{mvit_forward.1} parent=11 // pred_region
          _
        $region116: #{mvit_forward.1} parent=11 // pred_fallthru
          _
        // Predicated region
        $region117: #{mvit_forward.1} parent=11 // pred_check
          %p1265 = pneg %p705
        $region118: #{mvit_forward.1} parent=11 // pred_check_branch
          %1267 = sbr.rel (%p1265) target = $region120
        $region119: #{mvit_forward.1} parent=11 // pred_region
          _
        $region120: #{mvit_forward.1} parent=11 // pred_fallthru
          _
        // Predicated region
        $region121: #{mvit_forward.1} parent=11 // pred_check
          %p1268 = pneg %p726
        $region122: #{mvit_forward.1} parent=11 // pred_check_branch
          %1270 = sbr.rel (%p1268) target = $region124
        $region123: #{mvit_forward.1} parent=11 // pred_region
          _
        $region124: #{mvit_forward.1} parent=11 // pred_fallthru
          _
        // Predicated region
        $region125: #{mvit_forward.1} parent=11 // pred_check
          %p1271 = pneg %p747
        $region126: #{mvit_forward.1} parent=11 // pred_check_branch
          %1273 = sbr.rel (%p1271) target = $region128
        $region127: #{mvit_forward.1} parent=11 // pred_region
          _
        $region128: #{mvit_forward.1} parent=11 // pred_fallthru
          _
        // Predicated region
        $region129: #{mvit_forward.1} parent=11 // pred_check
          %p1274 = pneg %p768
        $region130: #{mvit_forward.1} parent=11 // pred_check_branch
          %1276 = sbr.rel (%p1274) target = $region132
        $region131: #{mvit_forward.1} parent=11 // pred_region
          _
        $region132: #{mvit_forward.1} parent=11 // pred_fallthru
          _
        // Predicated region
        $region133: #{mvit_forward.1} parent=11 // pred_check
          %p1277 = pneg %p789
        $region134: #{mvit_forward.1} parent=11 // pred_check_branch
          %1279 = sbr.rel (%p1277) target = $region136
        $region135: #{mvit_forward.1} parent=11 // pred_region
          _
        $region136: #{mvit_forward.1} parent=11 // pred_fallthru
          _
        // Predicated region
        $region137: #{mvit_forward.1} parent=11 // pred_check
          %p1280 = pneg %p810
        $region138: #{mvit_forward.1} parent=11 // pred_check_branch
          %1282 = sbr.rel (%p1280) target = $region140
        $region139: #{mvit_forward.1} parent=11 // pred_region
          _
        $region140: #{mvit_forward.1} parent=11 // pred_fallthru
          _
        // Predicated region
        $region141: #{mvit_forward.1} parent=11 // pred_check
          %p1283 = pneg %p831
        $region142: #{mvit_forward.1} parent=11 // pred_check_branch
          %1285 = sbr.rel (%p1283) target = $region144
        $region143: #{mvit_forward.1} parent=11 // pred_region
          _
        $region144: #{mvit_forward.1} parent=11 // pred_fallthru
          _
        // Predicated region
        $region145: #{mvit_forward.1} parent=11 // pred_check
          %p1286 = pneg %p852
        $region146: #{mvit_forward.1} parent=11 // pred_check_branch
          %1288 = sbr.rel (%p1286) target = $region148
        $region147: #{mvit_forward.1} parent=11 // pred_region
          _
        $region148: #{mvit_forward.1} parent=11 // pred_fallthru
          _
        // Predicated region
        $region149: #{mvit_forward.1} parent=11 // pred_check
          %p1289 = pneg %p873
        $region150: #{mvit_forward.1} parent=11 // pred_check_branch
          %1291 = sbr.rel (%p1289) target = $region152
        $region151: #{mvit_forward.1} parent=11 // pred_region
          _
        $region152: #{mvit_forward.1} parent=11 // pred_fallthru
          _
        // Predicated region
        $region153: #{mvit_forward.1} parent=11 // pred_check
          %p1292 = pneg %p894
        $region154: #{mvit_forward.1} parent=11 // pred_check_branch
          %1294 = sbr.rel (%p1292) target = $region156
        $region155: #{mvit_forward.1} parent=11 // pred_region
          _
        $region156: #{mvit_forward.1} parent=11 // pred_fallthru
          _
        // Predicated region
        $region157: #{mvit_forward.1} parent=11 // pred_check
          %p1295 = pneg %p915
        $region158: #{mvit_forward.1} parent=11 // pred_check_branch
          %1297 = sbr.rel (%p1295) target = $region160
        $region159: #{mvit_forward.1} parent=11 // pred_region
          _
        $region160: #{mvit_forward.1} parent=11 // pred_fallthru
          _
        // Predicated region
        $region161: #{mvit_forward.1} parent=11 // pred_check
          %p1298 = pneg %p936
        $region162: #{mvit_forward.1} parent=11 // pred_check_branch
          %1300 = sbr.rel (%p1298) target = $region164
        $region163: #{mvit_forward.1} parent=11 // pred_region
          _
        $region164: #{mvit_forward.1} parent=11 // pred_fallthru
          _
        // Predicated region
        $region165: #{mvit_forward.1} parent=11 // pred_check
          %p1301 = pneg %p957
        $region166: #{mvit_forward.1} parent=11 // pred_check_branch
          %1303 = sbr.rel (%p1301) target = $region168
        $region167: #{mvit_forward.1} parent=11 // pred_region
          %s1305 = ssub.s32 16, 16
          %1306 = vsyncadd [#allocation3], %s1305
          %s1308 = sshll.u32 [#allocation2], 4
          %s1309 = int_to_ptr.vmem [resolvable:$true] %s1308
          %1311 = dma.hbm_to_vmem [thread:$0]  %s79, 16, %s1309, [#allocation3]
        $region168: #{mvit_forward.1} parent=11 // pred_fallthru
          _
        // Predicated region
        $region169: #{mvit_forward.1} parent=11 // pred_check
          %p1312 = pneg %p978
        $region170: #{mvit_forward.1} parent=11 // pred_check_branch
          %1314 = sbr.rel (%p1312) target = $region172
        $region171: #{mvit_forward.1} parent=11 // pred_region
          %s1316 = ssub.s32 16, 16
          %1317 = vsyncadd [#allocation6], %s1316
          %s1319 = sshll.u32 [#allocation5], 4
          %s1320 = int_to_ptr.vmem [resolvable:$true] %s1319
          %1322 = dma.hbm_to_vmem [thread:$0]  %s81, 16, %s1320, [#allocation6]
        $region172: #{mvit_forward.1} parent=11 // pred_fallthru
          _
        // Predicated region
        $region173: #{mvit_forward.1} parent=11 // pred_check
          %p1323 = pneg %p999
        $region174: #{mvit_forward.1} parent=11 // pred_check_branch
          %1325 = sbr.rel (%p1323) target = $region176
        $region175: #{mvit_forward.1} parent=11 // pred_region
          _
        $region176: #{mvit_forward.1} parent=11 // pred_fallthru
          _
        // Predicated region
        $region177: #{mvit_forward.1} parent=11 // pred_check
          %p1326 = pneg %p1020
        $region178: #{mvit_forward.1} parent=11 // pred_check_branch
          %1328 = sbr.rel (%p1326) target = $region180
        $region179: #{mvit_forward.1} parent=11 // pred_region
          %s1330 = ssub.s32 16, 16
          %1331 = vsyncadd [#allocation6], %s1330
          %s1333 = sshll.u32 [#allocation7], 4
          %s1334 = int_to_ptr.vmem [resolvable:$true] %s1333
          %1336 = dma.hbm_to_vmem [thread:$0]  %s85, 16, %s1334, [#allocation6]
        $region180: #{mvit_forward.1} parent=11 // pred_fallthru
          _
        // Predicated region
        $region181: #{mvit_forward.1} parent=11 // pred_check
          %p1337 = pneg %p1041
        $region182: #{mvit_forward.1} parent=11 // pred_check_branch
          %1339 = sbr.rel (%p1337) target = $region184
        $region183: #{mvit_forward.1} parent=11 // pred_region
          %s1341 = ssub.s32 16, 16
          %1342 = vsyncadd [#allocation9], %s1341
          %s1344 = sshll.u32 [#allocation8], 4
          %s1345 = int_to_ptr.vmem [resolvable:$true] %s1344
          %1347 = dma.hbm_to_vmem [thread:$0]  %s87, 16, %s1345, [#allocation9]
        $region184: #{mvit_forward.1} parent=11 // pred_fallthru
          _
        // Predicated region
        $region185: #{mvit_forward.1} parent=11 // pred_check
          %p1348 = pneg %p1062
        $region186: #{mvit_forward.1} parent=11 // pred_check_branch
          %1350 = sbr.rel (%p1348) target = $region188
        $region187: #{mvit_forward.1} parent=11 // pred_region
          %s1352 = ssub.s32 16, 16
          %1353 = vsyncadd [#allocation9], %s1352
          %s1355 = sshll.u32 [#allocation10], 4
          %s1356 = int_to_ptr.vmem [resolvable:$true] %s1355
          %1358 = dma.hbm_to_vmem [thread:$0]  %s89, 16, %s1356, [#allocation9]
        $region188: #{mvit_forward.1} parent=11 // pred_fallthru
          _
        // Predicated region
        $region189: #{mvit_forward.1} parent=11 // pred_check
          %p1359 = pneg %p1083
        $region190: #{mvit_forward.1} parent=11 // pred_check_branch
          %1361 = sbr.rel (%p1359) target = $region192
        $region191: #{mvit_forward.1} parent=11 // pred_region
          _
        $region192: #{mvit_forward.1} parent=11 // pred_fallthru
          _
        // Predicated region
        $region193: #{mvit_forward.1} parent=11 // pred_check
          %p1362 = pneg %p1104
        $region194: #{mvit_forward.1} parent=11 // pred_check_branch
          %1364 = sbr.rel (%p1362) target = $region196
        $region195: #{mvit_forward.1} parent=11 // pred_region
          %s1366 = ssub.s32 16, 16
          %1367 = vsyncadd [#allocation12], %s1366
          %s1369 = sshll.u32 [#allocation11], 4
          %s1370 = int_to_ptr.vmem [resolvable:$true] %s1369
          %1372 = dma.hbm_to_vmem [thread:$0]  %s93, 16, %s1370, [#allocation12]
        $region196: #{mvit_forward.1} parent=11 // pred_fallthru
          _
        // Predicated region
        $region197: #{mvit_forward.1} parent=11 // pred_check
          %p1373 = pneg %p1125
        $region198: #{mvit_forward.1} parent=11 // pred_check_branch
          %1375 = sbr.rel (%p1373) target = $region200
        $region199: #{mvit_forward.1} parent=11 // pred_region
          _
        $region200: #{mvit_forward.1} parent=11 // pred_fallthru
          _
        // Predicated region
        $region201: #{mvit_forward.1} parent=11 // pred_check
          %p1376 = pneg %p1146
        $region202: #{mvit_forward.1} parent=11 // pred_check_branch
          %1378 = sbr.rel (%p1376) target = $region204
        $region203: #{mvit_forward.1} parent=11 // pred_region
          %s1380 = ssub.s32 16, 16
          %1381 = vsyncadd [#allocation12], %s1380
          %s1383 = sshll.u32 [#allocation13], 4
          %s1384 = int_to_ptr.vmem [resolvable:$true] %s1383
          %1386 = dma.hbm_to_vmem [thread:$0]  %s97, 16, %s1384, [#allocation12]
        $region204: #{mvit_forward.1} parent=11 // pred_fallthru
          _
      $region12: #{mvit_forward.1} parent=5 // pred_fallthru
        _
      %p1387 = scmp.lt.s32.totalorder %s112, 2
      // Predicated region
      $region205: #{mvit_forward.1} parent=5 // pred_check
        %p1388 = pneg %p1387
      $region206: #{mvit_forward.1} parent=5 // pred_check_branch
        %1390 = sbr.rel (%p1388) target = $region208
      $region207: #{mvit_forward.1} parent=5 // pred_region
        // Predicated region
        $region209: #{mvit_forward.1} parent=207 // pred_check
          %p1391 = pneg %p132
        $region210: #{mvit_forward.1} parent=207 // pred_check_branch
          %1393 = sbr.rel (%p1391) target = $region212
        $region211: #{mvit_forward.1} parent=207 // pred_region
          %p1394 = scmp.lt.s32.totalorder %s112, 1
          %s1395 = scalar_select %p1394, %s112, 1
          %s1396 = smul.addr %s1395, 12
          %s1397 = smul.addr %s1396, 8
          %s1398 = scalar_lea.vmem %s1, %s1397
        $region212: #{mvit_forward.1} parent=207 // pred_fallthru
          _
      $region208: #{mvit_forward.1} parent=5 // pred_fallthru
        _
      %p1399 = scmp.le.s32.totalorder 1, %s112
      %p1400 = scmp.lt.s32.totalorder %s112, 3
      %p1401 = pnand %p1399, %p1400
      %p1402 = pneg %p1401
      // Predicated region
      $region213: #{mvit_forward.1} parent=5 // pred_check
        _
      $region214: #{mvit_forward.1} parent=5 // pred_check_branch
        %1404 = sbr.rel (%p1401) target = $region216
      $region215: #{mvit_forward.1} parent=5 // pred_region
        %s1405 = ssub.s32 %s112, 1
        // Predicated region
        $region217: #{mvit_forward.1} parent=215 // pred_check
          %p1406 = pneg %p957
        $region218: #{mvit_forward.1} parent=215 // pred_check_branch
          %1408 = sbr.rel (%p1406) target = $region220
        $region219: #{mvit_forward.1} parent=215 // pred_region
          %1409 = dma.done [#allocation3], 16
        $region220: #{mvit_forward.1} parent=215 // pred_fallthru
          _
        // Predicated region
        $region221: #{mvit_forward.1} parent=215 // pred_check
          %p1410 = pneg %p978
        $region222: #{mvit_forward.1} parent=215 // pred_check_branch
          %1412 = sbr.rel (%p1410) target = $region224
        $region223: #{mvit_forward.1} parent=215 // pred_region
          %1413 = dma.done [#allocation6], 16
        $region224: #{mvit_forward.1} parent=215 // pred_fallthru
          _
        // Predicated region
        $region225: #{mvit_forward.1} parent=215 // pred_check
          %p1414 = pneg %p1020
        $region226: #{mvit_forward.1} parent=215 // pred_check_branch
          %1416 = sbr.rel (%p1414) target = $region228
        $region227: #{mvit_forward.1} parent=215 // pred_region
          %1417 = dma.done [#allocation6], 16
        $region228: #{mvit_forward.1} parent=215 // pred_fallthru
          _
        // Predicated region
        $region229: #{mvit_forward.1} parent=215 // pred_check
          %p1418 = pneg %p1041
        $region230: #{mvit_forward.1} parent=215 // pred_check_branch
          %1420 = sbr.rel (%p1418) target = $region232
        $region231: #{mvit_forward.1} parent=215 // pred_region
          %1421 = dma.done [#allocation9], 16
        $region232: #{mvit_forward.1} parent=215 // pred_fallthru
          _
        // Predicated region
        $region233: #{mvit_forward.1} parent=215 // pred_check
          %p1422 = pneg %p1062
        $region234: #{mvit_forward.1} parent=215 // pred_check_branch
          %1424 = sbr.rel (%p1422) target = $region236
        $region235: #{mvit_forward.1} parent=215 // pred_region
          %1425 = dma.done [#allocation9], 16
        $region236: #{mvit_forward.1} parent=215 // pred_fallthru
          _
        // Predicated region
        $region237: #{mvit_forward.1} parent=215 // pred_check
          %p1426 = pneg %p1104
        $region238: #{mvit_forward.1} parent=215 // pred_check_branch
          %1428 = sbr.rel (%p1426) target = $region240
        $region239: #{mvit_forward.1} parent=215 // pred_region
          %1429 = dma.done [#allocation12], 16
        $region240: #{mvit_forward.1} parent=215 // pred_fallthru
          _
        // Predicated region
        $region241: #{mvit_forward.1} parent=215 // pred_check
          %p1430 = pneg %p1146
        $region242: #{mvit_forward.1} parent=215 // pred_check_branch
          %1432 = sbr.rel (%p1430) target = $region244
        $region243: #{mvit_forward.1} parent=215 // pred_region
          %1433 = dma.done [#allocation12], 16
        $region244: #{mvit_forward.1} parent=215 // pred_fallthru
          _
        %p1434 = scmp.lt.s32.totalorder %s117, 1
        %s1435 = scalar_select %p1434, %s117, 1
        %s1436 = smul.addr %s1435, 12
        %s1437 = smul.addr %s1436, 8
        %s1438 = scalar_lea.vmem %s1, %s1437
        %p1439 = pneg %p138
        %p1440 = pneg %p135
        %p1441 = pneg %p159
        %p1442 = pneg %p156
        %p1443 = pneg %p180
        %p1444 = pneg %p177
        %p1445 = pneg %p201
        %p1446 = pneg %p198
        %p1447 = pneg %p222
        %p1448 = pneg %p219
        %p1449 = pneg %p243
        %p1450 = pneg %p240
        %p1451 = pneg %p264
        %p1452 = pneg %p261
        %p1453 = pneg %p285
        %p1454 = pneg %p282
        %p1455 = pneg %p306
        %p1456 = pneg %p303
        %p1457 = pneg %p327
        %p1458 = pneg %p324
        %p1459 = pneg %p348
        %p1460 = pneg %p345
        %p1461 = pneg %p369
        %p1462 = pneg %p366
        %p1463 = pneg %p390
        %p1464 = pneg %p387
        %p1465 = pneg %p411
        %p1466 = pneg %p408
        %p1467 = pneg %p432
        %p1468 = pneg %p429
        %p1469 = pneg %p453
        %p1470 = pneg %p450
        %p1471 = pneg %p474
        %p1472 = pneg %p471
        %p1473 = pneg %p495
        %p1474 = pneg %p492
        %p1475 = pneg %p516
        %p1476 = pneg %p513
        %p1477 = pneg %p537
        %p1478 = pneg %p534
        %p1479 = pneg %p558
        %p1480 = pneg %p555
        %p1481 = pneg %p579
        %p1482 = pneg %p576
        %p1483 = pneg %p600
        %p1484 = pneg %p597
        %p1485 = pneg %p621
        %p1486 = pneg %p618
        %p1487 = pneg %p642
        %p1488 = pneg %p639
        %p1489 = pneg %p663
        %p1490 = pneg %p660
        %p1491 = pneg %p684
        %p1492 = pneg %p681
        %p1493 = pneg %p705
        %p1494 = pneg %p702
        %p1495 = pneg %p726
        %p1496 = pneg %p723
        %p1497 = pneg %p747
        %p1498 = pneg %p744
        %p1499 = pneg %p768
        %p1500 = pneg %p765
        %p1501 = pneg %p789
        %p1502 = pneg %p786
        %p1503 = pneg %p810
        %p1504 = pneg %p807
        %p1505 = pneg %p831
        %p1506 = pneg %p828
        %p1507 = pneg %p852
        %p1508 = pneg %p849
        %p1509 = pneg %p873
        %p1510 = pneg %p870
        %p1511 = pneg %p894
        %p1512 = pneg %p891
        %p1513 = pneg %p915
        %p1514 = pneg %p912
        %p1515 = pneg %p936
        %p1516 = pneg %p933
        %p1517 = pneg %p957
        %p1518 = pneg %p954
        %p1519 = pneg %p978
        %p1520 = pneg %p975
        %p1521 = pneg %p999
        %p1522 = pneg %p996
        %p1523 = pneg %p1020
        %p1524 = pneg %p1017
        %p1525 = pneg %p1041
        %p1526 = pneg %p1038
        %p1527 = pneg %p1062
        %p1528 = pneg %p1059
        %p1529 = pneg %p1083
        %p1530 = pneg %p1080
        %p1531 = pneg %p1104
        %p1532 = pneg %p1101
        %p1533 = pneg %p1125
        %p1534 = pneg %p1122
        %p1535 = pneg %p1146
        %p1536 = pneg %p1143
        %p1537 = pneg %p1172
        %p1538 = pneg %p1169
        %s1539 = sand.u32 %s1159, 1
        %s1540 = scalar_lea.sflag [#allocation4], %s1539
        %s1541 = sand.u32 %s1159, 1
        %s1542 = scalar_lea.vmem [#allocation14], %s1541
        %p1543 = scmp.lt.s32.totalorder %s117, 1
        %s1544 = scalar_select %p1543, %s117, 1
        %s1545 = smul.addr %s1544, 12
        %s1546 = smul.addr %s1545, 8
        %s1547 = scalar_lea.vmem %s1, %s1546
        %v1549 = vld [vmem:[%s1547] sm:$0xff]
        %v1550 = vld [vmem:[%s1547 + $0x8] sm:$0xff]
        %v1551 = vld [vmem:[%s1547 + $0x10] sm:$0xff]
        %v1552 = vld [vmem:[%s1547 + $0x18] sm:$0xff]
        %v1553 = vld [vmem:[%s1547 + $0x20] sm:$0xff]
        %v1554 = vld [vmem:[%s1547 + $0x28] sm:$0xff]
        %v1555 = vld [vmem:[%s1547 + $0x30] sm:$0xff]
        %v1556 = vld [vmem:[%s1547 + $0x38] sm:$0xff]
        %v1557 = vld [vmem:[%s1547 + $0x40] sm:$0xff]
        %v1558 = vld [vmem:[%s1547 + $0x48] sm:$0xff]
        %v1559 = vld [vmem:[%s1547 + $0x50] sm:$0xff]
        %v1560 = vld [vmem:[%s1547 + $0x58] sm:$0xff]
        %v1561 = vld [vmem:[%s3] sm:$0xff]
        %v1562 = vld [vmem:[%s3 + $0x8] sm:$0xff]
        %v1563 = vld [vmem:[%s3 + $0x10] sm:$0xff]
        %v1564 = vld [vmem:[%s3 + $0x18] sm:$0xff]
        %v1565 = vld [vmem:[%s3 + $0x20] sm:$0xff]
        %v1566 = vld [vmem:[%s3 + $0x28] sm:$0xff]
        %v1567 = vld [vmem:[%s3 + $0x30] sm:$0xff]
        %v1568 = vld [vmem:[%s3 + $0x38] sm:$0xff]
        %v1569 = vld [vmem:[%s3 + $0x40] sm:$0xff]
        %v1570 = vld [vmem:[%s3 + $0x48] sm:$0xff]
        %v1571 = vld [vmem:[%s3 + $0x50] sm:$0xff]
        %v1572 = vld [vmem:[%s3 + $0x58] sm:$0xff]
        %v1573 = vld [vmem:[%s3 + $0x60] sm:$0xff]
        %v1574 = vld [vmem:[%s3 + $0x68] sm:$0xff]
        %v1575 = vld [vmem:[%s3 + $0x70] sm:$0xff]
        %v1576 = vld [vmem:[%s3 + $0x78] sm:$0xff]
        %v1577 = vld [vmem:[%s3 + $0x80] sm:$0xff]
        %v1578 = vld [vmem:[%s3 + $0x88] sm:$0xff]
        %v1579 = vld [vmem:[%s3 + $0x90] sm:$0xff]
        %v1580 = vld [vmem:[%s3 + $0x98] sm:$0xff]
        %v1581 = vld [vmem:[%s3 + $0xa0] sm:$0xff]
        %v1582 = vld [vmem:[%s3 + $0xa8] sm:$0xff]
        %v1583 = vld [vmem:[%s3 + $0xb0] sm:$0xff]
        %v1584 = vld [vmem:[%s3 + $0xb8] sm:$0xff]
        %v1585 = vld [vmem:[%s3 + $0xc0] sm:$0xff]
        %v1586 = vld [vmem:[%s3 + $0xc8] sm:$0xff]
        %v1587 = vld [vmem:[%s3 + $0xd0] sm:$0xff]
        %v1588 = vld [vmem:[%s3 + $0xd8] sm:$0xff]
        %v1589 = vld [vmem:[%s3 + $0xe0] sm:$0xff]
        %v1590 = vld [vmem:[%s3 + $0xe8] sm:$0xff]
        %v1591 = vld [vmem:[%s3 + $0xf0] sm:$0xff]
        %v1592 = vld [vmem:[%s3 + $0xf8] sm:$0xff]
        %v1593 = vld [vmem:[%s3 + $0x100] sm:$0xff]
        %v1594 = vld [vmem:[%s3 + $0x108] sm:$0xff]
        %v1595 = vld [vmem:[%s3 + $0x110] sm:$0xff]
        %v1596 = vld [vmem:[%s3 + $0x118] sm:$0xff]
        %v1597 = vld [vmem:[%s3 + $0x120] sm:$0xff]
        %v1598 = vld [vmem:[%s3 + $0x128] sm:$0xff]
        %v1599 = vld [vmem:[%s3 + $0x130] sm:$0xff]
        %v1600 = vld [vmem:[%s3 + $0x138] sm:$0xff]
        %v1601 = vld [vmem:[%s3 + $0x140] sm:$0xff]
        %v1602 = vld [vmem:[%s3 + $0x148] sm:$0xff]
        %v1603 = vld [vmem:[%s3 + $0x150] sm:$0xff]
        %v1604 = vld [vmem:[%s3 + $0x158] sm:$0xff]
        %v1605 = vld [vmem:[%s3 + $0x160] sm:$0xff]
        %v1606 = vld [vmem:[%s3 + $0x168] sm:$0xff]
        %v1607 = vld [vmem:[%s3 + $0x170] sm:$0xff]
        %v1608 = vld [vmem:[%s3 + $0x178] sm:$0xff]
        %v1609 = vld [vmem:[%s3 + $0x180] sm:$0xff]
        %v1610 = vld [vmem:[%s3 + $0x188] sm:$0xff]
        %v1611 = vld [vmem:[%s3 + $0x190] sm:$0xff]
        %v1612 = vld [vmem:[%s3 + $0x198] sm:$0xff]
        %v1613 = vld [vmem:[%s3 + $0x1a0] sm:$0xff]
        %v1614 = vld [vmem:[%s3 + $0x1a8] sm:$0xff]
        %v1615 = vld [vmem:[%s3 + $0x1b0] sm:$0xff]
        %v1616 = vld [vmem:[%s3 + $0x1b8] sm:$0xff]
        %v1617 = vld [vmem:[%s3 + $0x1c0] sm:$0xff]
        %v1618 = vld [vmem:[%s3 + $0x1c8] sm:$0xff]
        %v1619 = vld [vmem:[%s3 + $0x1d0] sm:$0xff]
        %v1620 = vld [vmem:[%s3 + $0x1d8] sm:$0xff]
        %v1621 = vld [vmem:[%s3 + $0x1e0] sm:$0xff]
        %v1622 = vld [vmem:[%s3 + $0x1e8] sm:$0xff]
        %v1623 = vld [vmem:[%s3 + $0x1f0] sm:$0xff]
        %v1624 = vld [vmem:[%s3 + $0x1f8] sm:$0xff]
        %v1625 = vld [vmem:[%s3 + $0x200] sm:$0xff]
        %v1626 = vld [vmem:[%s3 + $0x208] sm:$0xff]
        %v1627 = vld [vmem:[%s3 + $0x210] sm:$0xff]
        %v1628 = vld [vmem:[%s3 + $0x218] sm:$0xff]
        %v1629 = vld [vmem:[%s3 + $0x220] sm:$0xff]
        %v1630 = vld [vmem:[%s3 + $0x228] sm:$0xff]
        %v1631 = vld [vmem:[%s3 + $0x230] sm:$0xff]
        %v1632 = vld [vmem:[%s3 + $0x238] sm:$0xff]
        %v1633 = vld [vmem:[%s3 + $0x240] sm:$0xff]
        %v1634 = vld [vmem:[%s3 + $0x248] sm:$0xff]
        %v1635 = vld [vmem:[%s3 + $0x250] sm:$0xff]
        %v1636 = vld [vmem:[%s3 + $0x258] sm:$0xff]
        %v1637 = vld [vmem:[%s3 + $0x260] sm:$0xff]
        %v1638 = vld [vmem:[%s3 + $0x268] sm:$0xff]
        %v1639 = vld [vmem:[%s3 + $0x270] sm:$0xff]
        %v1640 = vld [vmem:[%s3 + $0x278] sm:$0xff]
        %v1641 = vld [vmem:[%s3 + $0x280] sm:$0xff]
        %v1642 = vld [vmem:[%s3 + $0x288] sm:$0xff]
        %v1643 = vld [vmem:[%s3 + $0x290] sm:$0xff]
        %v1644 = vld [vmem:[%s3 + $0x298] sm:$0xff]
        %v1645 = vld [vmem:[%s3 + $0x2a0] sm:$0xff]
        %v1646 = vld [vmem:[%s3 + $0x2a8] sm:$0xff]
        %v1647 = vld [vmem:[%s3 + $0x2b0] sm:$0xff]
        %v1648 = vld [vmem:[%s3 + $0x2b8] sm:$0xff]
        %v1649 = vld [vmem:[%s3 + $0x2c0] sm:$0xff]
        %v1650 = vld [vmem:[%s3 + $0x2c8] sm:$0xff]
        %v1651 = vld [vmem:[%s3 + $0x2d0] sm:$0xff]
        %v1652 = vld [vmem:[%s3 + $0x2d8] sm:$0xff]
        %v1653 = vld [vmem:[%s3 + $0x2e0] sm:$0xff]
        %v1654 = vld [vmem:[%s3 + $0x2e8] sm:$0xff]
        %v1655 = vld [vmem:[%s3 + $0x2f0] sm:$0xff]
        %v1656 = vld [vmem:[%s3 + $0x2f8] sm:$0xff]
        %v1657 = vpack.c.bf16 %v1555, %v1549
        %v1658 = vpack.c.bf16 %v1556, %v1550
        %v1659 = vpack.c.bf16 %v1557, %v1551
        %v1660 = vpack.c.bf16 %v1558, %v1552
        %v1661 = vpack.c.bf16 %v1559, %v1553
        %v1662 = vpack.c.bf16 %v1560, %v1554
        %v1663 = vpack.c.bf16 %v1562, %v1561
        %v1664 = vpack.c.bf16 %v1564, %v1563
        %v1665 = vpack.c.bf16 %v1566, %v1565
        %v1666 = vpack.c.bf16 %v1568, %v1567
        %v1667 = vpack.c.bf16 %v1570, %v1569
        %v1668 = vpack.c.bf16 %v1572, %v1571
        %v1669 = vpack.c.bf16 %v1574, %v1573
        %v1670 = vpack.c.bf16 %v1576, %v1575
        %v1671 = vpack.c.bf16 %v1578, %v1577
        %v1672 = vpack.c.bf16 %v1580, %v1579
        %v1673 = vpack.c.bf16 %v1582, %v1581
        %v1674 = vpack.c.bf16 %v1584, %v1583
        %v1675 = vpack.c.bf16 %v1586, %v1585
        %v1676 = vpack.c.bf16 %v1588, %v1587
        %v1677 = vpack.c.bf16 %v1590, %v1589
        %v1678 = vpack.c.bf16 %v1592, %v1591
        %v1679 = vpack.c.bf16 %v1594, %v1593
        %v1680 = vpack.c.bf16 %v1596, %v1595
        %v1681 = vpack.c.bf16 %v1598, %v1597
        %v1682 = vpack.c.bf16 %v1600, %v1599
        %v1683 = vpack.c.bf16 %v1602, %v1601
        %v1684 = vpack.c.bf16 %v1604, %v1603
        %v1685 = vpack.c.bf16 %v1606, %v1605
        %v1686 = vpack.c.bf16 %v1608, %v1607
        %v1687 = vpack.c.bf16 %v1610, %v1609
        %v1688 = vpack.c.bf16 %v1612, %v1611
        %v1689 = vpack.c.bf16 %v1614, %v1613
        %v1690 = vpack.c.bf16 %v1616, %v1615
        %v1691 = vpack.c.bf16 %v1618, %v1617
        %v1692 = vpack.c.bf16 %v1620, %v1619
        %v1693 = vpack.c.bf16 %v1622, %v1621
        %v1694 = vpack.c.bf16 %v1624, %v1623
        %v1695 = vpack.c.bf16 %v1626, %v1625
        %v1696 = vpack.c.bf16 %v1628, %v1627
        %v1697 = vpack.c.bf16 %v1630, %v1629
        %v1698 = vpack.c.bf16 %v1632, %v1631
        %v1699 = vpack.c.bf16 %v1634, %v1633
        %v1700 = vpack.c.bf16 %v1636, %v1635
        %v1701 = vpack.c.bf16 %v1638, %v1637
        %v1702 = vpack.c.bf16 %v1640, %v1639
        %v1703 = vpack.c.bf16 %v1642, %v1641
        %v1704 = vpack.c.bf16 %v1644, %v1643
        %v1705 = vpack.c.bf16 %v1646, %v1645
        %v1706 = vpack.c.bf16 %v1648, %v1647
        %v1707 = vpack.c.bf16 %v1650, %v1649
        %v1708 = vpack.c.bf16 %v1652, %v1651
        %v1709 = vpack.c.bf16 %v1654, %v1653
        %v1710 = vpack.c.bf16 %v1656, %v1655
        %v1711 = vld [vmem:[%s5] sm:$0x1]
        %v1713 = vlaneseq
        %v1714 = vshrl.u32 %v1713, 7
        %v1715 = vsub.s32 0, %v1714
        %v1716 = vrot.slane %v1711, %v1715
        %1718 = vmatprep.subr.bf16.mxu0 0
        %1719 = vmatpush1.bf16.msra.mxu0 %v1670
        %1720 = vmatprep.subr.bf16.mxu0 0
        %1721 = vmatpush1.bf16.msra.mxu0 %v1669
        %1722 = vmatprep.subr.bf16.mxu0 0
        %1723 = vmatpush1.bf16.msra.mxu0 %v1668
        %1724 = vmatprep.subr.bf16.mxu0 0
        %1725 = vmatpush1.bf16.msra.mxu0 %v1667
        %1726 = vmatprep.subr.bf16.mxu0 0
        %1727 = vmatpush1.bf16.msra.mxu0 %v1666
        %1728 = vmatprep.subr.bf16.mxu0 0
        %1729 = vmatpush1.bf16.msra.mxu0 %v1665
        %1730 = vmatprep.subr.bf16.mxu0 0
        %1731 = vmatpush1.bf16.msra.mxu0 %v1664
        %1732 = vmatprep.subr.bf16.mxu0 0
        %1733 = vmatpush1.bf16.msra.mxu0 %v1663
        %1734 = vmatprep.subr.bf16.mxu0 0
        %1735 = vmatpush2.bf16.msra.mxu0 %v1678
        %1736 = vmatprep.subr.bf16.mxu0 0
        %1737 = vmatpush2.bf16.msra.mxu0 %v1677
        %1738 = vmatprep.subr.bf16.mxu0 0
        %1739 = vmatpush2.bf16.msra.mxu0 %v1676
        %1740 = vmatprep.subr.bf16.mxu0 0
        %1741 = vmatpush2.bf16.msra.mxu0 %v1675
        %1742 = vmatprep.subr.bf16.mxu0 0
        %1743 = vmatpush2.bf16.msra.mxu0 %v1674
        %1744 = vmatprep.subr.bf16.mxu0 0
        %1745 = vmatpush2.bf16.msra.mxu0 %v1673
        %1746 = vmatprep.subr.bf16.mxu0 0
        %1747 = vmatpush2.bf16.msra.mxu0 %v1672
        %1748 = vmatprep.subr.bf16.mxu0 0
        %1749 = vmatpush2.bf16.msra.mxu0 %v1671
        %1750 = vmatprep.mubr.bf16.mxu0 %v1658
        %1751 = vmatmul.mubr.bf16.gmra.mxu0 %v1657
        %v1752 = vpop.f32.mrf.mxu0
        %v1753 = vadd.f32 %v1716, %v1752
        %v1754 = vpop.f32.mrf.mxu0
        %v1755 = vpop.f32.mrf.mxu0
        %v1756 = vadd.f32 %v1716, %v1755
        %v1757 = vpop.f32.mrf.mxu0
        %1758 = vdwg.mxu0
        %1759 = vmatprep.subr.bf16.mxu0 0
        %1760 = vmatpush1.bf16.msra.mxu0 %v1686
        %1761 = vmatprep.subr.bf16.mxu0 0
        %1762 = vmatpush1.bf16.msra.mxu0 %v1685
        %1763 = vmatprep.subr.bf16.mxu0 0
        %1764 = vmatpush1.bf16.msra.mxu0 %v1684
        %1765 = vmatprep.subr.bf16.mxu0 0
        %1766 = vmatpush1.bf16.msra.mxu0 %v1683
        %1767 = vmatprep.subr.bf16.mxu0 0
        %1768 = vmatpush1.bf16.msra.mxu0 %v1682
        %1769 = vmatprep.subr.bf16.mxu0 0
        %1770 = vmatpush1.bf16.msra.mxu0 %v1681
        %1771 = vmatprep.subr.bf16.mxu0 0
        %1772 = vmatpush1.bf16.msra.mxu0 %v1680
        %1773 = vmatprep.subr.bf16.mxu0 0
        %1774 = vmatpush1.bf16.msra.mxu0 %v1679
        %1775 = vmatprep.subr.bf16.mxu0 0
        %1776 = vmatpush2.bf16.msra.mxu0 %v1694
        %1777 = vmatprep.subr.bf16.mxu0 0
        %1778 = vmatpush2.bf16.msra.mxu0 %v1693
        %1779 = vmatprep.subr.bf16.mxu0 0
        %1780 = vmatpush2.bf16.msra.mxu0 %v1692
        %1781 = vmatprep.subr.bf16.mxu0 0
        %1782 = vmatpush2.bf16.msra.mxu0 %v1691
        %1783 = vmatprep.subr.bf16.mxu0 0
        %1784 = vmatpush2.bf16.msra.mxu0 %v1690
        %1785 = vmatprep.subr.bf16.mxu0 0
        %1786 = vmatpush2.bf16.msra.mxu0 %v1689
        %1787 = vmatprep.subr.bf16.mxu0 0
        %1788 = vmatpush2.bf16.msra.mxu0 %v1688
        %1789 = vmatprep.subr.bf16.mxu0 0
        %1790 = vmatpush2.bf16.msra.mxu0 %v1687
        %1791 = vmatprep.mubr.bf16.mxu0 %v1660
        %1792 = vmatmul.mubr.bf16.gmra.mxu0 %v1659
        %v1793 = vpop.f32.mrf.mxu0
        %v1794 = vadd.f32 %v1753, %v1793
        %v1795 = vpop.f32.mrf.mxu0
        %v1796 = vpop.f32.mrf.mxu0
        %v1797 = vadd.f32 %v1756, %v1796
        %v1798 = vpop.f32.mrf.mxu0
        %1799 = vdwg.mxu0
        %1800 = vmatprep.subr.bf16.mxu0 0
        %1801 = vmatpush1.bf16.msra.mxu0 %v1702
        %1802 = vmatprep.subr.bf16.mxu0 0
        %1803 = vmatpush1.bf16.msra.mxu0 %v1701
        %1804 = vmatprep.subr.bf16.mxu0 0
        %1805 = vmatpush1.bf16.msra.mxu0 %v1700
        %1806 = vmatprep.subr.bf16.mxu0 0
        %1807 = vmatpush1.bf16.msra.mxu0 %v1699
        %1808 = vmatprep.subr.bf16.mxu0 0
        %1809 = vmatpush1.bf16.msra.mxu0 %v1698
        %1810 = vmatprep.subr.bf16.mxu0 0
        %1811 = vmatpush1.bf16.msra.mxu0 %v1697
        %1812 = vmatprep.subr.bf16.mxu0 0
        %1813 = vmatpush1.bf16.msra.mxu0 %v1696
        %1814 = vmatprep.subr.bf16.mxu0 0
        %1815 = vmatpush1.bf16.msra.mxu0 %v1695
        %1816 = vmatprep.subr.bf16.mxu0 0
        %1817 = vmatpush2.bf16.msra.mxu0 %v1710
        %1818 = vmatprep.subr.bf16.mxu0 0
        %1819 = vmatpush2.bf16.msra.mxu0 %v1709
        %1820 = vmatprep.subr.bf16.mxu0 0
        %1821 = vmatpush2.bf16.msra.mxu0 %v1708
        %1822 = vmatprep.subr.bf16.mxu0 0
        %1823 = vmatpush2.bf16.msra.mxu0 %v1707
        %1824 = vmatprep.subr.bf16.mxu0 0
        %1825 = vmatpush2.bf16.msra.mxu0 %v1706
        %1826 = vmatprep.subr.bf16.mxu0 0
        %1827 = vmatpush2.bf16.msra.mxu0 %v1705
        %1828 = vmatprep.subr.bf16.mxu0 0
        %1829 = vmatpush2.bf16.msra.mxu0 %v1704
        %1830 = vmatprep.subr.bf16.mxu0 0
        %1831 = vmatpush2.bf16.msra.mxu0 %v1703
        %1832 = vmatprep.mubr.bf16.mxu0 %v1662
        %1833 = vmatmul.mubr.bf16.gmra.mxu0 %v1661
        %v1834 = vpop.f32.mrf.mxu0
        %v1835 = vadd.f32 %v1794, %v1834
        %v1836 = vpop.f32.mrf.mxu0
        %v1837 = vpop.f32.mrf.mxu0
        %v1838 = vadd.f32 %v1797, %v1837
        %v1839 = vpop.f32.mrf.mxu0
        %1840 = vdwg.mxu0
        %v1841 = vld [vmem:[%s9] sm:$0xff]
        %v1842 = vld [vmem:[%s9 + $0x8] sm:$0xff]
        %v1843 = vld [vmem:[%s9 + $0x10] sm:$0x1]
        %vm1847 = vcmask 1046528
        %v1848 = vrot.slane %v1841, 1
        %v1849 = vrot.slane %v1842, 1
        %v1850 = vsel %vm1847, %v1848, %v1849
        %v1851 = vrot.slane %v1843, 1
        %v1852 = vsel %vm1847, %v1849, %v1851
        %v1855 = vadd.f32 %v1835, %v1850
        %v1856 = vadd.f32 %v1838, %v1852
        %v1857 = vld [vmem:[%s7] sm:$0x1]
        %v1858 = vadd.f32 %v1857, %v1841
        %v1859 = vld [vmem:[%s23] sm:$0x1]
        %v1860 = vld [vmem:[%s25] sm:$0x1]
        %v1861 = vld [vmem:[%s27] sm:$0xff]
        %v1862 = vld [vmem:[%s27 + $0x8] sm:$0xff]
        %v1863 = vld [vmem:[%s27 + $0x10] sm:$0xff]
        %v1864 = vld [vmem:[%s27 + $0x18] sm:$0xff]
        %v1865 = vld [vmem:[%s29] sm:$0x1]
        %vm1866 = vcmask 261120
        %v1867 = vsel %vm1866, %v1855, 0.0
        %1868 = vadd.xlane.f32.xlu0 %v1867
        %v1869 = vpop.xlane.xlu0 %1868
        %v1870 = vsel %vm1866, %v1856, 0.0
        %1871 = vadd.xlane.f32.xlu0 %v1870
        %v1872 = vpop.xlane.xlu0 %1871
        %v1873 = vrcp.pop 32.0
        %v1874 = vmul.f32 %v1869, %v1873
        %v1875 = vmul.f32 %v1872, %v1873
        %v1876 = vsub.f32 %v1855, %v1874
        %v1877 = vsub.f32 %v1856, %v1875
        %v1878 = vmul.f32 %v1876, %v1876
        %v1879 = vmul.f32 %v1877, %v1877
        %v1880 = vsel %vm1866, %v1878, 0.0
        %1881 = vadd.xlane.f32.xlu0 %v1880
        %v1882 = vpop.xlane.xlu0 %1881
        %v1883 = vsel %vm1866, %v1879, 0.0
        %1884 = vadd.xlane.f32.xlu0 %v1883
        %v1885 = vpop.xlane.xlu0 %1884
        %v1886 = vmul.f32 %v1882, %v1873
        %v1887 = vmul.f32 %v1885, %v1873
        %v1888 = vadd.f32 %v1886, 1e-06
        %v1889 = vadd.f32 %v1887, 1e-06
        %v1890 = vrsqrt.pop %v1888
        %v1891 = vrsqrt.pop %v1889
        %v1892 = vmul.f32 %v1876, %v1890
        %v1893 = vmul.f32 %v1877, %v1891
        %v1895 = vlaneseq
        %v1896 = vshrl.u32 %v1895, 7
        %v1897 = vsub.s32 0, %v1896
        %v1898 = vrot.slane %v1859, %v1897
        %v1900 = vmul.f32 %v1892, %v1898
        %v1901 = vmul.f32 %v1893, %v1898
        %v1903 = vlaneseq
        %v1904 = vshrl.u32 %v1903, 7
        %v1905 = vsub.s32 0, %v1904
        %v1906 = vrot.slane %v1860, %v1905
        %v1908 = vadd.f32 %v1900, %v1906
        %v1909 = vadd.f32 %v1901, %v1906
        %v1910 = vpack.c.bf16 %v1909, %v1908
        %v1911 = vpack.c.bf16 %v1862, %v1861
        %v1912 = vpack.c.bf16 %v1864, %v1863
        %v1914 = vlaneseq
        %v1915 = vshrl.u32 %v1914, 7
        %v1916 = vsub.s32 0, %v1915
        %v1917 = vrot.slane %v1865, %v1916
        %v1920 = vsel %vm1866, %v1910, 0
        %1922 = vmatprep.subr.bf16.mxu0 0
        %1923 = vmatpush1.bf16.msra.mxu0 0
        %1924 = vmatprep.subr.bf16.mxu0 0
        %1925 = vmatpush1.bf16.msra.mxu0 0
        %1926 = vmatprep.subr.bf16.mxu0 0
        %1927 = vmatpush1.bf16.msra.mxu0 0
        %1928 = vmatprep.subr.bf16.mxu0 0
        %1929 = vmatpush1.bf16.msra.mxu0 0
        %1930 = vmatprep.subr.bf16.mxu0 0
        %1931 = vmatpush1.bf16.msra.mxu0 0
        %1932 = vmatprep.subr.bf16.mxu0 0
        %1933 = vmatpush1.bf16.msra.mxu0 0
        %1934 = vmatprep.subr.bf16.mxu0 0
        %1935 = vmatpush1.bf16.msra.mxu0 %v1912
        %1936 = vmatprep.subr.bf16.mxu0 0
        %1937 = vmatpush1.bf16.msra.mxu0 %v1911
        %1938 = vmatprep.subr.bf16.mxu0 0
        %1939 = vmatpush2.bf16.msra.mxu0 0
        %1940 = vmatprep.subr.bf16.mxu0 0
        %1941 = vmatpush2.bf16.msra.mxu0 0
        %1942 = vmatprep.subr.bf16.mxu0 0
        %1943 = vmatpush2.bf16.msra.mxu0 0
        %1944 = vmatprep.subr.bf16.mxu0 0
        %1945 = vmatpush2.bf16.msra.mxu0 0
        %1946 = vmatprep.subr.bf16.mxu0 0
        %1947 = vmatpush2.bf16.msra.mxu0 0
        %1948 = vmatprep.subr.bf16.mxu0 0
        %1949 = vmatpush2.bf16.msra.mxu0 0
        %1950 = vmatprep.subr.bf16.mxu0 0
        %1951 = vmatpush2.bf16.msra.mxu0 0
        %1952 = vmatprep.subr.bf16.mxu0 0
        %1953 = vmatpush2.bf16.msra.mxu0 0
        %1954 = vmatprep.mubr.bf16.mxu0 0
        %1955 = vmatmul.mubr.bf16.gmra.mxu0 %v1920
        %v1956 = vpop.f32.mrf.mxu0
        %v1957 = vadd.f32 %v1917, %v1956
        %v1958 = vpop.f32.mrf.mxu0
        %v1959 = vpop.f32.mrf.mxu0
        %v1960 = vadd.f32 %v1917, %v1959
        %v1961 = vpop.f32.mrf.mxu0
        %1962 = vdwg.mxu0
        %vm1963 = vcmask 253952
        %v1964 = vsel %vm1963, %v1858, 0.0
        %1965 = vadd.xlane.f32.xlu0 %v1964
        %v1966 = vpop.xlane.xlu0 %1965
        %v1967 = vmul.f32 %v1966, %v1873
        %v1968 = vsub.f32 %v1858, %v1967
        %v1969 = vmul.f32 %v1968, %v1968
        %v1970 = vsel %vm1963, %v1969, 0.0
        %1971 = vadd.xlane.f32.xlu0 %v1970
        %v1972 = vpop.xlane.xlu0 %1971
        %v1973 = vmul.f32 %v1972, %v1873
        %v1974 = vadd.f32 %v1973, 1e-06
        %v1975 = vrsqrt.pop %v1974
        %v1976 = vmul.f32 %v1968, %v1975
        %v1977 = vmul.f32 %v1976, %v1859
        %v1978 = vadd.f32 %v1977, %v1860
        %v1979 = vpack.c.bf16 %v1978, %v1978
        %v1981 = vsel %vm1866, %v1979, 0
        %1983 = vmatprep.subr.bf16.mxu0 0
        %1984 = vmatpush1.bf16.msra.mxu0 0
        %1985 = vmatprep.subr.bf16.mxu0 0
        %1986 = vmatpush1.bf16.msra.mxu0 0
        %1987 = vmatprep.subr.bf16.mxu0 0
        %1988 = vmatpush1.bf16.msra.mxu0 0
        %1989 = vmatprep.subr.bf16.mxu0 0
        %1990 = vmatpush1.bf16.msra.mxu0 0
        %1991 = vmatprep.subr.bf16.mxu0 0
        %1992 = vmatpush1.bf16.msra.mxu0 0
        %1993 = vmatprep.subr.bf16.mxu0 0
        %1994 = vmatpush1.bf16.msra.mxu0 0
        %1995 = vmatprep.subr.bf16.mxu0 0
        %1996 = vmatpush1.bf16.msra.mxu0 %v1912
        %1997 = vmatprep.subr.bf16.mxu0 0
        %1998 = vmatpush1.bf16.msra.mxu0 %v1911
        %1999 = vmatprep.subr.bf16.mxu0 0
        %2000 = vmatpush2.bf16.msra.mxu0 0
        %2001 = vmatprep.subr.bf16.mxu0 0
        %2002 = vmatpush2.bf16.msra.mxu0 0
        %2003 = vmatprep.subr.bf16.mxu0 0
        %2004 = vmatpush2.bf16.msra.mxu0 0
        %2005 = vmatprep.subr.bf16.mxu0 0
        %2006 = vmatpush2.bf16.msra.mxu0 0
        %2007 = vmatprep.subr.bf16.mxu0 0
        %2008 = vmatpush2.bf16.msra.mxu0 0
        %2009 = vmatprep.subr.bf16.mxu0 0
        %2010 = vmatpush2.bf16.msra.mxu0 0
        %2011 = vmatprep.subr.bf16.mxu0 0
        %2012 = vmatpush2.bf16.msra.mxu0 0
        %2013 = vmatprep.subr.bf16.mxu0 0
        %2014 = vmatpush2.bf16.msra.mxu0 0
        %2015 = vmatprep.mubr.bf16.mxu0 0
        %2016 = vmatmul.mubr.bf16.gmra.mxu0 %v1981
        %v2017 = vpop.f32.mrf.mxu0
        %v2018 = vadd.f32 %v1865, %v2017
        %v2019 = vpop.f32.mrf.mxu0
        %v2020 = vpop.f32.mrf.mxu0
        %v2021 = vpop.f32.mrf.mxu0
        %2022 = vdwg.mxu0
        %v2023 = vld [vmem:[%s11] sm:$0xff]
        %v2024 = vld [vmem:[%s11 + $0x8] sm:$0xff]
        %v2025 = vld [vmem:[%s11 + $0x10] sm:$0xff]
        %v2026 = vld [vmem:[%s11 + $0x18] sm:$0xff]
        %v2027 = vld [vmem:[%s13] sm:$0xff]
        %v2028 = vld [vmem:[%s13 + $0x8] sm:$0xff]
        %v2029 = vld [vmem:[%s13 + $0x10] sm:$0xff]
        %v2030 = vld [vmem:[%s13 + $0x18] sm:$0xff]
        %v2031 = vld [vmem:[%s13 + $0x20] sm:$0xff]
        %v2032 = vld [vmem:[%s13 + $0x28] sm:$0xff]
        %v2033 = vld [vmem:[%s13 + $0x30] sm:$0xff]
        %v2034 = vld [vmem:[%s13 + $0x38] sm:$0xff]
        %v2035 = vld [vmem:[%s35] sm:$0x1]
        %v2036 = vld [vmem:[%s37] sm:$0x1]
        %v2037 = vld [vmem:[%s31] sm:$0xff]
        %v2038 = vld [vmem:[%s31 + $0x8] sm:$0xff]
        %v2039 = vld [vmem:[%s31 + $0x10] sm:$0xff]
        %v2040 = vld [vmem:[%s31 + $0x18] sm:$0xff]
        %v2041 = vld [vmem:[%s31 + $0x20] sm:$0xf]
        %v2042 = vld [vmem:[%s33] sm:$0xff]
        %v2043 = vld [vmem:[%s33 + $0x8] sm:$0x1]
        %vm2044 = vcmask 130048
        %v2046 = vsel %vm2044, %v2037, 0
        %v2049 = vsel %vm2044, %v2038, 0
        %v2052 = vsel %vm2044, %v2039, 0
        %v2055 = vsel %vm2044, %v2040, 0
        %v2058 = vsel %vm2044, %v2041, 0
        %2060 = vmatprep.subr.mxu0 0.0
        %2061 = vmatpush1.msra.mxu0 0.0
        %2062 = vmatprep.subr.mxu0 0.0
        %2063 = vmatpush1.msra.mxu0 0.0
        %2064 = vmatprep.subr.mxu0 0.0
        %2065 = vmatpush1.msra.mxu0 0.0
        %2066 = vmatprep.subr.mxu0 0.0
        %2067 = vmatpush1.msra.mxu0 0.0
        %2068 = vmatprep.subr.mxu0 0.0
        %2069 = vmatpush1.msra.mxu0 0.0
        %2070 = vmatprep.subr.mxu0 0.0
        %2071 = vmatpush1.msra.mxu0 0.0
        %2072 = vmatprep.subr.mxu0 0.0
        %2073 = vmatpush1.msra.mxu0 0.0
        %2074 = vmatprep.subr.mxu0 0.0
        %2075 = vmatpush1.msra.mxu0 0.0
        %2076 = vmatprep.subr.mxu0 0.0
        %2077 = vmatpush1.msra.mxu0 0.0
        %2078 = vmatprep.subr.mxu0 0.0
        %2079 = vmatpush1.msra.mxu0 0.0
        %2080 = vmatprep.subr.mxu0 0.0
        %2081 = vmatpush1.msra.mxu0 0.0
        %2082 = vmatprep.subr.mxu0 0.0
        %2083 = vmatpush1.msra.mxu0 0.0
        %2084 = vmatprep.subr.mxu0 0.0
        %2085 = vmatpush1.msra.mxu0 0.0
        %2086 = vmatprep.subr.mxu0 0.0
        %2087 = vmatpush1.msra.mxu0 0.0
        %2088 = vmatprep.subr.mxu0 0.0
        %2089 = vmatpush1.msra.mxu0 %v1960
        %2090 = vmatprep.subr.mxu0 0.0
        %2091 = vmatpush1.msra.mxu0 %v1957
        %2092 = vmatprep.subr.mxu0 0.0
        %2093 = vmatpush2.msra.mxu0 0.0
        %2094 = vmatprep.subr.mxu0 0.0
        %2095 = vmatpush2.msra.mxu0 0.0
        %2096 = vmatprep.subr.mxu0 0.0
        %2097 = vmatpush2.msra.mxu0 0.0
        %2098 = vmatprep.subr.mxu0 0.0
        %2099 = vmatpush2.msra.mxu0 0.0
        %2100 = vmatprep.subr.mxu0 0.0
        %2101 = vmatpush2.msra.mxu0 0.0
        %2102 = vmatprep.subr.mxu0 0.0
        %2103 = vmatpush2.msra.mxu0 0.0
        %2104 = vmatprep.subr.mxu0 0.0
        %2105 = vmatpush2.msra.mxu0 0.0
        %2106 = vmatprep.subr.mxu0 0.0
        %2107 = vmatpush2.msra.mxu0 0.0
        %2108 = vmatprep.subr.mxu0 0.0
        %2109 = vmatpush2.msra.mxu0 0.0
        %2110 = vmatprep.subr.mxu0 0.0
        %2111 = vmatpush2.msra.mxu0 0.0
        %2112 = vmatprep.subr.mxu0 0.0
        %2113 = vmatpush2.msra.mxu0 0.0
        %2114 = vmatprep.subr.mxu0 0.0
        %2115 = vmatpush2.msra.mxu0 0.0
        %2116 = vmatprep.subr.mxu0 0.0
        %2117 = vmatpush2.msra.mxu0 0.0
        %2118 = vmatprep.subr.mxu0 0.0
        %2119 = vmatpush2.msra.mxu0 0.0
        %2120 = vmatprep.subr.mxu0 0.0
        %2121 = vmatpush2.msra.mxu0 0.0
        %2122 = vmatprep.subr.mxu0 0.0
        %2123 = vmatpush2.msra.mxu0 0.0
        %2124 = vmatprep.mubr.f32.mxu0 0.0
        %2125 = vmatmul.mubr.f32.gmra.mxu0 %v2046
        %v2126 = vpop.f32.mrf.mxu0
        %v2127 = vadd.f32 0.0, %v2126
        %v2128 = vpop.f32.mrf.mxu0
        %2129 = vmatprep.mubr.f32.mxu0 0.0
        %2130 = vmatmul.mubr.f32.gmra.mxu0 %v2049
        %v2131 = vpop.f32.mrf.mxu0
        %v2132 = vadd.f32 0.0, %v2131
        %v2133 = vpop.f32.mrf.mxu0
        %2134 = vmatprep.mubr.f32.mxu0 0.0
        %2135 = vmatmul.mubr.f32.gmra.mxu0 %v2052
        %v2136 = vpop.f32.mrf.mxu0
        %v2137 = vadd.f32 0.0, %v2136
        %v2138 = vpop.f32.mrf.mxu0
        %2139 = vmatprep.mubr.f32.mxu0 0.0
        %2140 = vmatmul.mubr.f32.gmra.mxu0 %v2055
        %v2141 = vpop.f32.mrf.mxu0
        %v2142 = vadd.f32 0.0, %v2141
        %v2143 = vpop.f32.mrf.mxu0
        %2144 = vmatprep.mubr.f32.mxu0 0.0
        %2145 = vmatmul.mubr.f32.gmra.mxu0 %v2058
        %v2146 = vpop.f32.mrf.mxu0
        %v2147 = vadd.f32 0.0, %v2146
        %v2148 = vpop.f32.mrf.mxu0
        %2149 = vdwg.mxu0
        %v2150 = vlaneseq
        %v2151 = vshrl.u32 %v2150, 7
        %v2152 = vsub.s32 0, %v2151
        %v2153 = vrot.slane %v2042, %v2152
        %v2154 = vmul.f32 %v2127, %v2153
        %v2155 = vlaneseq
        %v2156 = vshrl.u32 %v2155, 7
        %v2157 = vsub.s32 1, %v2156
        %v2158 = vrot.slane %v2042, %v2157
        %v2159 = vmul.f32 %v2127, %v2158
        %v2161 = vrot.slane %v2159, 4
        %v2163 = vadd.f32 %v2154, %v2161
        %v2164 = vlaneseq
        %v2165 = vshrl.u32 %v2164, 7
        %v2166 = vsub.s32 2, %v2165
        %v2167 = vrot.slane %v2042, %v2166
        %v2168 = vmul.f32 %v2132, %v2167
        %v2169 = vadd.f32 %v2163, %v2168
        %v2170 = vlaneseq
        %v2171 = vshrl.u32 %v2170, 7
        %v2172 = vsub.s32 3, %v2171
        %v2173 = vrot.slane %v2042, %v2172
        %v2174 = vmul.f32 %v2132, %v2173
        %v2176 = vrot.slane %v2174, 4
        %v2178 = vadd.f32 %v2169, %v2176
        %v2179 = vlaneseq
        %v2180 = vshrl.u32 %v2179, 7
        %v2181 = vsub.s32 4, %v2180
        %v2182 = vrot.slane %v2042, %v2181
        %v2183 = vmul.f32 %v2137, %v2182
        %v2184 = vadd.f32 %v2178, %v2183
        %v2185 = vlaneseq
        %v2186 = vshrl.u32 %v2185, 7
        %v2187 = vsub.s32 5, %v2186
        %v2188 = vrot.slane %v2042, %v2187
        %v2189 = vmul.f32 %v2137, %v2188
        %v2191 = vrot.slane %v2189, 4
        %v2193 = vadd.f32 %v2184, %v2191
        %v2194 = vlaneseq
        %v2195 = vshrl.u32 %v2194, 7
        %v2196 = vsub.s32 6, %v2195
        %v2197 = vrot.slane %v2042, %v2196
        %v2198 = vmul.f32 %v2142, %v2197
        %v2199 = vadd.f32 %v2193, %v2198
        %v2200 = vlaneseq
        %v2201 = vshrl.u32 %v2200, 7
        %v2202 = vsub.s32 7, %v2201
        %v2203 = vrot.slane %v2042, %v2202
        %v2204 = vmul.f32 %v2142, %v2203
        %v2206 = vrot.slane %v2204, 4
        %v2208 = vadd.f32 %v2199, %v2206
        %v2209 = vlaneseq
        %v2210 = vshrl.u32 %v2209, 7
        %v2211 = vsub.s32 0, %v2210
        %v2212 = vrot.slane %v2043, %v2211
        %v2213 = vmul.f32 %v2147, %v2212
        %v2214 = vadd.f32 %v2208, %v2213
        %v2216 = vsel %vm1866, %v2214, 0
        %2218 = vmatprep.subr.mxu0 0.0
        %2219 = vmatpush1.msra.mxu0 0.0
        %2220 = vmatprep.subr.mxu0 0.0
        %2221 = vmatpush1.msra.mxu0 0.0
        %2222 = vmatprep.subr.mxu0 0.0
        %2223 = vmatpush1.msra.mxu0 0.0
        %2224 = vmatprep.subr.mxu0 0.0
        %2225 = vmatpush1.msra.mxu0 0.0
        %2226 = vmatprep.subr.mxu0 0.0
        %2227 = vmatpush1.msra.mxu0 0.0
        %2228 = vmatprep.subr.mxu0 0.0
        %2229 = vmatpush1.msra.mxu0 0.0
        %2230 = vmatprep.subr.mxu0 0.0
        %2231 = vmatpush1.msra.mxu0 0.0
        %2232 = vmatprep.subr.mxu0 0.0
        %2233 = vmatpush1.msra.mxu0 0.0
        %2234 = vmatprep.subr.mxu0 0.0
        %2235 = vmatpush1.msra.mxu0 0.0
        %2236 = vmatprep.subr.mxu0 0.0
        %2237 = vmatpush1.msra.mxu0 0.0
        %2238 = vmatprep.subr.mxu0 0.0
        %2239 = vmatpush1.msra.mxu0 0.0
        %2240 = vmatprep.subr.mxu0 0.0
        %2241 = vmatpush1.msra.mxu0 0.0
        %2242 = vmatprep.subr.mxu0 0.0
        %2243 = vmatpush1.msra.mxu0 %v2026
        %2244 = vmatprep.subr.mxu0 0.0
        %2245 = vmatpush1.msra.mxu0 %v2025
        %2246 = vmatprep.subr.mxu0 0.0
        %2247 = vmatpush1.msra.mxu0 %v2024
        %2248 = vmatprep.subr.mxu0 0.0
        %2249 = vmatpush1.msra.mxu0 %v2023
        %2250 = vmatprep.subr.mxu0 0.0
        %2251 = vmatpush2.msra.mxu0 0.0
        %2252 = vmatprep.subr.mxu0 0.0
        %2253 = vmatpush2.msra.mxu0 0.0
        %2254 = vmatprep.subr.mxu0 0.0
        %2255 = vmatpush2.msra.mxu0 0.0
        %2256 = vmatprep.subr.mxu0 0.0
        %2257 = vmatpush2.msra.mxu0 0.0
        %2258 = vmatprep.subr.mxu0 0.0
        %2259 = vmatpush2.msra.mxu0 0.0
        %2260 = vmatprep.subr.mxu0 0.0
        %2261 = vmatpush2.msra.mxu0 0.0
        %2262 = vmatprep.subr.mxu0 0.0
        %2263 = vmatpush2.msra.mxu0 0.0
        %2264 = vmatprep.subr.mxu0 0.0
        %2265 = vmatpush2.msra.mxu0 0.0
        %2266 = vmatprep.subr.mxu0 0.0
        %2267 = vmatpush2.msra.mxu0 0.0
        %2268 = vmatprep.subr.mxu0 0.0
        %2269 = vmatpush2.msra.mxu0 0.0
        %2270 = vmatprep.subr.mxu0 0.0
        %2271 = vmatpush2.msra.mxu0 0.0
        %2272 = vmatprep.subr.mxu0 0.0
        %2273 = vmatpush2.msra.mxu0 0.0
        %2274 = vmatprep.subr.mxu0 0.0
        %2275 = vmatpush2.msra.mxu0 0.0
        %2276 = vmatprep.subr.mxu0 0.0
        %2277 = vmatpush2.msra.mxu0 0.0
        %2278 = vmatprep.subr.mxu0 0.0
        %2279 = vmatpush2.msra.mxu0 0.0
        %2280 = vmatprep.subr.mxu0 0.0
        %2281 = vmatpush2.msra.mxu0 0.0
        %2282 = vmatprep.mubr.f32.mxu0 0.0
        %2283 = vmatmul.mubr.f32.gmra.mxu0 %v2216
        %v2284 = vpop.f32.mrf.mxu0
        %v2285 = vadd.f32 0.0, %v2284
        %v2286 = vpop.f32.mrf.mxu0
        %2287 = vdwg.mxu0
        %v2288 = vsub.f32 %v2214, %v2285
        %v2289 = vmul.f32 %v2288, %v2288
        %v2291 = vsel %vm1866, %v2289, 0
        %2293 = vmatprep.subr.mxu0 0.0
        %2294 = vmatpush1.msra.mxu0 0.0
        %2295 = vmatprep.subr.mxu0 0.0
        %2296 = vmatpush1.msra.mxu0 0.0
        %2297 = vmatprep.subr.mxu0 0.0
        %2298 = vmatpush1.msra.mxu0 0.0
        %2299 = vmatprep.subr.mxu0 0.0
        %2300 = vmatpush1.msra.mxu0 0.0
        %2301 = vmatprep.subr.mxu0 0.0
        %2302 = vmatpush1.msra.mxu0 0.0
        %2303 = vmatprep.subr.mxu0 0.0
        %2304 = vmatpush1.msra.mxu0 0.0
        %2305 = vmatprep.subr.mxu0 0.0
        %2306 = vmatpush1.msra.mxu0 0.0
        %2307 = vmatprep.subr.mxu0 0.0
        %2308 = vmatpush1.msra.mxu0 0.0
        %2309 = vmatprep.subr.mxu0 0.0
        %2310 = vmatpush1.msra.mxu0 0.0
        %2311 = vmatprep.subr.mxu0 0.0
        %2312 = vmatpush1.msra.mxu0 0.0
        %2313 = vmatprep.subr.mxu0 0.0
        %2314 = vmatpush1.msra.mxu0 0.0
        %2315 = vmatprep.subr.mxu0 0.0
        %2316 = vmatpush1.msra.mxu0 0.0
        %2317 = vmatprep.subr.mxu0 0.0
        %2318 = vmatpush1.msra.mxu0 %v2026
        %2319 = vmatprep.subr.mxu0 0.0
        %2320 = vmatpush1.msra.mxu0 %v2025
        %2321 = vmatprep.subr.mxu0 0.0
        %2322 = vmatpush1.msra.mxu0 %v2024
        %2323 = vmatprep.subr.mxu0 0.0
        %2324 = vmatpush1.msra.mxu0 %v2023
        %2325 = vmatprep.subr.mxu0 0.0
        %2326 = vmatpush2.msra.mxu0 0.0
        %2327 = vmatprep.subr.mxu0 0.0
        %2328 = vmatpush2.msra.mxu0 0.0
        %2329 = vmatprep.subr.mxu0 0.0
        %2330 = vmatpush2.msra.mxu0 0.0
        %2331 = vmatprep.subr.mxu0 0.0
        %2332 = vmatpush2.msra.mxu0 0.0
        %2333 = vmatprep.subr.mxu0 0.0
        %2334 = vmatpush2.msra.mxu0 0.0
        %2335 = vmatprep.subr.mxu0 0.0
        %2336 = vmatpush2.msra.mxu0 0.0
        %2337 = vmatprep.subr.mxu0 0.0
        %2338 = vmatpush2.msra.mxu0 0.0
        %2339 = vmatprep.subr.mxu0 0.0
        %2340 = vmatpush2.msra.mxu0 0.0
        %2341 = vmatprep.subr.mxu0 0.0
        %2342 = vmatpush2.msra.mxu0 0.0
        %2343 = vmatprep.subr.mxu0 0.0
        %2344 = vmatpush2.msra.mxu0 0.0
        %2345 = vmatprep.subr.mxu0 0.0
        %2346 = vmatpush2.msra.mxu0 0.0
        %2347 = vmatprep.subr.mxu0 0.0
        %2348 = vmatpush2.msra.mxu0 0.0
        %2349 = vmatprep.subr.mxu0 0.0
        %2350 = vmatpush2.msra.mxu0 0.0
        %2351 = vmatprep.subr.mxu0 0.0
        %2352 = vmatpush2.msra.mxu0 0.0
        %2353 = vmatprep.subr.mxu0 0.0
        %2354 = vmatpush2.msra.mxu0 0.0
        %2355 = vmatprep.subr.mxu0 0.0
        %2356 = vmatpush2.msra.mxu0 0.0
        %2357 = vmatprep.mubr.f32.mxu0 0.0
        %2358 = vmatmul.mubr.f32.gmra.mxu0 %v2291
        %v2359 = vpop.f32.mrf.mxu0
        %v2360 = vadd.f32 1e-05, %v2359
        %v2361 = vpop.f32.mrf.mxu0
        %2362 = vdwg.mxu0
        %v2363 = vrsqrt.pop %v2360
        %v2364 = vmul.f32 %v2288, %v2363
        %v2366 = vlaneseq
        %v2367 = vshrl.u32 %v2366, 7
        %v2368 = vsub.s32 0, %v2367
        %v2369 = vrot.slane %v2035, %v2368
        %v2371 = vmul.f32 %v2364, %v2369
        %v2373 = vlaneseq
        %v2374 = vshrl.u32 %v2373, 7
        %v2375 = vsub.s32 0, %v2374
        %v2376 = vrot.slane %v2036, %v2375
        %v2378 = vadd.f32 %v2371, %v2376
        %v2380 = vsel %vm1866, %v2018, 0
        %2382 = vmatprep.subr.mxu0 0.0
        %2383 = vmatpush1.msra.mxu0 0.0
        %2384 = vmatprep.subr.mxu0 0.0
        %2385 = vmatpush1.msra.mxu0 0.0
        %2386 = vmatprep.subr.mxu0 0.0
        %2387 = vmatpush1.msra.mxu0 0.0
        %2388 = vmatprep.subr.mxu0 0.0
        %2389 = vmatpush1.msra.mxu0 0.0
        %2390 = vmatprep.subr.mxu0 0.0
        %2391 = vmatpush1.msra.mxu0 0.0
        %2392 = vmatprep.subr.mxu0 0.0
        %2393 = vmatpush1.msra.mxu0 0.0
        %2394 = vmatprep.subr.mxu0 0.0
        %2395 = vmatpush1.msra.mxu0 0.0
        %2396 = vmatprep.subr.mxu0 0.0
        %2397 = vmatpush1.msra.mxu0 0.0
        %2398 = vmatprep.subr.mxu0 0.0
        %2399 = vmatpush1.msra.mxu0 0.0
        %2400 = vmatprep.subr.mxu0 0.0
        %2401 = vmatpush1.msra.mxu0 0.0
        %2402 = vmatprep.subr.mxu0 0.0
        %2403 = vmatpush1.msra.mxu0 0.0
        %2404 = vmatprep.subr.mxu0 0.0
        %2405 = vmatpush1.msra.mxu0 0.0
        %2406 = vmatprep.subr.mxu0 0.0
        %2407 = vmatpush1.msra.mxu0 %v2026
        %2408 = vmatprep.subr.mxu0 0.0
        %2409 = vmatpush1.msra.mxu0 %v2025
        %2410 = vmatprep.subr.mxu0 0.0
        %2411 = vmatpush1.msra.mxu0 %v2024
        %2412 = vmatprep.subr.mxu0 0.0
        %2413 = vmatpush1.msra.mxu0 %v2023
        %2414 = vmatprep.subr.mxu0 0.0
        %2415 = vmatpush2.msra.mxu0 0.0
        %2416 = vmatprep.subr.mxu0 0.0
        %2417 = vmatpush2.msra.mxu0 0.0
        %2418 = vmatprep.subr.mxu0 0.0
        %2419 = vmatpush2.msra.mxu0 0.0
        %2420 = vmatprep.subr.mxu0 0.0
        %2421 = vmatpush2.msra.mxu0 0.0
        %2422 = vmatprep.subr.mxu0 0.0
        %2423 = vmatpush2.msra.mxu0 0.0
        %2424 = vmatprep.subr.mxu0 0.0
        %2425 = vmatpush2.msra.mxu0 0.0
        %2426 = vmatprep.subr.mxu0 0.0
        %2427 = vmatpush2.msra.mxu0 0.0
        %2428 = vmatprep.subr.mxu0 0.0
        %2429 = vmatpush2.msra.mxu0 0.0
        %2430 = vmatprep.subr.mxu0 0.0
        %2431 = vmatpush2.msra.mxu0 0.0
        %2432 = vmatprep.subr.mxu0 0.0
        %2433 = vmatpush2.msra.mxu0 0.0
        %2434 = vmatprep.subr.mxu0 0.0
        %2435 = vmatpush2.msra.mxu0 0.0
        %2436 = vmatprep.subr.mxu0 0.0
        %2437 = vmatpush2.msra.mxu0 0.0
        %2438 = vmatprep.subr.mxu0 0.0
        %2439 = vmatpush2.msra.mxu0 0.0
        %2440 = vmatprep.subr.mxu0 0.0
        %2441 = vmatpush2.msra.mxu0 0.0
        %2442 = vmatprep.subr.mxu0 0.0
        %2443 = vmatpush2.msra.mxu0 0.0
        %2444 = vmatprep.subr.mxu0 0.0
        %2445 = vmatpush2.msra.mxu0 0.0
        %2446 = vmatprep.mubr.f32.mxu0 0.0
        %2447 = vmatmul.mubr.f32.gmra.mxu0 %v2380
        %v2448 = vpop.f32.mrf.mxu0
        %v2449 = vadd.f32 0.0, %v2448
        %v2450 = vpop.f32.mrf.mxu0
        %2451 = vdwg.mxu0
        %v2452 = vsub.f32 %v2018, %v2449
        %v2453 = vmul.f32 %v2452, %v2452
        %v2455 = vsel %vm1866, %v2453, 0
        %2457 = vmatprep.subr.mxu0 0.0
        %2458 = vmatpush1.msra.mxu0 0.0
        %2459 = vmatprep.subr.mxu0 0.0
        %2460 = vmatpush1.msra.mxu0 0.0
        %2461 = vmatprep.subr.mxu0 0.0
        %2462 = vmatpush1.msra.mxu0 0.0
        %2463 = vmatprep.subr.mxu0 0.0
        %2464 = vmatpush1.msra.mxu0 0.0
        %2465 = vmatprep.subr.mxu0 0.0
        %2466 = vmatpush1.msra.mxu0 0.0
        %2467 = vmatprep.subr.mxu0 0.0
        %2468 = vmatpush1.msra.mxu0 0.0
        %2469 = vmatprep.subr.mxu0 0.0
        %2470 = vmatpush1.msra.mxu0 0.0
        %2471 = vmatprep.subr.mxu0 0.0
        %2472 = vmatpush1.msra.mxu0 0.0
        %2473 = vmatprep.subr.mxu0 0.0
        %2474 = vmatpush1.msra.mxu0 0.0
        %2475 = vmatprep.subr.mxu0 0.0
        %2476 = vmatpush1.msra.mxu0 0.0
        %2477 = vmatprep.subr.mxu0 0.0
        %2478 = vmatpush1.msra.mxu0 0.0
        %2479 = vmatprep.subr.mxu0 0.0
        %2480 = vmatpush1.msra.mxu0 0.0
        %2481 = vmatprep.subr.mxu0 0.0
        %2482 = vmatpush1.msra.mxu0 %v2026
        %2483 = vmatprep.subr.mxu0 0.0
        %2484 = vmatpush1.msra.mxu0 %v2025
        %2485 = vmatprep.subr.mxu0 0.0
        %2486 = vmatpush1.msra.mxu0 %v2024
        %2487 = vmatprep.subr.mxu0 0.0
        %2488 = vmatpush1.msra.mxu0 %v2023
        %2489 = vmatprep.subr.mxu0 0.0
        %2490 = vmatpush2.msra.mxu0 0.0
        %2491 = vmatprep.subr.mxu0 0.0
        %2492 = vmatpush2.msra.mxu0 0.0
        %2493 = vmatprep.subr.mxu0 0.0
        %2494 = vmatpush2.msra.mxu0 0.0
        %2495 = vmatprep.subr.mxu0 0.0
        %2496 = vmatpush2.msra.mxu0 0.0
        %2497 = vmatprep.subr.mxu0 0.0
        %2498 = vmatpush2.msra.mxu0 0.0
        %2499 = vmatprep.subr.mxu0 0.0
        %2500 = vmatpush2.msra.mxu0 0.0
        %2501 = vmatprep.subr.mxu0 0.0
        %2502 = vmatpush2.msra.mxu0 0.0
        %2503 = vmatprep.subr.mxu0 0.0
        %2504 = vmatpush2.msra.mxu0 0.0
        %2505 = vmatprep.subr.mxu0 0.0
        %2506 = vmatpush2.msra.mxu0 0.0
        %2507 = vmatprep.subr.mxu0 0.0
        %2508 = vmatpush2.msra.mxu0 0.0
        %2509 = vmatprep.subr.mxu0 0.0
        %2510 = vmatpush2.msra.mxu0 0.0
        %2511 = vmatprep.subr.mxu0 0.0
        %2512 = vmatpush2.msra.mxu0 0.0
        %2513 = vmatprep.subr.mxu0 0.0
        %2514 = vmatpush2.msra.mxu0 0.0
        %2515 = vmatprep.subr.mxu0 0.0
        %2516 = vmatpush2.msra.mxu0 0.0
        %2517 = vmatprep.subr.mxu0 0.0
        %2518 = vmatpush2.msra.mxu0 0.0
        %2519 = vmatprep.subr.mxu0 0.0
        %2520 = vmatpush2.msra.mxu0 0.0
        %2521 = vmatprep.mubr.f32.mxu0 0.0
        %2522 = vmatmul.mubr.f32.gmra.mxu0 %v2455
        %v2523 = vpop.f32.mrf.mxu0
        %v2524 = vadd.f32 1e-05, %v2523
        %v2525 = vpop.f32.mrf.mxu0
        %2526 = vdwg.mxu0
        %v2527 = vrsqrt.pop %v2524
        %v2528 = vmul.f32 %v2452, %v2527
        %v2529 = vmul.f32 %v2528, %v2035
        %v2530 = vadd.f32 %v2529, %v2036
        %v2531 = vld [vmem:[%s47] sm:$0x1]
        %v2532 = vld [vmem:[%s49] sm:$0x1]
        %v2533 = vld [vmem:[%s43] sm:$0xff]
        %v2534 = vld [vmem:[%s43 + $0x8] sm:$0xff]
        %v2535 = vld [vmem:[%s43 + $0x10] sm:$0xff]
        %v2536 = vld [vmem:[%s43 + $0x18] sm:$0xff]
        %v2537 = vld [vmem:[%s43 + $0x20] sm:$0xff]
        %v2538 = vld [vmem:[%s43 + $0x28] sm:$0xff]
        %v2539 = vld [vmem:[%s43 + $0x30] sm:$0xff]
        %v2540 = vld [vmem:[%s43 + $0x38] sm:$0xff]
        %v2541 = vld [vmem:[%s43 + $0x40] sm:$0xff]
        %v2542 = vld [vmem:[%s43 + $0x48] sm:$0xff]
        %v2543 = vld [vmem:[%s43 + $0x50] sm:$0xff]
        %v2544 = vld [vmem:[%s43 + $0x58] sm:$0xff]
        %v2545 = vld [vmem:[%s43 + $0x60] sm:$0xff]
        %v2546 = vld [vmem:[%s43 + $0x68] sm:$0xff]
        %v2547 = vld [vmem:[%s43 + $0x70] sm:$0xff]
        %v2548 = vld [vmem:[%s43 + $0x78] sm:$0xff]
        %v2549 = vld [vmem:[%s43 + $0x80] sm:$0xff]
        %v2550 = vld [vmem:[%s43 + $0x88] sm:$0xff]
        %v2551 = vld [vmem:[%s45] sm:$0xff]
        %v2552 = vld [vmem:[%s45 + $0x8] sm:$0x1]
        %2555 = vrot.lane.b32.xlu0 %v1957, 96
        %v2556 = vpop.permute.xlu0 %2555
        %2557 = vrot.lane.b32.xlu0 %v1960, 96
        %v2558 = vpop.permute.xlu0 %2557
        %v2562 = vsel %vm2044, %v2533, 0
        %v2565 = vsel %vm2044, %v2534, 0
        %v2568 = vsel %vm2044, %v2535, 0
        %v2571 = vsel %vm2044, %v2536, 0
        %v2574 = vsel %vm2044, %v2537, 0
        %v2577 = vsel %vm2044, %v2538, 0
        %v2580 = vsel %vm2044, %v2539, 0
        %v2583 = vsel %vm2044, %v2540, 0
        %v2586 = vsel %vm2044, %v2541, 0
        %v2589 = vsel %vm2044, %v2542, 0
        %v2592 = vsel %vm2044, %v2543, 0
        %v2595 = vsel %vm2044, %v2544, 0
        %v2598 = vsel %vm2044, %v2545, 0
        %v2601 = vsel %vm2044, %v2546, 0
        %v2604 = vsel %vm2044, %v2547, 0
        %v2607 = vsel %vm2044, %v2548, 0
        %v2610 = vsel %vm2044, %v2549, 0
        %v2613 = vsel %vm2044, %v2550, 0
        %2615 = vmatprep.subr.mxu0 0.0
        %2616 = vmatpush1.msra.mxu0 0.0
        %2617 = vmatprep.subr.mxu0 0.0
        %2618 = vmatpush1.msra.mxu0 0.0
        %2619 = vmatprep.subr.mxu0 0.0
        %2620 = vmatpush1.msra.mxu0 0.0
        %2621 = vmatprep.subr.mxu0 0.0
        %2622 = vmatpush1.msra.mxu0 0.0
        %2623 = vmatprep.subr.mxu0 0.0
        %2624 = vmatpush1.msra.mxu0 0.0
        %2625 = vmatprep.subr.mxu0 0.0
        %2626 = vmatpush1.msra.mxu0 0.0
        %2627 = vmatprep.subr.mxu0 0.0
        %2628 = vmatpush1.msra.mxu0 0.0
        %2629 = vmatprep.subr.mxu0 0.0
        %2630 = vmatpush1.msra.mxu0 0.0
        %2631 = vmatprep.subr.mxu0 0.0
        %2632 = vmatpush1.msra.mxu0 0.0
        %2633 = vmatprep.subr.mxu0 0.0
        %2634 = vmatpush1.msra.mxu0 0.0
        %2635 = vmatprep.subr.mxu0 0.0
        %2636 = vmatpush1.msra.mxu0 0.0
        %2637 = vmatprep.subr.mxu0 0.0
        %2638 = vmatpush1.msra.mxu0 0.0
        %2639 = vmatprep.subr.mxu0 0.0
        %2640 = vmatpush1.msra.mxu0 0.0
        %2641 = vmatprep.subr.mxu0 0.0
        %2642 = vmatpush1.msra.mxu0 0.0
        %2643 = vmatprep.subr.mxu0 0.0
        %2644 = vmatpush1.msra.mxu0 %v2558
        %2645 = vmatprep.subr.mxu0 0.0
        %2646 = vmatpush1.msra.mxu0 %v2556
        %2647 = vmatprep.subr.mxu0 0.0
        %2648 = vmatpush2.msra.mxu0 0.0
        %2649 = vmatprep.subr.mxu0 0.0
        %2650 = vmatpush2.msra.mxu0 0.0
        %2651 = vmatprep.subr.mxu0 0.0
        %2652 = vmatpush2.msra.mxu0 0.0
        %2653 = vmatprep.subr.mxu0 0.0
        %2654 = vmatpush2.msra.mxu0 0.0
        %2655 = vmatprep.subr.mxu0 0.0
        %2656 = vmatpush2.msra.mxu0 0.0
        %2657 = vmatprep.subr.mxu0 0.0
        %2658 = vmatpush2.msra.mxu0 0.0
        %2659 = vmatprep.subr.mxu0 0.0
        %2660 = vmatpush2.msra.mxu0 0.0
        %2661 = vmatprep.subr.mxu0 0.0
        %2662 = vmatpush2.msra.mxu0 0.0
        %2663 = vmatprep.subr.mxu0 0.0
        %2664 = vmatpush2.msra.mxu0 0.0
        %2665 = vmatprep.subr.mxu0 0.0
        %2666 = vmatpush2.msra.mxu0 0.0
        %2667 = vmatprep.subr.mxu0 0.0
        %2668 = vmatpush2.msra.mxu0 0.0
        %2669 = vmatprep.subr.mxu0 0.0
        %2670 = vmatpush2.msra.mxu0 0.0
        %2671 = vmatprep.subr.mxu0 0.0
        %2672 = vmatpush2.msra.mxu0 0.0
        %2673 = vmatprep.subr.mxu0 0.0
        %2674 = vmatpush2.msra.mxu0 0.0
        %2675 = vmatprep.subr.mxu0 0.0
        %2676 = vmatpush2.msra.mxu0 0.0
        %2677 = vmatprep.subr.mxu0 0.0
        %2678 = vmatpush2.msra.mxu0 0.0
        %2679 = vmatprep.mubr.f32.mxu0 0.0
        %2680 = vmatmul.mubr.f32.gmra.mxu0 %v2562
        %v2681 = vpop.f32.mrf.mxu0
        %v2682 = vadd.f32 0.0, %v2681
        %v2683 = vpop.f32.mrf.mxu0
        %2684 = vmatprep.mubr.f32.mxu0 0.0
        %2685 = vmatmul.mubr.f32.gmra.mxu0 %v2565
        %v2686 = vpop.f32.mrf.mxu0
        %v2687 = vadd.f32 0.0, %v2686
        %v2688 = vpop.f32.mrf.mxu0
        %2689 = vmatprep.mubr.f32.mxu0 0.0
        %2690 = vmatmul.mubr.f32.gmra.mxu0 %v2568
        %v2691 = vpop.f32.mrf.mxu0
        %v2692 = vadd.f32 0.0, %v2691
        %v2693 = vpop.f32.mrf.mxu0
        %2694 = vmatprep.mubr.f32.mxu0 0.0
        %2695 = vmatmul.mubr.f32.gmra.mxu0 %v2571
        %v2696 = vpop.f32.mrf.mxu0
        %v2697 = vadd.f32 0.0, %v2696
        %v2698 = vpop.f32.mrf.mxu0
        %2699 = vmatprep.mubr.f32.mxu0 0.0
        %2700 = vmatmul.mubr.f32.gmra.mxu0 %v2574
        %v2701 = vpop.f32.mrf.mxu0
        %v2702 = vadd.f32 0.0, %v2701
        %v2703 = vpop.f32.mrf.mxu0
        %2704 = vmatprep.mubr.f32.mxu0 0.0
        %2705 = vmatmul.mubr.f32.gmra.mxu0 %v2577
        %v2706 = vpop.f32.mrf.mxu0
        %v2707 = vadd.f32 0.0, %v2706
        %v2708 = vpop.f32.mrf.mxu0
        %2709 = vmatprep.mubr.f32.mxu0 0.0
        %2710 = vmatmul.mubr.f32.gmra.mxu0 %v2580
        %v2711 = vpop.f32.mrf.mxu0
        %v2712 = vadd.f32 0.0, %v2711
        %v2713 = vpop.f32.mrf.mxu0
        %2714 = vmatprep.mubr.f32.mxu0 0.0
        %2715 = vmatmul.mubr.f32.gmra.mxu0 %v2583
        %v2716 = vpop.f32.mrf.mxu0
        %v2717 = vadd.f32 0.0, %v2716
        %v2718 = vpop.f32.mrf.mxu0
        %2719 = vmatprep.mubr.f32.mxu0 0.0
        %2720 = vmatmul.mubr.f32.gmra.mxu0 %v2586
        %v2721 = vpop.f32.mrf.mxu0
        %v2722 = vadd.f32 0.0, %v2721
        %v2723 = vpop.f32.mrf.mxu0
        %2724 = vmatprep.mubr.f32.mxu0 0.0
        %2725 = vmatmul.mubr.f32.gmra.mxu0 %v2589
        %v2726 = vpop.f32.mrf.mxu0
        %v2727 = vadd.f32 0.0, %v2726
        %v2728 = vpop.f32.mrf.mxu0
        %2729 = vmatprep.mubr.f32.mxu0 0.0
        %2730 = vmatmul.mubr.f32.gmra.mxu0 %v2592
        %v2731 = vpop.f32.mrf.mxu0
        %v2732 = vadd.f32 0.0, %v2731
        %v2733 = vpop.f32.mrf.mxu0
        %2734 = vmatprep.mubr.f32.mxu0 0.0
        %2735 = vmatmul.mubr.f32.gmra.mxu0 %v2595
        %v2736 = vpop.f32.mrf.mxu0
        %v2737 = vadd.f32 0.0, %v2736
        %v2738 = vpop.f32.mrf.mxu0
        %2739 = vmatprep.mubr.f32.mxu0 0.0
        %2740 = vmatmul.mubr.f32.gmra.mxu0 %v2598
        %v2741 = vpop.f32.mrf.mxu0
        %v2742 = vadd.f32 0.0, %v2741
        %v2743 = vpop.f32.mrf.mxu0
        %2744 = vmatprep.mubr.f32.mxu0 0.0
        %2745 = vmatmul.mubr.f32.gmra.mxu0 %v2601
        %v2746 = vpop.f32.mrf.mxu0
        %v2747 = vadd.f32 0.0, %v2746
        %v2748 = vpop.f32.mrf.mxu0
        %2749 = vmatprep.mubr.f32.mxu0 0.0
        %2750 = vmatmul.mubr.f32.gmra.mxu0 %v2604
        %v2751 = vpop.f32.mrf.mxu0
        %v2752 = vadd.f32 0.0, %v2751
        %v2753 = vpop.f32.mrf.mxu0
        %2754 = vmatprep.mubr.f32.mxu0 0.0
        %2755 = vmatmul.mubr.f32.gmra.mxu0 %v2607
        %v2756 = vpop.f32.mrf.mxu0
        %v2757 = vadd.f32 0.0, %v2756
        %v2758 = vpop.f32.mrf.mxu0
        %2759 = vmatprep.mubr.f32.mxu0 0.0
        %2760 = vmatmul.mubr.f32.gmra.mxu0 %v2610
        %v2761 = vpop.f32.mrf.mxu0
        %v2762 = vadd.f32 0.0, %v2761
        %v2763 = vpop.f32.mrf.mxu0
        %2764 = vmatprep.mubr.f32.mxu0 0.0
        %2765 = vmatmul.mubr.f32.gmra.mxu0 %v2613
        %v2766 = vpop.f32.mrf.mxu0
        %v2767 = vadd.f32 0.0, %v2766
        %v2768 = vpop.f32.mrf.mxu0
        %2769 = vdwg.mxu0
        %v2770 = vlaneseq
        %v2771 = vshrl.u32 %v2770, 7
        %v2772 = vsub.s32 0, %v2771
        %v2773 = vrot.slane %v2551, %v2772
        %v2774 = vmul.f32 %v2682, %v2773
        %v2775 = vmul.f32 %v2687, %v2773
        %v2776 = vlaneseq
        %v2777 = vshrl.u32 %v2776, 7
        %v2778 = vsub.s32 1, %v2777
        %v2779 = vrot.slane %v2551, %v2778
        %v2780 = vmul.f32 %v2692, %v2779
        %v2781 = vmul.f32 %v2697, %v2779
        %v2782 = vadd.f32 %v2774, %v2780
        %v2783 = vadd.f32 %v2775, %v2781
        %v2784 = vlaneseq
        %v2785 = vshrl.u32 %v2784, 7
        %v2786 = vsub.s32 2, %v2785
        %v2787 = vrot.slane %v2551, %v2786
        %v2788 = vmul.f32 %v2702, %v2787
        %v2789 = vmul.f32 %v2707, %v2787
        %v2790 = vadd.f32 %v2782, %v2788
        %v2791 = vadd.f32 %v2783, %v2789
        %v2792 = vlaneseq
        %v2793 = vshrl.u32 %v2792, 7
        %v2794 = vsub.s32 3, %v2793
        %v2795 = vrot.slane %v2551, %v2794
        %v2796 = vmul.f32 %v2712, %v2795
        %v2797 = vmul.f32 %v2717, %v2795
        %v2798 = vadd.f32 %v2790, %v2796
        %v2799 = vadd.f32 %v2791, %v2797
        %v2800 = vlaneseq
        %v2801 = vshrl.u32 %v2800, 7
        %v2802 = vsub.s32 4, %v2801
        %v2803 = vrot.slane %v2551, %v2802
        %v2804 = vmul.f32 %v2722, %v2803
        %v2805 = vmul.f32 %v2727, %v2803
        %v2806 = vadd.f32 %v2798, %v2804
        %v2807 = vadd.f32 %v2799, %v2805
        %v2808 = vlaneseq
        %v2809 = vshrl.u32 %v2808, 7
        %v2810 = vsub.s32 5, %v2809
        %v2811 = vrot.slane %v2551, %v2810
        %v2812 = vmul.f32 %v2732, %v2811
        %v2813 = vmul.f32 %v2737, %v2811
        %v2814 = vadd.f32 %v2806, %v2812
        %v2815 = vadd.f32 %v2807, %v2813
        %v2816 = vlaneseq
        %v2817 = vshrl.u32 %v2816, 7
        %v2818 = vsub.s32 6, %v2817
        %v2819 = vrot.slane %v2551, %v2818
        %v2820 = vmul.f32 %v2742, %v2819
        %v2821 = vmul.f32 %v2747, %v2819
        %v2822 = vadd.f32 %v2814, %v2820
        %v2823 = vadd.f32 %v2815, %v2821
        %v2824 = vlaneseq
        %v2825 = vshrl.u32 %v2824, 7
        %v2826 = vsub.s32 7, %v2825
        %v2827 = vrot.slane %v2551, %v2826
        %v2828 = vmul.f32 %v2752, %v2827
        %v2829 = vmul.f32 %v2757, %v2827
        %v2830 = vadd.f32 %v2822, %v2828
        %v2831 = vadd.f32 %v2823, %v2829
        %v2832 = vlaneseq
        %v2833 = vshrl.u32 %v2832, 7
        %v2834 = vsub.s32 0, %v2833
        %v2835 = vrot.slane %v2552, %v2834
        %v2836 = vmul.f32 %v2762, %v2835
        %v2837 = vmul.f32 %v2767, %v2835
        %v2838 = vadd.f32 %v2830, %v2836
        %v2839 = vadd.f32 %v2831, %v2837
        %vm2840 = vcmask 523264
        %v2842 = vsel %vm2840, %v2838, 0
        %v2845 = vsel %vm2840, %v2839, 0
        %2847 = vmatprep.subr.mxu0 0.0
        %2848 = vmatpush1.msra.mxu0 0.0
        %2849 = vmatprep.subr.mxu0 0.0
        %2850 = vmatpush1.msra.mxu0 0.0
        %2851 = vmatprep.subr.mxu0 0.0
        %2852 = vmatpush1.msra.mxu0 0.0
        %2853 = vmatprep.subr.mxu0 0.0
        %2854 = vmatpush1.msra.mxu0 0.0
        %2855 = vmatprep.subr.mxu0 0.0
        %2856 = vmatpush1.msra.mxu0 0.0
        %2857 = vmatprep.subr.mxu0 0.0
        %2858 = vmatpush1.msra.mxu0 0.0
        %2859 = vmatprep.subr.mxu0 0.0
        %2860 = vmatpush1.msra.mxu0 0.0
        %2861 = vmatprep.subr.mxu0 0.0
        %2862 = vmatpush1.msra.mxu0 0.0
        %2863 = vmatprep.subr.mxu0 0.0
        %2864 = vmatpush1.msra.mxu0 %v2034
        %2865 = vmatprep.subr.mxu0 0.0
        %2866 = vmatpush1.msra.mxu0 %v2033
        %2867 = vmatprep.subr.mxu0 0.0
        %2868 = vmatpush1.msra.mxu0 %v2032
        %2869 = vmatprep.subr.mxu0 0.0
        %2870 = vmatpush1.msra.mxu0 %v2031
        %2871 = vmatprep.subr.mxu0 0.0
        %2872 = vmatpush1.msra.mxu0 %v2030
        %2873 = vmatprep.subr.mxu0 0.0
        %2874 = vmatpush1.msra.mxu0 %v2029
        %2875 = vmatprep.subr.mxu0 0.0
        %2876 = vmatpush1.msra.mxu0 %v2028
        %2877 = vmatprep.subr.mxu0 0.0
        %2878 = vmatpush1.msra.mxu0 %v2027
        %2879 = vmatprep.subr.mxu0 0.0
        %2880 = vmatpush2.msra.mxu0 0.0
        %2881 = vmatprep.subr.mxu0 0.0
        %2882 = vmatpush2.msra.mxu0 0.0
        %2883 = vmatprep.subr.mxu0 0.0
        %2884 = vmatpush2.msra.mxu0 0.0
        %2885 = vmatprep.subr.mxu0 0.0
        %2886 = vmatpush2.msra.mxu0 0.0
        %2887 = vmatprep.subr.mxu0 0.0
        %2888 = vmatpush2.msra.mxu0 0.0
        %2889 = vmatprep.subr.mxu0 0.0
        %2890 = vmatpush2.msra.mxu0 0.0
        %2891 = vmatprep.subr.mxu0 0.0
        %2892 = vmatpush2.msra.mxu0 0.0
        %2893 = vmatprep.subr.mxu0 0.0
        %2894 = vmatpush2.msra.mxu0 0.0
        %2895 = vmatprep.subr.mxu0 0.0
        %2896 = vmatpush2.msra.mxu0 0.0
        %2897 = vmatprep.subr.mxu0 0.0
        %2898 = vmatpush2.msra.mxu0 0.0
        %2899 = vmatprep.subr.mxu0 0.0
        %2900 = vmatpush2.msra.mxu0 0.0
        %2901 = vmatprep.subr.mxu0 0.0
        %2902 = vmatpush2.msra.mxu0 0.0
        %2903 = vmatprep.subr.mxu0 0.0
        %2904 = vmatpush2.msra.mxu0 0.0
        %2905 = vmatprep.subr.mxu0 0.0
        %2906 = vmatpush2.msra.mxu0 0.0
        %2907 = vmatprep.subr.mxu0 0.0
        %2908 = vmatpush2.msra.mxu0 0.0
        %2909 = vmatprep.subr.mxu0 0.0
        %2910 = vmatpush2.msra.mxu0 0.0
        %2911 = vmatprep.mubr.f32.mxu0 0.0
        %2912 = vmatmul.mubr.f32.gmra.mxu0 %v2842
        %v2913 = vpop.f32.mrf.mxu0
        %v2914 = vadd.f32 0.0, %v2913
        %v2915 = vpop.f32.mrf.mxu0
        %2916 = vmatprep.mubr.f32.mxu0 0.0
        %2917 = vmatmul.mubr.f32.gmra.mxu0 %v2845
        %v2918 = vpop.f32.mrf.mxu0
        %v2919 = vadd.f32 0.0, %v2918
        %v2920 = vpop.f32.mrf.mxu0
        %2921 = vdwg.mxu0
        %v2922 = vsub.f32 %v2838, %v2914
        %v2923 = vsub.f32 %v2839, %v2919
        %v2924 = vmul.f32 %v2922, %v2922
        %v2925 = vmul.f32 %v2923, %v2923
        %v2927 = vsel %vm2840, %v2924, 0
        %v2930 = vsel %vm2840, %v2925, 0
        %2932 = vmatprep.subr.mxu0 0.0
        %2933 = vmatpush1.msra.mxu0 0.0
        %2934 = vmatprep.subr.mxu0 0.0
        %2935 = vmatpush1.msra.mxu0 0.0
        %2936 = vmatprep.subr.mxu0 0.0
        %2937 = vmatpush1.msra.mxu0 0.0
        %2938 = vmatprep.subr.mxu0 0.0
        %2939 = vmatpush1.msra.mxu0 0.0
        %2940 = vmatprep.subr.mxu0 0.0
        %2941 = vmatpush1.msra.mxu0 0.0
        %2942 = vmatprep.subr.mxu0 0.0
        %2943 = vmatpush1.msra.mxu0 0.0
        %2944 = vmatprep.subr.mxu0 0.0
        %2945 = vmatpush1.msra.mxu0 0.0
        %2946 = vmatprep.subr.mxu0 0.0
        %2947 = vmatpush1.msra.mxu0 0.0
        %2948 = vmatprep.subr.mxu0 0.0
        %2949 = vmatpush1.msra.mxu0 %v2034
        %2950 = vmatprep.subr.mxu0 0.0
        %2951 = vmatpush1.msra.mxu0 %v2033
        %2952 = vmatprep.subr.mxu0 0.0
        %2953 = vmatpush1.msra.mxu0 %v2032
        %2954 = vmatprep.subr.mxu0 0.0
        %2955 = vmatpush1.msra.mxu0 %v2031
        %2956 = vmatprep.subr.mxu0 0.0
        %2957 = vmatpush1.msra.mxu0 %v2030
        %2958 = vmatprep.subr.mxu0 0.0
        %2959 = vmatpush1.msra.mxu0 %v2029
        %2960 = vmatprep.subr.mxu0 0.0
        %2961 = vmatpush1.msra.mxu0 %v2028
        %2962 = vmatprep.subr.mxu0 0.0
        %2963 = vmatpush1.msra.mxu0 %v2027
        %2964 = vmatprep.subr.mxu0 0.0
        %2965 = vmatpush2.msra.mxu0 0.0
        %2966 = vmatprep.subr.mxu0 0.0
        %2967 = vmatpush2.msra.mxu0 0.0
        %2968 = vmatprep.subr.mxu0 0.0
        %2969 = vmatpush2.msra.mxu0 0.0
        %2970 = vmatprep.subr.mxu0 0.0
        %2971 = vmatpush2.msra.mxu0 0.0
        %2972 = vmatprep.subr.mxu0 0.0
        %2973 = vmatpush2.msra.mxu0 0.0
        %2974 = vmatprep.subr.mxu0 0.0
        %2975 = vmatpush2.msra.mxu0 0.0
        %2976 = vmatprep.subr.mxu0 0.0
        %2977 = vmatpush2.msra.mxu0 0.0
        %2978 = vmatprep.subr.mxu0 0.0
        %2979 = vmatpush2.msra.mxu0 0.0
        %2980 = vmatprep.subr.mxu0 0.0
        %2981 = vmatpush2.msra.mxu0 0.0
        %2982 = vmatprep.subr.mxu0 0.0
        %2983 = vmatpush2.msra.mxu0 0.0
        %2984 = vmatprep.subr.mxu0 0.0
        %2985 = vmatpush2.msra.mxu0 0.0
        %2986 = vmatprep.subr.mxu0 0.0
        %2987 = vmatpush2.msra.mxu0 0.0
        %2988 = vmatprep.subr.mxu0 0.0
        %2989 = vmatpush2.msra.mxu0 0.0
        %2990 = vmatprep.subr.mxu0 0.0
        %2991 = vmatpush2.msra.mxu0 0.0
        %2992 = vmatprep.subr.mxu0 0.0
        %2993 = vmatpush2.msra.mxu0 0.0
        %2994 = vmatprep.subr.mxu0 0.0
        %2995 = vmatpush2.msra.mxu0 0.0
        %2996 = vmatprep.mubr.f32.mxu0 0.0
        %2997 = vmatmul.mubr.f32.gmra.mxu0 %v2927
        %v2998 = vpop.f32.mrf.mxu0
        %v2999 = vadd.f32 1e-05, %v2998
        %v3000 = vpop.f32.mrf.mxu0
        %3001 = vmatprep.mubr.f32.mxu0 0.0
        %3002 = vmatmul.mubr.f32.gmra.mxu0 %v2930
        %v3003 = vpop.f32.mrf.mxu0
        %v3004 = vadd.f32 1e-05, %v3003
        %v3005 = vpop.f32.mrf.mxu0
        %3006 = vdwg.mxu0
        %v3007 = vrsqrt.pop %v2999
        %v3008 = vrsqrt.pop %v3004
        %v3009 = vmul.f32 %v2922, %v3007
        %v3010 = vmul.f32 %v2923, %v3008
        %v3012 = vlaneseq
        %v3013 = vshrl.u32 %v3012, 7
        %v3014 = vsub.s32 0, %v3013
        %v3015 = vrot.slane %v2531, %v3014
        %v3017 = vmul.f32 %v3009, %v3015
        %v3018 = vmul.f32 %v3010, %v3015
        %v3020 = vlaneseq
        %v3021 = vshrl.u32 %v3020, 7
        %v3022 = vsub.s32 0, %v3021
        %v3023 = vrot.slane %v2532, %v3022
        %v3025 = vadd.f32 %v3017, %v3023
        %v3026 = vadd.f32 %v3018, %v3023
        %3027 = vrot.lane.b32.xlu0 %v2018, 96
        %v3028 = vpop.permute.xlu0 %3027
        %v3029 = vsel %vm2840, %v3028, 0
        %3031 = vmatprep.subr.mxu0 0.0
        %3032 = vmatpush1.msra.mxu0 0.0
        %3033 = vmatprep.subr.mxu0 0.0
        %3034 = vmatpush1.msra.mxu0 0.0
        %3035 = vmatprep.subr.mxu0 0.0
        %3036 = vmatpush1.msra.mxu0 0.0
        %3037 = vmatprep.subr.mxu0 0.0
        %3038 = vmatpush1.msra.mxu0 0.0
        %3039 = vmatprep.subr.mxu0 0.0
        %3040 = vmatpush1.msra.mxu0 0.0
        %3041 = vmatprep.subr.mxu0 0.0
        %3042 = vmatpush1.msra.mxu0 0.0
        %3043 = vmatprep.subr.mxu0 0.0
        %3044 = vmatpush1.msra.mxu0 0.0
        %3045 = vmatprep.subr.mxu0 0.0
        %3046 = vmatpush1.msra.mxu0 0.0
        %3047 = vmatprep.subr.mxu0 0.0
        %3048 = vmatpush1.msra.mxu0 %v2034
        %3049 = vmatprep.subr.mxu0 0.0
        %3050 = vmatpush1.msra.mxu0 %v2033
        %3051 = vmatprep.subr.mxu0 0.0
        %3052 = vmatpush1.msra.mxu0 %v2032
        %3053 = vmatprep.subr.mxu0 0.0
        %3054 = vmatpush1.msra.mxu0 %v2031
        %3055 = vmatprep.subr.mxu0 0.0
        %3056 = vmatpush1.msra.mxu0 %v2030
        %3057 = vmatprep.subr.mxu0 0.0
        %3058 = vmatpush1.msra.mxu0 %v2029
        %3059 = vmatprep.subr.mxu0 0.0
        %3060 = vmatpush1.msra.mxu0 %v2028
        %3061 = vmatprep.subr.mxu0 0.0
        %3062 = vmatpush1.msra.mxu0 %v2027
        %3063 = vmatprep.subr.mxu0 0.0
        %3064 = vmatpush2.msra.mxu0 0.0
        %3065 = vmatprep.subr.mxu0 0.0
        %3066 = vmatpush2.msra.mxu0 0.0
        %3067 = vmatprep.subr.mxu0 0.0
        %3068 = vmatpush2.msra.mxu0 0.0
        %3069 = vmatprep.subr.mxu0 0.0
        %3070 = vmatpush2.msra.mxu0 0.0
        %3071 = vmatprep.subr.mxu0 0.0
        %3072 = vmatpush2.msra.mxu0 0.0
        %3073 = vmatprep.subr.mxu0 0.0
        %3074 = vmatpush2.msra.mxu0 0.0
        %3075 = vmatprep.subr.mxu0 0.0
        %3076 = vmatpush2.msra.mxu0 0.0
        %3077 = vmatprep.subr.mxu0 0.0
        %3078 = vmatpush2.msra.mxu0 0.0
        %3079 = vmatprep.subr.mxu0 0.0
        %3080 = vmatpush2.msra.mxu0 0.0
        %3081 = vmatprep.subr.mxu0 0.0
        %3082 = vmatpush2.msra.mxu0 0.0
        %3083 = vmatprep.subr.mxu0 0.0
        %3084 = vmatpush2.msra.mxu0 0.0
        %3085 = vmatprep.subr.mxu0 0.0
        %3086 = vmatpush2.msra.mxu0 0.0
        %3087 = vmatprep.subr.mxu0 0.0
        %3088 = vmatpush2.msra.mxu0 0.0
        %3089 = vmatprep.subr.mxu0 0.0
        %3090 = vmatpush2.msra.mxu0 0.0
        %3091 = vmatprep.subr.mxu0 0.0
        %3092 = vmatpush2.msra.mxu0 0.0
        %3093 = vmatprep.subr.mxu0 0.0
        %3094 = vmatpush2.msra.mxu0 0.0
        %3095 = vmatprep.mubr.f32.mxu0 0.0
        %3096 = vmatmul.mubr.f32.gmra.mxu0 %v3029
        %v3097 = vpop.f32.mrf.mxu0
        %v3098 = vadd.f32 0.0, %v3097
        %v3099 = vpop.f32.mrf.mxu0
        %3100 = vdwg.mxu0
        %3102 = vrot.lane.b32.xlu0 %v3098, 32
        %v3103 = vpop.permute.xlu0 %3102
        %v3105 = vsub.f32 %v2018, %v3103
        %v3106 = vmul.f32 %v3105, %v3105
        %3108 = vrot.lane.b32.xlu0 %v3106, 96
        %v3109 = vpop.permute.xlu0 %3108
        %v3110 = vsel %vm2840, %v3109, 0
        %3112 = vmatprep.subr.mxu0 0.0
        %3113 = vmatpush1.msra.mxu0 0.0
        %3114 = vmatprep.subr.mxu0 0.0
        %3115 = vmatpush1.msra.mxu0 0.0
        %3116 = vmatprep.subr.mxu0 0.0
        %3117 = vmatpush1.msra.mxu0 0.0
        %3118 = vmatprep.subr.mxu0 0.0
        %3119 = vmatpush1.msra.mxu0 0.0
        %3120 = vmatprep.subr.mxu0 0.0
        %3121 = vmatpush1.msra.mxu0 0.0
        %3122 = vmatprep.subr.mxu0 0.0
        %3123 = vmatpush1.msra.mxu0 0.0
        %3124 = vmatprep.subr.mxu0 0.0
        %3125 = vmatpush1.msra.mxu0 0.0
        %3126 = vmatprep.subr.mxu0 0.0
        %3127 = vmatpush1.msra.mxu0 0.0
        %3128 = vmatprep.subr.mxu0 0.0
        %3129 = vmatpush1.msra.mxu0 %v2034
        %3130 = vmatprep.subr.mxu0 0.0
        %3131 = vmatpush1.msra.mxu0 %v2033
        %3132 = vmatprep.subr.mxu0 0.0
        %3133 = vmatpush1.msra.mxu0 %v2032
        %3134 = vmatprep.subr.mxu0 0.0
        %3135 = vmatpush1.msra.mxu0 %v2031
        %3136 = vmatprep.subr.mxu0 0.0
        %3137 = vmatpush1.msra.mxu0 %v2030
        %3138 = vmatprep.subr.mxu0 0.0
        %3139 = vmatpush1.msra.mxu0 %v2029
        %3140 = vmatprep.subr.mxu0 0.0
        %3141 = vmatpush1.msra.mxu0 %v2028
        %3142 = vmatprep.subr.mxu0 0.0
        %3143 = vmatpush1.msra.mxu0 %v2027
        %3144 = vmatprep.subr.mxu0 0.0
        %3145 = vmatpush2.msra.mxu0 0.0
        %3146 = vmatprep.subr.mxu0 0.0
        %3147 = vmatpush2.msra.mxu0 0.0
        %3148 = vmatprep.subr.mxu0 0.0
        %3149 = vmatpush2.msra.mxu0 0.0
        %3150 = vmatprep.subr.mxu0 0.0
        %3151 = vmatpush2.msra.mxu0 0.0
        %3152 = vmatprep.subr.mxu0 0.0
        %3153 = vmatpush2.msra.mxu0 0.0
        %3154 = vmatprep.subr.mxu0 0.0
        %3155 = vmatpush2.msra.mxu0 0.0
        %3156 = vmatprep.subr.mxu0 0.0
        %3157 = vmatpush2.msra.mxu0 0.0
        %3158 = vmatprep.subr.mxu0 0.0
        %3159 = vmatpush2.msra.mxu0 0.0
        %3160 = vmatprep.subr.mxu0 0.0
        %3161 = vmatpush2.msra.mxu0 0.0
        %3162 = vmatprep.subr.mxu0 0.0
        %3163 = vmatpush2.msra.mxu0 0.0
        %3164 = vmatprep.subr.mxu0 0.0
        %3165 = vmatpush2.msra.mxu0 0.0
        %3166 = vmatprep.subr.mxu0 0.0
        %3167 = vmatpush2.msra.mxu0 0.0
        %3168 = vmatprep.subr.mxu0 0.0
        %3169 = vmatpush2.msra.mxu0 0.0
        %3170 = vmatprep.subr.mxu0 0.0
        %3171 = vmatpush2.msra.mxu0 0.0
        %3172 = vmatprep.subr.mxu0 0.0
        %3173 = vmatpush2.msra.mxu0 0.0
        %3174 = vmatprep.subr.mxu0 0.0
        %3175 = vmatpush2.msra.mxu0 0.0
        %3176 = vmatprep.mubr.f32.mxu0 0.0
        %3177 = vmatmul.mubr.f32.gmra.mxu0 %v3110
        %v3178 = vpop.f32.mrf.mxu0
        %v3179 = vadd.f32 1e-05, %v3178
        %v3180 = vpop.f32.mrf.mxu0
        %3181 = vdwg.mxu0
        %v3182 = vrsqrt.pop %v3179
        %3184 = vrot.lane.b32.xlu0 %v3182, 32
        %v3185 = vpop.permute.xlu0 %3184
        %v3187 = vmul.f32 %v3105, %v3185
        %3188 = vrot.lane.b32.xlu0 %v3015, 32
        %v3189 = vpop.permute.xlu0 %3188
        %v3191 = vmul.f32 %v3187, %v3189
        %3192 = vrot.lane.b32.xlu0 %v3023, 32
        %v3193 = vpop.permute.xlu0 %3192
        %v3195 = vadd.f32 %v3191, %v3193
        %v3196 = vld [vmem:[%s39] sm:$0xff]
        %v3197 = vld [vmem:[%s39 + $0x8] sm:$0xff]
        %v3198 = vld [vmem:[%s39 + $0x10] sm:$0xff]
        %v3199 = vld [vmem:[%s39 + $0x18] sm:$0xff]
        %v3200 = vld [vmem:[%s39 + $0x20] sm:$0xf]
        %v3201 = vld [vmem:[%s41] sm:$0xff]
        %v3202 = vld [vmem:[%s41 + $0x8] sm:$0xff]
        %v3203 = vld [vmem:[%s41 + $0x10] sm:$0xff]
        %v3204 = vld [vmem:[%s41 + $0x18] sm:$0xff]
        %v3205 = vld [vmem:[%s41 + $0x20] sm:$0xf]
        %3207 = vset.pattern.permute.xlu0 0
        %3208 = vperm.xlu0 %3207, %v3201
        %v3209 = vpop.permute.xlu0 %3208
        %3212 = vset.pattern.permute.xlu0 0
        %3213 = vperm.xlu0 %3212, %v3202
        %v3214 = vpop.permute.xlu0 %3213
        %3217 = vset.pattern.permute.xlu0 0
        %3218 = vperm.xlu0 %3217, %v3203
        %v3219 = vpop.permute.xlu0 %3218
        %3222 = vset.pattern.permute.xlu0 0
        %3223 = vperm.xlu0 %3222, %v3204
        %v3224 = vpop.permute.xlu0 %3223
        %3227 = vset.pattern.permute.xlu0 0
        %3228 = vperm.xlu0 %3227, %v3205
        %v3229 = vpop.permute.xlu0 %3228
        %v3232 = vsel %vm2044, %v3196, 0
        %v3235 = vsel %vm2044, %v3197, 0
        %v3238 = vsel %vm2044, %v3198, 0
        %v3241 = vsel %vm2044, %v3199, 0
        %v3244 = vsel %vm2044, %v3200, 0
        %3246 = vmatprep.subr.mxu0 0.0
        %3247 = vmatpush1.msra.mxu0 0.0
        %3248 = vmatprep.subr.mxu0 0.0
        %3249 = vmatpush1.msra.mxu0 0.0
        %3250 = vmatprep.subr.mxu0 0.0
        %3251 = vmatpush1.msra.mxu0 0.0
        %3252 = vmatprep.subr.mxu0 0.0
        %3253 = vmatpush1.msra.mxu0 0.0
        %3254 = vmatprep.subr.mxu0 0.0
        %3255 = vmatpush1.msra.mxu0 0.0
        %3256 = vmatprep.subr.mxu0 0.0
        %3257 = vmatpush1.msra.mxu0 0.0
        %3258 = vmatprep.subr.mxu0 0.0
        %3259 = vmatpush1.msra.mxu0 0.0
        %3260 = vmatprep.subr.mxu0 0.0
        %3261 = vmatpush1.msra.mxu0 0.0
        %3262 = vmatprep.subr.mxu0 0.0
        %3263 = vmatpush1.msra.mxu0 0.0
        %3264 = vmatprep.subr.mxu0 0.0
        %3265 = vmatpush1.msra.mxu0 0.0
        %3266 = vmatprep.subr.mxu0 0.0
        %3267 = vmatpush1.msra.mxu0 0.0
        %3268 = vmatprep.subr.mxu0 0.0
        %3269 = vmatpush1.msra.mxu0 0.0
        %3270 = vmatprep.subr.mxu0 0.0
        %3271 = vmatpush1.msra.mxu0 0.0
        %3272 = vmatprep.subr.mxu0 0.0
        %3273 = vmatpush1.msra.mxu0 0.0
        %3274 = vmatprep.subr.mxu0 0.0
        %3275 = vmatpush1.msra.mxu0 %v1856
        %3276 = vmatprep.subr.mxu0 0.0
        %3277 = vmatpush1.msra.mxu0 %v1855
        %3278 = vmatprep.subr.mxu0 0.0
        %3279 = vmatpush2.msra.mxu0 0.0
        %3280 = vmatprep.subr.mxu0 0.0
        %3281 = vmatpush2.msra.mxu0 0.0
        %3282 = vmatprep.subr.mxu0 0.0
        %3283 = vmatpush2.msra.mxu0 0.0
        %3284 = vmatprep.subr.mxu0 0.0
        %3285 = vmatpush2.msra.mxu0 0.0
        %3286 = vmatprep.subr.mxu0 0.0
        %3287 = vmatpush2.msra.mxu0 0.0
        %3288 = vmatprep.subr.mxu0 0.0
        %3289 = vmatpush2.msra.mxu0 0.0
        %3290 = vmatprep.subr.mxu0 0.0
        %3291 = vmatpush2.msra.mxu0 0.0
        %3292 = vmatprep.subr.mxu0 0.0
        %3293 = vmatpush2.msra.mxu0 0.0
        %3294 = vmatprep.subr.mxu0 0.0
        %3295 = vmatpush2.msra.mxu0 0.0
        %3296 = vmatprep.subr.mxu0 0.0
        %3297 = vmatpush2.msra.mxu0 0.0
        %3298 = vmatprep.subr.mxu0 0.0
        %3299 = vmatpush2.msra.mxu0 0.0
        %3300 = vmatprep.subr.mxu0 0.0
        %3301 = vmatpush2.msra.mxu0 0.0
        %3302 = vmatprep.subr.mxu0 0.0
        %3303 = vmatpush2.msra.mxu0 0.0
        %3304 = vmatprep.subr.mxu0 0.0
        %3305 = vmatpush2.msra.mxu0 0.0
        %3306 = vmatprep.subr.mxu0 0.0
        %3307 = vmatpush2.msra.mxu0 0.0
        %3308 = vmatprep.subr.mxu0 0.0
        %3309 = vmatpush2.msra.mxu0 0.0
        %3310 = vmatprep.mubr.f32.mxu0 0.0
        %3311 = vmatmul.mubr.f32.gmra.mxu0 %v3232
        %v3312 = vpop.f32.mrf.mxu0
        %v3313 = vadd.f32 %v3209, %v3312
        %v3314 = vpop.f32.mrf.mxu0
        %3315 = vmatprep.mubr.f32.mxu0 0.0
        %3316 = vmatmul.mubr.f32.gmra.mxu0 %v3235
        %v3317 = vpop.f32.mrf.mxu0
        %v3318 = vadd.f32 %v3214, %v3317
        %v3319 = vpop.f32.mrf.mxu0
        %3320 = vmatprep.mubr.f32.mxu0 0.0
        %3321 = vmatmul.mubr.f32.gmra.mxu0 %v3238
        %v3322 = vpop.f32.mrf.mxu0
        %v3323 = vadd.f32 %v3219, %v3322
        %v3324 = vpop.f32.mrf.mxu0
        %3325 = vmatprep.mubr.f32.mxu0 0.0
        %3326 = vmatmul.mubr.f32.gmra.mxu0 %v3241
        %v3327 = vpop.f32.mrf.mxu0
        %v3328 = vadd.f32 %v3224, %v3327
        %v3329 = vpop.f32.mrf.mxu0
        %3330 = vmatprep.mubr.f32.mxu0 0.0
        %3331 = vmatmul.mubr.f32.gmra.mxu0 %v3244
        %v3332 = vpop.f32.mrf.mxu0
        %v3333 = vadd.f32 %v3229, %v3332
        %v3334 = vpop.f32.mrf.mxu0
        %3335 = vdwg.mxu0
        %v3337 = vrot.slane %v3313, 4
        %v3339 = vmax.f32 %v3313, %v3337
        %v3340 = vmax.f32 %v3339, %v3318
        %v3342 = vrot.slane %v3318, 4
        %v3344 = vmax.f32 %v3340, %v3342
        %v3345 = vmax.f32 %v3344, %v3323
        %v3347 = vrot.slane %v3323, 4
        %v3349 = vmax.f32 %v3345, %v3347
        %v3350 = vmax.f32 %v3349, %v3328
        %v3352 = vrot.slane %v3328, 4
        %v3354 = vmax.f32 %v3350, %v3352
        %v3355 = vmax.f32 %v3354, %v3333
        %v3356 = vld [vmem:[%s51] sm:$0xff]
        %v3357 = vld [vmem:[%s51 + $0x8] sm:$0xff]
        %v3358 = vld [vmem:[%s51 + $0x10] sm:$0xff]
        %v3359 = vld [vmem:[%s51 + $0x18] sm:$0xff]
        %v3360 = vld [vmem:[%s53] sm:$0x1]
        %v3361 = vlaneseq
        %v3362 = vand.u32 %v3361, 127
        %vm3363 = vcmp.ge.s32.totalorder %v3362, 0
        %vm3364 = vcmp.lt.s32.totalorder %v3362, 16
        %vm3365 = vmand %vm3363, %vm3364
        %v3366 = vsel %vm3365, 1, 0
        %v3367 = vcvt.s32.f32 %v3366
        %v3368 = vmul.f32 %v3025, %v3367
        %v3369 = vmul.f32 %v3026, %v3367
        %v3371 = vsel %vm1866, %v2378, 0
        %v3374 = vsel %vm1866, %v3368, 0
        %v3377 = vsel %vm1866, %v3369, 0
        %3379 = vmatprep.subr.mxu0 0.0
        %3380 = vmatpush1.xpose.msra.mxu0 0.0
        %3381 = vmatprep.subr.mxu0 0.0
        %3382 = vmatpush1.xpose.msra.mxu0 0.0
        %3383 = vmatprep.subr.mxu0 0.0
        %3384 = vmatpush1.xpose.msra.mxu0 0.0
        %3385 = vmatprep.subr.mxu0 0.0
        %3386 = vmatpush1.xpose.msra.mxu0 0.0
        %3387 = vmatprep.subr.mxu0 0.0
        %3388 = vmatpush1.xpose.msra.mxu0 0.0
        %3389 = vmatprep.subr.mxu0 0.0
        %3390 = vmatpush1.xpose.msra.mxu0 0.0
        %3391 = vmatprep.subr.mxu0 0.0
        %3392 = vmatpush1.xpose.msra.mxu0 0.0
        %3393 = vmatprep.subr.mxu0 0.0
        %3394 = vmatpush1.xpose.msra.mxu0 0.0
        %3395 = vmatprep.subr.mxu0 0.0
        %3396 = vmatpush1.xpose.msra.mxu0 0.0
        %3397 = vmatprep.subr.mxu0 0.0
        %3398 = vmatpush1.xpose.msra.mxu0 0.0
        %3399 = vmatprep.subr.mxu0 0.0
        %3400 = vmatpush1.xpose.msra.mxu0 0.0
        %3401 = vmatprep.subr.mxu0 0.0
        %3402 = vmatpush1.xpose.msra.mxu0 0.0
        %3403 = vmatprep.subr.mxu0 0.0
        %3404 = vmatpush1.xpose.msra.mxu0 0.0
        %3405 = vmatprep.subr.mxu0 0.0
        %3406 = vmatpush1.xpose.msra.mxu0 0.0
        %3407 = vmatprep.subr.mxu0 0.0
        %3408 = vmatpush1.xpose.msra.mxu0 %v3377
        %3409 = vmatprep.subr.mxu0 0.0
        %3410 = vmatpush1.xpose.msra.mxu0 %v3374
        %3411 = vmatprep.subr.mxu0 0.0
        %3412 = vmatpush2.xpose.msra.mxu0 0.0
        %3413 = vmatprep.subr.mxu0 0.0
        %3414 = vmatpush2.xpose.msra.mxu0 0.0
        %3415 = vmatprep.subr.mxu0 0.0
        %3416 = vmatpush2.xpose.msra.mxu0 0.0
        %3417 = vmatprep.subr.mxu0 0.0
        %3418 = vmatpush2.xpose.msra.mxu0 0.0
        %3419 = vmatprep.subr.mxu0 0.0
        %3420 = vmatpush2.xpose.msra.mxu0 0.0
        %3421 = vmatprep.subr.mxu0 0.0
        %3422 = vmatpush2.xpose.msra.mxu0 0.0
        %3423 = vmatprep.subr.mxu0 0.0
        %3424 = vmatpush2.xpose.msra.mxu0 0.0
        %3425 = vmatprep.subr.mxu0 0.0
        %3426 = vmatpush2.xpose.msra.mxu0 0.0
        %3427 = vmatprep.subr.mxu0 0.0
        %3428 = vmatpush2.xpose.msra.mxu0 0.0
        %3429 = vmatprep.subr.mxu0 0.0
        %3430 = vmatpush2.xpose.msra.mxu0 0.0
        %3431 = vmatprep.subr.mxu0 0.0
        %3432 = vmatpush2.xpose.msra.mxu0 0.0
        %3433 = vmatprep.subr.mxu0 0.0
        %3434 = vmatpush2.xpose.msra.mxu0 0.0
        %3435 = vmatprep.subr.mxu0 0.0
        %3436 = vmatpush2.xpose.msra.mxu0 0.0
        %3437 = vmatprep.subr.mxu0 0.0
        %3438 = vmatpush2.xpose.msra.mxu0 0.0
        %3439 = vmatprep.subr.mxu0 0.0
        %3440 = vmatpush2.xpose.msra.mxu0 0.0
        %3441 = vmatprep.subr.mxu0 0.0
        %3442 = vmatpush2.xpose.msra.mxu0 0.0
        %3443 = vmatprep.mubr.f32.mxu0 0.0
        %3444 = vmatmul.mubr.f32.gmra.mxu0 %v3371
        %v3445 = vpop.f32.mrf.mxu0
        %v3446 = vadd.f32 0.0, %v3445
        %v3447 = vpop.f32.mrf.mxu0
        %3448 = vdwg.mxu0
        %v3449 = vmul.f32 %v3446, 0.25
        %3451 = vrot.lane.b32.xlu0 %v3367, 32
        %v3452 = vpop.permute.xlu0 %3451
        %v3454 = vmul.f32 %v3195, %v3452
        %v3455 = vlaneseq
        %v3456 = vshrl.u32 %v3455, 7
        %v3457 = vsub.s32 0, %v3456
        %v3458 = vrot.slane %v3454, %v3457
        %3460 = vrot.lane.b32.xlu0 %v3458, 96
        %v3461 = vpop.permute.xlu0 %3460
        %v3463 = vmul.f32 %v2378, %v3461
        %vm3464 = vcmask 257024
        %v3465 = vsel %vm3464, %v3463, 0.0
        %3466 = vadd.xlane.f32.xlu0 %v3465
        %v3467 = vpop.xlane.xlu0 %3466
        %v3468 = vmul.f32 %v3467, 0.25
        %vm3469 = vcmask 125952
        %v3470 = vsel %vm3469, %v3449, -inf
        %3471 = vmax.xlane.f32.xlu0 %v3470
        %v3472 = vpop.xlane.xlu0 %3471
        %v3473 = vmax.f32 %v3472, %v3468
        %v3474 = vsub.f32 %v3449, %v3473
        %v3475 = vmul.f32 %v3474, 1.442695
        %v3476 = vpow.pop %v3475
        %v3477 = vsub.f32 %v3468, %v3473
        %v3478 = vmul.f32 %v3477, 1.442695
        %v3479 = vpow.pop %v3478
        %v3480 = vsel %vm3469, %v3476, 0.0
        %3481 = vadd.xlane.f32.xlu0 %v3480
        %v3482 = vpop.xlane.xlu0 %3481
        %v3483 = vadd.f32 %v3482, %v3479
        %v3484 = vrcp.pop %v3483
        %v3485 = vmul.f32 %v3025, %v3452
        %v3486 = vmul.f32 %v3026, %v3452
        %3487 = vrot.lane.b32.xlu0 %v3367, 64
        %v3488 = vpop.permute.xlu0 %3487
        %v3490 = vmul.f32 %v3195, %v3488
        %v3491 = vlaneseq
        %v3492 = vshrl.u32 %v3491, 7
        %v3493 = vsub.s32 0, %v3492
        %v3494 = vrot.slane %v3490, %v3493
        %v3495 = vmul.f32 %v3479, %v3494
        %3498 = vrot.lane.b32.xlu0 %v3485, 96
        %v3499 = vpop.permute.xlu0 %3498
        %3500 = vrot.lane.b32.xlu0 %v3486, 96
        %v3501 = vpop.permute.xlu0 %3500
        %3505 = vrot.lane.b32.xlu0 %v3495, 64
        %v3506 = vpop.permute.xlu0 %3505
        %v3509 = vsel %vm2044, %v3476, 0
        %3511 = vmatprep.subr.mxu0 0.0
        %3512 = vmatpush1.msra.mxu0 0.0
        %3513 = vmatprep.subr.mxu0 0.0
        %3514 = vmatpush1.msra.mxu0 0.0
        %3515 = vmatprep.subr.mxu0 0.0
        %3516 = vmatpush1.msra.mxu0 0.0
        %3517 = vmatprep.subr.mxu0 0.0
        %3518 = vmatpush1.msra.mxu0 0.0
        %3519 = vmatprep.subr.mxu0 0.0
        %3520 = vmatpush1.msra.mxu0 0.0
        %3521 = vmatprep.subr.mxu0 0.0
        %3522 = vmatpush1.msra.mxu0 0.0
        %3523 = vmatprep.subr.mxu0 0.0
        %3524 = vmatpush1.msra.mxu0 0.0
        %3525 = vmatprep.subr.mxu0 0.0
        %3526 = vmatpush1.msra.mxu0 0.0
        %3527 = vmatprep.subr.mxu0 0.0
        %3528 = vmatpush1.msra.mxu0 0.0
        %3529 = vmatprep.subr.mxu0 0.0
        %3530 = vmatpush1.msra.mxu0 0.0
        %3531 = vmatprep.subr.mxu0 0.0
        %3532 = vmatpush1.msra.mxu0 0.0
        %3533 = vmatprep.subr.mxu0 0.0
        %3534 = vmatpush1.msra.mxu0 0.0
        %3535 = vmatprep.subr.mxu0 0.0
        %3536 = vmatpush1.msra.mxu0 0.0
        %3537 = vmatprep.subr.mxu0 0.0
        %3538 = vmatpush1.msra.mxu0 0.0
        %3539 = vmatprep.subr.mxu0 0.0
        %3540 = vmatpush1.msra.mxu0 %v3501
        %3541 = vmatprep.subr.mxu0 0.0
        %3542 = vmatpush1.msra.mxu0 %v3499
        %3543 = vmatprep.subr.mxu0 0.0
        %3544 = vmatpush2.msra.mxu0 0.0
        %3545 = vmatprep.subr.mxu0 0.0
        %3546 = vmatpush2.msra.mxu0 0.0
        %3547 = vmatprep.subr.mxu0 0.0
        %3548 = vmatpush2.msra.mxu0 0.0
        %3549 = vmatprep.subr.mxu0 0.0
        %3550 = vmatpush2.msra.mxu0 0.0
        %3551 = vmatprep.subr.mxu0 0.0
        %3552 = vmatpush2.msra.mxu0 0.0
        %3553 = vmatprep.subr.mxu0 0.0
        %3554 = vmatpush2.msra.mxu0 0.0
        %3555 = vmatprep.subr.mxu0 0.0
        %3556 = vmatpush2.msra.mxu0 0.0
        %3557 = vmatprep.subr.mxu0 0.0
        %3558 = vmatpush2.msra.mxu0 0.0
        %3559 = vmatprep.subr.mxu0 0.0
        %3560 = vmatpush2.msra.mxu0 0.0
        %3561 = vmatprep.subr.mxu0 0.0
        %3562 = vmatpush2.msra.mxu0 0.0
        %3563 = vmatprep.subr.mxu0 0.0
        %3564 = vmatpush2.msra.mxu0 0.0
        %3565 = vmatprep.subr.mxu0 0.0
        %3566 = vmatpush2.msra.mxu0 0.0
        %3567 = vmatprep.subr.mxu0 0.0
        %3568 = vmatpush2.msra.mxu0 0.0
        %3569 = vmatprep.subr.mxu0 0.0
        %3570 = vmatpush2.msra.mxu0 0.0
        %3571 = vmatprep.subr.mxu0 0.0
        %3572 = vmatpush2.msra.mxu0 0.0
        %3573 = vmatprep.subr.mxu0 0.0
        %3574 = vmatpush2.msra.mxu0 0.0
        %3575 = vmatprep.mubr.f32.mxu0 0.0
        %3576 = vmatmul.mubr.f32.gmra.mxu0 %v3509
        %v3577 = vpop.f32.mrf.mxu0
        %v3578 = vadd.f32 %v3506, %v3577
        %v3579 = vpop.f32.mrf.mxu0
        %3580 = vdwg.mxu0
        %v3581 = vmul.f32 %v3578, %v3484
        %v3582 = vadd.f32 %v3581, 0.0
        %vm3583 = vcmp.ge.s32.totalorder %v3362, 16
        %vm3584 = vcmp.lt.s32.totalorder %v3362, 32
        %vm3585 = vmand %vm3583, %vm3584
        %v3586 = vsel %vm3585, 1, 0
        %v3587 = vcvt.s32.f32 %v3586
        %v3588 = vmul.f32 %v3025, %v3587
        %v3589 = vmul.f32 %v3026, %v3587
        %v3591 = vsel %vm1866, %v3588, 0
        %v3594 = vsel %vm1866, %v3589, 0
        %3596 = vmatprep.subr.mxu0 0.0
        %3597 = vmatpush1.xpose.msra.mxu0 0.0
        %3598 = vmatprep.subr.mxu0 0.0
        %3599 = vmatpush1.xpose.msra.mxu0 0.0
        %3600 = vmatprep.subr.mxu0 0.0
        %3601 = vmatpush1.xpose.msra.mxu0 0.0
        %3602 = vmatprep.subr.mxu0 0.0
        %3603 = vmatpush1.xpose.msra.mxu0 0.0
        %3604 = vmatprep.subr.mxu0 0.0
        %3605 = vmatpush1.xpose.msra.mxu0 0.0
        %3606 = vmatprep.subr.mxu0 0.0
        %3607 = vmatpush1.xpose.msra.mxu0 0.0
        %3608 = vmatprep.subr.mxu0 0.0
        %3609 = vmatpush1.xpose.msra.mxu0 0.0
        %3610 = vmatprep.subr.mxu0 0.0
        %3611 = vmatpush1.xpose.msra.mxu0 0.0
        %3612 = vmatprep.subr.mxu0 0.0
        %3613 = vmatpush1.xpose.msra.mxu0 0.0
        %3614 = vmatprep.subr.mxu0 0.0
        %3615 = vmatpush1.xpose.msra.mxu0 0.0
        %3616 = vmatprep.subr.mxu0 0.0
        %3617 = vmatpush1.xpose.msra.mxu0 0.0
        %3618 = vmatprep.subr.mxu0 0.0
        %3619 = vmatpush1.xpose.msra.mxu0 0.0
        %3620 = vmatprep.subr.mxu0 0.0
        %3621 = vmatpush1.xpose.msra.mxu0 0.0
        %3622 = vmatprep.subr.mxu0 0.0
        %3623 = vmatpush1.xpose.msra.mxu0 0.0
        %3624 = vmatprep.subr.mxu0 0.0
        %3625 = vmatpush1.xpose.msra.mxu0 %v3594
        %3626 = vmatprep.subr.mxu0 0.0
        %3627 = vmatpush1.xpose.msra.mxu0 %v3591
        %3628 = vmatprep.subr.mxu0 0.0
        %3629 = vmatpush2.xpose.msra.mxu0 0.0
        %3630 = vmatprep.subr.mxu0 0.0
        %3631 = vmatpush2.xpose.msra.mxu0 0.0
        %3632 = vmatprep.subr.mxu0 0.0
        %3633 = vmatpush2.xpose.msra.mxu0 0.0
        %3634 = vmatprep.subr.mxu0 0.0
        %3635 = vmatpush2.xpose.msra.mxu0 0.0
        %3636 = vmatprep.subr.mxu0 0.0
        %3637 = vmatpush2.xpose.msra.mxu0 0.0
        %3638 = vmatprep.subr.mxu0 0.0
        %3639 = vmatpush2.xpose.msra.mxu0 0.0
        %3640 = vmatprep.subr.mxu0 0.0
        %3641 = vmatpush2.xpose.msra.mxu0 0.0
        %3642 = vmatprep.subr.mxu0 0.0
        %3643 = vmatpush2.xpose.msra.mxu0 0.0
        %3644 = vmatprep.subr.mxu0 0.0
        %3645 = vmatpush2.xpose.msra.mxu0 0.0
        %3646 = vmatprep.subr.mxu0 0.0
        %3647 = vmatpush2.xpose.msra.mxu0 0.0
        %3648 = vmatprep.subr.mxu0 0.0
        %3649 = vmatpush2.xpose.msra.mxu0 0.0
        %3650 = vmatprep.subr.mxu0 0.0
        %3651 = vmatpush2.xpose.msra.mxu0 0.0
        %3652 = vmatprep.subr.mxu0 0.0
        %3653 = vmatpush2.xpose.msra.mxu0 0.0
        %3654 = vmatprep.subr.mxu0 0.0
        %3655 = vmatpush2.xpose.msra.mxu0 0.0
        %3656 = vmatprep.subr.mxu0 0.0
        %3657 = vmatpush2.xpose.msra.mxu0 0.0
        %3658 = vmatprep.subr.mxu0 0.0
        %3659 = vmatpush2.xpose.msra.mxu0 0.0
        %3660 = vmatprep.mubr.f32.mxu0 0.0
        %3661 = vmatmul.mubr.f32.gmra.mxu0 %v3371
        %v3662 = vpop.f32.mrf.mxu0
        %v3663 = vadd.f32 0.0, %v3662
        %v3664 = vpop.f32.mrf.mxu0
        %3665 = vdwg.mxu0
        %v3666 = vmul.f32 %v3663, 0.25
        %3668 = vrot.lane.b32.xlu0 %v3587, 32
        %v3669 = vpop.permute.xlu0 %3668
        %v3671 = vmul.f32 %v3195, %v3669
        %v3672 = vlaneseq
        %v3673 = vshrl.u32 %v3672, 7
        %v3674 = vsub.s32 0, %v3673
        %v3675 = vrot.slane %v3671, %v3674
        %3677 = vrot.lane.b32.xlu0 %v3675, 96
        %v3678 = vpop.permute.xlu0 %3677
        %v3680 = vmul.f32 %v2378, %v3678
        %v3681 = vsel %vm3464, %v3680, 0.0
        %3682 = vadd.xlane.f32.xlu0 %v3681
        %v3683 = vpop.xlane.xlu0 %3682
        %v3684 = vmul.f32 %v3683, 0.25
        %v3685 = vsel %vm3469, %v3666, -inf
        %3686 = vmax.xlane.f32.xlu0 %v3685
        %v3687 = vpop.xlane.xlu0 %3686
        %v3688 = vmax.f32 %v3687, %v3684
        %v3689 = vsub.f32 %v3666, %v3688
        %v3690 = vmul.f32 %v3689, 1.442695
        %v3691 = vpow.pop %v3690
        %v3692 = vsub.f32 %v3684, %v3688
        %v3693 = vmul.f32 %v3692, 1.442695
        %v3694 = vpow.pop %v3693
        %v3695 = vsel %vm3469, %v3691, 0.0
        %3696 = vadd.xlane.f32.xlu0 %v3695
        %v3697 = vpop.xlane.xlu0 %3696
        %v3698 = vadd.f32 %v3697, %v3694
        %v3699 = vrcp.pop %v3698
        %v3700 = vmul.f32 %v3025, %v3669
        %v3701 = vmul.f32 %v3026, %v3669
        %3702 = vrot.lane.b32.xlu0 %v3587, 64
        %v3703 = vpop.permute.xlu0 %3702
        %v3705 = vmul.f32 %v3195, %v3703
        %v3706 = vlaneseq
        %v3707 = vshrl.u32 %v3706, 7
        %v3708 = vsub.s32 0, %v3707
        %v3709 = vrot.slane %v3705, %v3708
        %v3710 = vmul.f32 %v3694, %v3709
        %3713 = vrot.lane.b32.xlu0 %v3700, 96
        %v3714 = vpop.permute.xlu0 %3713
        %3715 = vrot.lane.b32.xlu0 %v3701, 96
        %v3716 = vpop.permute.xlu0 %3715
        %3720 = vrot.lane.b32.xlu0 %v3710, 64
        %v3721 = vpop.permute.xlu0 %3720
        %v3724 = vsel %vm2044, %v3691, 0
        %3726 = vmatprep.subr.mxu0 0.0
        %3727 = vmatpush1.msra.mxu0 0.0
        %3728 = vmatprep.subr.mxu0 0.0
        %3729 = vmatpush1.msra.mxu0 0.0
        %3730 = vmatprep.subr.mxu0 0.0
        %3731 = vmatpush1.msra.mxu0 0.0
        %3732 = vmatprep.subr.mxu0 0.0
        %3733 = vmatpush1.msra.mxu0 0.0
        %3734 = vmatprep.subr.mxu0 0.0
        %3735 = vmatpush1.msra.mxu0 0.0
        %3736 = vmatprep.subr.mxu0 0.0
        %3737 = vmatpush1.msra.mxu0 0.0
        %3738 = vmatprep.subr.mxu0 0.0
        %3739 = vmatpush1.msra.mxu0 0.0
        %3740 = vmatprep.subr.mxu0 0.0
        %3741 = vmatpush1.msra.mxu0 0.0
        %3742 = vmatprep.subr.mxu0 0.0
        %3743 = vmatpush1.msra.mxu0 0.0
        %3744 = vmatprep.subr.mxu0 0.0
        %3745 = vmatpush1.msra.mxu0 0.0
        %3746 = vmatprep.subr.mxu0 0.0
        %3747 = vmatpush1.msra.mxu0 0.0
        %3748 = vmatprep.subr.mxu0 0.0
        %3749 = vmatpush1.msra.mxu0 0.0
        %3750 = vmatprep.subr.mxu0 0.0
        %3751 = vmatpush1.msra.mxu0 0.0
        %3752 = vmatprep.subr.mxu0 0.0
        %3753 = vmatpush1.msra.mxu0 0.0
        %3754 = vmatprep.subr.mxu0 0.0
        %3755 = vmatpush1.msra.mxu0 %v3716
        %3756 = vmatprep.subr.mxu0 0.0
        %3757 = vmatpush1.msra.mxu0 %v3714
        %3758 = vmatprep.subr.mxu0 0.0
        %3759 = vmatpush2.msra.mxu0 0.0
        %3760 = vmatprep.subr.mxu0 0.0
        %3761 = vmatpush2.msra.mxu0 0.0
        %3762 = vmatprep.subr.mxu0 0.0
        %3763 = vmatpush2.msra.mxu0 0.0
        %3764 = vmatprep.subr.mxu0 0.0
        %3765 = vmatpush2.msra.mxu0 0.0
        %3766 = vmatprep.subr.mxu0 0.0
        %3767 = vmatpush2.msra.mxu0 0.0
        %3768 = vmatprep.subr.mxu0 0.0
        %3769 = vmatpush2.msra.mxu0 0.0
        %3770 = vmatprep.subr.mxu0 0.0
        %3771 = vmatpush2.msra.mxu0 0.0
        %3772 = vmatprep.subr.mxu0 0.0
        %3773 = vmatpush2.msra.mxu0 0.0
        %3774 = vmatprep.subr.mxu0 0.0
        %3775 = vmatpush2.msra.mxu0 0.0
        %3776 = vmatprep.subr.mxu0 0.0
        %3777 = vmatpush2.msra.mxu0 0.0
        %3778 = vmatprep.subr.mxu0 0.0
        %3779 = vmatpush2.msra.mxu0 0.0
        %3780 = vmatprep.subr.mxu0 0.0
        %3781 = vmatpush2.msra.mxu0 0.0
        %3782 = vmatprep.subr.mxu0 0.0
        %3783 = vmatpush2.msra.mxu0 0.0
        %3784 = vmatprep.subr.mxu0 0.0
        %3785 = vmatpush2.msra.mxu0 0.0
        %3786 = vmatprep.subr.mxu0 0.0
        %3787 = vmatpush2.msra.mxu0 0.0
        %3788 = vmatprep.subr.mxu0 0.0
        %3789 = vmatpush2.msra.mxu0 0.0
        %3790 = vmatprep.mubr.f32.mxu0 0.0
        %3791 = vmatmul.mubr.f32.gmra.mxu0 %v3724
        %v3792 = vpop.f32.mrf.mxu0
        %v3793 = vadd.f32 %v3721, %v3792
        %v3794 = vpop.f32.mrf.mxu0
        %3795 = vdwg.mxu0
        %v3796 = vmul.f32 %v3793, %v3699
        %v3797 = vadd.f32 %v3582, %v3796
        %v3798 = vpack.c.bf16 %v3797, %v3797
        %v3799 = vpack.c.bf16 %v3357, %v3356
        %v3800 = vpack.c.bf16 %v3359, %v3358
        %v3802 = vlaneseq
        %v3803 = vshrl.u32 %v3802, 7
        %v3804 = vsub.s32 0, %v3803
        %v3805 = vrot.slane %v3360, %v3804
        %v3808 = vsel %vm1866, %v3798, 0
        %3810 = vmatprep.subr.bf16.mxu0 0
        %3811 = vmatpush1.bf16.msra.mxu0 0
        %3812 = vmatprep.subr.bf16.mxu0 0
        %3813 = vmatpush1.bf16.msra.mxu0 0
        %3814 = vmatprep.subr.bf16.mxu0 0
        %3815 = vmatpush1.bf16.msra.mxu0 0
        %3816 = vmatprep.subr.bf16.mxu0 0
        %3817 = vmatpush1.bf16.msra.mxu0 0
        %3818 = vmatprep.subr.bf16.mxu0 0
        %3819 = vmatpush1.bf16.msra.mxu0 0
        %3820 = vmatprep.subr.bf16.mxu0 0
        %3821 = vmatpush1.bf16.msra.mxu0 0
        %3822 = vmatprep.subr.bf16.mxu0 0
        %3823 = vmatpush1.bf16.msra.mxu0 %v3800
        %3824 = vmatprep.subr.bf16.mxu0 0
        %3825 = vmatpush1.bf16.msra.mxu0 %v3799
        %3826 = vmatprep.subr.bf16.mxu0 0
        %3827 = vmatpush2.bf16.msra.mxu0 0
        %3828 = vmatprep.subr.bf16.mxu0 0
        %3829 = vmatpush2.bf16.msra.mxu0 0
        %3830 = vmatprep.subr.bf16.mxu0 0
        %3831 = vmatpush2.bf16.msra.mxu0 0
        %3832 = vmatprep.subr.bf16.mxu0 0
        %3833 = vmatpush2.bf16.msra.mxu0 0
        %3834 = vmatprep.subr.bf16.mxu0 0
        %3835 = vmatpush2.bf16.msra.mxu0 0
        %3836 = vmatprep.subr.bf16.mxu0 0
        %3837 = vmatpush2.bf16.msra.mxu0 0
        %3838 = vmatprep.subr.bf16.mxu0 0
        %3839 = vmatpush2.bf16.msra.mxu0 0
        %3840 = vmatprep.subr.bf16.mxu0 0
        %3841 = vmatpush2.bf16.msra.mxu0 0
        %3842 = vmatprep.mubr.bf16.mxu0 0
        %3843 = vmatmul.mubr.bf16.gmra.mxu0 %v3808
        %v3844 = vpop.f32.mrf.mxu0
        %v3845 = vadd.f32 %v3805, %v3844
        %v3846 = vpop.f32.mrf.mxu0
        %v3847 = vpop.f32.mrf.mxu0
        %v3848 = vpop.f32.mrf.mxu0
        %3849 = vdwg.mxu0
        %v3850 = vadd.f32 %v3845, %v3355
        %v3852 = vsel %vm1866, %v2530, 0
        %3854 = vmatprep.subr.mxu0 0.0
        %3855 = vmatpush1.xpose.msra.mxu0 0.0
        %3856 = vmatprep.subr.mxu0 0.0
        %3857 = vmatpush1.xpose.msra.mxu0 0.0
        %3858 = vmatprep.subr.mxu0 0.0
        %3859 = vmatpush1.xpose.msra.mxu0 0.0
        %3860 = vmatprep.subr.mxu0 0.0
        %3861 = vmatpush1.xpose.msra.mxu0 0.0
        %3862 = vmatprep.subr.mxu0 0.0
        %3863 = vmatpush1.xpose.msra.mxu0 0.0
        %3864 = vmatprep.subr.mxu0 0.0
        %3865 = vmatpush1.xpose.msra.mxu0 0.0
        %3866 = vmatprep.subr.mxu0 0.0
        %3867 = vmatpush1.xpose.msra.mxu0 0.0
        %3868 = vmatprep.subr.mxu0 0.0
        %3869 = vmatpush1.xpose.msra.mxu0 0.0
        %3870 = vmatprep.subr.mxu0 0.0
        %3871 = vmatpush1.xpose.msra.mxu0 0.0
        %3872 = vmatprep.subr.mxu0 0.0
        %3873 = vmatpush1.xpose.msra.mxu0 0.0
        %3874 = vmatprep.subr.mxu0 0.0
        %3875 = vmatpush1.xpose.msra.mxu0 0.0
        %3876 = vmatprep.subr.mxu0 0.0
        %3877 = vmatpush1.xpose.msra.mxu0 0.0
        %3878 = vmatprep.subr.mxu0 0.0
        %3879 = vmatpush1.xpose.msra.mxu0 0.0
        %3880 = vmatprep.subr.mxu0 0.0
        %3881 = vmatpush1.xpose.msra.mxu0 0.0
        %3882 = vmatprep.subr.mxu0 0.0
        %3883 = vmatpush1.xpose.msra.mxu0 %v3377
        %3884 = vmatprep.subr.mxu0 0.0
        %3885 = vmatpush1.xpose.msra.mxu0 %v3374
        %3886 = vmatprep.subr.mxu0 0.0
        %3887 = vmatpush2.xpose.msra.mxu0 0.0
        %3888 = vmatprep.subr.mxu0 0.0
        %3889 = vmatpush2.xpose.msra.mxu0 0.0
        %3890 = vmatprep.subr.mxu0 0.0
        %3891 = vmatpush2.xpose.msra.mxu0 0.0
        %3892 = vmatprep.subr.mxu0 0.0
        %3893 = vmatpush2.xpose.msra.mxu0 0.0
        %3894 = vmatprep.subr.mxu0 0.0
        %3895 = vmatpush2.xpose.msra.mxu0 0.0
        %3896 = vmatprep.subr.mxu0 0.0
        %3897 = vmatpush2.xpose.msra.mxu0 0.0
        %3898 = vmatprep.subr.mxu0 0.0
        %3899 = vmatpush2.xpose.msra.mxu0 0.0
        %3900 = vmatprep.subr.mxu0 0.0
        %3901 = vmatpush2.xpose.msra.mxu0 0.0
        %3902 = vmatprep.subr.mxu0 0.0
        %3903 = vmatpush2.xpose.msra.mxu0 0.0
        %3904 = vmatprep.subr.mxu0 0.0
        %3905 = vmatpush2.xpose.msra.mxu0 0.0
        %3906 = vmatprep.subr.mxu0 0.0
        %3907 = vmatpush2.xpose.msra.mxu0 0.0
        %3908 = vmatprep.subr.mxu0 0.0
        %3909 = vmatpush2.xpose.msra.mxu0 0.0
        %3910 = vmatprep.subr.mxu0 0.0
        %3911 = vmatpush2.xpose.msra.mxu0 0.0
        %3912 = vmatprep.subr.mxu0 0.0
        %3913 = vmatpush2.xpose.msra.mxu0 0.0
        %3914 = vmatprep.subr.mxu0 0.0
        %3915 = vmatpush2.xpose.msra.mxu0 0.0
        %3916 = vmatprep.subr.mxu0 0.0
        %3917 = vmatpush2.xpose.msra.mxu0 0.0
        %3918 = vmatprep.mubr.f32.mxu0 0.0
        %3919 = vmatmul.mubr.f32.gmra.mxu0 %v3852
        %v3920 = vpop.f32.mrf.mxu0
        %v3921 = vadd.f32 0.0, %v3920
        %v3922 = vpop.f32.mrf.mxu0
        %3923 = vdwg.mxu0
        %v3924 = vmul.f32 %v3921, 0.25
        %3926 = vrot.lane.b32.xlu0 %v3454, 96
        %v3927 = vpop.permute.xlu0 %3926
        %v3929 = vmul.f32 %v2530, %v3927
        %v3930 = vsel %vm1963, %v3929, 0.0
        %3931 = vadd.xlane.f32.xlu0 %v3930
        %v3932 = vpop.xlane.xlu0 %3931
        %v3933 = vmul.f32 %v3932, 0.25
        %vm3934 = vcmask 122880
        %v3935 = vsel %vm3934, %v3924, -inf
        %3936 = vmax.xlane.f32.xlu0 %v3935
        %v3937 = vpop.xlane.xlu0 %3936
        %v3938 = vmax.f32 %v3937, %v3933
        %v3939 = vsub.f32 %v3924, %v3938
        %v3940 = vmul.f32 %v3939, 1.442695
        %v3941 = vpow.pop %v3940
        %v3942 = vsub.f32 %v3933, %v3938
        %v3943 = vmul.f32 %v3942, 1.442695
        %v3944 = vpow.pop %v3943
        %v3945 = vsel %vm3934, %v3941, 0.0
        %3946 = vadd.xlane.f32.xlu0 %v3945
        %v3947 = vpop.xlane.xlu0 %3946
        %v3948 = vadd.f32 %v3947, %v3944
        %v3949 = vrcp.pop %v3948
        %v3950 = vmul.f32 %v3944, %v3490
        %3952 = vrot.lane.b32.xlu0 %v3950, 64
        %v3953 = vpop.permute.xlu0 %3952
        %v3956 = vsel %vm2044, %v3941, 0
        %3958 = vmatprep.subr.mxu0 0.0
        %3959 = vmatpush1.msra.mxu0 0.0
        %3960 = vmatprep.subr.mxu0 0.0
        %3961 = vmatpush1.msra.mxu0 0.0
        %3962 = vmatprep.subr.mxu0 0.0
        %3963 = vmatpush1.msra.mxu0 0.0
        %3964 = vmatprep.subr.mxu0 0.0
        %3965 = vmatpush1.msra.mxu0 0.0
        %3966 = vmatprep.subr.mxu0 0.0
        %3967 = vmatpush1.msra.mxu0 0.0
        %3968 = vmatprep.subr.mxu0 0.0
        %3969 = vmatpush1.msra.mxu0 0.0
        %3970 = vmatprep.subr.mxu0 0.0
        %3971 = vmatpush1.msra.mxu0 0.0
        %3972 = vmatprep.subr.mxu0 0.0
        %3973 = vmatpush1.msra.mxu0 0.0
        %3974 = vmatprep.subr.mxu0 0.0
        %3975 = vmatpush1.msra.mxu0 0.0
        %3976 = vmatprep.subr.mxu0 0.0
        %3977 = vmatpush1.msra.mxu0 0.0
        %3978 = vmatprep.subr.mxu0 0.0
        %3979 = vmatpush1.msra.mxu0 0.0
        %3980 = vmatprep.subr.mxu0 0.0
        %3981 = vmatpush1.msra.mxu0 0.0
        %3982 = vmatprep.subr.mxu0 0.0
        %3983 = vmatpush1.msra.mxu0 0.0
        %3984 = vmatprep.subr.mxu0 0.0
        %3985 = vmatpush1.msra.mxu0 0.0
        %3986 = vmatprep.subr.mxu0 0.0
        %3987 = vmatpush1.msra.mxu0 %v3501
        %3988 = vmatprep.subr.mxu0 0.0
        %3989 = vmatpush1.msra.mxu0 %v3499
        %3990 = vmatprep.subr.mxu0 0.0
        %3991 = vmatpush2.msra.mxu0 0.0
        %3992 = vmatprep.subr.mxu0 0.0
        %3993 = vmatpush2.msra.mxu0 0.0
        %3994 = vmatprep.subr.mxu0 0.0
        %3995 = vmatpush2.msra.mxu0 0.0
        %3996 = vmatprep.subr.mxu0 0.0
        %3997 = vmatpush2.msra.mxu0 0.0
        %3998 = vmatprep.subr.mxu0 0.0
        %3999 = vmatpush2.msra.mxu0 0.0
        %4000 = vmatprep.subr.mxu0 0.0
        %4001 = vmatpush2.msra.mxu0 0.0
        %4002 = vmatprep.subr.mxu0 0.0
        %4003 = vmatpush2.msra.mxu0 0.0
        %4004 = vmatprep.subr.mxu0 0.0
        %4005 = vmatpush2.msra.mxu0 0.0
        %4006 = vmatprep.subr.mxu0 0.0
        %4007 = vmatpush2.msra.mxu0 0.0
        %4008 = vmatprep.subr.mxu0 0.0
        %4009 = vmatpush2.msra.mxu0 0.0
        %4010 = vmatprep.subr.mxu0 0.0
        %4011 = vmatpush2.msra.mxu0 0.0
        %4012 = vmatprep.subr.mxu0 0.0
        %4013 = vmatpush2.msra.mxu0 0.0
        %4014 = vmatprep.subr.mxu0 0.0
        %4015 = vmatpush2.msra.mxu0 0.0
        %4016 = vmatprep.subr.mxu0 0.0
        %4017 = vmatpush2.msra.mxu0 0.0
        %4018 = vmatprep.subr.mxu0 0.0
        %4019 = vmatpush2.msra.mxu0 0.0
        %4020 = vmatprep.subr.mxu0 0.0
        %4021 = vmatpush2.msra.mxu0 0.0
        %4022 = vmatprep.mubr.f32.mxu0 0.0
        %4023 = vmatmul.mubr.f32.gmra.mxu0 %v3956
        %v4024 = vpop.f32.mrf.mxu0
        %v4025 = vadd.f32 %v3953, %v4024
        %v4026 = vpop.f32.mrf.mxu0
        %4027 = vdwg.mxu0
        %v4028 = vmul.f32 %v4025, %v3949
        %v4029 = vadd.f32 %v4028, 0.0
        %4030 = vmatprep.subr.mxu0 0.0
        %4031 = vmatpush1.xpose.msra.mxu0 0.0
        %4032 = vmatprep.subr.mxu0 0.0
        %4033 = vmatpush1.xpose.msra.mxu0 0.0
        %4034 = vmatprep.subr.mxu0 0.0
        %4035 = vmatpush1.xpose.msra.mxu0 0.0
        %4036 = vmatprep.subr.mxu0 0.0
        %4037 = vmatpush1.xpose.msra.mxu0 0.0
        %4038 = vmatprep.subr.mxu0 0.0
        %4039 = vmatpush1.xpose.msra.mxu0 0.0
        %4040 = vmatprep.subr.mxu0 0.0
        %4041 = vmatpush1.xpose.msra.mxu0 0.0
        %4042 = vmatprep.subr.mxu0 0.0
        %4043 = vmatpush1.xpose.msra.mxu0 0.0
        %4044 = vmatprep.subr.mxu0 0.0
        %4045 = vmatpush1.xpose.msra.mxu0 0.0
        %4046 = vmatprep.subr.mxu0 0.0
        %4047 = vmatpush1.xpose.msra.mxu0 0.0
        %4048 = vmatprep.subr.mxu0 0.0
        %4049 = vmatpush1.xpose.msra.mxu0 0.0
        %4050 = vmatprep.subr.mxu0 0.0
        %4051 = vmatpush1.xpose.msra.mxu0 0.0
        %4052 = vmatprep.subr.mxu0 0.0
        %4053 = vmatpush1.xpose.msra.mxu0 0.0
        %4054 = vmatprep.subr.mxu0 0.0
        %4055 = vmatpush1.xpose.msra.mxu0 0.0
        %4056 = vmatprep.subr.mxu0 0.0
        %4057 = vmatpush1.xpose.msra.mxu0 0.0
        %4058 = vmatprep.subr.mxu0 0.0
        %4059 = vmatpush1.xpose.msra.mxu0 %v3594
        %4060 = vmatprep.subr.mxu0 0.0
        %4061 = vmatpush1.xpose.msra.mxu0 %v3591
        %4062 = vmatprep.subr.mxu0 0.0
        %4063 = vmatpush2.xpose.msra.mxu0 0.0
        %4064 = vmatprep.subr.mxu0 0.0
        %4065 = vmatpush2.xpose.msra.mxu0 0.0
        %4066 = vmatprep.subr.mxu0 0.0
        %4067 = vmatpush2.xpose.msra.mxu0 0.0
        %4068 = vmatprep.subr.mxu0 0.0
        %4069 = vmatpush2.xpose.msra.mxu0 0.0
        %4070 = vmatprep.subr.mxu0 0.0
        %4071 = vmatpush2.xpose.msra.mxu0 0.0
        %4072 = vmatprep.subr.mxu0 0.0
        %4073 = vmatpush2.xpose.msra.mxu0 0.0
        %4074 = vmatprep.subr.mxu0 0.0
        %4075 = vmatpush2.xpose.msra.mxu0 0.0
        %4076 = vmatprep.subr.mxu0 0.0
        %4077 = vmatpush2.xpose.msra.mxu0 0.0
        %4078 = vmatprep.subr.mxu0 0.0
        %4079 = vmatpush2.xpose.msra.mxu0 0.0
        %4080 = vmatprep.subr.mxu0 0.0
        %4081 = vmatpush2.xpose.msra.mxu0 0.0
        %4082 = vmatprep.subr.mxu0 0.0
        %4083 = vmatpush2.xpose.msra.mxu0 0.0
        %4084 = vmatprep.subr.mxu0 0.0
        %4085 = vmatpush2.xpose.msra.mxu0 0.0
        %4086 = vmatprep.subr.mxu0 0.0
        %4087 = vmatpush2.xpose.msra.mxu0 0.0
        %4088 = vmatprep.subr.mxu0 0.0
        %4089 = vmatpush2.xpose.msra.mxu0 0.0
        %4090 = vmatprep.subr.mxu0 0.0
        %4091 = vmatpush2.xpose.msra.mxu0 0.0
        %4092 = vmatprep.subr.mxu0 0.0
        %4093 = vmatpush2.xpose.msra.mxu0 0.0
        %4094 = vmatprep.mubr.f32.mxu0 0.0
        %4095 = vmatmul.mubr.f32.gmra.mxu0 %v3852
        %v4096 = vpop.f32.mrf.mxu0
        %v4097 = vadd.f32 0.0, %v4096
        %v4098 = vpop.f32.mrf.mxu0
        %4099 = vdwg.mxu0
        %v4100 = vmul.f32 %v4097, 0.25
        %4102 = vrot.lane.b32.xlu0 %v3671, 96
        %v4103 = vpop.permute.xlu0 %4102
        %v4105 = vmul.f32 %v2530, %v4103
        %v4106 = vsel %vm1963, %v4105, 0.0
        %4107 = vadd.xlane.f32.xlu0 %v4106
        %v4108 = vpop.xlane.xlu0 %4107
        %v4109 = vmul.f32 %v4108, 0.25
        %v4110 = vsel %vm3934, %v4100, -inf
        %4111 = vmax.xlane.f32.xlu0 %v4110
        %v4112 = vpop.xlane.xlu0 %4111
        %v4113 = vmax.f32 %v4112, %v4109
        %v4114 = vsub.f32 %v4100, %v4113
        %v4115 = vmul.f32 %v4114, 1.442695
        %v4116 = vpow.pop %v4115
        %v4117 = vsub.f32 %v4109, %v4113
        %v4118 = vmul.f32 %v4117, 1.442695
        %v4119 = vpow.pop %v4118
        %v4120 = vsel %vm3934, %v4116, 0.0
        %4121 = vadd.xlane.f32.xlu0 %v4120
        %v4122 = vpop.xlane.xlu0 %4121
        %v4123 = vadd.f32 %v4122, %v4119
        %v4124 = vrcp.pop %v4123
        %v4125 = vmul.f32 %v4119, %v3705
        %4127 = vrot.lane.b32.xlu0 %v4125, 64
        %v4128 = vpop.permute.xlu0 %4127
        %v4131 = vsel %vm2044, %v4116, 0
        %4133 = vmatprep.subr.mxu0 0.0
        %4134 = vmatpush1.msra.mxu0 0.0
        %4135 = vmatprep.subr.mxu0 0.0
        %4136 = vmatpush1.msra.mxu0 0.0
        %4137 = vmatprep.subr.mxu0 0.0
        %4138 = vmatpush1.msra.mxu0 0.0
        %4139 = vmatprep.subr.mxu0 0.0
        %4140 = vmatpush1.msra.mxu0 0.0
        %4141 = vmatprep.subr.mxu0 0.0
        %4142 = vmatpush1.msra.mxu0 0.0
        %4143 = vmatprep.subr.mxu0 0.0
        %4144 = vmatpush1.msra.mxu0 0.0
        %4145 = vmatprep.subr.mxu0 0.0
        %4146 = vmatpush1.msra.mxu0 0.0
        %4147 = vmatprep.subr.mxu0 0.0
        %4148 = vmatpush1.msra.mxu0 0.0
        %4149 = vmatprep.subr.mxu0 0.0
        %4150 = vmatpush1.msra.mxu0 0.0
        %4151 = vmatprep.subr.mxu0 0.0
        %4152 = vmatpush1.msra.mxu0 0.0
        %4153 = vmatprep.subr.mxu0 0.0
        %4154 = vmatpush1.msra.mxu0 0.0
        %4155 = vmatprep.subr.mxu0 0.0
        %4156 = vmatpush1.msra.mxu0 0.0
        %4157 = vmatprep.subr.mxu0 0.0
        %4158 = vmatpush1.msra.mxu0 0.0
        %4159 = vmatprep.subr.mxu0 0.0
        %4160 = vmatpush1.msra.mxu0 0.0
        %4161 = vmatprep.subr.mxu0 0.0
        %4162 = vmatpush1.msra.mxu0 %v3716
        %4163 = vmatprep.subr.mxu0 0.0
        %4164 = vmatpush1.msra.mxu0 %v3714
        %4165 = vmatprep.subr.mxu0 0.0
        %4166 = vmatpush2.msra.mxu0 0.0
        %4167 = vmatprep.subr.mxu0 0.0
        %4168 = vmatpush2.msra.mxu0 0.0
        %4169 = vmatprep.subr.mxu0 0.0
        %4170 = vmatpush2.msra.mxu0 0.0
        %4171 = vmatprep.subr.mxu0 0.0
        %4172 = vmatpush2.msra.mxu0 0.0
        %4173 = vmatprep.subr.mxu0 0.0
        %4174 = vmatpush2.msra.mxu0 0.0
        %4175 = vmatprep.subr.mxu0 0.0
        %4176 = vmatpush2.msra.mxu0 0.0
        %4177 = vmatprep.subr.mxu0 0.0
        %4178 = vmatpush2.msra.mxu0 0.0
        %4179 = vmatprep.subr.mxu0 0.0
        %4180 = vmatpush2.msra.mxu0 0.0
        %4181 = vmatprep.subr.mxu0 0.0
        %4182 = vmatpush2.msra.mxu0 0.0
        %4183 = vmatprep.subr.mxu0 0.0
        %4184 = vmatpush2.msra.mxu0 0.0
        %4185 = vmatprep.subr.mxu0 0.0
        %4186 = vmatpush2.msra.mxu0 0.0
        %4187 = vmatprep.subr.mxu0 0.0
        %4188 = vmatpush2.msra.mxu0 0.0
        %4189 = vmatprep.subr.mxu0 0.0
        %4190 = vmatpush2.msra.mxu0 0.0
        %4191 = vmatprep.subr.mxu0 0.0
        %4192 = vmatpush2.msra.mxu0 0.0
        %4193 = vmatprep.subr.mxu0 0.0
        %4194 = vmatpush2.msra.mxu0 0.0
        %4195 = vmatprep.subr.mxu0 0.0
        %4196 = vmatpush2.msra.mxu0 0.0
        %4197 = vmatprep.mubr.f32.mxu0 0.0
        %4198 = vmatmul.mubr.f32.gmra.mxu0 %v4131
        %v4199 = vpop.f32.mrf.mxu0
        %v4200 = vadd.f32 %v4128, %v4199
        %v4201 = vpop.f32.mrf.mxu0
        %4202 = vdwg.mxu0
        %v4203 = vmul.f32 %v4200, %v4124
        %v4204 = vadd.f32 %v4029, %v4203
        %v4205 = vpack.c.bf16 %v4204, %v4204
        %v4207 = vsel %vm1866, %v4205, 0
        %4209 = vmatprep.subr.bf16.mxu0 0
        %4210 = vmatpush1.bf16.msra.mxu0 0
        %4211 = vmatprep.subr.bf16.mxu0 0
        %4212 = vmatpush1.bf16.msra.mxu0 0
        %4213 = vmatprep.subr.bf16.mxu0 0
        %4214 = vmatpush1.bf16.msra.mxu0 0
        %4215 = vmatprep.subr.bf16.mxu0 0
        %4216 = vmatpush1.bf16.msra.mxu0 0
        %4217 = vmatprep.subr.bf16.mxu0 0
        %4218 = vmatpush1.bf16.msra.mxu0 0
        %4219 = vmatprep.subr.bf16.mxu0 0
        %4220 = vmatpush1.bf16.msra.mxu0 0
        %4221 = vmatprep.subr.bf16.mxu0 0
        %4222 = vmatpush1.bf16.msra.mxu0 %v3800
        %4223 = vmatprep.subr.bf16.mxu0 0
        %4224 = vmatpush1.bf16.msra.mxu0 %v3799
        %4225 = vmatprep.subr.bf16.mxu0 0
        %4226 = vmatpush2.bf16.msra.mxu0 0
        %4227 = vmatprep.subr.bf16.mxu0 0
        %4228 = vmatpush2.bf16.msra.mxu0 0
        %4229 = vmatprep.subr.bf16.mxu0 0
        %4230 = vmatpush2.bf16.msra.mxu0 0
        %4231 = vmatprep.subr.bf16.mxu0 0
        %4232 = vmatpush2.bf16.msra.mxu0 0
        %4233 = vmatprep.subr.bf16.mxu0 0
        %4234 = vmatpush2.bf16.msra.mxu0 0
        %4235 = vmatprep.subr.bf16.mxu0 0
        %4236 = vmatpush2.bf16.msra.mxu0 0
        %4237 = vmatprep.subr.bf16.mxu0 0
        %4238 = vmatpush2.bf16.msra.mxu0 0
        %4239 = vmatprep.subr.bf16.mxu0 0
        %4240 = vmatpush2.bf16.msra.mxu0 0
        %4241 = vmatprep.mubr.bf16.mxu0 0
        %4242 = vmatmul.mubr.bf16.gmra.mxu0 %v4207
        %v4243 = vpop.f32.mrf.mxu0
        %v4244 = vadd.f32 %v3360, %v4243
        %v4245 = vpop.f32.mrf.mxu0
        %v4246 = vpop.f32.mrf.mxu0
        %v4247 = vpop.f32.mrf.mxu0
        %4248 = vdwg.mxu0
        %v4249 = vadd.f32 %v4244, %v1858
        %v4250 = vld [vmem:[%s55] sm:$0x1]
        %v4251 = vld [vmem:[%s57] sm:$0x1]
        %v4252 = vld [vmem:[%s59] sm:$0xff]
        %v4253 = vld [vmem:[%s59 + $0x8] sm:$0xff]
        %v4254 = vld [vmem:[%s59 + $0x10] sm:$0xff]
        %v4255 = vld [vmem:[%s59 + $0x18] sm:$0xff]
        %v4256 = vld [vmem:[%s61] sm:$0x1]
        %v4257 = vld [vmem:[%s63] sm:$0xff]
        %v4258 = vld [vmem:[%s63 + $0x8] sm:$0xff]
        %v4259 = vld [vmem:[%s63 + $0x10] sm:$0xff]
        %v4260 = vld [vmem:[%s63 + $0x18] sm:$0xff]
        %v4261 = vld [vmem:[%s63 + $0x20] sm:$0xff]
        %v4262 = vld [vmem:[%s63 + $0x28] sm:$0xff]
        %v4263 = vld [vmem:[%s63 + $0x30] sm:$0xff]
        %v4264 = vld [vmem:[%s63 + $0x38] sm:$0xff]
        %v4265 = vld [vmem:[%s63 + $0x40] sm:$0xff]
        %v4266 = vld [vmem:[%s63 + $0x48] sm:$0xff]
        %v4267 = vld [vmem:[%s63 + $0x50] sm:$0xff]
        %v4268 = vld [vmem:[%s63 + $0x58] sm:$0xff]
        %v4269 = vld [vmem:[%s63 + $0x60] sm:$0xff]
        %v4270 = vld [vmem:[%s63 + $0x68] sm:$0xff]
        %v4271 = vld [vmem:[%s63 + $0x70] sm:$0xff]
        %v4272 = vld [vmem:[%s63 + $0x78] sm:$0xff]
        %v4273 = vld [vmem:[%s65] sm:$0x1]
        %v4274 = vsel %vm3464, %v3850, 0.0
        %4275 = vadd.xlane.f32.xlu0 %v4274
        %v4276 = vpop.xlane.xlu0 %4275
        %v4277 = vmul.f32 %v4276, %v1873
        %v4278 = vsub.f32 %v3850, %v4277
        %v4279 = vmul.f32 %v4278, %v4278
        %v4280 = vsel %vm3464, %v4279, 0.0
        %4281 = vadd.xlane.f32.xlu0 %v4280
        %v4282 = vpop.xlane.xlu0 %4281
        %v4283 = vmul.f32 %v4282, %v1873
        %v4284 = vadd.f32 %v4283, 1e-06
        %v4285 = vrsqrt.pop %v4284
        %v4286 = vmul.f32 %v4278, %v4285
        %v4288 = vlaneseq
        %v4289 = vshrl.u32 %v4288, 7
        %v4290 = vsub.s32 0, %v4289
        %v4291 = vrot.slane %v4250, %v4290
        %v4293 = vmul.f32 %v4286, %v4291
        %v4295 = vlaneseq
        %v4296 = vshrl.u32 %v4295, 7
        %v4297 = vsub.s32 0, %v4296
        %v4298 = vrot.slane %v4251, %v4297
        %v4300 = vadd.f32 %v4293, %v4298
        %v4301 = vpack.c.bf16 %v4300, %v4300
        %v4302 = vpack.c.bf16 %v4253, %v4252
        %v4303 = vpack.c.bf16 %v4255, %v4254
        %v4305 = vlaneseq
        %v4306 = vshrl.u32 %v4305, 7
        %v4307 = vsub.s32 0, %v4306
        %v4308 = vrot.slane %v4256, %v4307
        %v4311 = vsel %vm1866, %v4301, 0
        %4313 = vmatprep.subr.bf16.mxu0 0
        %4314 = vmatpush1.bf16.msra.mxu0 0
        %4315 = vmatprep.subr.bf16.mxu0 0
        %4316 = vmatpush1.bf16.msra.mxu0 0
        %4317 = vmatprep.subr.bf16.mxu0 0
        %4318 = vmatpush1.bf16.msra.mxu0 0
        %4319 = vmatprep.subr.bf16.mxu0 0
        %4320 = vmatpush1.bf16.msra.mxu0 0
        %4321 = vmatprep.subr.bf16.mxu0 0
        %4322 = vmatpush1.bf16.msra.mxu0 0
        %4323 = vmatprep.subr.bf16.mxu0 0
        %4324 = vmatpush1.bf16.msra.mxu0 0
        %4325 = vmatprep.subr.bf16.mxu0 0
        %4326 = vmatpush1.bf16.msra.mxu0 %v4303
        %4327 = vmatprep.subr.bf16.mxu0 0
        %4328 = vmatpush1.bf16.msra.mxu0 %v4302
        %4329 = vmatprep.subr.bf16.mxu0 0
        %4330 = vmatpush2.bf16.msra.mxu0 0
        %4331 = vmatprep.subr.bf16.mxu0 0
        %4332 = vmatpush2.bf16.msra.mxu0 0
        %4333 = vmatprep.subr.bf16.mxu0 0
        %4334 = vmatpush2.bf16.msra.mxu0 0
        %4335 = vmatprep.subr.bf16.mxu0 0
        %4336 = vmatpush2.bf16.msra.mxu0 0
        %4337 = vmatprep.subr.bf16.mxu0 0
        %4338 = vmatpush2.bf16.msra.mxu0 0
        %4339 = vmatprep.subr.bf16.mxu0 0
        %4340 = vmatpush2.bf16.msra.mxu0 0
        %4341 = vmatprep.subr.bf16.mxu0 0
        %4342 = vmatpush2.bf16.msra.mxu0 0
        %4343 = vmatprep.subr.bf16.mxu0 0
        %4344 = vmatpush2.bf16.msra.mxu0 0
        %4345 = vmatprep.mubr.bf16.mxu0 0
        %4346 = vmatmul.mubr.bf16.gmra.mxu0 %v4311
        %v4347 = vpop.f32.mrf.mxu0
        %v4348 = vadd.f32 %v4308, %v4347
        %v4349 = vpop.f32.mrf.mxu0
        %v4350 = vpop.f32.mrf.mxu0
        %v4351 = vpop.f32.mrf.mxu0
        %4352 = vdwg.mxu0
        %v4353 = vmul.f32 %v4348, 0.5
        %v4354 = vmul.f32 %v4348, 0.70710677
        %v4355 = verf.f32.pop %v4354
        %v4356 = vadd.f32 %v4355, 1.0
        %v4357 = vmul.f32 %v4353, %v4356
        %v4358 = vpack.c.bf16 %v4357, %v4357
        %v4359 = vpack.c.bf16 %v4258, %v4257
        %v4360 = vpack.c.bf16 %v4260, %v4259
        %v4361 = vpack.c.bf16 %v4262, %v4261
        %v4362 = vpack.c.bf16 %v4264, %v4263
        %v4363 = vpack.c.bf16 %v4266, %v4265
        %v4364 = vpack.c.bf16 %v4268, %v4267
        %v4365 = vpack.c.bf16 %v4270, %v4269
        %v4366 = vpack.c.bf16 %v4272, %v4271
        %4367 = vmatprep.subr.bf16.mxu0 0
        %4368 = vmatpush1.bf16.msra.mxu0 %v4366
        %4369 = vmatprep.subr.bf16.mxu0 0
        %4370 = vmatpush1.bf16.msra.mxu0 %v4365
        %4371 = vmatprep.subr.bf16.mxu0 0
        %4372 = vmatpush1.bf16.msra.mxu0 %v4364
        %4373 = vmatprep.subr.bf16.mxu0 0
        %4374 = vmatpush1.bf16.msra.mxu0 %v4363
        %4375 = vmatprep.subr.bf16.mxu0 0
        %4376 = vmatpush1.bf16.msra.mxu0 %v4362
        %4377 = vmatprep.subr.bf16.mxu0 0
        %4378 = vmatpush1.bf16.msra.mxu0 %v4361
        %4379 = vmatprep.subr.bf16.mxu0 0
        %4380 = vmatpush1.bf16.msra.mxu0 %v4360
        %4381 = vmatprep.subr.bf16.mxu0 0
        %4382 = vmatpush1.bf16.msra.mxu0 %v4359
        %4383 = vmatprep.subr.bf16.mxu0 0
        %4384 = vmatpush2.bf16.msra.mxu0 0
        %4385 = vmatprep.subr.bf16.mxu0 0
        %4386 = vmatpush2.bf16.msra.mxu0 0
        %4387 = vmatprep.subr.bf16.mxu0 0
        %4388 = vmatpush2.bf16.msra.mxu0 0
        %4389 = vmatprep.subr.bf16.mxu0 0
        %4390 = vmatpush2.bf16.msra.mxu0 0
        %4391 = vmatprep.subr.bf16.mxu0 0
        %4392 = vmatpush2.bf16.msra.mxu0 0
        %4393 = vmatprep.subr.bf16.mxu0 0
        %4394 = vmatpush2.bf16.msra.mxu0 0
        %4395 = vmatprep.subr.bf16.mxu0 0
        %4396 = vmatpush2.bf16.msra.mxu0 0
        %4397 = vmatprep.subr.bf16.mxu0 0
        %4398 = vmatpush2.bf16.msra.mxu0 0
        %4399 = vmatprep.mubr.bf16.mxu0 0
        %4400 = vmatmul.mubr.bf16.gmra.mxu0 %v4358
        %v4401 = vpop.f32.mrf.mxu0
        %v4402 = vadd.f32 0.0, %v4401
        %v4403 = vpop.f32.mrf.mxu0
        %v4404 = vpop.f32.mrf.mxu0
        %v4405 = vpop.f32.mrf.mxu0
        %4406 = vdwg.mxu0
        %v4407 = vadd.f32 %v3850, %v4402
        %v4409 = vlaneseq
        %v4410 = vshrl.u32 %v4409, 7
        %v4411 = vsub.s32 0, %v4410
        %v4412 = vrot.slane %v4273, %v4411
        %v4414 = vadd.f32 %v4407, %v4412
        %v4415 = vsel %vm1963, %v4249, 0.0
        %4416 = vadd.xlane.f32.xlu0 %v4415
        %v4417 = vpop.xlane.xlu0 %4416
        %v4418 = vmul.f32 %v4417, %v1873
        %v4419 = vsub.f32 %v4249, %v4418
        %v4420 = vmul.f32 %v4419, %v4419
        %v4421 = vsel %vm1963, %v4420, 0.0
        %4422 = vadd.xlane.f32.xlu0 %v4421
        %v4423 = vpop.xlane.xlu0 %4422
        %v4424 = vmul.f32 %v4423, %v1873
        %v4425 = vadd.f32 %v4424, 1e-06
        %v4426 = vrsqrt.pop %v4425
        %v4427 = vmul.f32 %v4419, %v4426
        %v4428 = vmul.f32 %v4427, %v4250
        %v4429 = vadd.f32 %v4428, %v4251
        %v4430 = vpack.c.bf16 %v4429, %v4429
        %v4432 = vsel %vm1866, %v4430, 0
        %4434 = vmatprep.subr.bf16.mxu0 0
        %4435 = vmatpush1.bf16.msra.mxu0 0
        %4436 = vmatprep.subr.bf16.mxu0 0
        %4437 = vmatpush1.bf16.msra.mxu0 0
        %4438 = vmatprep.subr.bf16.mxu0 0
        %4439 = vmatpush1.bf16.msra.mxu0 0
        %4440 = vmatprep.subr.bf16.mxu0 0
        %4441 = vmatpush1.bf16.msra.mxu0 0
        %4442 = vmatprep.subr.bf16.mxu0 0
        %4443 = vmatpush1.bf16.msra.mxu0 0
        %4444 = vmatprep.subr.bf16.mxu0 0
        %4445 = vmatpush1.bf16.msra.mxu0 0
        %4446 = vmatprep.subr.bf16.mxu0 0
        %4447 = vmatpush1.bf16.msra.mxu0 %v4303
        %4448 = vmatprep.subr.bf16.mxu0 0
        %4449 = vmatpush1.bf16.msra.mxu0 %v4302
        %4450 = vmatprep.subr.bf16.mxu0 0
        %4451 = vmatpush2.bf16.msra.mxu0 0
        %4452 = vmatprep.subr.bf16.mxu0 0
        %4453 = vmatpush2.bf16.msra.mxu0 0
        %4454 = vmatprep.subr.bf16.mxu0 0
        %4455 = vmatpush2.bf16.msra.mxu0 0
        %4456 = vmatprep.subr.bf16.mxu0 0
        %4457 = vmatpush2.bf16.msra.mxu0 0
        %4458 = vmatprep.subr.bf16.mxu0 0
        %4459 = vmatpush2.bf16.msra.mxu0 0
        %4460 = vmatprep.subr.bf16.mxu0 0
        %4461 = vmatpush2.bf16.msra.mxu0 0
        %4462 = vmatprep.subr.bf16.mxu0 0
        %4463 = vmatpush2.bf16.msra.mxu0 0
        %4464 = vmatprep.subr.bf16.mxu0 0
        %4465 = vmatpush2.bf16.msra.mxu0 0
        %4466 = vmatprep.mubr.bf16.mxu0 0
        %4467 = vmatmul.mubr.bf16.gmra.mxu0 %v4432
        %v4468 = vpop.f32.mrf.mxu0
        %v4469 = vadd.f32 %v4256, %v4468
        %v4470 = vpop.f32.mrf.mxu0
        %v4471 = vpop.f32.mrf.mxu0
        %v4472 = vpop.f32.mrf.mxu0
        %4473 = vdwg.mxu0
        %v4474 = vmul.f32 %v4469, 0.5
        %v4475 = vmul.f32 %v4469, 0.70710677
        %v4476 = verf.f32.pop %v4475
        %v4477 = vadd.f32 %v4476, 1.0
        %v4478 = vmul.f32 %v4474, %v4477
        %v4479 = vpack.c.bf16 %v4478, %v4478
        %4480 = vmatprep.subr.bf16.mxu0 0
        %4481 = vmatpush1.bf16.msra.mxu0 %v4366
        %4482 = vmatprep.subr.bf16.mxu0 0
        %4483 = vmatpush1.bf16.msra.mxu0 %v4365
        %4484 = vmatprep.subr.bf16.mxu0 0
        %4485 = vmatpush1.bf16.msra.mxu0 %v4364
        %4486 = vmatprep.subr.bf16.mxu0 0
        %4487 = vmatpush1.bf16.msra.mxu0 %v4363
        %4488 = vmatprep.subr.bf16.mxu0 0
        %4489 = vmatpush1.bf16.msra.mxu0 %v4362
        %4490 = vmatprep.subr.bf16.mxu0 0
        %4491 = vmatpush1.bf16.msra.mxu0 %v4361
        %4492 = vmatprep.subr.bf16.mxu0 0
        %4493 = vmatpush1.bf16.msra.mxu0 %v4360
        %4494 = vmatprep.subr.bf16.mxu0 0
        %4495 = vmatpush1.bf16.msra.mxu0 %v4359
        %4496 = vmatprep.subr.bf16.mxu0 0
        %4497 = vmatpush2.bf16.msra.mxu0 0
        %4498 = vmatprep.subr.bf16.mxu0 0
        %4499 = vmatpush2.bf16.msra.mxu0 0
        %4500 = vmatprep.subr.bf16.mxu0 0
        %4501 = vmatpush2.bf16.msra.mxu0 0
        %4502 = vmatprep.subr.bf16.mxu0 0
        %4503 = vmatpush2.bf16.msra.mxu0 0
        %4504 = vmatprep.subr.bf16.mxu0 0
        %4505 = vmatpush2.bf16.msra.mxu0 0
        %4506 = vmatprep.subr.bf16.mxu0 0
        %4507 = vmatpush2.bf16.msra.mxu0 0
        %4508 = vmatprep.subr.bf16.mxu0 0
        %4509 = vmatpush2.bf16.msra.mxu0 0
        %4510 = vmatprep.subr.bf16.mxu0 0
        %4511 = vmatpush2.bf16.msra.mxu0 0
        %4512 = vmatprep.mubr.bf16.mxu0 0
        %4513 = vmatmul.mubr.bf16.gmra.mxu0 %v4479
        %v4514 = vpop.f32.mrf.mxu0
        %v4515 = vadd.f32 0.0, %v4514
        %v4516 = vpop.f32.mrf.mxu0
        %v4517 = vpop.f32.mrf.mxu0
        %v4518 = vpop.f32.mrf.mxu0
        %4519 = vdwg.mxu0
        %v4520 = vadd.f32 %v4249, %v4515
        %v4521 = vadd.f32 %v4520, %v4273
        %v4522 = vld [vmem:[%s67] sm:$0x1]
        %v4523 = vld [vmem:[%s69] sm:$0x1]
        %v4524 = vld [vmem:[%s71] sm:$0xff]
        %v4525 = vld [vmem:[%s71 + $0x8] sm:$0xff]
        %v4526 = vld [vmem:[%s71 + $0x10] sm:$0xff]
        %v4527 = vld [vmem:[%s71 + $0x18] sm:$0xff]
        %v4528 = vld [vmem:[%s73] sm:$0x1]
        %v4529 = vsel %vm3464, %v4414, 0.0
        %4530 = vadd.xlane.f32.xlu0 %v4529
        %v4531 = vpop.xlane.xlu0 %4530
        %v4532 = vmul.f32 %v4531, %v1873
        %v4533 = vsub.f32 %v4414, %v4532
        %v4534 = vmul.f32 %v4533, %v4533
        %v4535 = vsel %vm3464, %v4534, 0.0
        %4536 = vadd.xlane.f32.xlu0 %v4535
        %v4537 = vpop.xlane.xlu0 %4536
        %v4538 = vmul.f32 %v4537, %v1873
        %v4539 = vadd.f32 %v4538, 1e-06
        %v4540 = vrsqrt.pop %v4539
        %v4541 = vmul.f32 %v4533, %v4540
        %v4543 = vlaneseq
        %v4544 = vshrl.u32 %v4543, 7
        %v4545 = vsub.s32 0, %v4544
        %v4546 = vrot.slane %v4522, %v4545
        %v4548 = vmul.f32 %v4541, %v4546
        %v4550 = vlaneseq
        %v4551 = vshrl.u32 %v4550, 7
        %v4552 = vsub.s32 0, %v4551
        %v4553 = vrot.slane %v4523, %v4552
        %v4555 = vadd.f32 %v4548, %v4553
        %v4556 = vpack.c.bf16 %v4555, %v4555
        %v4557 = vpack.c.bf16 %v4525, %v4524
        %v4558 = vpack.c.bf16 %v4527, %v4526
        %v4560 = vlaneseq
        %v4561 = vshrl.u32 %v4560, 7
        %v4562 = vsub.s32 0, %v4561
        %v4563 = vrot.slane %v4528, %v4562
        %v4566 = vsel %vm1866, %v4556, 0
        %4568 = vmatprep.subr.bf16.mxu0 0
        %4569 = vmatpush1.bf16.msra.mxu0 0
        %4570 = vmatprep.subr.bf16.mxu0 0
        %4571 = vmatpush1.bf16.msra.mxu0 0
        %4572 = vmatprep.subr.bf16.mxu0 0
        %4573 = vmatpush1.bf16.msra.mxu0 0
        %4574 = vmatprep.subr.bf16.mxu0 0
        %4575 = vmatpush1.bf16.msra.mxu0 0
        %4576 = vmatprep.subr.bf16.mxu0 0
        %4577 = vmatpush1.bf16.msra.mxu0 0
        %4578 = vmatprep.subr.bf16.mxu0 0
        %4579 = vmatpush1.bf16.msra.mxu0 0
        %4580 = vmatprep.subr.bf16.mxu0 0
        %4581 = vmatpush1.bf16.msra.mxu0 %v4558
        %4582 = vmatprep.subr.bf16.mxu0 0
        %4583 = vmatpush1.bf16.msra.mxu0 %v4557
        %4584 = vmatprep.subr.bf16.mxu0 0
        %4585 = vmatpush2.bf16.msra.mxu0 0
        %4586 = vmatprep.subr.bf16.mxu0 0
        %4587 = vmatpush2.bf16.msra.mxu0 0
        %4588 = vmatprep.subr.bf16.mxu0 0
        %4589 = vmatpush2.bf16.msra.mxu0 0
        %4590 = vmatprep.subr.bf16.mxu0 0
        %4591 = vmatpush2.bf16.msra.mxu0 0
        %4592 = vmatprep.subr.bf16.mxu0 0
        %4593 = vmatpush2.bf16.msra.mxu0 0
        %4594 = vmatprep.subr.bf16.mxu0 0
        %4595 = vmatpush2.bf16.msra.mxu0 0
        %4596 = vmatprep.subr.bf16.mxu0 0
        %4597 = vmatpush2.bf16.msra.mxu0 0
        %4598 = vmatprep.subr.bf16.mxu0 0
        %4599 = vmatpush2.bf16.msra.mxu0 0
        %4600 = vmatprep.mubr.bf16.mxu0 0
        %4601 = vmatmul.mubr.bf16.gmra.mxu0 %v4566
        %v4602 = vpop.f32.mrf.mxu0
        %v4603 = vadd.f32 %v4563, %v4602
        %v4604 = vpop.f32.mrf.mxu0
        %v4605 = vpop.f32.mrf.mxu0
        %v4606 = vpop.f32.mrf.mxu0
        %4607 = vdwg.mxu0
        %v4608 = vsel %vm1963, %v4521, 0.0
        %4609 = vadd.xlane.f32.xlu0 %v4608
        %v4610 = vpop.xlane.xlu0 %4609
        %v4611 = vmul.f32 %v4610, %v1873
        %v4612 = vsub.f32 %v4521, %v4611
        %v4613 = vmul.f32 %v4612, %v4612
        %v4614 = vsel %vm1963, %v4613, 0.0
        %4615 = vadd.xlane.f32.xlu0 %v4614
        %v4616 = vpop.xlane.xlu0 %4615
        %v4617 = vmul.f32 %v4616, %v1873
        %v4618 = vadd.f32 %v4617, 1e-06
        %v4619 = vrsqrt.pop %v4618
        %v4620 = vmul.f32 %v4612, %v4619
        %v4621 = vmul.f32 %v4620, %v4522
        %v4622 = vadd.f32 %v4621, %v4523
        %v4623 = vpack.c.bf16 %v4622, %v4622
        %v4625 = vsel %vm1866, %v4623, 0
        %4627 = vmatprep.subr.bf16.mxu0 0
        %4628 = vmatpush1.bf16.msra.mxu0 0
        %4629 = vmatprep.subr.bf16.mxu0 0
        %4630 = vmatpush1.bf16.msra.mxu0 0
        %4631 = vmatprep.subr.bf16.mxu0 0
        %4632 = vmatpush1.bf16.msra.mxu0 0
        %4633 = vmatprep.subr.bf16.mxu0 0
        %4634 = vmatpush1.bf16.msra.mxu0 0
        %4635 = vmatprep.subr.bf16.mxu0 0
        %4636 = vmatpush1.bf16.msra.mxu0 0
        %4637 = vmatprep.subr.bf16.mxu0 0
        %4638 = vmatpush1.bf16.msra.mxu0 0
        %4639 = vmatprep.subr.bf16.mxu0 0
        %4640 = vmatpush1.bf16.msra.mxu0 %v4558
        %4641 = vmatprep.subr.bf16.mxu0 0
        %4642 = vmatpush1.bf16.msra.mxu0 %v4557
        %4643 = vmatprep.subr.bf16.mxu0 0
        %4644 = vmatpush2.bf16.msra.mxu0 0
        %4645 = vmatprep.subr.bf16.mxu0 0
        %4646 = vmatpush2.bf16.msra.mxu0 0
        %4647 = vmatprep.subr.bf16.mxu0 0
        %4648 = vmatpush2.bf16.msra.mxu0 0
        %4649 = vmatprep.subr.bf16.mxu0 0
        %4650 = vmatpush2.bf16.msra.mxu0 0
        %4651 = vmatprep.subr.bf16.mxu0 0
        %4652 = vmatpush2.bf16.msra.mxu0 0
        %4653 = vmatprep.subr.bf16.mxu0 0
        %4654 = vmatpush2.bf16.msra.mxu0 0
        %4655 = vmatprep.subr.bf16.mxu0 0
        %4656 = vmatpush2.bf16.msra.mxu0 0
        %4657 = vmatprep.subr.bf16.mxu0 0
        %4658 = vmatpush2.bf16.msra.mxu0 0
        %4659 = vmatprep.mubr.bf16.mxu0 0
        %4660 = vmatmul.mubr.bf16.gmra.mxu0 %v4625
        %v4661 = vpop.f32.mrf.mxu0
        %v4662 = vadd.f32 %v4528, %v4661
        %v4663 = vpop.f32.mrf.mxu0
        %v4664 = vpop.f32.mrf.mxu0
        %v4665 = vpop.f32.mrf.mxu0
        %4666 = vdwg.mxu0
        %v4667 = vld [vmem:[#allocation2] sm:$0x1]
        %v4668 = vld [vmem:[#allocation5] sm:$0x1]
        %v4669 = vld [vmem:[%s75] sm:$0xff]
        %v4670 = vld [vmem:[%s75 + $0x8] sm:$0xff]
        %v4671 = vld [vmem:[%s75 + $0x10] sm:$0xff]
        %v4672 = vld [vmem:[%s75 + $0x18] sm:$0xff]
        %v4673 = vld [vmem:[%s75 + $0x20] sm:$0xf]
        %v4674 = vld [vmem:[%s77] sm:$0xff]
        %v4675 = vld [vmem:[%s77 + $0x8] sm:$0x1]
        %4677 = vrot.lane.b32.xlu0 %v4603, 96
        %v4678 = vpop.permute.xlu0 %4677
        %vm4679 = vcmask 31744
        %v4681 = vsel %vm4679, %v4669, 0
        %v4684 = vsel %vm4679, %v4670, 0
        %v4687 = vsel %vm4679, %v4671, 0
        %v4690 = vsel %vm4679, %v4672, 0
        %v4693 = vsel %vm4679, %v4673, 0
        %vm4695 = vcmask 1043456
        %v4696 = vsel %vm4695, %v4678, 0
        %4698 = vmatprep.subr.mxu0 0.0
        %4699 = vmatpush1.msra.mxu0 0.0
        %4700 = vmatprep.subr.mxu0 0.0
        %4701 = vmatpush1.msra.mxu0 0.0
        %4702 = vmatprep.subr.mxu0 0.0
        %4703 = vmatpush1.msra.mxu0 0.0
        %4704 = vmatprep.subr.mxu0 0.0
        %4705 = vmatpush1.msra.mxu0 0.0
        %4706 = vmatprep.subr.mxu0 0.0
        %4707 = vmatpush1.msra.mxu0 0.0
        %4708 = vmatprep.subr.mxu0 0.0
        %4709 = vmatpush1.msra.mxu0 0.0
        %4710 = vmatprep.subr.mxu0 0.0
        %4711 = vmatpush1.msra.mxu0 0.0
        %4712 = vmatprep.subr.mxu0 0.0
        %4713 = vmatpush1.msra.mxu0 0.0
        %4714 = vmatprep.subr.mxu0 0.0
        %4715 = vmatpush1.msra.mxu0 0.0
        %4716 = vmatprep.subr.mxu0 0.0
        %4717 = vmatpush1.msra.mxu0 0.0
        %4718 = vmatprep.subr.mxu0 0.0
        %4719 = vmatpush1.msra.mxu0 0.0
        %4720 = vmatprep.subr.mxu0 0.0
        %4721 = vmatpush1.msra.mxu0 0.0
        %4722 = vmatprep.subr.mxu0 0.0
        %4723 = vmatpush1.msra.mxu0 0.0
        %4724 = vmatprep.subr.mxu0 0.0
        %4725 = vmatpush1.msra.mxu0 0.0
        %4726 = vmatprep.subr.mxu0 0.0
        %4727 = vmatpush1.msra.mxu0 0.0
        %4728 = vmatprep.subr.mxu0 0.0
        %4729 = vmatpush1.msra.mxu0 %v4696
        %4730 = vmatprep.subr.mxu0 0.0
        %4731 = vmatpush2.msra.mxu0 0.0
        %4732 = vmatprep.subr.mxu0 0.0
        %4733 = vmatpush2.msra.mxu0 0.0
        %4734 = vmatprep.subr.mxu0 0.0
        %4735 = vmatpush2.msra.mxu0 0.0
        %4736 = vmatprep.subr.mxu0 0.0
        %4737 = vmatpush2.msra.mxu0 0.0
        %4738 = vmatprep.subr.mxu0 0.0
        %4739 = vmatpush2.msra.mxu0 0.0
        %4740 = vmatprep.subr.mxu0 0.0
        %4741 = vmatpush2.msra.mxu0 0.0
        %4742 = vmatprep.subr.mxu0 0.0
        %4743 = vmatpush2.msra.mxu0 0.0
        %4744 = vmatprep.subr.mxu0 0.0
        %4745 = vmatpush2.msra.mxu0 0.0
        %4746 = vmatprep.subr.mxu0 0.0
        %4747 = vmatpush2.msra.mxu0 0.0
        %4748 = vmatprep.subr.mxu0 0.0
        %4749 = vmatpush2.msra.mxu0 0.0
        %4750 = vmatprep.subr.mxu0 0.0
        %4751 = vmatpush2.msra.mxu0 0.0
        %4752 = vmatprep.subr.mxu0 0.0
        %4753 = vmatpush2.msra.mxu0 0.0
        %4754 = vmatprep.subr.mxu0 0.0
        %4755 = vmatpush2.msra.mxu0 0.0
        %4756 = vmatprep.subr.mxu0 0.0
        %4757 = vmatpush2.msra.mxu0 0.0
        %4758 = vmatprep.subr.mxu0 0.0
        %4759 = vmatpush2.msra.mxu0 0.0
        %4760 = vmatprep.subr.mxu0 0.0
        %4761 = vmatpush2.msra.mxu0 0.0
        %4762 = vmatprep.mubr.f32.mxu0 0.0
        %4763 = vmatmul.mubr.f32.gmra.mxu0 %v4681
        %v4764 = vpop.f32.mrf.mxu0
        %v4765 = vadd.f32 0.0, %v4764
        %v4766 = vpop.f32.mrf.mxu0
        %4767 = vmatprep.mubr.f32.mxu0 0.0
        %4768 = vmatmul.mubr.f32.gmra.mxu0 %v4684
        %v4769 = vpop.f32.mrf.mxu0
        %v4770 = vadd.f32 0.0, %v4769
        %v4771 = vpop.f32.mrf.mxu0
        %4772 = vmatprep.mubr.f32.mxu0 0.0
        %4773 = vmatmul.mubr.f32.gmra.mxu0 %v4687
        %v4774 = vpop.f32.mrf.mxu0
        %v4775 = vadd.f32 0.0, %v4774
        %v4776 = vpop.f32.mrf.mxu0
        %4777 = vmatprep.mubr.f32.mxu0 0.0
        %4778 = vmatmul.mubr.f32.gmra.mxu0 %v4690
        %v4779 = vpop.f32.mrf.mxu0
        %v4780 = vadd.f32 0.0, %v4779
        %v4781 = vpop.f32.mrf.mxu0
        %4782 = vmatprep.mubr.f32.mxu0 0.0
        %4783 = vmatmul.mubr.f32.gmra.mxu0 %v4693
        %v4784 = vpop.f32.mrf.mxu0
        %v4785 = vadd.f32 0.0, %v4784
        %v4786 = vpop.f32.mrf.mxu0
        %4787 = vdwg.mxu0
        %v4788 = vlaneseq
        %v4789 = vshrl.u32 %v4788, 7
        %v4790 = vsub.s32 0, %v4789
        %v4791 = vrot.slane %v4674, %v4790
        %v4792 = vmul.f32 %v4765, %v4791
        %v4793 = vlaneseq
        %v4794 = vshrl.u32 %v4793, 7
        %v4795 = vsub.s32 1, %v4794
        %v4796 = vrot.slane %v4674, %v4795
        %v4797 = vmul.f32 %v4765, %v4796
        %v4799 = vrot.slane %v4797, 4
        %v4801 = vadd.f32 %v4792, %v4799
        %v4802 = vlaneseq
        %v4803 = vshrl.u32 %v4802, 7
        %v4804 = vsub.s32 2, %v4803
        %v4805 = vrot.slane %v4674, %v4804
        %v4806 = vmul.f32 %v4770, %v4805
        %v4807 = vadd.f32 %v4801, %v4806
        %v4808 = vlaneseq
        %v4809 = vshrl.u32 %v4808, 7
        %v4810 = vsub.s32 3, %v4809
        %v4811 = vrot.slane %v4674, %v4810
        %v4812 = vmul.f32 %v4770, %v4811
        %v4814 = vrot.slane %v4812, 4
        %v4816 = vadd.f32 %v4807, %v4814
        %v4817 = vlaneseq
        %v4818 = vshrl.u32 %v4817, 7
        %v4819 = vsub.s32 4, %v4818
        %v4820 = vrot.slane %v4674, %v4819
        %v4821 = vmul.f32 %v4775, %v4820
        %v4822 = vadd.f32 %v4816, %v4821
        %v4823 = vlaneseq
        %v4824 = vshrl.u32 %v4823, 7
        %v4825 = vsub.s32 5, %v4824
        %v4826 = vrot.slane %v4674, %v4825
        %v4827 = vmul.f32 %v4775, %v4826
        %v4829 = vrot.slane %v4827, 4
        %v4831 = vadd.f32 %v4822, %v4829
        %v4832 = vlaneseq
        %v4833 = vshrl.u32 %v4832, 7
        %v4834 = vsub.s32 6, %v4833
        %v4835 = vrot.slane %v4674, %v4834
        %v4836 = vmul.f32 %v4780, %v4835
        %v4837 = vadd.f32 %v4831, %v4836
        %v4838 = vlaneseq
        %v4839 = vshrl.u32 %v4838, 7
        %v4840 = vsub.s32 7, %v4839
        %v4841 = vrot.slane %v4674, %v4840
        %v4842 = vmul.f32 %v4780, %v4841
        %v4844 = vrot.slane %v4842, 4
        %v4846 = vadd.f32 %v4837, %v4844
        %v4847 = vlaneseq
        %v4848 = vshrl.u32 %v4847, 7
        %v4849 = vsub.s32 0, %v4848
        %v4850 = vrot.slane %v4675, %v4849
        %v4851 = vmul.f32 %v4785, %v4850
        %v4852 = vadd.f32 %v4846, %v4851
        %v4854 = vsel %vm2840, %v4852, 0
        %4856 = vmatprep.subr.mxu0 0.0
        %4857 = vmatpush1.msra.mxu0 0.0
        %4858 = vmatprep.subr.mxu0 0.0
        %4859 = vmatpush1.msra.mxu0 0.0
        %4860 = vmatprep.subr.mxu0 0.0
        %4861 = vmatpush1.msra.mxu0 0.0
        %4862 = vmatprep.subr.mxu0 0.0
        %4863 = vmatpush1.msra.mxu0 0.0
        %4864 = vmatprep.subr.mxu0 0.0
        %4865 = vmatpush1.msra.mxu0 0.0
        %4866 = vmatprep.subr.mxu0 0.0
        %4867 = vmatpush1.msra.mxu0 0.0
        %4868 = vmatprep.subr.mxu0 0.0
        %4869 = vmatpush1.msra.mxu0 0.0
        %4870 = vmatprep.subr.mxu0 0.0
        %4871 = vmatpush1.msra.mxu0 0.0
        %4872 = vmatprep.subr.mxu0 0.0
        %4873 = vmatpush1.msra.mxu0 %v2034
        %4874 = vmatprep.subr.mxu0 0.0
        %4875 = vmatpush1.msra.mxu0 %v2033
        %4876 = vmatprep.subr.mxu0 0.0
        %4877 = vmatpush1.msra.mxu0 %v2032
        %4878 = vmatprep.subr.mxu0 0.0
        %4879 = vmatpush1.msra.mxu0 %v2031
        %4880 = vmatprep.subr.mxu0 0.0
        %4881 = vmatpush1.msra.mxu0 %v2030
        %4882 = vmatprep.subr.mxu0 0.0
        %4883 = vmatpush1.msra.mxu0 %v2029
        %4884 = vmatprep.subr.mxu0 0.0
        %4885 = vmatpush1.msra.mxu0 %v2028
        %4886 = vmatprep.subr.mxu0 0.0
        %4887 = vmatpush1.msra.mxu0 %v2027
        %4888 = vmatprep.subr.mxu0 0.0
        %4889 = vmatpush2.msra.mxu0 0.0
        %4890 = vmatprep.subr.mxu0 0.0
        %4891 = vmatpush2.msra.mxu0 0.0
        %4892 = vmatprep.subr.mxu0 0.0
        %4893 = vmatpush2.msra.mxu0 0.0
        %4894 = vmatprep.subr.mxu0 0.0
        %4895 = vmatpush2.msra.mxu0 0.0
        %4896 = vmatprep.subr.mxu0 0.0
        %4897 = vmatpush2.msra.mxu0 0.0
        %4898 = vmatprep.subr.mxu0 0.0
        %4899 = vmatpush2.msra.mxu0 0.0
        %4900 = vmatprep.subr.mxu0 0.0
        %4901 = vmatpush2.msra.mxu0 0.0
        %4902 = vmatprep.subr.mxu0 0.0
        %4903 = vmatpush2.msra.mxu0 0.0
        %4904 = vmatprep.subr.mxu0 0.0
        %4905 = vmatpush2.msra.mxu0 0.0
        %4906 = vmatprep.subr.mxu0 0.0
        %4907 = vmatpush2.msra.mxu0 0.0
        %4908 = vmatprep.subr.mxu0 0.0
        %4909 = vmatpush2.msra.mxu0 0.0
        %4910 = vmatprep.subr.mxu0 0.0
        %4911 = vmatpush2.msra.mxu0 0.0
        %4912 = vmatprep.subr.mxu0 0.0
        %4913 = vmatpush2.msra.mxu0 0.0
        %4914 = vmatprep.subr.mxu0 0.0
        %4915 = vmatpush2.msra.mxu0 0.0
        %4916 = vmatprep.subr.mxu0 0.0
        %4917 = vmatpush2.msra.mxu0 0.0
        %4918 = vmatprep.subr.mxu0 0.0
        %4919 = vmatpush2.msra.mxu0 0.0
        %4920 = vmatprep.mubr.f32.mxu0 0.0
        %4921 = vmatmul.mubr.f32.gmra.mxu0 %v4854
        %v4922 = vpop.f32.mrf.mxu0
        %v4923 = vadd.f32 0.0, %v4922
        %v4924 = vpop.f32.mrf.mxu0
        %4925 = vdwg.mxu0
        %v4926 = vsub.f32 %v4852, %v4923
        %v4927 = vmul.f32 %v4926, %v4926
        %v4929 = vsel %vm2840, %v4927, 0
        %4931 = vmatprep.subr.mxu0 0.0
        %4932 = vmatpush1.msra.mxu0 0.0
        %4933 = vmatprep.subr.mxu0 0.0
        %4934 = vmatpush1.msra.mxu0 0.0
        %4935 = vmatprep.subr.mxu0 0.0
        %4936 = vmatpush1.msra.mxu0 0.0
        %4937 = vmatprep.subr.mxu0 0.0
        %4938 = vmatpush1.msra.mxu0 0.0
        %4939 = vmatprep.subr.mxu0 0.0
        %4940 = vmatpush1.msra.mxu0 0.0
        %4941 = vmatprep.subr.mxu0 0.0
        %4942 = vmatpush1.msra.mxu0 0.0
        %4943 = vmatprep.subr.mxu0 0.0
        %4944 = vmatpush1.msra.mxu0 0.0
        %4945 = vmatprep.subr.mxu0 0.0
        %4946 = vmatpush1.msra.mxu0 0.0
        %4947 = vmatprep.subr.mxu0 0.0
        %4948 = vmatpush1.msra.mxu0 %v2034
        %4949 = vmatprep.subr.mxu0 0.0
        %4950 = vmatpush1.msra.mxu0 %v2033
        %4951 = vmatprep.subr.mxu0 0.0
        %4952 = vmatpush1.msra.mxu0 %v2032
        %4953 = vmatprep.subr.mxu0 0.0
        %4954 = vmatpush1.msra.mxu0 %v2031
        %4955 = vmatprep.subr.mxu0 0.0
        %4956 = vmatpush1.msra.mxu0 %v2030
        %4957 = vmatprep.subr.mxu0 0.0
        %4958 = vmatpush1.msra.mxu0 %v2029
        %4959 = vmatprep.subr.mxu0 0.0
        %4960 = vmatpush1.msra.mxu0 %v2028
        %4961 = vmatprep.subr.mxu0 0.0
        %4962 = vmatpush1.msra.mxu0 %v2027
        %4963 = vmatprep.subr.mxu0 0.0
        %4964 = vmatpush2.msra.mxu0 0.0
        %4965 = vmatprep.subr.mxu0 0.0
        %4966 = vmatpush2.msra.mxu0 0.0
        %4967 = vmatprep.subr.mxu0 0.0
        %4968 = vmatpush2.msra.mxu0 0.0
        %4969 = vmatprep.subr.mxu0 0.0
        %4970 = vmatpush2.msra.mxu0 0.0
        %4971 = vmatprep.subr.mxu0 0.0
        %4972 = vmatpush2.msra.mxu0 0.0
        %4973 = vmatprep.subr.mxu0 0.0
        %4974 = vmatpush2.msra.mxu0 0.0
        %4975 = vmatprep.subr.mxu0 0.0
        %4976 = vmatpush2.msra.mxu0 0.0
        %4977 = vmatprep.subr.mxu0 0.0
        %4978 = vmatpush2.msra.mxu0 0.0
        %4979 = vmatprep.subr.mxu0 0.0
        %4980 = vmatpush2.msra.mxu0 0.0
        %4981 = vmatprep.subr.mxu0 0.0
        %4982 = vmatpush2.msra.mxu0 0.0
        %4983 = vmatprep.subr.mxu0 0.0
        %4984 = vmatpush2.msra.mxu0 0.0
        %4985 = vmatprep.subr.mxu0 0.0
        %4986 = vmatpush2.msra.mxu0 0.0
        %4987 = vmatprep.subr.mxu0 0.0
        %4988 = vmatpush2.msra.mxu0 0.0
        %4989 = vmatprep.subr.mxu0 0.0
        %4990 = vmatpush2.msra.mxu0 0.0
        %4991 = vmatprep.subr.mxu0 0.0
        %4992 = vmatpush2.msra.mxu0 0.0
        %4993 = vmatprep.subr.mxu0 0.0
        %4994 = vmatpush2.msra.mxu0 0.0
        %4995 = vmatprep.mubr.f32.mxu0 0.0
        %4996 = vmatmul.mubr.f32.gmra.mxu0 %v4929
        %v4997 = vpop.f32.mrf.mxu0
        %v4998 = vadd.f32 1e-05, %v4997
        %v4999 = vpop.f32.mrf.mxu0
        %5000 = vdwg.mxu0
        %v5001 = vrsqrt.pop %v4998
        %v5002 = vmul.f32 %v4926, %v5001
        %v5004 = vlaneseq
        %v5005 = vshrl.u32 %v5004, 7
        %v5006 = vsub.s32 0, %v5005
        %v5007 = vrot.slane %v4667, %v5006
        %v5009 = vmul.f32 %v5002, %v5007
        %v5011 = vlaneseq
        %v5012 = vshrl.u32 %v5011, 7
        %v5013 = vsub.s32 0, %v5012
        %v5014 = vrot.slane %v4668, %v5013
        %v5016 = vadd.f32 %v5009, %v5014
        %5018 = vrot.lane.b32.xlu0 %v4662, 96
        %v5019 = vpop.permute.xlu0 %5018
        %v5020 = vsel %vm2840, %v5019, 0
        %5022 = vmatprep.subr.mxu0 0.0
        %5023 = vmatpush1.msra.mxu0 0.0
        %5024 = vmatprep.subr.mxu0 0.0
        %5025 = vmatpush1.msra.mxu0 0.0
        %5026 = vmatprep.subr.mxu0 0.0
        %5027 = vmatpush1.msra.mxu0 0.0
        %5028 = vmatprep.subr.mxu0 0.0
        %5029 = vmatpush1.msra.mxu0 0.0
        %5030 = vmatprep.subr.mxu0 0.0
        %5031 = vmatpush1.msra.mxu0 0.0
        %5032 = vmatprep.subr.mxu0 0.0
        %5033 = vmatpush1.msra.mxu0 0.0
        %5034 = vmatprep.subr.mxu0 0.0
        %5035 = vmatpush1.msra.mxu0 0.0
        %5036 = vmatprep.subr.mxu0 0.0
        %5037 = vmatpush1.msra.mxu0 0.0
        %5038 = vmatprep.subr.mxu0 0.0
        %5039 = vmatpush1.msra.mxu0 %v2034
        %5040 = vmatprep.subr.mxu0 0.0
        %5041 = vmatpush1.msra.mxu0 %v2033
        %5042 = vmatprep.subr.mxu0 0.0
        %5043 = vmatpush1.msra.mxu0 %v2032
        %5044 = vmatprep.subr.mxu0 0.0
        %5045 = vmatpush1.msra.mxu0 %v2031
        %5046 = vmatprep.subr.mxu0 0.0
        %5047 = vmatpush1.msra.mxu0 %v2030
        %5048 = vmatprep.subr.mxu0 0.0
        %5049 = vmatpush1.msra.mxu0 %v2029
        %5050 = vmatprep.subr.mxu0 0.0
        %5051 = vmatpush1.msra.mxu0 %v2028
        %5052 = vmatprep.subr.mxu0 0.0
        %5053 = vmatpush1.msra.mxu0 %v2027
        %5054 = vmatprep.subr.mxu0 0.0
        %5055 = vmatpush2.msra.mxu0 0.0
        %5056 = vmatprep.subr.mxu0 0.0
        %5057 = vmatpush2.msra.mxu0 0.0
        %5058 = vmatprep.subr.mxu0 0.0
        %5059 = vmatpush2.msra.mxu0 0.0
        %5060 = vmatprep.subr.mxu0 0.0
        %5061 = vmatpush2.msra.mxu0 0.0
        %5062 = vmatprep.subr.mxu0 0.0
        %5063 = vmatpush2.msra.mxu0 0.0
        %5064 = vmatprep.subr.mxu0 0.0
        %5065 = vmatpush2.msra.mxu0 0.0
        %5066 = vmatprep.subr.mxu0 0.0
        %5067 = vmatpush2.msra.mxu0 0.0
        %5068 = vmatprep.subr.mxu0 0.0
        %5069 = vmatpush2.msra.mxu0 0.0
        %5070 = vmatprep.subr.mxu0 0.0
        %5071 = vmatpush2.msra.mxu0 0.0
        %5072 = vmatprep.subr.mxu0 0.0
        %5073 = vmatpush2.msra.mxu0 0.0
        %5074 = vmatprep.subr.mxu0 0.0
        %5075 = vmatpush2.msra.mxu0 0.0
        %5076 = vmatprep.subr.mxu0 0.0
        %5077 = vmatpush2.msra.mxu0 0.0
        %5078 = vmatprep.subr.mxu0 0.0
        %5079 = vmatpush2.msra.mxu0 0.0
        %5080 = vmatprep.subr.mxu0 0.0
        %5081 = vmatpush2.msra.mxu0 0.0
        %5082 = vmatprep.subr.mxu0 0.0
        %5083 = vmatpush2.msra.mxu0 0.0
        %5084 = vmatprep.subr.mxu0 0.0
        %5085 = vmatpush2.msra.mxu0 0.0
        %5086 = vmatprep.mubr.f32.mxu0 0.0
        %5087 = vmatmul.mubr.f32.gmra.mxu0 %v5020
        %v5088 = vpop.f32.mrf.mxu0
        %v5089 = vadd.f32 0.0, %v5088
        %v5090 = vpop.f32.mrf.mxu0
        %5091 = vdwg.mxu0
        %5093 = vrot.lane.b32.xlu0 %v5089, 32
        %v5094 = vpop.permute.xlu0 %5093
        %v5096 = vsub.f32 %v4662, %v5094
        %v5097 = vmul.f32 %v5096, %v5096
        %5099 = vrot.lane.b32.xlu0 %v5097, 96
        %v5100 = vpop.permute.xlu0 %5099
        %v5101 = vsel %vm2840, %v5100, 0
        %5103 = vmatprep.subr.mxu0 0.0
        %5104 = vmatpush1.msra.mxu0 0.0
        %5105 = vmatprep.subr.mxu0 0.0
        %5106 = vmatpush1.msra.mxu0 0.0
        %5107 = vmatprep.subr.mxu0 0.0
        %5108 = vmatpush1.msra.mxu0 0.0
        %5109 = vmatprep.subr.mxu0 0.0
        %5110 = vmatpush1.msra.mxu0 0.0
        %5111 = vmatprep.subr.mxu0 0.0
        %5112 = vmatpush1.msra.mxu0 0.0
        %5113 = vmatprep.subr.mxu0 0.0
        %5114 = vmatpush1.msra.mxu0 0.0
        %5115 = vmatprep.subr.mxu0 0.0
        %5116 = vmatpush1.msra.mxu0 0.0
        %5117 = vmatprep.subr.mxu0 0.0
        %5118 = vmatpush1.msra.mxu0 0.0
        %5119 = vmatprep.subr.mxu0 0.0
        %5120 = vmatpush1.msra.mxu0 %v2034
        %5121 = vmatprep.subr.mxu0 0.0
        %5122 = vmatpush1.msra.mxu0 %v2033
        %5123 = vmatprep.subr.mxu0 0.0
        %5124 = vmatpush1.msra.mxu0 %v2032
        %5125 = vmatprep.subr.mxu0 0.0
        %5126 = vmatpush1.msra.mxu0 %v2031
        %5127 = vmatprep.subr.mxu0 0.0
        %5128 = vmatpush1.msra.mxu0 %v2030
        %5129 = vmatprep.subr.mxu0 0.0
        %5130 = vmatpush1.msra.mxu0 %v2029
        %5131 = vmatprep.subr.mxu0 0.0
        %5132 = vmatpush1.msra.mxu0 %v2028
        %5133 = vmatprep.subr.mxu0 0.0
        %5134 = vmatpush1.msra.mxu0 %v2027
        %5135 = vmatprep.subr.mxu0 0.0
        %5136 = vmatpush2.msra.mxu0 0.0
        %5137 = vmatprep.subr.mxu0 0.0
        %5138 = vmatpush2.msra.mxu0 0.0
        %5139 = vmatprep.subr.mxu0 0.0
        %5140 = vmatpush2.msra.mxu0 0.0
        %5141 = vmatprep.subr.mxu0 0.0
        %5142 = vmatpush2.msra.mxu0 0.0
        %5143 = vmatprep.subr.mxu0 0.0
        %5144 = vmatpush2.msra.mxu0 0.0
        %5145 = vmatprep.subr.mxu0 0.0
        %5146 = vmatpush2.msra.mxu0 0.0
        %5147 = vmatprep.subr.mxu0 0.0
        %5148 = vmatpush2.msra.mxu0 0.0
        %5149 = vmatprep.subr.mxu0 0.0
        %5150 = vmatpush2.msra.mxu0 0.0
        %5151 = vmatprep.subr.mxu0 0.0
        %5152 = vmatpush2.msra.mxu0 0.0
        %5153 = vmatprep.subr.mxu0 0.0
        %5154 = vmatpush2.msra.mxu0 0.0
        %5155 = vmatprep.subr.mxu0 0.0
        %5156 = vmatpush2.msra.mxu0 0.0
        %5157 = vmatprep.subr.mxu0 0.0
        %5158 = vmatpush2.msra.mxu0 0.0
        %5159 = vmatprep.subr.mxu0 0.0
        %5160 = vmatpush2.msra.mxu0 0.0
        %5161 = vmatprep.subr.mxu0 0.0
        %5162 = vmatpush2.msra.mxu0 0.0
        %5163 = vmatprep.subr.mxu0 0.0
        %5164 = vmatpush2.msra.mxu0 0.0
        %5165 = vmatprep.subr.mxu0 0.0
        %5166 = vmatpush2.msra.mxu0 0.0
        %5167 = vmatprep.mubr.f32.mxu0 0.0
        %5168 = vmatmul.mubr.f32.gmra.mxu0 %v5101
        %v5169 = vpop.f32.mrf.mxu0
        %v5170 = vadd.f32 1e-05, %v5169
        %v5171 = vpop.f32.mrf.mxu0
        %5172 = vdwg.mxu0
        %v5173 = vrsqrt.pop %v5170
        %5175 = vrot.lane.b32.xlu0 %v5173, 32
        %v5176 = vpop.permute.xlu0 %5175
        %v5178 = vmul.f32 %v5096, %v5176
        %5179 = vrot.lane.b32.xlu0 %v5007, 32
        %v5180 = vpop.permute.xlu0 %5179
        %v5182 = vmul.f32 %v5178, %v5180
        %5183 = vrot.lane.b32.xlu0 %v5014, 32
        %v5184 = vpop.permute.xlu0 %5183
        %v5186 = vadd.f32 %v5182, %v5184
        %v5187 = vld [vmem:[%s83] sm:$0xff]
        %v5188 = vld [vmem:[%s83 + $0x8] sm:$0xff]
        %v5189 = vld [vmem:[%s83 + $0x10] sm:$0xff]
        %v5190 = vld [vmem:[%s83 + $0x18] sm:$0xff]
        %v5191 = vld [vmem:[#allocation7] sm:$0x1]
        %v5192 = vmul.f32 %v5016, %v3367
        %v5193 = vsel %vm1866, %v4662, 0
        %v5196 = vsel %vm1866, %v5192, 0
        %5198 = vmatprep.subr.mxu0 0.0
        %5199 = vmatpush1.xpose.msra.mxu0 0.0
        %5200 = vmatprep.subr.mxu0 0.0
        %5201 = vmatpush1.xpose.msra.mxu0 0.0
        %5202 = vmatprep.subr.mxu0 0.0
        %5203 = vmatpush1.xpose.msra.mxu0 0.0
        %5204 = vmatprep.subr.mxu0 0.0
        %5205 = vmatpush1.xpose.msra.mxu0 0.0
        %5206 = vmatprep.subr.mxu0 0.0
        %5207 = vmatpush1.xpose.msra.mxu0 0.0
        %5208 = vmatprep.subr.mxu0 0.0
        %5209 = vmatpush1.xpose.msra.mxu0 0.0
        %5210 = vmatprep.subr.mxu0 0.0
        %5211 = vmatpush1.xpose.msra.mxu0 0.0
        %5212 = vmatprep.subr.mxu0 0.0
        %5213 = vmatpush1.xpose.msra.mxu0 0.0
        %5214 = vmatprep.subr.mxu0 0.0
        %5215 = vmatpush1.xpose.msra.mxu0 0.0
        %5216 = vmatprep.subr.mxu0 0.0
        %5217 = vmatpush1.xpose.msra.mxu0 0.0
        %5218 = vmatprep.subr.mxu0 0.0
        %5219 = vmatpush1.xpose.msra.mxu0 0.0
        %5220 = vmatprep.subr.mxu0 0.0
        %5221 = vmatpush1.xpose.msra.mxu0 0.0
        %5222 = vmatprep.subr.mxu0 0.0
        %5223 = vmatpush1.xpose.msra.mxu0 0.0
        %5224 = vmatprep.subr.mxu0 0.0
        %5225 = vmatpush1.xpose.msra.mxu0 0.0
        %5226 = vmatprep.subr.mxu0 0.0
        %5227 = vmatpush1.xpose.msra.mxu0 0.0
        %5228 = vmatprep.subr.mxu0 0.0
        %5229 = vmatpush1.xpose.msra.mxu0 %v5196
        %5230 = vmatprep.subr.mxu0 0.0
        %5231 = vmatpush2.xpose.msra.mxu0 0.0
        %5232 = vmatprep.subr.mxu0 0.0
        %5233 = vmatpush2.xpose.msra.mxu0 0.0
        %5234 = vmatprep.subr.mxu0 0.0
        %5235 = vmatpush2.xpose.msra.mxu0 0.0
        %5236 = vmatprep.subr.mxu0 0.0
        %5237 = vmatpush2.xpose.msra.mxu0 0.0
        %5238 = vmatprep.subr.mxu0 0.0
        %5239 = vmatpush2.xpose.msra.mxu0 0.0
        %5240 = vmatprep.subr.mxu0 0.0
        %5241 = vmatpush2.xpose.msra.mxu0 0.0
        %5242 = vmatprep.subr.mxu0 0.0
        %5243 = vmatpush2.xpose.msra.mxu0 0.0
        %5244 = vmatprep.subr.mxu0 0.0
        %5245 = vmatpush2.xpose.msra.mxu0 0.0
        %5246 = vmatprep.subr.mxu0 0.0
        %5247 = vmatpush2.xpose.msra.mxu0 0.0
        %5248 = vmatprep.subr.mxu0 0.0
        %5249 = vmatpush2.xpose.msra.mxu0 0.0
        %5250 = vmatprep.subr.mxu0 0.0
        %5251 = vmatpush2.xpose.msra.mxu0 0.0
        %5252 = vmatprep.subr.mxu0 0.0
        %5253 = vmatpush2.xpose.msra.mxu0 0.0
        %5254 = vmatprep.subr.mxu0 0.0
        %5255 = vmatpush2.xpose.msra.mxu0 0.0
        %5256 = vmatprep.subr.mxu0 0.0
        %5257 = vmatpush2.xpose.msra.mxu0 0.0
        %5258 = vmatprep.subr.mxu0 0.0
        %5259 = vmatpush2.xpose.msra.mxu0 0.0
        %5260 = vmatprep.subr.mxu0 0.0
        %5261 = vmatpush2.xpose.msra.mxu0 0.0
        %5262 = vmatprep.mubr.f32.mxu0 0.0
        %5263 = vmatmul.mubr.f32.gmra.mxu0 %v5193
        %v5264 = vpop.f32.mrf.mxu0
        %v5265 = vadd.f32 0.0, %v5264
        %v5266 = vpop.f32.mrf.mxu0
        %5267 = vdwg.mxu0
        %v5268 = vmul.f32 %v5265, 0.25
        %v5269 = vmul.f32 %v5186, %v3452
        %5271 = vrot.lane.b32.xlu0 %v5269, 96
        %v5272 = vpop.permute.xlu0 %5271
        %v5274 = vmul.f32 %v4662, %v5272
        %v5275 = vsel %vm1963, %v5274, 0.0
        %5276 = vadd.xlane.f32.xlu0 %v5275
        %v5277 = vpop.xlane.xlu0 %5276
        %v5278 = vmul.f32 %v5277, 0.25
        %vm5279 = vcmask 24576
        %v5280 = vsel %vm5279, %v5268, -inf
        %5281 = vmax.xlane.f32.xlu0 %v5280
        %v5282 = vpop.xlane.xlu0 %5281
        %v5283 = vmax.f32 %v5282, %v5278
        %v5284 = vsub.f32 %v5268, %v5283
        %v5285 = vmul.f32 %v5284, 1.442695
        %v5286 = vpow.pop %v5285
        %v5287 = vsub.f32 %v5278, %v5283
        %v5288 = vmul.f32 %v5287, 1.442695
        %v5289 = vpow.pop %v5288
        %v5290 = vsel %vm5279, %v5286, 0.0
        %5291 = vadd.xlane.f32.xlu0 %v5290
        %v5292 = vpop.xlane.xlu0 %5291
        %v5293 = vadd.f32 %v5292, %v5289
        %v5294 = vrcp.pop %v5293
        %v5295 = vmul.f32 %v5016, %v3452
        %v5296 = vmul.f32 %v5186, %v3488
        %v5297 = vmul.f32 %v5289, %v5296
        %5299 = vrot.lane.b32.xlu0 %v5295, 96
        %v5300 = vpop.permute.xlu0 %5299
        %5302 = vrot.lane.b32.xlu0 %v5297, 64
        %v5303 = vpop.permute.xlu0 %5302
        %v5306 = vsel %vm4679, %v5286, 0
        %v5308 = vsel %vm4695, %v5300, 0
        %5310 = vmatprep.subr.mxu0 0.0
        %5311 = vmatpush1.msra.mxu0 0.0
        %5312 = vmatprep.subr.mxu0 0.0
        %5313 = vmatpush1.msra.mxu0 0.0
        %5314 = vmatprep.subr.mxu0 0.0
        %5315 = vmatpush1.msra.mxu0 0.0
        %5316 = vmatprep.subr.mxu0 0.0
        %5317 = vmatpush1.msra.mxu0 0.0
        %5318 = vmatprep.subr.mxu0 0.0
        %5319 = vmatpush1.msra.mxu0 0.0
        %5320 = vmatprep.subr.mxu0 0.0
        %5321 = vmatpush1.msra.mxu0 0.0
        %5322 = vmatprep.subr.mxu0 0.0
        %5323 = vmatpush1.msra.mxu0 0.0
        %5324 = vmatprep.subr.mxu0 0.0
        %5325 = vmatpush1.msra.mxu0 0.0
        %5326 = vmatprep.subr.mxu0 0.0
        %5327 = vmatpush1.msra.mxu0 0.0
        %5328 = vmatprep.subr.mxu0 0.0
        %5329 = vmatpush1.msra.mxu0 0.0
        %5330 = vmatprep.subr.mxu0 0.0
        %5331 = vmatpush1.msra.mxu0 0.0
        %5332 = vmatprep.subr.mxu0 0.0
        %5333 = vmatpush1.msra.mxu0 0.0
        %5334 = vmatprep.subr.mxu0 0.0
        %5335 = vmatpush1.msra.mxu0 0.0
        %5336 = vmatprep.subr.mxu0 0.0
        %5337 = vmatpush1.msra.mxu0 0.0
        %5338 = vmatprep.subr.mxu0 0.0
        %5339 = vmatpush1.msra.mxu0 0.0
        %5340 = vmatprep.subr.mxu0 0.0
        %5341 = vmatpush1.msra.mxu0 %v5308
        %5342 = vmatprep.subr.mxu0 0.0
        %5343 = vmatpush2.msra.mxu0 0.0
        %5344 = vmatprep.subr.mxu0 0.0
        %5345 = vmatpush2.msra.mxu0 0.0
        %5346 = vmatprep.subr.mxu0 0.0
        %5347 = vmatpush2.msra.mxu0 0.0
        %5348 = vmatprep.subr.mxu0 0.0
        %5349 = vmatpush2.msra.mxu0 0.0
        %5350 = vmatprep.subr.mxu0 0.0
        %5351 = vmatpush2.msra.mxu0 0.0
        %5352 = vmatprep.subr.mxu0 0.0
        %5353 = vmatpush2.msra.mxu0 0.0
        %5354 = vmatprep.subr.mxu0 0.0
        %5355 = vmatpush2.msra.mxu0 0.0
        %5356 = vmatprep.subr.mxu0 0.0
        %5357 = vmatpush2.msra.mxu0 0.0
        %5358 = vmatprep.subr.mxu0 0.0
        %5359 = vmatpush2.msra.mxu0 0.0
        %5360 = vmatprep.subr.mxu0 0.0
        %5361 = vmatpush2.msra.mxu0 0.0
        %5362 = vmatprep.subr.mxu0 0.0
        %5363 = vmatpush2.msra.mxu0 0.0
        %5364 = vmatprep.subr.mxu0 0.0
        %5365 = vmatpush2.msra.mxu0 0.0
        %5366 = vmatprep.subr.mxu0 0.0
        %5367 = vmatpush2.msra.mxu0 0.0
        %5368 = vmatprep.subr.mxu0 0.0
        %5369 = vmatpush2.msra.mxu0 0.0
        %5370 = vmatprep.subr.mxu0 0.0
        %5371 = vmatpush2.msra.mxu0 0.0
        %5372 = vmatprep.subr.mxu0 0.0
        %5373 = vmatpush2.msra.mxu0 0.0
        %5374 = vmatprep.mubr.f32.mxu0 0.0
        %5375 = vmatmul.mubr.f32.gmra.mxu0 %v5306
        %v5376 = vpop.f32.mrf.mxu0
        %v5377 = vadd.f32 %v5303, %v5376
        %v5378 = vpop.f32.mrf.mxu0
        %5379 = vdwg.mxu0
        %v5380 = vmul.f32 %v5377, %v5294
        %v5381 = vadd.f32 %v5380, 0.0
        %v5382 = vmul.f32 %v5016, %v3587
        %v5384 = vsel %vm1866, %v5382, 0
        %5386 = vmatprep.subr.mxu0 0.0
        %5387 = vmatpush1.xpose.msra.mxu0 0.0
        %5388 = vmatprep.subr.mxu0 0.0
        %5389 = vmatpush1.xpose.msra.mxu0 0.0
        %5390 = vmatprep.subr.mxu0 0.0
        %5391 = vmatpush1.xpose.msra.mxu0 0.0
        %5392 = vmatprep.subr.mxu0 0.0
        %5393 = vmatpush1.xpose.msra.mxu0 0.0
        %5394 = vmatprep.subr.mxu0 0.0
        %5395 = vmatpush1.xpose.msra.mxu0 0.0
        %5396 = vmatprep.subr.mxu0 0.0
        %5397 = vmatpush1.xpose.msra.mxu0 0.0
        %5398 = vmatprep.subr.mxu0 0.0
        %5399 = vmatpush1.xpose.msra.mxu0 0.0
        %5400 = vmatprep.subr.mxu0 0.0
        %5401 = vmatpush1.xpose.msra.mxu0 0.0
        %5402 = vmatprep.subr.mxu0 0.0
        %5403 = vmatpush1.xpose.msra.mxu0 0.0
        %5404 = vmatprep.subr.mxu0 0.0
        %5405 = vmatpush1.xpose.msra.mxu0 0.0
        %5406 = vmatprep.subr.mxu0 0.0
        %5407 = vmatpush1.xpose.msra.mxu0 0.0
        %5408 = vmatprep.subr.mxu0 0.0
        %5409 = vmatpush1.xpose.msra.mxu0 0.0
        %5410 = vmatprep.subr.mxu0 0.0
        %5411 = vmatpush1.xpose.msra.mxu0 0.0
        %5412 = vmatprep.subr.mxu0 0.0
        %5413 = vmatpush1.xpose.msra.mxu0 0.0
        %5414 = vmatprep.subr.mxu0 0.0
        %5415 = vmatpush1.xpose.msra.mxu0 0.0
        %5416 = vmatprep.subr.mxu0 0.0
        %5417 = vmatpush1.xpose.msra.mxu0 %v5384
        %5418 = vmatprep.subr.mxu0 0.0
        %5419 = vmatpush2.xpose.msra.mxu0 0.0
        %5420 = vmatprep.subr.mxu0 0.0
        %5421 = vmatpush2.xpose.msra.mxu0 0.0
        %5422 = vmatprep.subr.mxu0 0.0
        %5423 = vmatpush2.xpose.msra.mxu0 0.0
        %5424 = vmatprep.subr.mxu0 0.0
        %5425 = vmatpush2.xpose.msra.mxu0 0.0
        %5426 = vmatprep.subr.mxu0 0.0
        %5427 = vmatpush2.xpose.msra.mxu0 0.0
        %5428 = vmatprep.subr.mxu0 0.0
        %5429 = vmatpush2.xpose.msra.mxu0 0.0
        %5430 = vmatprep.subr.mxu0 0.0
        %5431 = vmatpush2.xpose.msra.mxu0 0.0
        %5432 = vmatprep.subr.mxu0 0.0
        %5433 = vmatpush2.xpose.msra.mxu0 0.0
        %5434 = vmatprep.subr.mxu0 0.0
        %5435 = vmatpush2.xpose.msra.mxu0 0.0
        %5436 = vmatprep.subr.mxu0 0.0
        %5437 = vmatpush2.xpose.msra.mxu0 0.0
        %5438 = vmatprep.subr.mxu0 0.0
        %5439 = vmatpush2.xpose.msra.mxu0 0.0
        %5440 = vmatprep.subr.mxu0 0.0
        %5441 = vmatpush2.xpose.msra.mxu0 0.0
        %5442 = vmatprep.subr.mxu0 0.0
        %5443 = vmatpush2.xpose.msra.mxu0 0.0
        %5444 = vmatprep.subr.mxu0 0.0
        %5445 = vmatpush2.xpose.msra.mxu0 0.0
        %5446 = vmatprep.subr.mxu0 0.0
        %5447 = vmatpush2.xpose.msra.mxu0 0.0
        %5448 = vmatprep.subr.mxu0 0.0
        %5449 = vmatpush2.xpose.msra.mxu0 0.0
        %5450 = vmatprep.mubr.f32.mxu0 0.0
        %5451 = vmatmul.mubr.f32.gmra.mxu0 %v5193
        %v5452 = vpop.f32.mrf.mxu0
        %v5453 = vadd.f32 0.0, %v5452
        %v5454 = vpop.f32.mrf.mxu0
        %5455 = vdwg.mxu0
        %v5456 = vmul.f32 %v5453, 0.25
        %v5457 = vmul.f32 %v5186, %v3669
        %5459 = vrot.lane.b32.xlu0 %v5457, 96
        %v5460 = vpop.permute.xlu0 %5459
        %v5462 = vmul.f32 %v4662, %v5460
        %v5463 = vsel %vm1963, %v5462, 0.0
        %5464 = vadd.xlane.f32.xlu0 %v5463
        %v5465 = vpop.xlane.xlu0 %5464
        %v5466 = vmul.f32 %v5465, 0.25
        %v5467 = vsel %vm5279, %v5456, -inf
        %5468 = vmax.xlane.f32.xlu0 %v5467
        %v5469 = vpop.xlane.xlu0 %5468
        %v5470 = vmax.f32 %v5469, %v5466
        %v5471 = vsub.f32 %v5456, %v5470
        %v5472 = vmul.f32 %v5471, 1.442695
        %v5473 = vpow.pop %v5472
        %v5474 = vsub.f32 %v5466, %v5470
        %v5475 = vmul.f32 %v5474, 1.442695
        %v5476 = vpow.pop %v5475
        %v5477 = vsel %vm5279, %v5473, 0.0
        %5478 = vadd.xlane.f32.xlu0 %v5477
        %v5479 = vpop.xlane.xlu0 %5478
        %v5480 = vadd.f32 %v5479, %v5476
        %v5481 = vrcp.pop %v5480
        %v5482 = vmul.f32 %v5016, %v3669
        %v5483 = vmul.f32 %v5186, %v3703
        %v5484 = vmul.f32 %v5476, %v5483
        %5486 = vrot.lane.b32.xlu0 %v5482, 96
        %v5487 = vpop.permute.xlu0 %5486
        %5489 = vrot.lane.b32.xlu0 %v5484, 64
        %v5490 = vpop.permute.xlu0 %5489
        %v5493 = vsel %vm4679, %v5473, 0
        %v5495 = vsel %vm4695, %v5487, 0
        %5497 = vmatprep.subr.mxu0 0.0
        %5498 = vmatpush1.msra.mxu0 0.0
        %5499 = vmatprep.subr.mxu0 0.0
        %5500 = vmatpush1.msra.mxu0 0.0
        %5501 = vmatprep.subr.mxu0 0.0
        %5502 = vmatpush1.msra.mxu0 0.0
        %5503 = vmatprep.subr.mxu0 0.0
        %5504 = vmatpush1.msra.mxu0 0.0
        %5505 = vmatprep.subr.mxu0 0.0
        %5506 = vmatpush1.msra.mxu0 0.0
        %5507 = vmatprep.subr.mxu0 0.0
        %5508 = vmatpush1.msra.mxu0 0.0
        %5509 = vmatprep.subr.mxu0 0.0
        %5510 = vmatpush1.msra.mxu0 0.0
        %5511 = vmatprep.subr.mxu0 0.0
        %5512 = vmatpush1.msra.mxu0 0.0
        %5513 = vmatprep.subr.mxu0 0.0
        %5514 = vmatpush1.msra.mxu0 0.0
        %5515 = vmatprep.subr.mxu0 0.0
        %5516 = vmatpush1.msra.mxu0 0.0
        %5517 = vmatprep.subr.mxu0 0.0
        %5518 = vmatpush1.msra.mxu0 0.0
        %5519 = vmatprep.subr.mxu0 0.0
        %5520 = vmatpush1.msra.mxu0 0.0
        %5521 = vmatprep.subr.mxu0 0.0
        %5522 = vmatpush1.msra.mxu0 0.0
        %5523 = vmatprep.subr.mxu0 0.0
        %5524 = vmatpush1.msra.mxu0 0.0
        %5525 = vmatprep.subr.mxu0 0.0
        %5526 = vmatpush1.msra.mxu0 0.0
        %5527 = vmatprep.subr.mxu0 0.0
        %5528 = vmatpush1.msra.mxu0 %v5495
        %5529 = vmatprep.subr.mxu0 0.0
        %5530 = vmatpush2.msra.mxu0 0.0
        %5531 = vmatprep.subr.mxu0 0.0
        %5532 = vmatpush2.msra.mxu0 0.0
        %5533 = vmatprep.subr.mxu0 0.0
        %5534 = vmatpush2.msra.mxu0 0.0
        %5535 = vmatprep.subr.mxu0 0.0
        %5536 = vmatpush2.msra.mxu0 0.0
        %5537 = vmatprep.subr.mxu0 0.0
        %5538 = vmatpush2.msra.mxu0 0.0
        %5539 = vmatprep.subr.mxu0 0.0
        %5540 = vmatpush2.msra.mxu0 0.0
        %5541 = vmatprep.subr.mxu0 0.0
        %5542 = vmatpush2.msra.mxu0 0.0
        %5543 = vmatprep.subr.mxu0 0.0
        %5544 = vmatpush2.msra.mxu0 0.0
        %5545 = vmatprep.subr.mxu0 0.0
        %5546 = vmatpush2.msra.mxu0 0.0
        %5547 = vmatprep.subr.mxu0 0.0
        %5548 = vmatpush2.msra.mxu0 0.0
        %5549 = vmatprep.subr.mxu0 0.0
        %5550 = vmatpush2.msra.mxu0 0.0
        %5551 = vmatprep.subr.mxu0 0.0
        %5552 = vmatpush2.msra.mxu0 0.0
        %5553 = vmatprep.subr.mxu0 0.0
        %5554 = vmatpush2.msra.mxu0 0.0
        %5555 = vmatprep.subr.mxu0 0.0
        %5556 = vmatpush2.msra.mxu0 0.0
        %5557 = vmatprep.subr.mxu0 0.0
        %5558 = vmatpush2.msra.mxu0 0.0
        %5559 = vmatprep.subr.mxu0 0.0
        %5560 = vmatpush2.msra.mxu0 0.0
        %5561 = vmatprep.mubr.f32.mxu0 0.0
        %5562 = vmatmul.mubr.f32.gmra.mxu0 %v5493
        %v5563 = vpop.f32.mrf.mxu0
        %v5564 = vadd.f32 %v5490, %v5563
        %v5565 = vpop.f32.mrf.mxu0
        %5566 = vdwg.mxu0
        %v5567 = vmul.f32 %v5564, %v5481
        %v5568 = vadd.f32 %v5381, %v5567
        %v5569 = vpack.c.bf16 %v5568, %v5568
        %v5570 = vpack.c.bf16 %v5188, %v5187
        %v5571 = vpack.c.bf16 %v5190, %v5189
        %v5573 = vsel %vm1866, %v5569, 0
        %5575 = vmatprep.subr.bf16.mxu0 0
        %5576 = vmatpush1.bf16.msra.mxu0 0
        %5577 = vmatprep.subr.bf16.mxu0 0
        %5578 = vmatpush1.bf16.msra.mxu0 0
        %5579 = vmatprep.subr.bf16.mxu0 0
        %5580 = vmatpush1.bf16.msra.mxu0 0
        %5581 = vmatprep.subr.bf16.mxu0 0
        %5582 = vmatpush1.bf16.msra.mxu0 0
        %5583 = vmatprep.subr.bf16.mxu0 0
        %5584 = vmatpush1.bf16.msra.mxu0 0
        %5585 = vmatprep.subr.bf16.mxu0 0
        %5586 = vmatpush1.bf16.msra.mxu0 0
        %5587 = vmatprep.subr.bf16.mxu0 0
        %5588 = vmatpush1.bf16.msra.mxu0 %v5571
        %5589 = vmatprep.subr.bf16.mxu0 0
        %5590 = vmatpush1.bf16.msra.mxu0 %v5570
        %5591 = vmatprep.subr.bf16.mxu0 0
        %5592 = vmatpush2.bf16.msra.mxu0 0
        %5593 = vmatprep.subr.bf16.mxu0 0
        %5594 = vmatpush2.bf16.msra.mxu0 0
        %5595 = vmatprep.subr.bf16.mxu0 0
        %5596 = vmatpush2.bf16.msra.mxu0 0
        %5597 = vmatprep.subr.bf16.mxu0 0
        %5598 = vmatpush2.bf16.msra.mxu0 0
        %5599 = vmatprep.subr.bf16.mxu0 0
        %5600 = vmatpush2.bf16.msra.mxu0 0
        %5601 = vmatprep.subr.bf16.mxu0 0
        %5602 = vmatpush2.bf16.msra.mxu0 0
        %5603 = vmatprep.subr.bf16.mxu0 0
        %5604 = vmatpush2.bf16.msra.mxu0 0
        %5605 = vmatprep.subr.bf16.mxu0 0
        %5606 = vmatpush2.bf16.msra.mxu0 0
        %5607 = vmatprep.mubr.bf16.mxu0 0
        %5608 = vmatmul.mubr.bf16.gmra.mxu0 %v5573
        %v5609 = vpop.f32.mrf.mxu0
        %v5610 = vadd.f32 %v5191, %v5609
        %v5611 = vpop.f32.mrf.mxu0
        %v5612 = vpop.f32.mrf.mxu0
        %v5613 = vpop.f32.mrf.mxu0
        %5614 = vdwg.mxu0
        %v5615 = vadd.f32 %v5610, %v4521
        %v5616 = vld [vmem:[#allocation8] sm:$0x1]
        %v5617 = vld [vmem:[#allocation10] sm:$0x1]
        %v5618 = vld [vmem:[%s91] sm:$0xff]
        %v5619 = vld [vmem:[%s91 + $0x8] sm:$0xff]
        %v5620 = vld [vmem:[%s91 + $0x10] sm:$0xff]
        %v5621 = vld [vmem:[%s91 + $0x18] sm:$0xff]
        %v5622 = vld [vmem:[#allocation11] sm:$0x1]
        %v5623 = vld [vmem:[%s95] sm:$0xff]
        %v5624 = vld [vmem:[%s95 + $0x8] sm:$0xff]
        %v5625 = vld [vmem:[%s95 + $0x10] sm:$0xff]
        %v5626 = vld [vmem:[%s95 + $0x18] sm:$0xff]
        %v5627 = vld [vmem:[%s95 + $0x20] sm:$0xff]
        %v5628 = vld [vmem:[%s95 + $0x28] sm:$0xff]
        %v5629 = vld [vmem:[%s95 + $0x30] sm:$0xff]
        %v5630 = vld [vmem:[%s95 + $0x38] sm:$0xff]
        %v5631 = vld [vmem:[%s95 + $0x40] sm:$0xff]
        %v5632 = vld [vmem:[%s95 + $0x48] sm:$0xff]
        %v5633 = vld [vmem:[%s95 + $0x50] sm:$0xff]
        %v5634 = vld [vmem:[%s95 + $0x58] sm:$0xff]
        %v5635 = vld [vmem:[%s95 + $0x60] sm:$0xff]
        %v5636 = vld [vmem:[%s95 + $0x68] sm:$0xff]
        %v5637 = vld [vmem:[%s95 + $0x70] sm:$0xff]
        %v5638 = vld [vmem:[%s95 + $0x78] sm:$0xff]
        %v5639 = vld [vmem:[#allocation13] sm:$0x1]
        %v5640 = vsel %vm1963, %v5615, 0.0
        %5641 = vadd.xlane.f32.xlu0 %v5640
        %v5642 = vpop.xlane.xlu0 %5641
        %v5643 = vmul.f32 %v5642, %v1873
        %v5644 = vsub.f32 %v5615, %v5643
        %v5645 = vmul.f32 %v5644, %v5644
        %v5646 = vsel %vm1963, %v5645, 0.0
        %5647 = vadd.xlane.f32.xlu0 %v5646
        %v5648 = vpop.xlane.xlu0 %5647
        %v5649 = vmul.f32 %v5648, %v1873
        %v5650 = vadd.f32 %v5649, 1e-06
        %v5651 = vrsqrt.pop %v5650
        %v5652 = vmul.f32 %v5644, %v5651
        %v5653 = vmul.f32 %v5652, %v5616
        %v5654 = vadd.f32 %v5653, %v5617
        %v5655 = vpack.c.bf16 %v5654, %v5654
        %v5656 = vpack.c.bf16 %v5619, %v5618
        %v5657 = vpack.c.bf16 %v5621, %v5620
        %v5659 = vsel %vm1866, %v5655, 0
        %5661 = vmatprep.subr.bf16.mxu0 0
        %5662 = vmatpush1.bf16.msra.mxu0 0
        %5663 = vmatprep.subr.bf16.mxu0 0
        %5664 = vmatpush1.bf16.msra.mxu0 0
        %5665 = vmatprep.subr.bf16.mxu0 0
        %5666 = vmatpush1.bf16.msra.mxu0 0
        %5667 = vmatprep.subr.bf16.mxu0 0
        %5668 = vmatpush1.bf16.msra.mxu0 0
        %5669 = vmatprep.subr.bf16.mxu0 0
        %5670 = vmatpush1.bf16.msra.mxu0 0
        %5671 = vmatprep.subr.bf16.mxu0 0
        %5672 = vmatpush1.bf16.msra.mxu0 0
        %5673 = vmatprep.subr.bf16.mxu0 0
        %5674 = vmatpush1.bf16.msra.mxu0 %v5657
        %5675 = vmatprep.subr.bf16.mxu0 0
        %5676 = vmatpush1.bf16.msra.mxu0 %v5656
        %5677 = vmatprep.subr.bf16.mxu0 0
        %5678 = vmatpush2.bf16.msra.mxu0 0
        %5679 = vmatprep.subr.bf16.mxu0 0
        %5680 = vmatpush2.bf16.msra.mxu0 0
        %5681 = vmatprep.subr.bf16.mxu0 0
        %5682 = vmatpush2.bf16.msra.mxu0 0
        %5683 = vmatprep.subr.bf16.mxu0 0
        %5684 = vmatpush2.bf16.msra.mxu0 0
        %5685 = vmatprep.subr.bf16.mxu0 0
        %5686 = vmatpush2.bf16.msra.mxu0 0
        %5687 = vmatprep.subr.bf16.mxu0 0
        %5688 = vmatpush2.bf16.msra.mxu0 0
        %5689 = vmatprep.subr.bf16.mxu0 0
        %5690 = vmatpush2.bf16.msra.mxu0 0
        %5691 = vmatprep.subr.bf16.mxu0 0
        %5692 = vmatpush2.bf16.msra.mxu0 0
        %5693 = vmatprep.mubr.bf16.mxu0 0
        %5694 = vmatmul.mubr.bf16.gmra.mxu0 %v5659
        %v5695 = vpop.f32.mrf.mxu0
        %v5696 = vadd.f32 %v5622, %v5695
        %v5697 = vpop.f32.mrf.mxu0
        %v5698 = vpop.f32.mrf.mxu0
        %v5699 = vpop.f32.mrf.mxu0
        %5700 = vdwg.mxu0
        %v5701 = vmul.f32 %v5696, 0.5
        %v5702 = vmul.f32 %v5696, 0.70710677
        %v5703 = verf.f32.pop %v5702
        %v5704 = vadd.f32 %v5703, 1.0
        %v5705 = vmul.f32 %v5701, %v5704
        %v5706 = vpack.c.bf16 %v5705, %v5705
        %v5707 = vpack.c.bf16 %v5624, %v5623
        %v5708 = vpack.c.bf16 %v5626, %v5625
        %v5709 = vpack.c.bf16 %v5628, %v5627
        %v5710 = vpack.c.bf16 %v5630, %v5629
        %v5711 = vpack.c.bf16 %v5632, %v5631
        %v5712 = vpack.c.bf16 %v5634, %v5633
        %v5713 = vpack.c.bf16 %v5636, %v5635
        %v5714 = vpack.c.bf16 %v5638, %v5637
        %5715 = vmatprep.subr.bf16.mxu0 0
        %5716 = vmatpush1.bf16.msra.mxu0 %v5714
        %5717 = vmatprep.subr.bf16.mxu0 0
        %5718 = vmatpush1.bf16.msra.mxu0 %v5713
        %5719 = vmatprep.subr.bf16.mxu0 0
        %5720 = vmatpush1.bf16.msra.mxu0 %v5712
        %5721 = vmatprep.subr.bf16.mxu0 0
        %5722 = vmatpush1.bf16.msra.mxu0 %v5711
        %5723 = vmatprep.subr.bf16.mxu0 0
        %5724 = vmatpush1.bf16.msra.mxu0 %v5710
        %5725 = vmatprep.subr.bf16.mxu0 0
        %5726 = vmatpush1.bf16.msra.mxu0 %v5709
        %5727 = vmatprep.subr.bf16.mxu0 0
        %5728 = vmatpush1.bf16.msra.mxu0 %v5708
        %5729 = vmatprep.subr.bf16.mxu0 0
        %5730 = vmatpush1.bf16.msra.mxu0 %v5707
        %5731 = vmatprep.subr.bf16.mxu0 0
        %5732 = vmatpush2.bf16.msra.mxu0 0
        %5733 = vmatprep.subr.bf16.mxu0 0
        %5734 = vmatpush2.bf16.msra.mxu0 0
        %5735 = vmatprep.subr.bf16.mxu0 0
        %5736 = vmatpush2.bf16.msra.mxu0 0
        %5737 = vmatprep.subr.bf16.mxu0 0
        %5738 = vmatpush2.bf16.msra.mxu0 0
        %5739 = vmatprep.subr.bf16.mxu0 0
        %5740 = vmatpush2.bf16.msra.mxu0 0
        %5741 = vmatprep.subr.bf16.mxu0 0
        %5742 = vmatpush2.bf16.msra.mxu0 0
        %5743 = vmatprep.subr.bf16.mxu0 0
        %5744 = vmatpush2.bf16.msra.mxu0 0
        %5745 = vmatprep.subr.bf16.mxu0 0
        %5746 = vmatpush2.bf16.msra.mxu0 0
        %5747 = vmatprep.mubr.bf16.mxu0 0
        %5748 = vmatmul.mubr.bf16.gmra.mxu0 %v5706
        %v5749 = vpop.f32.mrf.mxu0
        %v5750 = vadd.f32 0.0, %v5749
        %v5751 = vpop.f32.mrf.mxu0
        %v5752 = vpop.f32.mrf.mxu0
        %v5753 = vpop.f32.mrf.mxu0
        %5754 = vdwg.mxu0
        %v5755 = vadd.f32 %v5615, %v5750
        %v5756 = vadd.f32 %v5755, %v5639
        %v5757 = vld [vmem:[%s15] sm:$0x1]
        %v5758 = vld [vmem:[%s17] sm:$0x1]
        %v5759 = vsel %vm1963, %v5756, 0.0
        %5760 = vadd.xlane.f32.xlu0 %v5759
        %v5761 = vpop.xlane.xlu0 %5760
        %v5762 = vmul.f32 %v5761, %v1873
        %v5763 = vsub.f32 %v5756, %v5762
        %v5764 = vmul.f32 %v5763, %v5763
        %v5765 = vsel %vm1963, %v5764, 0.0
        %5766 = vadd.xlane.f32.xlu0 %v5765
        %v5767 = vpop.xlane.xlu0 %5766
        %v5768 = vmul.f32 %v5767, %v1873
        %v5769 = vadd.f32 %v5768, 1e-06
        %v5770 = vrsqrt.pop %v5769
        %v5771 = vmul.f32 %v5763, %v5770
        %v5772 = vmul.f32 %v5771, %v5757
        %v5773 = vadd.f32 %v5772, %v5758
        %v5774 = vld [vmem:[%s19] sm:$0xff]
        %v5775 = vld [vmem:[%s19 + $0x8] sm:$0xff]
        %v5776 = vld [vmem:[%s19 + $0x10] sm:$0xff]
        %v5777 = vld [vmem:[%s19 + $0x18] sm:$0xff]
        %v5778 = vld [vmem:[%s21] sm:$0x1]
        %v5780 = vsel %vm1866, %v5773, 0
        %5782 = vmatprep.subr.mxu0 0.0
        %5783 = vmatpush1.msra.mxu0 0.0
        %5784 = vmatprep.subr.mxu0 0.0
        %5785 = vmatpush1.msra.mxu0 0.0
        %5786 = vmatprep.subr.mxu0 0.0
        %5787 = vmatpush1.msra.mxu0 0.0
        %5788 = vmatprep.subr.mxu0 0.0
        %5789 = vmatpush1.msra.mxu0 0.0
        %5790 = vmatprep.subr.mxu0 0.0
        %5791 = vmatpush1.msra.mxu0 0.0
        %5792 = vmatprep.subr.mxu0 0.0
        %5793 = vmatpush1.msra.mxu0 0.0
        %5794 = vmatprep.subr.mxu0 0.0
        %5795 = vmatpush1.msra.mxu0 0.0
        %5796 = vmatprep.subr.mxu0 0.0
        %5797 = vmatpush1.msra.mxu0 0.0
        %5798 = vmatprep.subr.mxu0 0.0
        %5799 = vmatpush1.msra.mxu0 0.0
        %5800 = vmatprep.subr.mxu0 0.0
        %5801 = vmatpush1.msra.mxu0 0.0
        %5802 = vmatprep.subr.mxu0 0.0
        %5803 = vmatpush1.msra.mxu0 0.0
        %5804 = vmatprep.subr.mxu0 0.0
        %5805 = vmatpush1.msra.mxu0 0.0
        %5806 = vmatprep.subr.mxu0 0.0
        %5807 = vmatpush1.msra.mxu0 %v5777
        %5808 = vmatprep.subr.mxu0 0.0
        %5809 = vmatpush1.msra.mxu0 %v5776
        %5810 = vmatprep.subr.mxu0 0.0
        %5811 = vmatpush1.msra.mxu0 %v5775
        %5812 = vmatprep.subr.mxu0 0.0
        %5813 = vmatpush1.msra.mxu0 %v5774
        %5814 = vmatprep.subr.mxu0 0.0
        %5815 = vmatpush2.msra.mxu0 0.0
        %5816 = vmatprep.subr.mxu0 0.0
        %5817 = vmatpush2.msra.mxu0 0.0
        %5818 = vmatprep.subr.mxu0 0.0
        %5819 = vmatpush2.msra.mxu0 0.0
        %5820 = vmatprep.subr.mxu0 0.0
        %5821 = vmatpush2.msra.mxu0 0.0
        %5822 = vmatprep.subr.mxu0 0.0
        %5823 = vmatpush2.msra.mxu0 0.0
        %5824 = vmatprep.subr.mxu0 0.0
        %5825 = vmatpush2.msra.mxu0 0.0
        %5826 = vmatprep.subr.mxu0 0.0
        %5827 = vmatpush2.msra.mxu0 0.0
        %5828 = vmatprep.subr.mxu0 0.0
        %5829 = vmatpush2.msra.mxu0 0.0
        %5830 = vmatprep.subr.mxu0 0.0
        %5831 = vmatpush2.msra.mxu0 0.0
        %5832 = vmatprep.subr.mxu0 0.0
        %5833 = vmatpush2.msra.mxu0 0.0
        %5834 = vmatprep.subr.mxu0 0.0
        %5835 = vmatpush2.msra.mxu0 0.0
        %5836 = vmatprep.subr.mxu0 0.0
        %5837 = vmatpush2.msra.mxu0 0.0
        %5838 = vmatprep.subr.mxu0 0.0
        %5839 = vmatpush2.msra.mxu0 0.0
        %5840 = vmatprep.subr.mxu0 0.0
        %5841 = vmatpush2.msra.mxu0 0.0
        %5842 = vmatprep.subr.mxu0 0.0
        %5843 = vmatpush2.msra.mxu0 0.0
        %5844 = vmatprep.subr.mxu0 0.0
        %5845 = vmatpush2.msra.mxu0 0.0
        %5846 = vmatprep.mubr.f32.mxu0 0.0
        %5847 = vmatmul.mubr.f32.gmra.mxu0 %v5780
        %v5848 = vpop.f32.mrf.mxu0
        %v5849 = vadd.f32 %v5778, %v5848
        %v5850 = vpop.f32.mrf.mxu0
        %5851 = vdwg.mxu0
        %vm5852 = vcmask 73728
        %5853 = vst.msk [vmem:[%s1542] sm:$0x1] %vm5852, %v5849
        %s5854 = sand.u32 %s1159, 1
        %s5855 = scalar_lea.sflag [#allocation4], %s5854
        %s5856 = sand.u32 %s1159, 1
        %s5857 = scalar_lea.vmem [#allocation14], %s5856
        // Predicated region
        $region245: #{mvit_forward.1} parent=215 // pred_check
          %p5858 = pneg %p1169
        $region246: #{mvit_forward.1} parent=215 // pred_check_branch
          %5860 = sbr.rel (%p5858) target = $region248
        $region247: #{mvit_forward.1} parent=215 // pred_region
          %s5862 = ssub.s32 16, 16
          %5863 = vsyncadd %s5855, %s5862
          %s5864 = smul.addr %s117, 16
          %s5865 = scalar_lea.hbm %s99, %s5864
          %s5867 = sshll.u32 %s5857, 4
          %s5868 = int_to_ptr.vmem [resolvable:$true] %s5867
          %5870 = dma.vmem_to_hbm [thread:$0]  %s5868, 16, %s5865, %s5855
        $region248: #{mvit_forward.1} parent=215 // pred_fallthru
          _
      $region216: #{mvit_forward.1} parent=5 // pred_fallthru
        _
      %p5871 = scmp.le.s32.totalorder 2, %s112
      // Predicated region
      $region249: #{mvit_forward.1} parent=5 // pred_check
        %p5872 = pneg %p5871
      $region250: #{mvit_forward.1} parent=5 // pred_check_branch
        %5874 = sbr.rel (%p5872) target = $region252
      $region251: #{mvit_forward.1} parent=5 // pred_region
        %s5875 = ssub.s32 %s112, 2
        // Predicated region
        $region253: #{mvit_forward.1} parent=251 // pred_check
          %p5876 = pneg %p1175
        $region254: #{mvit_forward.1} parent=251 // pred_check_branch
          %5878 = sbr.rel (%p5876) target = $region256
        $region255: #{mvit_forward.1} parent=251 // pred_region
          %s5879 = sand.u32 %s1160, 1
          %s5880 = scalar_lea.sflag [#allocation4], %s5879
          %s5881 = sand.u32 %s1160, 1
          %s5882 = scalar_lea.vmem [#allocation14], %s5881
          %5883 = dma.done %s5880, 16
        $region256: #{mvit_forward.1} parent=251 // pred_fallthru
          _
      $region252: #{mvit_forward.1} parent=5 // pred_fallthru
        _
    $region6: #{mvit_forward.1} parent=1 // loop_footer
      %s116 = sadd.s32 1, %s112
    $region7: #{mvit_forward.1} parent=1 // loop_footer_branch
      %111 = sbr.rel target = $region3
    $region8: #{mvit_forward.1} parent=1 // loop_exit
      _
    %5884 = vsyncpa [#allocation3], 1
    %s5885 = scalar_lea.sflag [#allocation3], 1
    %5886 = vsyncpa %s5885, 1
    %5887 = vsyncpa [#allocation6], 1
    %5888 = vsyncpa [#allocation9], 1
    %5889 = vsyncpa [#allocation12], 1
    %5890 = vsyncpa [#allocation4], 1
    %s5891 = scalar_lea.sflag [#allocation4], 1
    %5892 = vsyncpa %s5891, 1

</llo_original>
